<compile_context>
chip_gen: v5e
topology: v5e:2x2
jax: 0.10.0
libtpu: 0.0.40
codegen_flags: <defaults>
</compile_context>

<pallas_src>
import functools

import jax
import jax.numpy as jnp
from jax.experimental import pallas as pl
from jax.experimental.pallas import tpu as pltpu

_LANE = 128


def _round_up(n, m):
    return ((n + m - 1) // m) * m


def _bottleneck_kernel(x_ref, w1_ref, w2_ref, w3_ref,
                       g1_ref, b1_ref, g2_ref, b2_ref, g3_ref, b3_ref,
                       ml_ref, mr_ref,
                       o_ref, y1_ref, z2_ref, *, N, H, W, RC, eps):
    """Fused bottleneck block: three conv stages + training-mode BN + ReLU."""
    M = x_ref.shape[0]          # N*H*W flat rows
    CP = w2_ref.shape[2]        # lane-padded mid channel count
    HW = H * W
    inv_m = 1.0 / M

    def scale_shift(s, ss, g_ref, b_ref):
        # Single-pass training-mode BN: var = E[z^2] - mean^2 (f32, clamped).
        mean = s * inv_m
        var = jnp.maximum(ss * inv_m - mean * mean, 0.0)
        scale = g_ref[...] * jax.lax.rsqrt(var + eps)
        return scale, b_ref[...] - mean * scale

    # ---------------- conv1 (1x1) + bn1 + relu -------------------------------
    z1 = jnp.dot(x_ref[...].astype(jnp.bfloat16), w1_ref[...],
                 preferred_element_type=jnp.float32)
    sc1, sh1 = scale_shift(jnp.sum(z1, axis=0, keepdims=True),
                           jnp.sum(z1 * z1, axis=0, keepdims=True),
                           g1_ref, b1_ref)
    y1 = jnp.maximum(z1 * sc1 + sh1, 0.0).astype(jnp.bfloat16)

    # Park y1 (bf16) in the per-image zero-gutter VMEM scratch.  Only the
    # (N+1) gutter bands (2W rows each) are zeroed; real rows are overwritten.
    zero_band = jnp.zeros((2 * W, CP), jnp.bfloat16)
    y1_ref[pl.ds(0, 2 * W), :] = zero_band
    for n in range(N):
        base = (2 + n * (H + 2)) * W
        y1_ref[pl.ds(base, HW), :] = y1[n * HW:(n + 1) * HW, :]
        y1_ref[pl.ds(base + HW, 2 * W), :] = zero_band

    # ---------------- conv2 (3x3, stride=1, pad=1) ---------------------------
    # 9 shifted matmuls per row chunk.  The 2W-row gutters absorb all row /
    # image boundary bleed, so only the two column-boundary masks remain and
    # they are applied once per dx-group (2 multiplies instead of 8 selects).
    # The f32 accumulator of a chunk stays vreg-resident across all 9 taps.
    mask_l = ml_ref[...]        # (RC, 1) f32: 1.0 where j > 0       (dx = -1)
    mask_r = mr_ref[...]        # (RC, 1) f32: 1.0 where j < W - 1   (dx = +1)
    s2 = jnp.zeros((1, CP), jnp.float32)
    ss2 = jnp.zeros((1, CP), jnp.float32)
    for n in range(N):
        base = (2 + n * (H + 2)) * W
        for c in range(HW // RC):
            p0 = base + c * RC

            def tap(dy, dx, _p0=p0):
                t = (dy + 1) * 3 + (dx + 1)
                win = y1_ref[pl.ds(_p0 + dy * W + dx, RC), :]
                return jnp.dot(win, w2_ref[t],
                               preferred_element_type=jnp.float32)

            left = tap(-1, -1) + tap(0, -1) + tap(1, -1)
            acc = left * mask_l
            right = tap(-1, 1) + tap(0, 1) + tap(1, 1)
            acc = acc + right * mask_r
            acc = acc + tap(-1, 0) + tap(0, 0) + tap(1, 0)

            s2 = s2 + jnp.sum(acc, axis=0, keepdims=True)
            ss2 = ss2 + jnp.sum(acc * acc, axis=0, keepdims=True)
            z2_ref[pl.ds(n * HW + c * RC, RC), :] = acc

    sc2, sh2 = scale_shift(s2, ss2, g2_ref, b2_ref)
    y2 = jnp.maximum(z2_ref[...] * sc2 + sh2, 0.0).astype(jnp.bfloat16)

    # ---------------- conv3 (1x1) + bn3 + residual + relu --------------------
    z3 = jnp.dot(y2, w3_ref[...], preferred_element_type=jnp.float32)
    sc3, sh3 = scale_shift(jnp.sum(z3, axis=0, keepdims=True),
                           jnp.sum(z3 * z3, axis=0, keepdims=True),
                           g3_ref, b3_ref)
    # Residual comes straight from the single f32 x input block (no dup DMA).
    o_ref[...] = jnp.maximum(z3 * sc3 + sh3 + x_ref[...], 0.0).astype(o_ref.dtype)


def bottleneck_block_forward(x_nchw, p, stride=1, eps=1e-5):
    """Forward pass of bottleneck_block (downsample=None).  NCHW f32 in/out."""
    N, Cin, H, W = x_nchw.shape
    C = p["w1"].shape[0]            # conv1 weight: (C, Cin, 1, 1)
    C4 = p["w3"].shape[0]           # conv3 weight: (C4, C, 1, 1)
    # downsample=None => residual is the raw input; only valid for stride=1
    # and matching channel counts.
    assert stride == 1 and Cin == C4, (
        "downsample=None requires stride=1 and in_channels == out_channels*4")
    M = N * H * W

    CinP = _round_up(Cin, _LANE)
    CP = _round_up(C, _LANE)
    C4P = _round_up(C4, _LANE)
    assert CinP == C4P              # follows from Cin == C4

    # conv2 row-chunk size: a multiple of W that divides H*W, ~128 rows.
    rpc = min(H, max(1, 128 // W))
    while H % rpc:
        rpc -= 1
    RC = rpc * W

    def pad2(a, rows, cols):
        return jnp.pad(a, ((0, rows - a.shape[0]), (0, cols - a.shape[1])))

    # x shipped ONCE, f32, flat NHWC rows, channels zero-padded to 128 lanes.
    x2d = pad2(jnp.transpose(x_nchw, (0, 2, 3, 1)).reshape(M, Cin), M, CinP)

    # Weights -> (cin, cout) matmul layout, zero-padded, bf16 for the MXU.
    w1 = pad2(p["w1"].reshape(C, Cin).T, CinP, CP).astype(jnp.bfloat16)
    w2 = jnp.transpose(p["w2"], (2, 3, 1, 0)).reshape(9, C, C)   # (tap,cin,cout)
    w2 = jnp.pad(w2, ((0, 0), (0, CP - C), (0, CP - C))).astype(jnp.bfloat16)
    w3 = pad2(p["w3"].reshape(C4, C).T, CP, C4P).astype(jnp.bfloat16)

    # BN affine params: f32, zero-padded so padded channels come out as 0.
    g1 = pad2(p["g1"].reshape(1, C), 1, CP)
    b1 = pad2(p["b1"].reshape(1, C), 1, CP)
    g2 = pad2(p["g2"].reshape(1, C), 1, CP)
    b2 = pad2(p["b2"].reshape(1, C), 1, CP)
    g3 = pad2(p["g3"].reshape(1, C4), 1, C4P)
    b3 = pad2(p["b3"].reshape(1, C4), 1, C4P)

    # Column-boundary masks for the dx = -1 / dx = +1 tap groups.  RC is a
    # multiple of W, so the same (RC, 1) pattern is valid for every chunk.
    jloc = jnp.arange(RC, dtype=jnp.int32) % W
    mask_l = (jloc > 0).astype(jnp.float32).reshape(RC, 1)
    mask_r = (jloc < W - 1).astype(jnp.float32).reshape(RC, 1)

    args = [x2d, w1, w2, w3, g1, b1, g2, b2, g3, b3, mask_l, mask_r]

    # y1 scratch rows: N images of H*W rows, separated by 2W-row zero gutters
    # (plus 2W head / 2W tail), so every 3x3 shifted read stays in-bounds and
    # boundary bleed hits zeros.
    s_rows = (N * (H + 2) + 2) * W

    flops = 2 * M * (CinP * CP + 9 * CP * CP + CP * C4P)
    bytes_accessed = int(sum(a.size * a.dtype.itemsize for a in args)
                         + M * C4P * 4)

    out2d = pl.pallas_call(
        functools.partial(_bottleneck_kernel, N=N, H=H, W=W, RC=RC, eps=eps),
        out_shape=jax.ShapeDtypeStruct((M, C4P), jnp.float32),
        grid=(1,),
        in_specs=[pl.BlockSpec(a.shape, lambda i, _n=a.ndim: (0,) * _n)
                  for a in args],
        out_specs=pl.BlockSpec((M, C4P), lambda i: (0, 0)),
        scratch_shapes=[pltpu.VMEM((s_rows, CP), jnp.bfloat16),   # gutter y1
                        pltpu.VMEM((M, CP), jnp.float32)],        # raw conv2
        compiler_params=pltpu.CompilerParams(
            dimension_semantics=("arbitrary",)),
        cost_estimate=pl.CostEstimate(flops=flops,
                                      transcendentals=2 * CP + C4P,
                                      bytes_accessed=bytes_accessed),
    )(*args)

    out = out2d[:, :C4].reshape(N, H, W, C4)
    return jnp.transpose(out, (0, 3, 1, 2))               # back to NCHW


def init_params(key, in_channels, out_channels, expansion=4):
    ks = jax.random.split(key, 9)
    C, Cin, C4 = out_channels, in_channels, out_channels * expansion
    n = jax.random.normal
    return {
        "w1": 0.1 * n(ks[0], (C, Cin, 1, 1), jnp.float32),
        "g1": 1.0 + 0.1 * n(ks[1], (C,), jnp.float32),
        "b1": 0.1 * n(ks[2], (C,), jnp.float32),
        "w2": 0.1 * n(ks[3], (C, C, 3, 3), jnp.float32),
        "g2": 1.0 + 0.1 * n(ks[4], (C,), jnp.float32),
        "b2": 0.1 * n(ks[5], (C,), jnp.float32),
        "w3": 0.1 * n(ks[6], (C4, C, 1, 1), jnp.float32),
        "g3": 1.0 + 0.1 * n(ks[7], (C4,), jnp.float32),
        "b3": 0.1 * n(ks[8], (C4,), jnp.float32),
    }


def reference_forward(x_nchw, p, stride=1, eps=1e-5, operand_dtype=jnp.float32):
    """Pure-JAX reference mirroring the PyTorch module (training-mode BN).

    With operand_dtype=bfloat16 the conv inputs/weights are rounded to bf16
    (accumulation stays f32), matching the kernel's MXU operand precision.
    """
    def cast(a):
        return a.astype(operand_dtype).astype(jnp.float32)

    def conv(x, w, s, pad):
        return jax.lax.conv_general_dilated(
            cast(x), cast(w), window_strides=(s, s), padding=pad,
            dimension_numbers=("NCHW", "OIHW", "NCHW"))

    def bn(x, g, b):
        m = jnp.mean(x, axis=(0, 2, 3), keepdims=True)
        v = jnp.mean(jnp.square(x - m), axis=(0, 2, 3), keepdims=True)
        return ((x - m) * jax.lax.rsqrt(v + eps) * g[None, :, None, None]
                + b[None, :, None, None])

    out = jax.nn.relu(bn(conv(x_nchw, p["w1"], 1, "VALID"), p["g1"], p["b1"]))
    out = jax.nn.relu(bn(conv(out, p["w2"], stride, [(1, 1), (1, 1)]),
                         p["g2"], p["b2"]))
    out = bn(conv(out, p["w3"], 1, "VALID"), p["g3"], p["b3"])
    return jax.nn.relu(out + x_nchw)


if __name__ == "__main__":
    key = jax.random.PRNGKey(0)
    k_x, k_p = jax.random.split(key)

    # downsample=None requires in_channels == out_channels * expansion, stride=1
    in_channels, out_channels, stride = 16, 4, 1
    x = jax.random.normal(k_x, (2, in_channels, 16, 16), jnp.float32)   # NCHW
    params = init_params(k_p, in_channels, out_channels)

    fwd = jax.jit(functools.partial(bottleneck_block_forward, stride=stride))
    out = jax.block_until_ready(fwd(x, params))

    ref_f32 = reference_forward(x, params, stride=stride)
    ref_match = reference_forward(x, params, stride=stride,
                                  operand_dtype=jnp.bfloat16)
    assert out.shape == ref_f32.shape == (2, out_channels * 4, 16, 16)

    err_match = float(jnp.max(jnp.abs(out - ref_match)))
    err_f32 = float(jnp.max(jnp.abs(out - ref_f32)))
    # Tight structural check against a precision-matched (bf16-operand)
    # reference: catches any shift/gutter/mask/BN/residual bug.
    assert jnp.allclose(out, ref_match, atol=2e-2, rtol=2e-2), err_match
    # Looser semantic check against the pure-f32 reference (bf16 MXU operand
    # rounding is amplified by three training-mode BatchNorm normalizations).
    assert jnp.allclose(out, ref_f32, atol=1.5e-1, rtol=1e-1), err_f32
    print("KERNEL_OK")
</pallas_src>

<mosaic_0001>
module attributes {stable_mosaic.version = 11 : i64} {
  func.func @_bottleneck_kernel(%arg0: i32, %arg1: memref<512x128xf32, #tpu.memory_space<vmem>>, %arg2: memref<128x128xbf16, #tpu.memory_space<vmem>>, %arg3: memref<9x128x128xbf16, #tpu.memory_space<vmem>>, %arg4: memref<128x128xbf16, #tpu.memory_space<vmem>>, %arg5: memref<1x128xf32, #tpu.memory_space<vmem>>, %arg6: memref<1x128xf32, #tpu.memory_space<vmem>>, %arg7: memref<1x128xf32, #tpu.memory_space<vmem>>, %arg8: memref<1x128xf32, #tpu.memory_space<vmem>>, %arg9: memref<1x128xf32, #tpu.memory_space<vmem>>, %arg10: memref<1x128xf32, #tpu.memory_space<vmem>>, %arg11: memref<128x1xf32, #tpu.memory_space<vmem>>, %arg12: memref<128x1xf32, #tpu.memory_space<vmem>>, %arg13: memref<512x128xf32, #tpu.memory_space<vmem>>, %arg14: memref<608x128xbf16, #tpu.memory_space<vmem>>, %arg15: memref<512x128xf32, #tpu.memory_space<vmem>>) attributes {dimension_semantics = [#tpu.dimension_semantics<arbitrary>], iteration_bounds = array<i64: 1>, scalar_prefetch = 0 : i64, scratch_operands = 2 : i64, tpu.core_type = #tpu.core_type<tc>, window_params = [{pipeline_mode = #tpu.pipeline_mode<synchronous>, transform_indices = @transform_0, window_bounds = array<i64: 512, 128>}, {pipeline_mode = #tpu.pipeline_mode<synchronous>, transform_indices = @transform_1, window_bounds = array<i64: 128, 128>}, {pipeline_mode = #tpu.pipeline_mode<synchronous>, transform_indices = @transform_2, window_bounds = array<i64: 9, 128, 128>}, {pipeline_mode = #tpu.pipeline_mode<synchronous>, transform_indices = @transform_3, window_bounds = array<i64: 128, 128>}, {pipeline_mode = #tpu.pipeline_mode<synchronous>, transform_indices = @transform_4, window_bounds = array<i64: 1, 128>}, {pipeline_mode = #tpu.pipeline_mode<synchronous>, transform_indices = @transform_5, window_bounds = array<i64: 1, 128>}, {pipeline_mode = #tpu.pipeline_mode<synchronous>, transform_indices = @transform_6, window_bounds = array<i64: 1, 128>}, {pipeline_mode = #tpu.pipeline_mode<synchronous>, transform_indices = @transform_7, window_bounds = array<i64: 1, 128>}, {pipeline_mode = #tpu.pipeline_mode<synchronous>, transform_indices = @transform_8, window_bounds = array<i64: 1, 128>}, {pipeline_mode = #tpu.pipeline_mode<synchronous>, transform_indices = @transform_9, window_bounds = array<i64: 1, 128>}, {pipeline_mode = #tpu.pipeline_mode<synchronous>, transform_indices = @transform_10, window_bounds = array<i64: 128, 1>}, {pipeline_mode = #tpu.pipeline_mode<synchronous>, transform_indices = @transform_11, window_bounds = array<i64: 128, 1>}, {pipeline_mode = #tpu.pipeline_mode<synchronous>, transform_indices = @transform_12, window_bounds = array<i64: 512, 128>}]} {
    %c0 = arith.constant 0 : index
    %c0_0 = arith.constant 0 : index
    %0 = vector.load %arg1[%c0, %c0_0] : memref<512x128xf32, #tpu.memory_space<vmem>>, vector<512x128xf32>
    %1 = arith.truncf %0 : vector<512x128xf32> to vector<512x128xbf16>
    %c0_1 = arith.constant 0 : index
    %c0_2 = arith.constant 0 : index
    %2 = vector.load %arg2[%c0_1, %c0_2] : memref<128x128xbf16, #tpu.memory_space<vmem>>, vector<128x128xbf16>
    %cst = arith.constant dense<0.000000e+00> : vector<512x128xf32>
    %3 = tpu.matmul %1, %2, %cst {dimension_numbers = #tpu.dot_dimension_numbers<[1], [0], [0], [1], [0, 0, 1, 1], [], []>} : vector<512x128xbf16>, vector<128x128xbf16>, vector<512x128xf32> -> vector<512x128xf32>
    %cst_3 = arith.constant dense<0.000000e+00> : vector<128xf32>
    %4 = vector.multi_reduction <add>, %3, %cst_3 [0] : vector<512x128xf32> to vector<128xf32>
    %5 = vector.shape_cast %4 : vector<128xf32> to vector<1x128xf32>
    %6 = arith.mulf %3, %3 : vector<512x128xf32>
    %cst_4 = arith.constant dense<0.000000e+00> : vector<128xf32>
    %7 = vector.multi_reduction <add>, %6, %cst_4 [0] : vector<512x128xf32> to vector<128xf32>
    %8 = vector.shape_cast %7 : vector<128xf32> to vector<1x128xf32>
    %cst_5 = arith.constant 0.001953125 : f32
    %9 = vector.broadcast %cst_5 : f32 to vector<1x128xf32>
    %10 = arith.mulf %5, %9 : vector<1x128xf32>
    %cst_6 = arith.constant 0.001953125 : f32
    %11 = vector.broadcast %cst_6 : f32 to vector<1x128xf32>
    %12 = arith.mulf %8, %11 : vector<1x128xf32>
    %13 = arith.mulf %10, %10 : vector<1x128xf32>
    %14 = arith.subf %12, %13 : vector<1x128xf32>
    %cst_7 = arith.constant 0.000000e+00 : f32
    %15 = vector.broadcast %cst_7 : f32 to vector<1x128xf32>
    %16 = arith.maximumf %14, %15 : vector<1x128xf32>
    %c0_8 = arith.constant 0 : index
    %c0_9 = arith.constant 0 : index
    %17 = vector.load %arg5[%c0_8, %c0_9] : memref<1x128xf32, #tpu.memory_space<vmem>>, vector<1x128xf32>
    %cst_10 = arith.constant 9.99999974E-6 : f32
    %18 = vector.broadcast %cst_10 : f32 to vector<1x128xf32>
    %19 = arith.addf %16, %18 : vector<1x128xf32>
    %20 = math.rsqrt %19 : vector<1x128xf32>
    %21 = arith.mulf %17, %20 : vector<1x128xf32>
    %c0_11 = arith.constant 0 : index
    %c0_12 = arith.constant 0 : index
    %22 = vector.load %arg6[%c0_11, %c0_12] : memref<1x128xf32, #tpu.memory_space<vmem>>, vector<1x128xf32>
    %23 = arith.mulf %10, %21 : vector<1x128xf32>
    %24 = arith.subf %22, %23 : vector<1x128xf32>
    %25 = vector.broadcast %21 : vector<1x128xf32> to vector<512x128xf32>
    %26 = arith.mulf %3, %25 : vector<512x128xf32>
    %27 = vector.broadcast %24 : vector<1x128xf32> to vector<512x128xf32>
    %28 = arith.addf %26, %27 : vector<512x128xf32>
    %cst_13 = arith.constant 0.000000e+00 : f32
    %29 = vector.broadcast %cst_13 : f32 to vector<512x128xf32>
    %30 = arith.maximumf %28, %29 : vector<512x128xf32>
    %31 = arith.truncf %30 : vector<512x128xf32> to vector<512x128xbf16>
    %cst_14 = arith.constant 0.000000e+00 : bf16
    %32 = vector.broadcast %cst_14 : bf16 to vector<32x128xbf16>
    %c0_15 = arith.constant 0 : index
    %c0_16 = arith.constant 0 : index
    %33 = vector.load %arg14[%c0_15, %c0_16] : memref<608x128xbf16, #tpu.memory_space<vmem>>, vector<32x128xbf16>
    tpu.vector_store %arg14[%c0_15, %c0_16], %32 {strides = array<i32>} : memref<608x128xbf16, #tpu.memory_space<vmem>>, vector<32x128xbf16>,
    %34 = vector.extract_strided_slice %31 {offsets = [0, 0], sizes = [256, 128], strides = [1, 1]} : vector<512x128xbf16> to vector<256x128xbf16>
    %c32 = arith.constant 32 : index
    %c0_17 = arith.constant 0 : index
    %35 = vector.load %arg14[%c32, %c0_17] : memref<608x128xbf16, #tpu.memory_space<vmem>>, vector<256x128xbf16>
    tpu.vector_store %arg14[%c32, %c0_17], %34 {strides = array<i32>} : memref<608x128xbf16, #tpu.memory_space<vmem>>, vector<256x128xbf16>,
    %c288 = arith.constant 288 : index
    %c0_18 = arith.constant 0 : index
    %36 = vector.load %arg14[%c288, %c0_18] : memref<608x128xbf16, #tpu.memory_space<vmem>>, vector<32x128xbf16>
    tpu.vector_store %arg14[%c288, %c0_18], %32 {strides = array<i32>} : memref<608x128xbf16, #tpu.memory_space<vmem>>, vector<32x128xbf16>,
    %37 = vector.extract_strided_slice %31 {offsets = [256, 0], sizes = [256, 128], strides = [1, 1]} : vector<512x128xbf16> to vector<256x128xbf16>
    %c320 = arith.constant 320 : index
    %c0_19 = arith.constant 0 : index
    %38 = vector.load %arg14[%c320, %c0_19] : memref<608x128xbf16, #tpu.memory_space<vmem>>, vector<256x128xbf16>
    tpu.vector_store %arg14[%c320, %c0_19], %37 {strides = array<i32>} : memref<608x128xbf16, #tpu.memory_space<vmem>>, vector<256x128xbf16>,
    %c576 = arith.constant 576 : index
    %c0_20 = arith.constant 0 : index
    %39 = vector.load %arg14[%c576, %c0_20] : memref<608x128xbf16, #tpu.memory_space<vmem>>, vector<32x128xbf16>
    tpu.vector_store %arg14[%c576, %c0_20], %32 {strides = array<i32>} : memref<608x128xbf16, #tpu.memory_space<vmem>>, vector<32x128xbf16>,
    %c0_21 = arith.constant 0 : index
    %c0_22 = arith.constant 0 : index
    %40 = vector.load %arg11[%c0_21, %c0_22] : memref<128x1xf32, #tpu.memory_space<vmem>>, vector<128x1xf32>
    %c0_23 = arith.constant 0 : index
    %c0_24 = arith.constant 0 : index
    %41 = vector.load %arg12[%c0_23, %c0_24] : memref<128x1xf32, #tpu.memory_space<vmem>>, vector<128x1xf32>
    %cst_25 = arith.constant 0.000000e+00 : f32
    %42 = vector.broadcast %cst_25 : f32 to vector<1x128xf32>
    %cst_26 = arith.constant 0.000000e+00 : f32
    %43 = vector.broadcast %cst_26 : f32 to vector<1x128xf32>
    %c15 = arith.constant 15 : index
    %c0_27 = arith.constant 0 : index
    %44 = vector.load %arg14[%c15, %c0_27] : memref<608x128xbf16, #tpu.memory_space<vmem>>, vector<128x128xbf16>
    %c0_28 = arith.constant 0 : index
    %c0_29 = arith.constant 0 : index
    %c0_30 = arith.constant 0 : index
    %45 = vector.load %arg3[%c0_28, %c0_29, %c0_30] : memref<9x128x128xbf16, #tpu.memory_space<vmem>>, vector<1x128x128xbf16>
    %46 = vector.shape_cast %45 : vector<1x128x128xbf16> to vector<128x128xbf16>
    %cst_31 = arith.constant dense<0.000000e+00> : vector<128x128xf32>
    %47 = tpu.matmul %44, %46, %cst_31 {dimension_numbers = #tpu.dot_dimension_numbers<[1], [0], [0], [1], [0, 0, 1, 1], [], []>} : vector<128x128xbf16>, vector<128x128xbf16>, vector<128x128xf32> -> vector<128x128xf32>
    %c31 = arith.constant 31 : index
    %c0_32 = arith.constant 0 : index
    %48 = vector.load %arg14[%c31, %c0_32] : memref<608x128xbf16, #tpu.memory_space<vmem>>, vector<128x128xbf16>
    %c3 = arith.constant 3 : index
    %c0_33 = arith.constant 0 : index
    %c0_34 = arith.constant 0 : index
    %49 = vector.load %arg3[%c3, %c0_33, %c0_34] : memref<9x128x128xbf16, #tpu.memory_space<vmem>>, vector<1x128x128xbf16>
    %50 = vector.shape_cast %49 : vector<1x128x128xbf16> to vector<128x128xbf16>
    %cst_35 = arith.constant dense<0.000000e+00> : vector<128x128xf32>
    %51 = tpu.matmul %48, %50, %cst_35 {dimension_numbers = #tpu.dot_dimension_numbers<[1], [0], [0], [1], [0, 0, 1, 1], [], []>} : vector<128x128xbf16>, vector<128x128xbf16>, vector<128x128xf32> -> vector<128x128xf32>
    %52 = arith.addf %47, %51 : vector<128x128xf32>
    %c47 = arith.constant 47 : index
    %c0_36 = arith.constant 0 : index
    %53 = vector.load %arg14[%c47, %c0_36] : memref<608x128xbf16, #tpu.memory_space<vmem>>, vector<128x128xbf16>
    %c6 = arith.constant 6 : index
    %c0_37 = arith.constant 0 : index
    %c0_38 = arith.constant 0 : index
    %54 = vector.load %arg3[%c6, %c0_37, %c0_38] : memref<9x128x128xbf16, #tpu.memory_space<vmem>>, vector<1x128x128xbf16>
    %55 = vector.shape_cast %54 : vector<1x128x128xbf16> to vector<128x128xbf16>
    %cst_39 = arith.constant dense<0.000000e+00> : vector<128x128xf32>
    %56 = tpu.matmul %53, %55, %cst_39 {dimension_numbers = #tpu.dot_dimension_numbers<[1], [0], [0], [1], [0, 0, 1, 1], [], []>} : vector<128x128xbf16>, vector<128x128xbf16>, vector<128x128xf32> -> vector<128x128xf32>
    %57 = arith.addf %52, %56 : vector<128x128xf32>
    %58 = vector.broadcast %40 : vector<128x1xf32> to vector<128x128xf32>
    %59 = arith.mulf %57, %58 : vector<128x128xf32>
    %c17 = arith.constant 17 : index
    %c0_40 = arith.constant 0 : index
    %60 = vector.load %arg14[%c17, %c0_40] : memref<608x128xbf16, #tpu.memory_space<vmem>>, vector<128x128xbf16>
    %c2 = arith.constant 2 : index
    %c0_41 = arith.constant 0 : index
    %c0_42 = arith.constant 0 : index
    %61 = vector.load %arg3[%c2, %c0_41, %c0_42] : memref<9x128x128xbf16, #tpu.memory_space<vmem>>, vector<1x128x128xbf16>
    %62 = vector.shape_cast %61 : vector<1x128x128xbf16> to vector<128x128xbf16>
    %cst_43 = arith.constant dense<0.000000e+00> : vector<128x128xf32>
    %63 = tpu.matmul %60, %62, %cst_43 {dimension_numbers = #tpu.dot_dimension_numbers<[1], [0], [0], [1], [0, 0, 1, 1], [], []>} : vector<128x128xbf16>, vector<128x128xbf16>, vector<128x128xf32> -> vector<128x128xf32>
    %c33 = arith.constant 33 : index
    %c0_44 = arith.constant 0 : index
    %64 = vector.load %arg14[%c33, %c0_44] : memref<608x128xbf16, #tpu.memory_space<vmem>>, vector<128x128xbf16>
    %c5 = arith.constant 5 : index
    %c0_45 = arith.constant 0 : index
    %c0_46 = arith.constant 0 : index
    %65 = vector.load %arg3[%c5, %c0_45, %c0_46] : memref<9x128x128xbf16, #tpu.memory_space<vmem>>, vector<1x128x128xbf16>
    %66 = vector.shape_cast %65 : vector<1x128x128xbf16> to vector<128x128xbf16>
    %cst_47 = arith.constant dense<0.000000e+00> : vector<128x128xf32>
    %67 = tpu.matmul %64, %66, %cst_47 {dimension_numbers = #tpu.dot_dimension_numbers<[1], [0], [0], [1], [0, 0, 1, 1], [], []>} : vector<128x128xbf16>, vector<128x128xbf16>, vector<128x128xf32> -> vector<128x128xf32>
    %68 = arith.addf %63, %67 : vector<128x128xf32>
    %c49 = arith.constant 49 : index
    %c0_48 = arith.constant 0 : index
    %69 = vector.load %arg14[%c49, %c0_48] : memref<608x128xbf16, #tpu.memory_space<vmem>>, vector<128x128xbf16>
    %c8 = arith.constant 8 : index
    %c0_49 = arith.constant 0 : index
    %c0_50 = arith.constant 0 : index
    %70 = vector.load %arg3[%c8, %c0_49, %c0_50] : memref<9x128x128xbf16, #tpu.memory_space<vmem>>, vector<1x128x128xbf16>
    %71 = vector.shape_cast %70 : vector<1x128x128xbf16> to vector<128x128xbf16>
    %cst_51 = arith.constant dense<0.000000e+00> : vector<128x128xf32>
    %72 = tpu.matmul %69, %71, %cst_51 {dimension_numbers = #tpu.dot_dimension_numbers<[1], [0], [0], [1], [0, 0, 1, 1], [], []>} : vector<128x128xbf16>, vector<128x128xbf16>, vector<128x128xf32> -> vector<128x128xf32>
    %73 = arith.addf %68, %72 : vector<128x128xf32>
    %74 = vector.broadcast %41 : vector<128x1xf32> to vector<128x128xf32>
    %75 = arith.mulf %73, %74 : vector<128x128xf32>
    %76 = arith.addf %59, %75 : vector<128x128xf32>
    %c16 = arith.constant 16 : index
    %c0_52 = arith.constant 0 : index
    %77 = vector.load %arg14[%c16, %c0_52] : memref<608x128xbf16, #tpu.memory_space<vmem>>, vector<128x128xbf16>
    %c1 = arith.constant 1 : index
    %c0_53 = arith.constant 0 : index
    %c0_54 = arith.constant 0 : index
    %78 = vector.load %arg3[%c1, %c0_53, %c0_54] : memref<9x128x128xbf16, #tpu.memory_space<vmem>>, vector<1x128x128xbf16>
    %79 = vector.shape_cast %78 : vector<1x128x128xbf16> to vector<128x128xbf16>
    %cst_55 = arith.constant dense<0.000000e+00> : vector<128x128xf32>
    %80 = tpu.matmul %77, %79, %cst_55 {dimension_numbers = #tpu.dot_dimension_numbers<[1], [0], [0], [1], [0, 0, 1, 1], [], []>} : vector<128x128xbf16>, vector<128x128xbf16>, vector<128x128xf32> -> vector<128x128xf32>
    %81 = arith.addf %76, %80 : vector<128x128xf32>
    %c32_56 = arith.constant 32 : index
    %c0_57 = arith.constant 0 : index
    %82 = vector.load %arg14[%c32_56, %c0_57] : memref<608x128xbf16, #tpu.memory_space<vmem>>, vector<128x128xbf16>
    %c4 = arith.constant 4 : index
    %c0_58 = arith.constant 0 : index
    %c0_59 = arith.constant 0 : index
    %83 = vector.load %arg3[%c4, %c0_58, %c0_59] : memref<9x128x128xbf16, #tpu.memory_space<vmem>>, vector<1x128x128xbf16>
    %84 = vector.shape_cast %83 : vector<1x128x128xbf16> to vector<128x128xbf16>
    %cst_60 = arith.constant dense<0.000000e+00> : vector<128x128xf32>
    %85 = tpu.matmul %82, %84, %cst_60 {dimension_numbers = #tpu.dot_dimension_numbers<[1], [0], [0], [1], [0, 0, 1, 1], [], []>} : vector<128x128xbf16>, vector<128x128xbf16>, vector<128x128xf32> -> vector<128x128xf32>
    %86 = arith.addf %81, %85 : vector<128x128xf32>
    %c48 = arith.constant 48 : index
    %c0_61 = arith.constant 0 : index
    %87 = vector.load %arg14[%c48, %c0_61] : memref<608x128xbf16, #tpu.memory_space<vmem>>, vector<128x128xbf16>
    %c7 = arith.constant 7 : index
    %c0_62 = arith.constant 0 : index
    %c0_63 = arith.constant 0 : index
    %88 = vector.load %arg3[%c7, %c0_62, %c0_63] : memref<9x128x128xbf16, #tpu.memory_space<vmem>>, vector<1x128x128xbf16>
    %89 = vector.shape_cast %88 : vector<1x128x128xbf16> to vector<128x128xbf16>
    %cst_64 = arith.constant dense<0.000000e+00> : vector<128x128xf32>
    %90 = tpu.matmul %87, %89, %cst_64 {dimension_numbers = #tpu.dot_dimension_numbers<[1], [0], [0], [1], [0, 0, 1, 1], [], []>} : vector<128x128xbf16>, vector<128x128xbf16>, vector<128x128xf32> -> vector<128x128xf32>
    %91 = arith.addf %86, %90 : vector<128x128xf32>
    %cst_65 = arith.constant dense<0.000000e+00> : vector<128xf32>
    %92 = vector.multi_reduction <add>, %91, %cst_65 [0] : vector<128x128xf32> to vector<128xf32>
    %93 = vector.shape_cast %92 : vector<128xf32> to vector<1x128xf32>
    %94 = arith.addf %42, %93 : vector<1x128xf32>
    %95 = arith.mulf %91, %91 : vector<128x128xf32>
    %cst_66 = arith.constant dense<0.000000e+00> : vector<128xf32>
    %96 = vector.multi_reduction <add>, %95, %cst_66 [0] : vector<128x128xf32> to vector<128xf32>
    %97 = vector.shape_cast %96 : vector<128xf32> to vector<1x128xf32>
    %98 = arith.addf %43, %97 : vector<1x128xf32>
    %c0_67 = arith.constant 0 : index
    %c0_68 = arith.constant 0 : index
    %99 = vector.load %arg15[%c0_67, %c0_68] : memref<512x128xf32, #tpu.memory_space<vmem>>, vector<128x128xf32>
    tpu.vector_store %arg15[%c0_67, %c0_68], %91 {strides = array<i32>} : memref<512x128xf32, #tpu.memory_space<vmem>>, vector<128x128xf32>,
    %c143 = arith.constant 143 : index
    %c0_69 = arith.constant 0 : index
    %100 = vector.load %arg14[%c143, %c0_69] : memref<608x128xbf16, #tpu.memory_space<vmem>>, vector<128x128xbf16>
    %c0_70 = arith.constant 0 : index
    %c0_71 = arith.constant 0 : index
    %c0_72 = arith.constant 0 : index
    %101 = vector.load %arg3[%c0_70, %c0_71, %c0_72] : memref<9x128x128xbf16, #tpu.memory_space<vmem>>, vector<1x128x128xbf16>
    %102 = vector.shape_cast %101 : vector<1x128x128xbf16> to vector<128x128xbf16>
    %cst_73 = arith.constant dense<0.000000e+00> : vector<128x128xf32>
    %103 = tpu.matmul %100, %102, %cst_73 {dimension_numbers = #tpu.dot_dimension_numbers<[1], [0], [0], [1], [0, 0, 1, 1], [], []>} : vector<128x128xbf16>, vector<128x128xbf16>, vector<128x128xf32> -> vector<128x128xf32>
    %c159 = arith.constant 159 : index
    %c0_74 = arith.constant 0 : index
    %104 = vector.load %arg14[%c159, %c0_74] : memref<608x128xbf16, #tpu.memory_space<vmem>>, vector<128x128xbf16>
    %c3_75 = arith.constant 3 : index
    %c0_76 = arith.constant 0 : index
    %c0_77 = arith.constant 0 : index
    %105 = vector.load %arg3[%c3_75, %c0_76, %c0_77] : memref<9x128x128xbf16, #tpu.memory_space<vmem>>, vector<1x128x128xbf16>
    %106 = vector.shape_cast %105 : vector<1x128x128xbf16> to vector<128x128xbf16>
    %cst_78 = arith.constant dense<0.000000e+00> : vector<128x128xf32>
    %107 = tpu.matmul %104, %106, %cst_78 {dimension_numbers = #tpu.dot_dimension_numbers<[1], [0], [0], [1], [0, 0, 1, 1], [], []>} : vector<128x128xbf16>, vector<128x128xbf16>, vector<128x128xf32> -> vector<128x128xf32>
    %108 = arith.addf %103, %107 : vector<128x128xf32>
    %c175 = arith.constant 175 : index
    %c0_79 = arith.constant 0 : index
    %109 = vector.load %arg14[%c175, %c0_79] : memref<608x128xbf16, #tpu.memory_space<vmem>>, vector<128x128xbf16>
    %c6_80 = arith.constant 6 : index
    %c0_81 = arith.constant 0 : index
    %c0_82 = arith.constant 0 : index
    %110 = vector.load %arg3[%c6_80, %c0_81, %c0_82] : memref<9x128x128xbf16, #tpu.memory_space<vmem>>, vector<1x128x128xbf16>
    %111 = vector.shape_cast %110 : vector<1x128x128xbf16> to vector<128x128xbf16>
    %cst_83 = arith.constant dense<0.000000e+00> : vector<128x128xf32>
    %112 = tpu.matmul %109, %111, %cst_83 {dimension_numbers = #tpu.dot_dimension_numbers<[1], [0], [0], [1], [0, 0, 1, 1], [], []>} : vector<128x128xbf16>, vector<128x128xbf16>, vector<128x128xf32> -> vector<128x128xf32>
    %113 = arith.addf %108, %112 : vector<128x128xf32>
    %114 = vector.broadcast %40 : vector<128x1xf32> to vector<128x128xf32>
    %115 = arith.mulf %113, %114 : vector<128x128xf32>
    %c145 = arith.constant 145 : index
    %c0_84 = arith.constant 0 : index
    %116 = vector.load %arg14[%c145, %c0_84] : memref<608x128xbf16, #tpu.memory_space<vmem>>, vector<128x128xbf16>
    %c2_85 = arith.constant 2 : index
    %c0_86 = arith.constant 0 : index
    %c0_87 = arith.constant 0 : index
    %117 = vector.load %arg3[%c2_85, %c0_86, %c0_87] : memref<9x128x128xbf16, #tpu.memory_space<vmem>>, vector<1x128x128xbf16>
    %118 = vector.shape_cast %117 : vector<1x128x128xbf16> to vector<128x128xbf16>
    %cst_88 = arith.constant dense<0.000000e+00> : vector<128x128xf32>
    %119 = tpu.matmul %116, %118, %cst_88 {dimension_numbers = #tpu.dot_dimension_numbers<[1], [0], [0], [1], [0, 0, 1, 1], [], []>} : vector<128x128xbf16>, vector<128x128xbf16>, vector<128x128xf32> -> vector<128x128xf32>
    %c161 = arith.constant 161 : index
    %c0_89 = arith.constant 0 : index
    %120 = vector.load %arg14[%c161, %c0_89] : memref<608x128xbf16, #tpu.memory_space<vmem>>, vector<128x128xbf16>
    %c5_90 = arith.constant 5 : index
    %c0_91 = arith.constant 0 : index
    %c0_92 = arith.constant 0 : index
    %121 = vector.load %arg3[%c5_90, %c0_91, %c0_92] : memref<9x128x128xbf16, #tpu.memory_space<vmem>>, vector<1x128x128xbf16>
    %122 = vector.shape_cast %121 : vector<1x128x128xbf16> to vector<128x128xbf16>
    %cst_93 = arith.constant dense<0.000000e+00> : vector<128x128xf32>
    %123 = tpu.matmul %120, %122, %cst_93 {dimension_numbers = #tpu.dot_dimension_numbers<[1], [0], [0], [1], [0, 0, 1, 1], [], []>} : vector<128x128xbf16>, vector<128x128xbf16>, vector<128x128xf32> -> vector<128x128xf32>
    %124 = arith.addf %119, %123 : vector<128x128xf32>
    %c177 = arith.constant 177 : index
    %c0_94 = arith.constant 0 : index
    %125 = vector.load %arg14[%c177, %c0_94] : memref<608x128xbf16, #tpu.memory_space<vmem>>, vector<128x128xbf16>
    %c8_95 = arith.constant 8 : index
    %c0_96 = arith.constant 0 : index
    %c0_97 = arith.constant 0 : index
    %126 = vector.load %arg3[%c8_95, %c0_96, %c0_97] : memref<9x128x128xbf16, #tpu.memory_space<vmem>>, vector<1x128x128xbf16>
    %127 = vector.shape_cast %126 : vector<1x128x128xbf16> to vector<128x128xbf16>
    %cst_98 = arith.constant dense<0.000000e+00> : vector<128x128xf32>
    %128 = tpu.matmul %125, %127, %cst_98 {dimension_numbers = #tpu.dot_dimension_numbers<[1], [0], [0], [1], [0, 0, 1, 1], [], []>} : vector<128x128xbf16>, vector<128x128xbf16>, vector<128x128xf32> -> vector<128x128xf32>
    %129 = arith.addf %124, %128 : vector<128x128xf32>
    %130 = vector.broadcast %41 : vector<128x1xf32> to vector<128x128xf32>
    %131 = arith.mulf %129, %130 : vector<128x128xf32>
    %132 = arith.addf %115, %131 : vector<128x128xf32>
    %c144 = arith.constant 144 : index
    %c0_99 = arith.constant 0 : index
    %133 = vector.load %arg14[%c144, %c0_99] : memref<608x128xbf16, #tpu.memory_space<vmem>>, vector<128x128xbf16>
    %c1_100 = arith.constant 1 : index
    %c0_101 = arith.constant 0 : index
    %c0_102 = arith.constant 0 : index
    %134 = vector.load %arg3[%c1_100, %c0_101, %c0_102] : memref<9x128x128xbf16, #tpu.memory_space<vmem>>, vector<1x128x128xbf16>
    %135 = vector.shape_cast %134 : vector<1x128x128xbf16> to vector<128x128xbf16>
    %cst_103 = arith.constant dense<0.000000e+00> : vector<128x128xf32>
    %136 = tpu.matmul %133, %135, %cst_103 {dimension_numbers = #tpu.dot_dimension_numbers<[1], [0], [0], [1], [0, 0, 1, 1], [], []>} : vector<128x128xbf16>, vector<128x128xbf16>, vector<128x128xf32> -> vector<128x128xf32>
    %137 = arith.addf %132, %136 : vector<128x128xf32>
    %c160 = arith.constant 160 : index
    %c0_104 = arith.constant 0 : index
    %138 = vector.load %arg14[%c160, %c0_104] : memref<608x128xbf16, #tpu.memory_space<vmem>>, vector<128x128xbf16>
    %c4_105 = arith.constant 4 : index
    %c0_106 = arith.constant 0 : index
    %c0_107 = arith.constant 0 : index
    %139 = vector.load %arg3[%c4_105, %c0_106, %c0_107] : memref<9x128x128xbf16, #tpu.memory_space<vmem>>, vector<1x128x128xbf16>
    %140 = vector.shape_cast %139 : vector<1x128x128xbf16> to vector<128x128xbf16>
    %cst_108 = arith.constant dense<0.000000e+00> : vector<128x128xf32>
    %141 = tpu.matmul %138, %140, %cst_108 {dimension_numbers = #tpu.dot_dimension_numbers<[1], [0], [0], [1], [0, 0, 1, 1], [], []>} : vector<128x128xbf16>, vector<128x128xbf16>, vector<128x128xf32> -> vector<128x128xf32>
    %142 = arith.addf %137, %141 : vector<128x128xf32>
    %c176 = arith.constant 176 : index
    %c0_109 = arith.constant 0 : index
    %143 = vector.load %arg14[%c176, %c0_109] : memref<608x128xbf16, #tpu.memory_space<vmem>>, vector<128x128xbf16>
    %c7_110 = arith.constant 7 : index
    %c0_111 = arith.constant 0 : index
    %c0_112 = arith.constant 0 : index
    %144 = vector.load %arg3[%c7_110, %c0_111, %c0_112] : memref<9x128x128xbf16, #tpu.memory_space<vmem>>, vector<1x128x128xbf16>
    %145 = vector.shape_cast %144 : vector<1x128x128xbf16> to vector<128x128xbf16>
    %cst_113 = arith.constant dense<0.000000e+00> : vector<128x128xf32>
    %146 = tpu.matmul %143, %145, %cst_113 {dimension_numbers = #tpu.dot_dimension_numbers<[1], [0], [0], [1], [0, 0, 1, 1], [], []>} : vector<128x128xbf16>, vector<128x128xbf16>, vector<128x128xf32> -> vector<128x128xf32>
    %147 = arith.addf %142, %146 : vector<128x128xf32>
    %cst_114 = arith.constant dense<0.000000e+00> : vector<128xf32>
    %148 = vector.multi_reduction <add>, %147, %cst_114 [0] : vector<128x128xf32> to vector<128xf32>
    %149 = vector.shape_cast %148 : vector<128xf32> to vector<1x128xf32>
    %150 = arith.addf %94, %149 : vector<1x128xf32>
    %151 = arith.mulf %147, %147 : vector<128x128xf32>
    %cst_115 = arith.constant dense<0.000000e+00> : vector<128xf32>
    %152 = vector.multi_reduction <add>, %151, %cst_115 [0] : vector<128x128xf32> to vector<128xf32>
    %153 = vector.shape_cast %152 : vector<128xf32> to vector<1x128xf32>
    %154 = arith.addf %98, %153 : vector<1x128xf32>
    %c128 = arith.constant 128 : index
    %c0_116 = arith.constant 0 : index
    %155 = vector.load %arg15[%c128, %c0_116] : memref<512x128xf32, #tpu.memory_space<vmem>>, vector<128x128xf32>
    tpu.vector_store %arg15[%c128, %c0_116], %147 {strides = array<i32>} : memref<512x128xf32, #tpu.memory_space<vmem>>, vector<128x128xf32>,
    %c303 = arith.constant 303 : index
    %c0_117 = arith.constant 0 : index
    %156 = vector.load %arg14[%c303, %c0_117] : memref<608x128xbf16, #tpu.memory_space<vmem>>, vector<128x128xbf16>
    %c0_118 = arith.constant 0 : index
    %c0_119 = arith.constant 0 : index
    %c0_120 = arith.constant 0 : index
    %157 = vector.load %arg3[%c0_118, %c0_119, %c0_120] : memref<9x128x128xbf16, #tpu.memory_space<vmem>>, vector<1x128x128xbf16>
    %158 = vector.shape_cast %157 : vector<1x128x128xbf16> to vector<128x128xbf16>
    %cst_121 = arith.constant dense<0.000000e+00> : vector<128x128xf32>
    %159 = tpu.matmul %156, %158, %cst_121 {dimension_numbers = #tpu.dot_dimension_numbers<[1], [0], [0], [1], [0, 0, 1, 1], [], []>} : vector<128x128xbf16>, vector<128x128xbf16>, vector<128x128xf32> -> vector<128x128xf32>
    %c319 = arith.constant 319 : index
    %c0_122 = arith.constant 0 : index
    %160 = vector.load %arg14[%c319, %c0_122] : memref<608x128xbf16, #tpu.memory_space<vmem>>, vector<128x128xbf16>
    %c3_123 = arith.constant 3 : index
    %c0_124 = arith.constant 0 : index
    %c0_125 = arith.constant 0 : index
    %161 = vector.load %arg3[%c3_123, %c0_124, %c0_125] : memref<9x128x128xbf16, #tpu.memory_space<vmem>>, vector<1x128x128xbf16>
    %162 = vector.shape_cast %161 : vector<1x128x128xbf16> to vector<128x128xbf16>
    %cst_126 = arith.constant dense<0.000000e+00> : vector<128x128xf32>
    %163 = tpu.matmul %160, %162, %cst_126 {dimension_numbers = #tpu.dot_dimension_numbers<[1], [0], [0], [1], [0, 0, 1, 1], [], []>} : vector<128x128xbf16>, vector<128x128xbf16>, vector<128x128xf32> -> vector<128x128xf32>
    %164 = arith.addf %159, %163 : vector<128x128xf32>
    %c335 = arith.constant 335 : index
    %c0_127 = arith.constant 0 : index
    %165 = vector.load %arg14[%c335, %c0_127] : memref<608x128xbf16, #tpu.memory_space<vmem>>, vector<128x128xbf16>
    %c6_128 = arith.constant 6 : index
    %c0_129 = arith.constant 0 : index
    %c0_130 = arith.constant 0 : index
    %166 = vector.load %arg3[%c6_128, %c0_129, %c0_130] : memref<9x128x128xbf16, #tpu.memory_space<vmem>>, vector<1x128x128xbf16>
    %167 = vector.shape_cast %166 : vector<1x128x128xbf16> to vector<128x128xbf16>
    %cst_131 = arith.constant dense<0.000000e+00> : vector<128x128xf32>
    %168 = tpu.matmul %165, %167, %cst_131 {dimension_numbers = #tpu.dot_dimension_numbers<[1], [0], [0], [1], [0, 0, 1, 1], [], []>} : vector<128x128xbf16>, vector<128x128xbf16>, vector<128x128xf32> -> vector<128x128xf32>
    %169 = arith.addf %164, %168 : vector<128x128xf32>
    %170 = vector.broadcast %40 : vector<128x1xf32> to vector<128x128xf32>
    %171 = arith.mulf %169, %170 : vector<128x128xf32>
    %c305 = arith.constant 305 : index
    %c0_132 = arith.constant 0 : index
    %172 = vector.load %arg14[%c305, %c0_132] : memref<608x128xbf16, #tpu.memory_space<vmem>>, vector<128x128xbf16>
    %c2_133 = arith.constant 2 : index
    %c0_134 = arith.constant 0 : index
    %c0_135 = arith.constant 0 : index
    %173 = vector.load %arg3[%c2_133, %c0_134, %c0_135] : memref<9x128x128xbf16, #tpu.memory_space<vmem>>, vector<1x128x128xbf16>
    %174 = vector.shape_cast %173 : vector<1x128x128xbf16> to vector<128x128xbf16>
    %cst_136 = arith.constant dense<0.000000e+00> : vector<128x128xf32>
    %175 = tpu.matmul %172, %174, %cst_136 {dimension_numbers = #tpu.dot_dimension_numbers<[1], [0], [0], [1], [0, 0, 1, 1], [], []>} : vector<128x128xbf16>, vector<128x128xbf16>, vector<128x128xf32> -> vector<128x128xf32>
    %c321 = arith.constant 321 : index
    %c0_137 = arith.constant 0 : index
    %176 = vector.load %arg14[%c321, %c0_137] : memref<608x128xbf16, #tpu.memory_space<vmem>>, vector<128x128xbf16>
    %c5_138 = arith.constant 5 : index
    %c0_139 = arith.constant 0 : index
    %c0_140 = arith.constant 0 : index
    %177 = vector.load %arg3[%c5_138, %c0_139, %c0_140] : memref<9x128x128xbf16, #tpu.memory_space<vmem>>, vector<1x128x128xbf16>
    %178 = vector.shape_cast %177 : vector<1x128x128xbf16> to vector<128x128xbf16>
    %cst_141 = arith.constant dense<0.000000e+00> : vector<128x128xf32>
    %179 = tpu.matmul %176, %178, %cst_141 {dimension_numbers = #tpu.dot_dimension_numbers<[1], [0], [0], [1], [0, 0, 1, 1], [], []>} : vector<128x128xbf16>, vector<128x128xbf16>, vector<128x128xf32> -> vector<128x128xf32>
    %180 = arith.addf %175, %179 : vector<128x128xf32>
    %c337 = arith.constant 337 : index
    %c0_142 = arith.constant 0 : index
    %181 = vector.load %arg14[%c337, %c0_142] : memref<608x128xbf16, #tpu.memory_space<vmem>>, vector<128x128xbf16>
    %c8_143 = arith.constant 8 : index
    %c0_144 = arith.constant 0 : index
    %c0_145 = arith.constant 0 : index
    %182 = vector.load %arg3[%c8_143, %c0_144, %c0_145] : memref<9x128x128xbf16, #tpu.memory_space<vmem>>, vector<1x128x128xbf16>
    %183 = vector.shape_cast %182 : vector<1x128x128xbf16> to vector<128x128xbf16>
    %cst_146 = arith.constant dense<0.000000e+00> : vector<128x128xf32>
    %184 = tpu.matmul %181, %183, %cst_146 {dimension_numbers = #tpu.dot_dimension_numbers<[1], [0], [0], [1], [0, 0, 1, 1], [], []>} : vector<128x128xbf16>, vector<128x128xbf16>, vector<128x128xf32> -> vector<128x128xf32>
    %185 = arith.addf %180, %184 : vector<128x128xf32>
    %186 = vector.broadcast %41 : vector<128x1xf32> to vector<128x128xf32>
    %187 = arith.mulf %185, %186 : vector<128x128xf32>
    %188 = arith.addf %171, %187 : vector<128x128xf32>
    %c304 = arith.constant 304 : index
    %c0_147 = arith.constant 0 : index
    %189 = vector.load %arg14[%c304, %c0_147] : memref<608x128xbf16, #tpu.memory_space<vmem>>, vector<128x128xbf16>
    %c1_148 = arith.constant 1 : index
    %c0_149 = arith.constant 0 : index
    %c0_150 = arith.constant 0 : index
    %190 = vector.load %arg3[%c1_148, %c0_149, %c0_150] : memref<9x128x128xbf16, #tpu.memory_space<vmem>>, vector<1x128x128xbf16>
    %191 = vector.shape_cast %190 : vector<1x128x128xbf16> to vector<128x128xbf16>
    %cst_151 = arith.constant dense<0.000000e+00> : vector<128x128xf32>
    %192 = tpu.matmul %189, %191, %cst_151 {dimension_numbers = #tpu.dot_dimension_numbers<[1], [0], [0], [1], [0, 0, 1, 1], [], []>} : vector<128x128xbf16>, vector<128x128xbf16>, vector<128x128xf32> -> vector<128x128xf32>
    %193 = arith.addf %188, %192 : vector<128x128xf32>
    %c320_152 = arith.constant 320 : index
    %c0_153 = arith.constant 0 : index
    %194 = vector.load %arg14[%c320_152, %c0_153] : memref<608x128xbf16, #tpu.memory_space<vmem>>, vector<128x128xbf16>
    %c4_154 = arith.constant 4 : index
    %c0_155 = arith.constant 0 : index
    %c0_156 = arith.constant 0 : index
    %195 = vector.load %arg3[%c4_154, %c0_155, %c0_156] : memref<9x128x128xbf16, #tpu.memory_space<vmem>>, vector<1x128x128xbf16>
    %196 = vector.shape_cast %195 : vector<1x128x128xbf16> to vector<128x128xbf16>
    %cst_157 = arith.constant dense<0.000000e+00> : vector<128x128xf32>
    %197 = tpu.matmul %194, %196, %cst_157 {dimension_numbers = #tpu.dot_dimension_numbers<[1], [0], [0], [1], [0, 0, 1, 1], [], []>} : vector<128x128xbf16>, vector<128x128xbf16>, vector<128x128xf32> -> vector<128x128xf32>
    %198 = arith.addf %193, %197 : vector<128x128xf32>
    %c336 = arith.constant 336 : index
    %c0_158 = arith.constant 0 : index
    %199 = vector.load %arg14[%c336, %c0_158] : memref<608x128xbf16, #tpu.memory_space<vmem>>, vector<128x128xbf16>
    %c7_159 = arith.constant 7 : index
    %c0_160 = arith.constant 0 : index
    %c0_161 = arith.constant 0 : index
    %200 = vector.load %arg3[%c7_159, %c0_160, %c0_161] : memref<9x128x128xbf16, #tpu.memory_space<vmem>>, vector<1x128x128xbf16>
    %201 = vector.shape_cast %200 : vector<1x128x128xbf16> to vector<128x128xbf16>
    %cst_162 = arith.constant dense<0.000000e+00> : vector<128x128xf32>
    %202 = tpu.matmul %199, %201, %cst_162 {dimension_numbers = #tpu.dot_dimension_numbers<[1], [0], [0], [1], [0, 0, 1, 1], [], []>} : vector<128x128xbf16>, vector<128x128xbf16>, vector<128x128xf32> -> vector<128x128xf32>
    %203 = arith.addf %198, %202 : vector<128x128xf32>
    %cst_163 = arith.constant dense<0.000000e+00> : vector<128xf32>
    %204 = vector.multi_reduction <add>, %203, %cst_163 [0] : vector<128x128xf32> to vector<128xf32>
    %205 = vector.shape_cast %204 : vector<128xf32> to vector<1x128xf32>
    %206 = arith.addf %150, %205 : vector<1x128xf32>
    %207 = arith.mulf %203, %203 : vector<128x128xf32>
    %cst_164 = arith.constant dense<0.000000e+00> : vector<128xf32>
    %208 = vector.multi_reduction <add>, %207, %cst_164 [0] : vector<128x128xf32> to vector<128xf32>
    %209 = vector.shape_cast %208 : vector<128xf32> to vector<1x128xf32>
    %210 = arith.addf %154, %209 : vector<1x128xf32>
    %c256 = arith.constant 256 : index
    %c0_165 = arith.constant 0 : index
    %211 = vector.load %arg15[%c256, %c0_165] : memref<512x128xf32, #tpu.memory_space<vmem>>, vector<128x128xf32>
    tpu.vector_store %arg15[%c256, %c0_165], %203 {strides = array<i32>} : memref<512x128xf32, #tpu.memory_space<vmem>>, vector<128x128xf32>,
    %c431 = arith.constant 431 : index
    %c0_166 = arith.constant 0 : index
    %212 = vector.load %arg14[%c431, %c0_166] : memref<608x128xbf16, #tpu.memory_space<vmem>>, vector<128x128xbf16>
    %c0_167 = arith.constant 0 : index
    %c0_168 = arith.constant 0 : index
    %c0_169 = arith.constant 0 : index
    %213 = vector.load %arg3[%c0_167, %c0_168, %c0_169] : memref<9x128x128xbf16, #tpu.memory_space<vmem>>, vector<1x128x128xbf16>
    %214 = vector.shape_cast %213 : vector<1x128x128xbf16> to vector<128x128xbf16>
    %cst_170 = arith.constant dense<0.000000e+00> : vector<128x128xf32>
    %215 = tpu.matmul %212, %214, %cst_170 {dimension_numbers = #tpu.dot_dimension_numbers<[1], [0], [0], [1], [0, 0, 1, 1], [], []>} : vector<128x128xbf16>, vector<128x128xbf16>, vector<128x128xf32> -> vector<128x128xf32>
    %c447 = arith.constant 447 : index
    %c0_171 = arith.constant 0 : index
    %216 = vector.load %arg14[%c447, %c0_171] : memref<608x128xbf16, #tpu.memory_space<vmem>>, vector<128x128xbf16>
    %c3_172 = arith.constant 3 : index
    %c0_173 = arith.constant 0 : index
    %c0_174 = arith.constant 0 : index
    %217 = vector.load %arg3[%c3_172, %c0_173, %c0_174] : memref<9x128x128xbf16, #tpu.memory_space<vmem>>, vector<1x128x128xbf16>
    %218 = vector.shape_cast %217 : vector<1x128x128xbf16> to vector<128x128xbf16>
    %cst_175 = arith.constant dense<0.000000e+00> : vector<128x128xf32>
    %219 = tpu.matmul %216, %218, %cst_175 {dimension_numbers = #tpu.dot_dimension_numbers<[1], [0], [0], [1], [0, 0, 1, 1], [], []>} : vector<128x128xbf16>, vector<128x128xbf16>, vector<128x128xf32> -> vector<128x128xf32>
    %220 = arith.addf %215, %219 : vector<128x128xf32>
    %c463 = arith.constant 463 : index
    %c0_176 = arith.constant 0 : index
    %221 = vector.load %arg14[%c463, %c0_176] : memref<608x128xbf16, #tpu.memory_space<vmem>>, vector<128x128xbf16>
    %c6_177 = arith.constant 6 : index
    %c0_178 = arith.constant 0 : index
    %c0_179 = arith.constant 0 : index
    %222 = vector.load %arg3[%c6_177, %c0_178, %c0_179] : memref<9x128x128xbf16, #tpu.memory_space<vmem>>, vector<1x128x128xbf16>
    %223 = vector.shape_cast %222 : vector<1x128x128xbf16> to vector<128x128xbf16>
    %cst_180 = arith.constant dense<0.000000e+00> : vector<128x128xf32>
    %224 = tpu.matmul %221, %223, %cst_180 {dimension_numbers = #tpu.dot_dimension_numbers<[1], [0], [0], [1], [0, 0, 1, 1], [], []>} : vector<128x128xbf16>, vector<128x128xbf16>, vector<128x128xf32> -> vector<128x128xf32>
    %225 = arith.addf %220, %224 : vector<128x128xf32>
    %226 = vector.broadcast %40 : vector<128x1xf32> to vector<128x128xf32>
    %227 = arith.mulf %225, %226 : vector<128x128xf32>
    %c433 = arith.constant 433 : index
    %c0_181 = arith.constant 0 : index
    %228 = vector.load %arg14[%c433, %c0_181] : memref<608x128xbf16, #tpu.memory_space<vmem>>, vector<128x128xbf16>
    %c2_182 = arith.constant 2 : index
    %c0_183 = arith.constant 0 : index
    %c0_184 = arith.constant 0 : index
    %229 = vector.load %arg3[%c2_182, %c0_183, %c0_184] : memref<9x128x128xbf16, #tpu.memory_space<vmem>>, vector<1x128x128xbf16>
    %230 = vector.shape_cast %229 : vector<1x128x128xbf16> to vector<128x128xbf16>
    %cst_185 = arith.constant dense<0.000000e+00> : vector<128x128xf32>
    %231 = tpu.matmul %228, %230, %cst_185 {dimension_numbers = #tpu.dot_dimension_numbers<[1], [0], [0], [1], [0, 0, 1, 1], [], []>} : vector<128x128xbf16>, vector<128x128xbf16>, vector<128x128xf32> -> vector<128x128xf32>
    %c449 = arith.constant 449 : index
    %c0_186 = arith.constant 0 : index
    %232 = vector.load %arg14[%c449, %c0_186] : memref<608x128xbf16, #tpu.memory_space<vmem>>, vector<128x128xbf16>
    %c5_187 = arith.constant 5 : index
    %c0_188 = arith.constant 0 : index
    %c0_189 = arith.constant 0 : index
    %233 = vector.load %arg3[%c5_187, %c0_188, %c0_189] : memref<9x128x128xbf16, #tpu.memory_space<vmem>>, vector<1x128x128xbf16>
    %234 = vector.shape_cast %233 : vector<1x128x128xbf16> to vector<128x128xbf16>
    %cst_190 = arith.constant dense<0.000000e+00> : vector<128x128xf32>
    %235 = tpu.matmul %232, %234, %cst_190 {dimension_numbers = #tpu.dot_dimension_numbers<[1], [0], [0], [1], [0, 0, 1, 1], [], []>} : vector<128x128xbf16>, vector<128x128xbf16>, vector<128x128xf32> -> vector<128x128xf32>
    %236 = arith.addf %231, %235 : vector<128x128xf32>
    %c465 = arith.constant 465 : index
    %c0_191 = arith.constant 0 : index
    %237 = vector.load %arg14[%c465, %c0_191] : memref<608x128xbf16, #tpu.memory_space<vmem>>, vector<128x128xbf16>
    %c8_192 = arith.constant 8 : index
    %c0_193 = arith.constant 0 : index
    %c0_194 = arith.constant 0 : index
    %238 = vector.load %arg3[%c8_192, %c0_193, %c0_194] : memref<9x128x128xbf16, #tpu.memory_space<vmem>>, vector<1x128x128xbf16>
    %239 = vector.shape_cast %238 : vector<1x128x128xbf16> to vector<128x128xbf16>
    %cst_195 = arith.constant dense<0.000000e+00> : vector<128x128xf32>
    %240 = tpu.matmul %237, %239, %cst_195 {dimension_numbers = #tpu.dot_dimension_numbers<[1], [0], [0], [1], [0, 0, 1, 1], [], []>} : vector<128x128xbf16>, vector<128x128xbf16>, vector<128x128xf32> -> vector<128x128xf32>
    %241 = arith.addf %236, %240 : vector<128x128xf32>
    %242 = vector.broadcast %41 : vector<128x1xf32> to vector<128x128xf32>
    %243 = arith.mulf %241, %242 : vector<128x128xf32>
    %244 = arith.addf %227, %243 : vector<128x128xf32>
    %c432 = arith.constant 432 : index
    %c0_196 = arith.constant 0 : index
    %245 = vector.load %arg14[%c432, %c0_196] : memref<608x128xbf16, #tpu.memory_space<vmem>>, vector<128x128xbf16>
    %c1_197 = arith.constant 1 : index
    %c0_198 = arith.constant 0 : index
    %c0_199 = arith.constant 0 : index
    %246 = vector.load %arg3[%c1_197, %c0_198, %c0_199] : memref<9x128x128xbf16, #tpu.memory_space<vmem>>, vector<1x128x128xbf16>
    %247 = vector.shape_cast %246 : vector<1x128x128xbf16> to vector<128x128xbf16>
    %cst_200 = arith.constant dense<0.000000e+00> : vector<128x128xf32>
    %248 = tpu.matmul %245, %247, %cst_200 {dimension_numbers = #tpu.dot_dimension_numbers<[1], [0], [0], [1], [0, 0, 1, 1], [], []>} : vector<128x128xbf16>, vector<128x128xbf16>, vector<128x128xf32> -> vector<128x128xf32>
    %249 = arith.addf %244, %248 : vector<128x128xf32>
    %c448 = arith.constant 448 : index
    %c0_201 = arith.constant 0 : index
    %250 = vector.load %arg14[%c448, %c0_201] : memref<608x128xbf16, #tpu.memory_space<vmem>>, vector<128x128xbf16>
    %c4_202 = arith.constant 4 : index
    %c0_203 = arith.constant 0 : index
    %c0_204 = arith.constant 0 : index
    %251 = vector.load %arg3[%c4_202, %c0_203, %c0_204] : memref<9x128x128xbf16, #tpu.memory_space<vmem>>, vector<1x128x128xbf16>
    %252 = vector.shape_cast %251 : vector<1x128x128xbf16> to vector<128x128xbf16>
    %cst_205 = arith.constant dense<0.000000e+00> : vector<128x128xf32>
    %253 = tpu.matmul %250, %252, %cst_205 {dimension_numbers = #tpu.dot_dimension_numbers<[1], [0], [0], [1], [0, 0, 1, 1], [], []>} : vector<128x128xbf16>, vector<128x128xbf16>, vector<128x128xf32> -> vector<128x128xf32>
    %254 = arith.addf %249, %253 : vector<128x128xf32>
    %c464 = arith.constant 464 : index
    %c0_206 = arith.constant 0 : index
    %255 = vector.load %arg14[%c464, %c0_206] : memref<608x128xbf16, #tpu.memory_space<vmem>>, vector<128x128xbf16>
    %c7_207 = arith.constant 7 : index
    %c0_208 = arith.constant 0 : index
    %c0_209 = arith.constant 0 : index
    %256 = vector.load %arg3[%c7_207, %c0_208, %c0_209] : memref<9x128x128xbf16, #tpu.memory_space<vmem>>, vector<1x128x128xbf16>
    %257 = vector.shape_cast %256 : vector<1x128x128xbf16> to vector<128x128xbf16>
    %cst_210 = arith.constant dense<0.000000e+00> : vector<128x128xf32>
    %258 = tpu.matmul %255, %257, %cst_210 {dimension_numbers = #tpu.dot_dimension_numbers<[1], [0], [0], [1], [0, 0, 1, 1], [], []>} : vector<128x128xbf16>, vector<128x128xbf16>, vector<128x128xf32> -> vector<128x128xf32>
    %259 = arith.addf %254, %258 : vector<128x128xf32>
    %cst_211 = arith.constant dense<0.000000e+00> : vector<128xf32>
    %260 = vector.multi_reduction <add>, %259, %cst_211 [0] : vector<128x128xf32> to vector<128xf32>
    %261 = vector.shape_cast %260 : vector<128xf32> to vector<1x128xf32>
    %262 = arith.addf %206, %261 : vector<1x128xf32>
    %263 = arith.mulf %259, %259 : vector<128x128xf32>
    %cst_212 = arith.constant dense<0.000000e+00> : vector<128xf32>
    %264 = vector.multi_reduction <add>, %263, %cst_212 [0] : vector<128x128xf32> to vector<128xf32>
    %265 = vector.shape_cast %264 : vector<128xf32> to vector<1x128xf32>
    %266 = arith.addf %210, %265 : vector<1x128xf32>
    %c384 = arith.constant 384 : index
    %c0_213 = arith.constant 0 : index
    %267 = vector.load %arg15[%c384, %c0_213] : memref<512x128xf32, #tpu.memory_space<vmem>>, vector<128x128xf32>
    tpu.vector_store %arg15[%c384, %c0_213], %259 {strides = array<i32>} : memref<512x128xf32, #tpu.memory_space<vmem>>, vector<128x128xf32>,
    %cst_214 = arith.constant 0.001953125 : f32
    %268 = vector.broadcast %cst_214 : f32 to vector<1x128xf32>
    %269 = arith.mulf %262, %268 : vector<1x128xf32>
    %cst_215 = arith.constant 0.001953125 : f32
    %270 = vector.broadcast %cst_215 : f32 to vector<1x128xf32>
    %271 = arith.mulf %266, %270 : vector<1x128xf32>
    %272 = arith.mulf %269, %269 : vector<1x128xf32>
    %273 = arith.subf %271, %272 : vector<1x128xf32>
    %cst_216 = arith.constant 0.000000e+00 : f32
    %274 = vector.broadcast %cst_216 : f32 to vector<1x128xf32>
    %275 = arith.maximumf %273, %274 : vector<1x128xf32>
    %c0_217 = arith.constant 0 : index
    %c0_218 = arith.constant 0 : index
    %276 = vector.load %arg7[%c0_217, %c0_218] : memref<1x128xf32, #tpu.memory_space<vmem>>, vector<1x128xf32>
    %cst_219 = arith.constant 9.99999974E-6 : f32
    %277 = vector.broadcast %cst_219 : f32 to vector<1x128xf32>
    %278 = arith.addf %275, %277 : vector<1x128xf32>
    %279 = math.rsqrt %278 : vector<1x128xf32>
    %280 = arith.mulf %276, %279 : vector<1x128xf32>
    %c0_220 = arith.constant 0 : index
    %c0_221 = arith.constant 0 : index
    %281 = vector.load %arg8[%c0_220, %c0_221] : memref<1x128xf32, #tpu.memory_space<vmem>>, vector<1x128xf32>
    %282 = arith.mulf %269, %280 : vector<1x128xf32>
    %283 = arith.subf %281, %282 : vector<1x128xf32>
    %c0_222 = arith.constant 0 : index
    %c0_223 = arith.constant 0 : index
    %284 = vector.load %arg15[%c0_222, %c0_223] : memref<512x128xf32, #tpu.memory_space<vmem>>, vector<512x128xf32>
    %285 = vector.broadcast %280 : vector<1x128xf32> to vector<512x128xf32>
    %286 = arith.mulf %284, %285 : vector<512x128xf32>
    %287 = vector.broadcast %283 : vector<1x128xf32> to vector<512x128xf32>
    %288 = arith.addf %286, %287 : vector<512x128xf32>
    %cst_224 = arith.constant 0.000000e+00 : f32
    %289 = vector.broadcast %cst_224 : f32 to vector<512x128xf32>
    %290 = arith.maximumf %288, %289 : vector<512x128xf32>
    %291 = arith.truncf %290 : vector<512x128xf32> to vector<512x128xbf16>
    %c0_225 = arith.constant 0 : index
    %c0_226 = arith.constant 0 : index
    %292 = vector.load %arg4[%c0_225, %c0_226] : memref<128x128xbf16, #tpu.memory_space<vmem>>, vector<128x128xbf16>
    %cst_227 = arith.constant dense<0.000000e+00> : vector<512x128xf32>
    %293 = tpu.matmul %291, %292, %cst_227 {dimension_numbers = #tpu.dot_dimension_numbers<[1], [0], [0], [1], [0, 0, 1, 1], [], []>} : vector<512x128xbf16>, vector<128x128xbf16>, vector<512x128xf32> -> vector<512x128xf32>
    %cst_228 = arith.constant dense<0.000000e+00> : vector<128xf32>
    %294 = vector.multi_reduction <add>, %293, %cst_228 [0] : vector<512x128xf32> to vector<128xf32>
    %295 = vector.shape_cast %294 : vector<128xf32> to vector<1x128xf32>
    %296 = arith.mulf %293, %293 : vector<512x128xf32>
    %cst_229 = arith.constant dense<0.000000e+00> : vector<128xf32>
    %297 = vector.multi_reduction <add>, %296, %cst_229 [0] : vector<512x128xf32> to vector<128xf32>
    %298 = vector.shape_cast %297 : vector<128xf32> to vector<1x128xf32>
    %cst_230 = arith.constant 0.001953125 : f32
    %299 = vector.broadcast %cst_230 : f32 to vector<1x128xf32>
    %300 = arith.mulf %295, %299 : vector<1x128xf32>
    %cst_231 = arith.constant 0.001953125 : f32
    %301 = vector.broadcast %cst_231 : f32 to vector<1x128xf32>
    %302 = arith.mulf %298, %301 : vector<1x128xf32>
    %303 = arith.mulf %300, %300 : vector<1x128xf32>
    %304 = arith.subf %302, %303 : vector<1x128xf32>
    %cst_232 = arith.constant 0.000000e+00 : f32
    %305 = vector.broadcast %cst_232 : f32 to vector<1x128xf32>
    %306 = arith.maximumf %304, %305 : vector<1x128xf32>
    %c0_233 = arith.constant 0 : index
    %c0_234 = arith.constant 0 : index
    %307 = vector.load %arg9[%c0_233, %c0_234] : memref<1x128xf32, #tpu.memory_space<vmem>>, vector<1x128xf32>
    %cst_235 = arith.constant 9.99999974E-6 : f32
    %308 = vector.broadcast %cst_235 : f32 to vector<1x128xf32>
    %309 = arith.addf %306, %308 : vector<1x128xf32>
    %310 = math.rsqrt %309 : vector<1x128xf32>
    %311 = arith.mulf %307, %310 : vector<1x128xf32>
    %c0_236 = arith.constant 0 : index
    %c0_237 = arith.constant 0 : index
    %312 = vector.load %arg10[%c0_236, %c0_237] : memref<1x128xf32, #tpu.memory_space<vmem>>, vector<1x128xf32>
    %313 = arith.mulf %300, %311 : vector<1x128xf32>
    %314 = arith.subf %312, %313 : vector<1x128xf32>
    %315 = vector.broadcast %311 : vector<1x128xf32> to vector<512x128xf32>
    %316 = arith.mulf %293, %315 : vector<512x128xf32>
    %317 = vector.broadcast %314 : vector<1x128xf32> to vector<512x128xf32>
    %318 = arith.addf %316, %317 : vector<512x128xf32>
    %c0_238 = arith.constant 0 : index
    %c0_239 = arith.constant 0 : index
    %319 = vector.load %arg1[%c0_238, %c0_239] : memref<512x128xf32, #tpu.memory_space<vmem>>, vector<512x128xf32>
    %320 = arith.addf %318, %319 : vector<512x128xf32>
    %cst_240 = arith.constant 0.000000e+00 : f32
    %321 = vector.broadcast %cst_240 : f32 to vector<512x128xf32>
    %322 = arith.maximumf %320, %321 : vector<512x128xf32>
    %c0_241 = arith.constant 0 : index
    %c0_242 = arith.constant 0 : index
    %323 = vector.load %arg13[%c0_241, %c0_242] : memref<512x128xf32, #tpu.memory_space<vmem>>, vector<512x128xf32>
    tpu.vector_store %arg13[%c0_241, %c0_242], %322 {strides = array<i32>} : memref<512x128xf32, #tpu.memory_space<vmem>>, vector<512x128xf32>,
    return
  }
  func.func @transform_0(%arg0: i32) -> (i32, i32) {
    %c0_i32 = arith.constant 0 : i32
    %c0_i32_0 = arith.constant 0 : i32
    %c0_i32_1 = arith.constant 0 : i32
    return %c0_i32, %c0_i32_0 : i32, i32
  }
  func.func @transform_1(%arg0: i32) -> (i32, i32) {
    %c0_i32 = arith.constant 0 : i32
    %c0_i32_0 = arith.constant 0 : i32
    %c0_i32_1 = arith.constant 0 : i32
    return %c0_i32, %c0_i32_0 : i32, i32
  }
  func.func @transform_2(%arg0: i32) -> (i32, i32, i32) {
    %c0_i32 = arith.constant 0 : i32
    %c0_i32_0 = arith.constant 0 : i32
    %c0_i32_1 = arith.constant 0 : i32
    %c0_i32_2 = arith.constant 0 : i32
    return %c0_i32, %c0_i32_0, %c0_i32_1 : i32, i32, i32
  }
  func.func @transform_3(%arg0: i32) -> (i32, i32) {
    %c0_i32 = arith.constant 0 : i32
    %c0_i32_0 = arith.constant 0 : i32
    %c0_i32_1 = arith.constant 0 : i32
    return %c0_i32, %c0_i32_0 : i32, i32
  }
  func.func @transform_4(%arg0: i32) -> (i32, i32) {
    %c0_i32 = arith.constant 0 : i32
    %c0_i32_0 = arith.constant 0 : i32
    %c0_i32_1 = arith.constant 0 : i32
    return %c0_i32, %c0_i32_0 : i32, i32
  }
  func.func @transform_5(%arg0: i32) -> (i32, i32) {
    %c0_i32 = arith.constant 0 : i32
    %c0_i32_0 = arith.constant 0 : i32
    %c0_i32_1 = arith.constant 0 : i32
    return %c0_i32, %c0_i32_0 : i32, i32
  }
  func.func @transform_6(%arg0: i32) -> (i32, i32) {
    %c0_i32 = arith.constant 0 : i32
    %c0_i32_0 = arith.constant 0 : i32
    %c0_i32_1 = arith.constant 0 : i32
    return %c0_i32, %c0_i32_0 : i32, i32
  }
  func.func @transform_7(%arg0: i32) -> (i32, i32) {
    %c0_i32 = arith.constant 0 : i32
    %c0_i32_0 = arith.constant 0 : i32
    %c0_i32_1 = arith.constant 0 : i32
    return %c0_i32, %c0_i32_0 : i32, i32
  }
  func.func @transform_8(%arg0: i32) -> (i32, i32) {
    %c0_i32 = arith.constant 0 : i32
    %c0_i32_0 = arith.constant 0 : i32
    %c0_i32_1 = arith.constant 0 : i32
    return %c0_i32, %c0_i32_0 : i32, i32
  }
  func.func @transform_9(%arg0: i32) -> (i32, i32) {
    %c0_i32 = arith.constant 0 : i32
    %c0_i32_0 = arith.constant 0 : i32
    %c0_i32_1 = arith.constant 0 : i32
    return %c0_i32, %c0_i32_0 : i32, i32
  }
  func.func @transform_10(%arg0: i32) -> (i32, i32) {
    %c0_i32 = arith.constant 0 : i32
    %c0_i32_0 = arith.constant 0 : i32
    %c0_i32_1 = arith.constant 0 : i32
    return %c0_i32, %c0_i32_0 : i32, i32
  }
  func.func @transform_11(%arg0: i32) -> (i32, i32) {
    %c0_i32 = arith.constant 0 : i32
    %c0_i32_0 = arith.constant 0 : i32
    %c0_i32_1 = arith.constant 0 : i32
    return %c0_i32, %c0_i32_0 : i32, i32
  }
  func.func @transform_12(%arg0: i32) -> (i32, i32) {
    %c0_i32 = arith.constant 0 : i32
    %c0_i32_0 = arith.constant 0 : i32
    %c0_i32_1 = arith.constant 0 : i32
    return %c0_i32, %c0_i32_0 : i32, i32
  }
}

</mosaic_0001>

<llo_original>
// kernel: bottleneck_block_forward.1
$region0: #{bottleneck_block_forward.1}
  #allocation0 [shape = 'u32[]', space=smem, size = 0x4, offset = 0x4, fixed_abs, tag = 'smem constant byte address 0x4 - core index']
  #allocation1 [shape = 'u32[72,128]{1,0:T(1,128)}', space=vmem, size = 0x9000, scoped, tag = 'internal scratch']
  #allocation2 [shape = 'bf16[608,128]{1,0:T(8,128)(2,1)}', space=vmem, size = 0x26000, scoped, tag = 'scratch operand']
  #allocation3 [shape = 'f32[512,128]{1,0:T(8,128)}', space=vmem, size = 0x40000, scoped, tag = 'scratch operand']
  %s0 = inlined_call_operand.vmem [shape: f32[512,128], index: 0, kind: input, shape index: {}]
  %s1 = inlined_call_operand.vmem [shape: bf16[128,128], index: 1, kind: input, shape index: {}]
  %s2 = inlined_call_operand.vmem [shape: bf16[9,128,128], index: 2, kind: input, shape index: {}]
  %s3 = inlined_call_operand.vmem [shape: bf16[128,128], index: 3, kind: input, shape index: {}]
  %s4 = inlined_call_operand.vmem [shape: f32[1,128], index: 4, kind: input, shape index: {}]
  %s5 = inlined_call_operand.vmem [shape: f32[1,128], index: 5, kind: input, shape index: {}]
  %s6 = inlined_call_operand.vmem [shape: f32[1,128], index: 6, kind: input, shape index: {}]
  %s7 = inlined_call_operand.vmem [shape: f32[1,128], index: 7, kind: input, shape index: {}]
  %s8 = inlined_call_operand.vmem [shape: f32[1,128], index: 8, kind: input, shape index: {}]
  %s9 = inlined_call_operand.vmem [shape: f32[1,128], index: 9, kind: input, shape index: {}]
  %s10 = inlined_call_operand.vmem [shape: f32[128,1], index: 10, kind: input, shape index: {}]
  %s11 = inlined_call_operand.vmem [shape: f32[128,1], index: 11, kind: input, shape index: {}]
  %s12 = inlined_call_operand.vmem [shape: f32[512,128], index: 12, kind: output, shape index: {}]
  %s13 = sld [smem:[#allocation0]]
  $region58: #{bottleneck_block_forward.1} parent=0
    _
  %s15 = ssub.s32 1, %s13
  %s16 = scalar_select 0, %s15, %s13
  // Predicated region
  $region2: #{bottleneck_block_forward.1} parent=0 // pred_check
    _
  $region3: #{bottleneck_block_forward.1} parent=0 // pred_check_branch
    %18 = sbr.rel (0) target = $region5
  $region4: #{bottleneck_block_forward.1} parent=0 // pred_region
    _
  $region5: #{bottleneck_block_forward.1} parent=0 // pred_fallthru
    _
  // Predicated region
  $region6: #{bottleneck_block_forward.1} parent=0 // pred_check
    _
  $region7: #{bottleneck_block_forward.1} parent=0 // pred_check_branch
    %20 = sbr.rel (0) target = $region9
  $region8: #{bottleneck_block_forward.1} parent=0 // pred_region
    _
  $region9: #{bottleneck_block_forward.1} parent=0 // pred_fallthru
    _
  // Predicated region
  $region10: #{bottleneck_block_forward.1} parent=0 // pred_check
    _
  $region11: #{bottleneck_block_forward.1} parent=0 // pred_check_branch
    %22 = sbr.rel (0) target = $region13
  $region12: #{bottleneck_block_forward.1} parent=0 // pred_region
    _
  $region13: #{bottleneck_block_forward.1} parent=0 // pred_fallthru
    _
  // Predicated region
  $region14: #{bottleneck_block_forward.1} parent=0 // pred_check
    _
  $region15: #{bottleneck_block_forward.1} parent=0 // pred_check_branch
    %24 = sbr.rel (0) target = $region17
  $region16: #{bottleneck_block_forward.1} parent=0 // pred_region
    _
  $region17: #{bottleneck_block_forward.1} parent=0 // pred_fallthru
    _
  // Predicated region
  $region18: #{bottleneck_block_forward.1} parent=0 // pred_check
    _
  $region19: #{bottleneck_block_forward.1} parent=0 // pred_check_branch
    %26 = sbr.rel (0) target = $region21
  $region20: #{bottleneck_block_forward.1} parent=0 // pred_region
    _
  $region21: #{bottleneck_block_forward.1} parent=0 // pred_fallthru
    _
  // Predicated region
  $region22: #{bottleneck_block_forward.1} parent=0 // pred_check
    _
  $region23: #{bottleneck_block_forward.1} parent=0 // pred_check_branch
    %28 = sbr.rel (0) target = $region25
  $region24: #{bottleneck_block_forward.1} parent=0 // pred_region
    _
  $region25: #{bottleneck_block_forward.1} parent=0 // pred_fallthru
    _
  // Predicated region
  $region26: #{bottleneck_block_forward.1} parent=0 // pred_check
    _
  $region27: #{bottleneck_block_forward.1} parent=0 // pred_check_branch
    %30 = sbr.rel (0) target = $region29
  $region28: #{bottleneck_block_forward.1} parent=0 // pred_region
    _
  $region29: #{bottleneck_block_forward.1} parent=0 // pred_fallthru
    _
  // Predicated region
  $region30: #{bottleneck_block_forward.1} parent=0 // pred_check
    _
  $region31: #{bottleneck_block_forward.1} parent=0 // pred_check_branch
    %32 = sbr.rel (0) target = $region33
  $region32: #{bottleneck_block_forward.1} parent=0 // pred_region
    _
  $region33: #{bottleneck_block_forward.1} parent=0 // pred_fallthru
    _
  // Predicated region
  $region34: #{bottleneck_block_forward.1} parent=0 // pred_check
    _
  $region35: #{bottleneck_block_forward.1} parent=0 // pred_check_branch
    %34 = sbr.rel (0) target = $region37
  $region36: #{bottleneck_block_forward.1} parent=0 // pred_region
    _
  $region37: #{bottleneck_block_forward.1} parent=0 // pred_fallthru
    _
  // Predicated region
  $region38: #{bottleneck_block_forward.1} parent=0 // pred_check
    _
  $region39: #{bottleneck_block_forward.1} parent=0 // pred_check_branch
    %36 = sbr.rel (0) target = $region41
  $region40: #{bottleneck_block_forward.1} parent=0 // pred_region
    _
  $region41: #{bottleneck_block_forward.1} parent=0 // pred_fallthru
    _
  // Predicated region
  $region42: #{bottleneck_block_forward.1} parent=0 // pred_check
    _
  $region43: #{bottleneck_block_forward.1} parent=0 // pred_check_branch
    %38 = sbr.rel (0) target = $region45
  $region44: #{bottleneck_block_forward.1} parent=0 // pred_region
    _
  $region45: #{bottleneck_block_forward.1} parent=0 // pred_fallthru
    _
  // Predicated region
  $region46: #{bottleneck_block_forward.1} parent=0 // pred_check
    _
  $region47: #{bottleneck_block_forward.1} parent=0 // pred_check_branch
    %40 = sbr.rel (0) target = $region49
  $region48: #{bottleneck_block_forward.1} parent=0 // pred_region
    _
  $region49: #{bottleneck_block_forward.1} parent=0 // pred_fallthru
    _
  %v42 = vld [vmem:[%s0] sm:$0xff]
  %v43 = vld [vmem:[%s0 + $0x8] sm:$0xff]
  %v44 = vld [vmem:[%s0 + $0x10] sm:$0xff]
  %v45 = vld [vmem:[%s0 + $0x18] sm:$0xff]
  %v46 = vld [vmem:[%s0 + $0x20] sm:$0xff]
  %v47 = vld [vmem:[%s0 + $0x28] sm:$0xff]
  %v48 = vld [vmem:[%s0 + $0x30] sm:$0xff]
  %v49 = vld [vmem:[%s0 + $0x38] sm:$0xff]
  %v50 = vld [vmem:[%s0 + $0x40] sm:$0xff]
  %v51 = vld [vmem:[%s0 + $0x48] sm:$0xff]
  %v52 = vld [vmem:[%s0 + $0x50] sm:$0xff]
  %v53 = vld [vmem:[%s0 + $0x58] sm:$0xff]
  %v54 = vld [vmem:[%s0 + $0x60] sm:$0xff]
  %v55 = vld [vmem:[%s0 + $0x68] sm:$0xff]
  %v56 = vld [vmem:[%s0 + $0x70] sm:$0xff]
  %v57 = vld [vmem:[%s0 + $0x78] sm:$0xff]
  %v58 = vld [vmem:[%s0 + $0x80] sm:$0xff]
  %v59 = vld [vmem:[%s0 + $0x88] sm:$0xff]
  %v60 = vld [vmem:[%s0 + $0x90] sm:$0xff]
  %v61 = vld [vmem:[%s0 + $0x98] sm:$0xff]
  %v62 = vld [vmem:[%s0 + $0xa0] sm:$0xff]
  %v63 = vld [vmem:[%s0 + $0xa8] sm:$0xff]
  %v64 = vld [vmem:[%s0 + $0xb0] sm:$0xff]
  %v65 = vld [vmem:[%s0 + $0xb8] sm:$0xff]
  %v66 = vld [vmem:[%s0 + $0xc0] sm:$0xff]
  %v67 = vld [vmem:[%s0 + $0xc8] sm:$0xff]
  %v68 = vld [vmem:[%s0 + $0xd0] sm:$0xff]
  %v69 = vld [vmem:[%s0 + $0xd8] sm:$0xff]
  %v70 = vld [vmem:[%s0 + $0xe0] sm:$0xff]
  %v71 = vld [vmem:[%s0 + $0xe8] sm:$0xff]
  %v72 = vld [vmem:[%s0 + $0xf0] sm:$0xff]
  %v73 = vld [vmem:[%s0 + $0xf8] sm:$0xff]
  %v74 = vld [vmem:[%s0 + $0x100] sm:$0xff]
  %v75 = vld [vmem:[%s0 + $0x108] sm:$0xff]
  %v76 = vld [vmem:[%s0 + $0x110] sm:$0xff]
  %v77 = vld [vmem:[%s0 + $0x118] sm:$0xff]
  %v78 = vld [vmem:[%s0 + $0x120] sm:$0xff]
  %v79 = vld [vmem:[%s0 + $0x128] sm:$0xff]
  %v80 = vld [vmem:[%s0 + $0x130] sm:$0xff]
  %v81 = vld [vmem:[%s0 + $0x138] sm:$0xff]
  %v82 = vld [vmem:[%s0 + $0x140] sm:$0xff]
  %v83 = vld [vmem:[%s0 + $0x148] sm:$0xff]
  %v84 = vld [vmem:[%s0 + $0x150] sm:$0xff]
  %v85 = vld [vmem:[%s0 + $0x158] sm:$0xff]
  %v86 = vld [vmem:[%s0 + $0x160] sm:$0xff]
  %v87 = vld [vmem:[%s0 + $0x168] sm:$0xff]
  %v88 = vld [vmem:[%s0 + $0x170] sm:$0xff]
  %v89 = vld [vmem:[%s0 + $0x178] sm:$0xff]
  %v90 = vld [vmem:[%s0 + $0x180] sm:$0xff]
  %v91 = vld [vmem:[%s0 + $0x188] sm:$0xff]
  %v92 = vld [vmem:[%s0 + $0x190] sm:$0xff]
  %v93 = vld [vmem:[%s0 + $0x198] sm:$0xff]
  %v94 = vld [vmem:[%s0 + $0x1a0] sm:$0xff]
  %v95 = vld [vmem:[%s0 + $0x1a8] sm:$0xff]
  %v96 = vld [vmem:[%s0 + $0x1b0] sm:$0xff]
  %v97 = vld [vmem:[%s0 + $0x1b8] sm:$0xff]
  %v98 = vld [vmem:[%s0 + $0x1c0] sm:$0xff]
  %v99 = vld [vmem:[%s0 + $0x1c8] sm:$0xff]
  %v100 = vld [vmem:[%s0 + $0x1d0] sm:$0xff]
  %v101 = vld [vmem:[%s0 + $0x1d8] sm:$0xff]
  %v102 = vld [vmem:[%s0 + $0x1e0] sm:$0xff]
  %v103 = vld [vmem:[%s0 + $0x1e8] sm:$0xff]
  %v104 = vld [vmem:[%s0 + $0x1f0] sm:$0xff]
  %v105 = vld [vmem:[%s0 + $0x1f8] sm:$0xff]
  %v106 = vpack.c.bf16 %v43, %v42
  %v107 = vpack.c.bf16 %v45, %v44
  %v108 = vpack.c.bf16 %v47, %v46
  %v109 = vpack.c.bf16 %v49, %v48
  %v110 = vpack.c.bf16 %v51, %v50
  %v111 = vpack.c.bf16 %v53, %v52
  %v112 = vpack.c.bf16 %v55, %v54
  %v113 = vpack.c.bf16 %v57, %v56
  %v114 = vpack.c.bf16 %v59, %v58
  %v115 = vpack.c.bf16 %v61, %v60
  %v116 = vpack.c.bf16 %v63, %v62
  %v117 = vpack.c.bf16 %v65, %v64
  %v118 = vpack.c.bf16 %v67, %v66
  %v119 = vpack.c.bf16 %v69, %v68
  %v120 = vpack.c.bf16 %v71, %v70
  %v121 = vpack.c.bf16 %v73, %v72
  %v122 = vpack.c.bf16 %v75, %v74
  %v123 = vpack.c.bf16 %v77, %v76
  %v124 = vpack.c.bf16 %v79, %v78
  %v125 = vpack.c.bf16 %v81, %v80
  %v126 = vpack.c.bf16 %v83, %v82
  %v127 = vpack.c.bf16 %v85, %v84
  %v128 = vpack.c.bf16 %v87, %v86
  %v129 = vpack.c.bf16 %v89, %v88
  %v130 = vpack.c.bf16 %v91, %v90
  %v131 = vpack.c.bf16 %v93, %v92
  %v132 = vpack.c.bf16 %v95, %v94
  %v133 = vpack.c.bf16 %v97, %v96
  %v134 = vpack.c.bf16 %v99, %v98
  %v135 = vpack.c.bf16 %v101, %v100
  %v136 = vpack.c.bf16 %v103, %v102
  %v137 = vpack.c.bf16 %v105, %v104
  %v138 = vld [vmem:[%s1] sm:$0xf]
  %v139 = vld [vmem:[%s1 + $0x4] sm:$0xf]
  %v140 = vld [vmem:[%s1 + $0x8] sm:$0xf]
  %v141 = vld [vmem:[%s1 + $0xc] sm:$0xf]
  %v142 = vld [vmem:[%s1 + $0x10] sm:$0xf]
  %v143 = vld [vmem:[%s1 + $0x14] sm:$0xf]
  %v144 = vld [vmem:[%s1 + $0x18] sm:$0xf]
  %v145 = vld [vmem:[%s1 + $0x1c] sm:$0xf]
  %v146 = vld [vmem:[%s1 + $0x20] sm:$0xf]
  %v147 = vld [vmem:[%s1 + $0x24] sm:$0xf]
  %v148 = vld [vmem:[%s1 + $0x28] sm:$0xf]
  %v149 = vld [vmem:[%s1 + $0x2c] sm:$0xf]
  %v150 = vld [vmem:[%s1 + $0x30] sm:$0xf]
  %v151 = vld [vmem:[%s1 + $0x34] sm:$0xf]
  %v152 = vld [vmem:[%s1 + $0x38] sm:$0xf]
  %v153 = vld [vmem:[%s1 + $0x3c] sm:$0xf]
  %v170 = vunpack.c.l.b16 %v138
  %v171 = vunpack.c.l.b16 %v139
  %v172 = vunpack.c.l.b16 %v140
  %v173 = vunpack.c.l.b16 %v141
  %v174 = vunpack.c.l.b16 %v142
  %v175 = vunpack.c.l.b16 %v143
  %v176 = vunpack.c.l.b16 %v144
  %v177 = vunpack.c.l.b16 %v145
  %v178 = vunpack.c.l.b16 %v146
  %v179 = vunpack.c.l.b16 %v147
  %v180 = vunpack.c.l.b16 %v148
  %v181 = vunpack.c.l.b16 %v149
  %v182 = vunpack.c.l.b16 %v150
  %v183 = vunpack.c.l.b16 %v151
  %v184 = vunpack.c.l.b16 %v152
  %v185 = vunpack.c.l.b16 %v153
  %v186 = vpack.c.b16 %v171, %v170
  %v187 = vpack.c.b16 %v173, %v172
  %v188 = vpack.c.b16 %v175, %v174
  %v189 = vpack.c.b16 %v177, %v176
  %v190 = vpack.c.b16 %v179, %v178
  %v191 = vpack.c.b16 %v181, %v180
  %v192 = vpack.c.b16 %v183, %v182
  %v193 = vpack.c.b16 %v185, %v184
  %202 = vmatpush.bf16.msra.mxu0 %v193
  %203 = vmatpush.bf16.msra.mxu0 %v192
  %204 = vmatpush.bf16.msra.mxu0 %v191
  %205 = vmatpush.bf16.msra.mxu0 %v190
  %206 = vmatpush.bf16.msra.mxu0 %v189
  %207 = vmatpush.bf16.msra.mxu0 %v188
  %208 = vmatpush.bf16.msra.mxu0 %v187
  %209 = vmatpush.bf16.msra.mxu0 %v186
  %210 = vmatmul.bf16.gmra.mxu0 %v106
  %v211 = vpop.f32.mrf.mxu0
  %v212 = vadd.f32 0.0, %v211
  %v213 = vpop.f32.mrf.mxu0
  %v214 = vadd.f32 0.0, %v213
  %215 = vmatmul.bf16.gmra.mxu0 %v107
  %v216 = vpop.f32.mrf.mxu0
  %v217 = vadd.f32 0.0, %v216
  %v218 = vpop.f32.mrf.mxu0
  %v219 = vadd.f32 0.0, %v218
  %220 = vmatmul.bf16.gmra.mxu0 %v108
  %v221 = vpop.f32.mrf.mxu0
  %v222 = vadd.f32 0.0, %v221
  %v223 = vpop.f32.mrf.mxu0
  %v224 = vadd.f32 0.0, %v223
  %225 = vmatmul.bf16.gmra.mxu0 %v109
  %v226 = vpop.f32.mrf.mxu0
  %v227 = vadd.f32 0.0, %v226
  %v228 = vpop.f32.mrf.mxu0
  %v229 = vadd.f32 0.0, %v228
  %230 = vmatmul.bf16.gmra.mxu0 %v110
  %v231 = vpop.f32.mrf.mxu0
  %v232 = vadd.f32 0.0, %v231
  %v233 = vpop.f32.mrf.mxu0
  %v234 = vadd.f32 0.0, %v233
  %235 = vmatmul.bf16.gmra.mxu0 %v111
  %v236 = vpop.f32.mrf.mxu0
  %v237 = vadd.f32 0.0, %v236
  %v238 = vpop.f32.mrf.mxu0
  %v239 = vadd.f32 0.0, %v238
  %240 = vmatmul.bf16.gmra.mxu0 %v112
  %v241 = vpop.f32.mrf.mxu0
  %v242 = vadd.f32 0.0, %v241
  %v243 = vpop.f32.mrf.mxu0
  %v244 = vadd.f32 0.0, %v243
  %245 = vmatmul.bf16.gmra.mxu0 %v113
  %v246 = vpop.f32.mrf.mxu0
  %v247 = vadd.f32 0.0, %v246
  %v248 = vpop.f32.mrf.mxu0
  %v249 = vadd.f32 0.0, %v248
  %250 = vmatmul.bf16.gmra.mxu0 %v114
  %v251 = vpop.f32.mrf.mxu0
  %v252 = vadd.f32 0.0, %v251
  %v253 = vpop.f32.mrf.mxu0
  %v254 = vadd.f32 0.0, %v253
  %255 = vmatmul.bf16.gmra.mxu0 %v115
  %v256 = vpop.f32.mrf.mxu0
  %v257 = vadd.f32 0.0, %v256
  %v258 = vpop.f32.mrf.mxu0
  %v259 = vadd.f32 0.0, %v258
  %260 = vmatmul.bf16.gmra.mxu0 %v116
  %v261 = vpop.f32.mrf.mxu0
  %v262 = vadd.f32 0.0, %v261
  %v263 = vpop.f32.mrf.mxu0
  %v264 = vadd.f32 0.0, %v263
  %265 = vmatmul.bf16.gmra.mxu0 %v117
  %v266 = vpop.f32.mrf.mxu0
  %v267 = vadd.f32 0.0, %v266
  %v268 = vpop.f32.mrf.mxu0
  %v269 = vadd.f32 0.0, %v268
  %270 = vmatmul.bf16.gmra.mxu0 %v118
  %v271 = vpop.f32.mrf.mxu0
  %v272 = vadd.f32 0.0, %v271
  %v273 = vpop.f32.mrf.mxu0
  %v274 = vadd.f32 0.0, %v273
  %275 = vmatmul.bf16.gmra.mxu0 %v119
  %v276 = vpop.f32.mrf.mxu0
  %v277 = vadd.f32 0.0, %v276
  %v278 = vpop.f32.mrf.mxu0
  %v279 = vadd.f32 0.0, %v278
  %280 = vmatmul.bf16.gmra.mxu0 %v120
  %v281 = vpop.f32.mrf.mxu0
  %v282 = vadd.f32 0.0, %v281
  %v283 = vpop.f32.mrf.mxu0
  %v284 = vadd.f32 0.0, %v283
  %285 = vmatmul.bf16.gmra.mxu0 %v121
  %v286 = vpop.f32.mrf.mxu0
  %v287 = vadd.f32 0.0, %v286
  %v288 = vpop.f32.mrf.mxu0
  %v289 = vadd.f32 0.0, %v288
  %290 = vmatmul.bf16.gmra.mxu0 %v122
  %v291 = vpop.f32.mrf.mxu0
  %v292 = vadd.f32 0.0, %v291
  %v293 = vpop.f32.mrf.mxu0
  %v294 = vadd.f32 0.0, %v293
  %295 = vmatmul.bf16.gmra.mxu0 %v123
  %v296 = vpop.f32.mrf.mxu0
  %v297 = vadd.f32 0.0, %v296
  %v298 = vpop.f32.mrf.mxu0
  %v299 = vadd.f32 0.0, %v298
  %300 = vmatmul.bf16.gmra.mxu0 %v124
  %v301 = vpop.f32.mrf.mxu0
  %v302 = vadd.f32 0.0, %v301
  %v303 = vpop.f32.mrf.mxu0
  %v304 = vadd.f32 0.0, %v303
  %305 = vmatmul.bf16.gmra.mxu0 %v125
  %v306 = vpop.f32.mrf.mxu0
  %v307 = vadd.f32 0.0, %v306
  %v308 = vpop.f32.mrf.mxu0
  %v309 = vadd.f32 0.0, %v308
  %310 = vmatmul.bf16.gmra.mxu0 %v126
  %v311 = vpop.f32.mrf.mxu0
  %v312 = vadd.f32 0.0, %v311
  %v313 = vpop.f32.mrf.mxu0
  %v314 = vadd.f32 0.0, %v313
  %315 = vmatmul.bf16.gmra.mxu0 %v127
  %v316 = vpop.f32.mrf.mxu0
  %v317 = vadd.f32 0.0, %v316
  %v318 = vpop.f32.mrf.mxu0
  %v319 = vadd.f32 0.0, %v318
  %320 = vmatmul.bf16.gmra.mxu0 %v128
  %v321 = vpop.f32.mrf.mxu0
  %v322 = vadd.f32 0.0, %v321
  %v323 = vpop.f32.mrf.mxu0
  %v324 = vadd.f32 0.0, %v323
  %325 = vmatmul.bf16.gmra.mxu0 %v129
  %v326 = vpop.f32.mrf.mxu0
  %v327 = vadd.f32 0.0, %v326
  %v328 = vpop.f32.mrf.mxu0
  %v329 = vadd.f32 0.0, %v328
  %330 = vmatmul.bf16.gmra.mxu0 %v130
  %v331 = vpop.f32.mrf.mxu0
  %v332 = vadd.f32 0.0, %v331
  %v333 = vpop.f32.mrf.mxu0
  %v334 = vadd.f32 0.0, %v333
  %335 = vmatmul.bf16.gmra.mxu0 %v131
  %v336 = vpop.f32.mrf.mxu0
  %v337 = vadd.f32 0.0, %v336
  %v338 = vpop.f32.mrf.mxu0
  %v339 = vadd.f32 0.0, %v338
  %340 = vmatmul.bf16.gmra.mxu0 %v132
  %v341 = vpop.f32.mrf.mxu0
  %v342 = vadd.f32 0.0, %v341
  %v343 = vpop.f32.mrf.mxu0
  %v344 = vadd.f32 0.0, %v343
  %345 = vmatmul.bf16.gmra.mxu0 %v133
  %v346 = vpop.f32.mrf.mxu0
  %v347 = vadd.f32 0.0, %v346
  %v348 = vpop.f32.mrf.mxu0
  %v349 = vadd.f32 0.0, %v348
  %350 = vmatmul.bf16.gmra.mxu0 %v134
  %v351 = vpop.f32.mrf.mxu0
  %v352 = vadd.f32 0.0, %v351
  %v353 = vpop.f32.mrf.mxu0
  %v354 = vadd.f32 0.0, %v353
  %355 = vmatmul.bf16.gmra.mxu0 %v135
  %v356 = vpop.f32.mrf.mxu0
  %v357 = vadd.f32 0.0, %v356
  %v358 = vpop.f32.mrf.mxu0
  %v359 = vadd.f32 0.0, %v358
  %360 = vmatmul.bf16.gmra.mxu0 %v136
  %v361 = vpop.f32.mrf.mxu0
  %v362 = vadd.f32 0.0, %v361
  %v363 = vpop.f32.mrf.mxu0
  %v364 = vadd.f32 0.0, %v363
  %365 = vmatmul.bf16.gmra.mxu0 %v137
  %v366 = vpop.f32.mrf.mxu0
  %v367 = vadd.f32 0.0, %v366
  %v368 = vpop.f32.mrf.mxu0
  %v369 = vadd.f32 0.0, %v368
  %370 = vdwg.mxu0
  %v371 = vadd.f32 %v212, %v214
  %v372 = vadd.f32 %v371, %v217
  %v373 = vadd.f32 %v372, %v219
  %v374 = vadd.f32 %v373, %v222
  %v375 = vadd.f32 %v374, %v224
  %v376 = vadd.f32 %v375, %v227
  %v377 = vadd.f32 %v376, %v229
  %v378 = vadd.f32 %v377, %v232
  %v379 = vadd.f32 %v378, %v234
  %v380 = vadd.f32 %v379, %v237
  %v381 = vadd.f32 %v380, %v239
  %v382 = vadd.f32 %v381, %v242
  %v383 = vadd.f32 %v382, %v244
  %v384 = vadd.f32 %v383, %v247
  %v385 = vadd.f32 %v384, %v249
  %v386 = vadd.f32 %v385, %v252
  %v387 = vadd.f32 %v386, %v254
  %v388 = vadd.f32 %v387, %v257
  %v389 = vadd.f32 %v388, %v259
  %v390 = vadd.f32 %v389, %v262
  %v391 = vadd.f32 %v390, %v264
  %v392 = vadd.f32 %v391, %v267
  %v393 = vadd.f32 %v392, %v269
  %v394 = vadd.f32 %v393, %v272
  %v395 = vadd.f32 %v394, %v274
  %v396 = vadd.f32 %v395, %v277
  %v397 = vadd.f32 %v396, %v279
  %v398 = vadd.f32 %v397, %v282
  %v399 = vadd.f32 %v398, %v284
  %v400 = vadd.f32 %v399, %v287
  %v401 = vadd.f32 %v400, %v289
  %v402 = vadd.f32 %v401, %v292
  %v403 = vadd.f32 %v402, %v294
  %v404 = vadd.f32 %v403, %v297
  %v405 = vadd.f32 %v404, %v299
  %v406 = vadd.f32 %v405, %v302
  %v407 = vadd.f32 %v406, %v304
  %v408 = vadd.f32 %v407, %v307
  %v409 = vadd.f32 %v408, %v309
  %v410 = vadd.f32 %v409, %v312
  %v411 = vadd.f32 %v410, %v314
  %v412 = vadd.f32 %v411, %v317
  %v413 = vadd.f32 %v412, %v319
  %v414 = vadd.f32 %v413, %v322
  %v415 = vadd.f32 %v414, %v324
  %v416 = vadd.f32 %v415, %v327
  %v417 = vadd.f32 %v416, %v329
  %v418 = vadd.f32 %v417, %v332
  %v419 = vadd.f32 %v418, %v334
  %v420 = vadd.f32 %v419, %v337
  %v421 = vadd.f32 %v420, %v339
  %v422 = vadd.f32 %v421, %v342
  %v423 = vadd.f32 %v422, %v344
  %v424 = vadd.f32 %v423, %v347
  %v425 = vadd.f32 %v424, %v349
  %v426 = vadd.f32 %v425, %v352
  %v427 = vadd.f32 %v426, %v354
  %v428 = vadd.f32 %v427, %v357
  %v429 = vadd.f32 %v428, %v359
  %v430 = vadd.f32 %v429, %v362
  %v431 = vadd.f32 %v430, %v364
  %v432 = vadd.f32 %v431, %v367
  %v433 = vadd.f32 %v432, %v369
  %v434 = vrot.slane %v433, 4
  %v435 = vadd.f32 %v433, %v434
  %v436 = vrot.slane %v435, 2
  %v437 = vadd.f32 %v435, %v436
  %v438 = vrot.slane %v437, 1
  %v439 = vadd.f32 %v437, %v438
  %v440 = vmul.f32 %v212, %v212
  %v441 = vmul.f32 %v214, %v214
  %v442 = vmul.f32 %v217, %v217
  %v443 = vmul.f32 %v219, %v219
  %v444 = vmul.f32 %v222, %v222
  %v445 = vmul.f32 %v224, %v224
  %v446 = vmul.f32 %v227, %v227
  %v447 = vmul.f32 %v229, %v229
  %v448 = vmul.f32 %v232, %v232
  %v449 = vmul.f32 %v234, %v234
  %v450 = vmul.f32 %v237, %v237
  %v451 = vmul.f32 %v239, %v239
  %v452 = vmul.f32 %v242, %v242
  %v453 = vmul.f32 %v244, %v244
  %v454 = vmul.f32 %v247, %v247
  %v455 = vmul.f32 %v249, %v249
  %v456 = vmul.f32 %v252, %v252
  %v457 = vmul.f32 %v254, %v254
  %v458 = vmul.f32 %v257, %v257
  %v459 = vmul.f32 %v259, %v259
  %v460 = vmul.f32 %v262, %v262
  %v461 = vmul.f32 %v264, %v264
  %v462 = vmul.f32 %v267, %v267
  %v463 = vmul.f32 %v269, %v269
  %v464 = vmul.f32 %v272, %v272
  %v465 = vmul.f32 %v274, %v274
  %v466 = vmul.f32 %v277, %v277
  %v467 = vmul.f32 %v279, %v279
  %v468 = vmul.f32 %v282, %v282
  %v469 = vmul.f32 %v284, %v284
  %v470 = vmul.f32 %v287, %v287
  %v471 = vmul.f32 %v289, %v289
  %v472 = vmul.f32 %v292, %v292
  %v473 = vmul.f32 %v294, %v294
  %v474 = vmul.f32 %v297, %v297
  %v475 = vmul.f32 %v299, %v299
  %v476 = vmul.f32 %v302, %v302
  %v477 = vmul.f32 %v304, %v304
  %v478 = vmul.f32 %v307, %v307
  %v479 = vmul.f32 %v309, %v309
  %v480 = vmul.f32 %v312, %v312
  %v481 = vmul.f32 %v314, %v314
  %v482 = vmul.f32 %v317, %v317
  %v483 = vmul.f32 %v319, %v319
  %v484 = vmul.f32 %v322, %v322
  %v485 = vmul.f32 %v324, %v324
  %v486 = vmul.f32 %v327, %v327
  %v487 = vmul.f32 %v329, %v329
  %v488 = vmul.f32 %v332, %v332
  %v489 = vmul.f32 %v334, %v334
  %v490 = vmul.f32 %v337, %v337
  %v491 = vmul.f32 %v339, %v339
  %v492 = vmul.f32 %v342, %v342
  %v493 = vmul.f32 %v344, %v344
  %v494 = vmul.f32 %v347, %v347
  %v495 = vmul.f32 %v349, %v349
  %v496 = vmul.f32 %v352, %v352
  %v497 = vmul.f32 %v354, %v354
  %v498 = vmul.f32 %v357, %v357
  %v499 = vmul.f32 %v359, %v359
  %v500 = vmul.f32 %v362, %v362
  %v501 = vmul.f32 %v364, %v364
  %v502 = vmul.f32 %v367, %v367
  %v503 = vmul.f32 %v369, %v369
  %v504 = vadd.f32 %v440, %v441
  %v505 = vadd.f32 %v504, %v442
  %v506 = vadd.f32 %v505, %v443
  %v507 = vadd.f32 %v506, %v444
  %v508 = vadd.f32 %v507, %v445
  %v509 = vadd.f32 %v508, %v446
  %v510 = vadd.f32 %v509, %v447
  %v511 = vadd.f32 %v510, %v448
  %v512 = vadd.f32 %v511, %v449
  %v513 = vadd.f32 %v512, %v450
  %v514 = vadd.f32 %v513, %v451
  %v515 = vadd.f32 %v514, %v452
  %v516 = vadd.f32 %v515, %v453
  %v517 = vadd.f32 %v516, %v454
  %v518 = vadd.f32 %v517, %v455
  %v519 = vadd.f32 %v518, %v456
  %v520 = vadd.f32 %v519, %v457
  %v521 = vadd.f32 %v520, %v458
  %v522 = vadd.f32 %v521, %v459
  %v523 = vadd.f32 %v522, %v460
  %v524 = vadd.f32 %v523, %v461
  %v525 = vadd.f32 %v524, %v462
  %v526 = vadd.f32 %v525, %v463
  %v527 = vadd.f32 %v526, %v464
  %v528 = vadd.f32 %v527, %v465
  %v529 = vadd.f32 %v528, %v466
  %v530 = vadd.f32 %v529, %v467
  %v531 = vadd.f32 %v530, %v468
  %v532 = vadd.f32 %v531, %v469
  %v533 = vadd.f32 %v532, %v470
  %v534 = vadd.f32 %v533, %v471
  %v535 = vadd.f32 %v534, %v472
  %v536 = vadd.f32 %v535, %v473
  %v537 = vadd.f32 %v536, %v474
  %v538 = vadd.f32 %v537, %v475
  %v539 = vadd.f32 %v538, %v476
  %v540 = vadd.f32 %v539, %v477
  %v541 = vadd.f32 %v540, %v478
  %v542 = vadd.f32 %v541, %v479
  %v543 = vadd.f32 %v542, %v480
  %v544 = vadd.f32 %v543, %v481
  %v545 = vadd.f32 %v544, %v482
  %v546 = vadd.f32 %v545, %v483
  %v547 = vadd.f32 %v546, %v484
  %v548 = vadd.f32 %v547, %v485
  %v549 = vadd.f32 %v548, %v486
  %v550 = vadd.f32 %v549, %v487
  %v551 = vadd.f32 %v550, %v488
  %v552 = vadd.f32 %v551, %v489
  %v553 = vadd.f32 %v552, %v490
  %v554 = vadd.f32 %v553, %v491
  %v555 = vadd.f32 %v554, %v492
  %v556 = vadd.f32 %v555, %v493
  %v557 = vadd.f32 %v556, %v494
  %v558 = vadd.f32 %v557, %v495
  %v559 = vadd.f32 %v558, %v496
  %v560 = vadd.f32 %v559, %v497
  %v561 = vadd.f32 %v560, %v498
  %v562 = vadd.f32 %v561, %v499
  %v563 = vadd.f32 %v562, %v500
  %v564 = vadd.f32 %v563, %v501
  %v565 = vadd.f32 %v564, %v502
  %v566 = vadd.f32 %v565, %v503
  %v567 = vrot.slane %v566, 4
  %v568 = vadd.f32 %v566, %v567
  %v569 = vrot.slane %v568, 2
  %v570 = vadd.f32 %v568, %v569
  %v571 = vrot.slane %v570, 1
  %v572 = vadd.f32 %v570, %v571
  %v573 = vmul.f32 %v439, 0.001953125
  %v574 = vmul.f32 %v572, 0.001953125
  %v575 = vmul.f32 %v573, %v573
  %v576 = vsub.f32 %v574, %v575
  %v577 = vmax.f32 %v576, 0.0
  %v578 = vld [vmem:[%s4] sm:$0x1]
  %v579 = vadd.f32 %v577, 1e-05
  %v580 = vrsqrt.pop %v579
  %v581 = vmul.f32 %v580, %v579
  %v582 = vmul.f32 %v581, %v580
  %v583 = vmul.f32 0.5, %v582
  %v584 = vsub.f32 1.5, %v583
  %v585 = vmul.f32 %v580, %v584
  %vm586 = vweird.f32 %v579
  %vm587 = vweird.f32 %v580
  %vm588 = vmor %vm586, %vm587
  %v589 = vsel %vm588, %v580, %v585
  %v590 = vmul.f32 %v578, %v589
  %v591 = vld [vmem:[%s5] sm:$0x1]
  %v592 = vmul.f32 %v573, %v590
  %v593 = vsub.f32 %v591, %v592
  %v595 = vperm.slane %v590, 0
  %v597 = vmul.f32 %v212, %v595
  %v598 = vmul.f32 %v214, %v595
  %v599 = vmul.f32 %v217, %v595
  %v600 = vmul.f32 %v219, %v595
  %v601 = vmul.f32 %v222, %v595
  %v602 = vmul.f32 %v224, %v595
  %v603 = vmul.f32 %v227, %v595
  %v604 = vmul.f32 %v229, %v595
  %v605 = vmul.f32 %v232, %v595
  %v606 = vmul.f32 %v234, %v595
  %v607 = vmul.f32 %v237, %v595
  %v608 = vmul.f32 %v239, %v595
  %v609 = vmul.f32 %v242, %v595
  %v610 = vmul.f32 %v244, %v595
  %v611 = vmul.f32 %v247, %v595
  %v612 = vmul.f32 %v249, %v595
  %v613 = vmul.f32 %v252, %v595
  %v614 = vmul.f32 %v254, %v595
  %v615 = vmul.f32 %v257, %v595
  %v616 = vmul.f32 %v259, %v595
  %v617 = vmul.f32 %v262, %v595
  %v618 = vmul.f32 %v264, %v595
  %v619 = vmul.f32 %v267, %v595
  %v620 = vmul.f32 %v269, %v595
  %v621 = vmul.f32 %v272, %v595
  %v622 = vmul.f32 %v274, %v595
  %v623 = vmul.f32 %v277, %v595
  %v624 = vmul.f32 %v279, %v595
  %v625 = vmul.f32 %v282, %v595
  %v626 = vmul.f32 %v284, %v595
  %v627 = vmul.f32 %v287, %v595
  %v628 = vmul.f32 %v289, %v595
  %v629 = vmul.f32 %v292, %v595
  %v630 = vmul.f32 %v294, %v595
  %v631 = vmul.f32 %v297, %v595
  %v632 = vmul.f32 %v299, %v595
  %v633 = vmul.f32 %v302, %v595
  %v634 = vmul.f32 %v304, %v595
  %v635 = vmul.f32 %v307, %v595
  %v636 = vmul.f32 %v309, %v595
  %v637 = vmul.f32 %v312, %v595
  %v638 = vmul.f32 %v314, %v595
  %v639 = vmul.f32 %v317, %v595
  %v640 = vmul.f32 %v319, %v595
  %v641 = vmul.f32 %v322, %v595
  %v642 = vmul.f32 %v324, %v595
  %v643 = vmul.f32 %v327, %v595
  %v644 = vmul.f32 %v329, %v595
  %v645 = vmul.f32 %v332, %v595
  %v646 = vmul.f32 %v334, %v595
  %v647 = vmul.f32 %v337, %v595
  %v648 = vmul.f32 %v339, %v595
  %v649 = vmul.f32 %v342, %v595
  %v650 = vmul.f32 %v344, %v595
  %v651 = vmul.f32 %v347, %v595
  %v652 = vmul.f32 %v349, %v595
  %v653 = vmul.f32 %v352, %v595
  %v654 = vmul.f32 %v354, %v595
  %v655 = vmul.f32 %v357, %v595
  %v656 = vmul.f32 %v359, %v595
  %v657 = vmul.f32 %v362, %v595
  %v658 = vmul.f32 %v364, %v595
  %v659 = vmul.f32 %v367, %v595
  %v660 = vmul.f32 %v369, %v595
  %v662 = vperm.slane %v593, 0
  %v664 = vadd.f32 %v597, %v662
  %v665 = vadd.f32 %v598, %v662
  %v666 = vadd.f32 %v599, %v662
  %v667 = vadd.f32 %v600, %v662
  %v668 = vadd.f32 %v601, %v662
  %v669 = vadd.f32 %v602, %v662
  %v670 = vadd.f32 %v603, %v662
  %v671 = vadd.f32 %v604, %v662
  %v672 = vadd.f32 %v605, %v662
  %v673 = vadd.f32 %v606, %v662
  %v674 = vadd.f32 %v607, %v662
  %v675 = vadd.f32 %v608, %v662
  %v676 = vadd.f32 %v609, %v662
  %v677 = vadd.f32 %v610, %v662
  %v678 = vadd.f32 %v611, %v662
  %v679 = vadd.f32 %v612, %v662
  %v680 = vadd.f32 %v613, %v662
  %v681 = vadd.f32 %v614, %v662
  %v682 = vadd.f32 %v615, %v662
  %v683 = vadd.f32 %v616, %v662
  %v684 = vadd.f32 %v617, %v662
  %v685 = vadd.f32 %v618, %v662
  %v686 = vadd.f32 %v619, %v662
  %v687 = vadd.f32 %v620, %v662
  %v688 = vadd.f32 %v621, %v662
  %v689 = vadd.f32 %v622, %v662
  %v690 = vadd.f32 %v623, %v662
  %v691 = vadd.f32 %v624, %v662
  %v692 = vadd.f32 %v625, %v662
  %v693 = vadd.f32 %v626, %v662
  %v694 = vadd.f32 %v627, %v662
  %v695 = vadd.f32 %v628, %v662
  %v696 = vadd.f32 %v629, %v662
  %v697 = vadd.f32 %v630, %v662
  %v698 = vadd.f32 %v631, %v662
  %v699 = vadd.f32 %v632, %v662
  %v700 = vadd.f32 %v633, %v662
  %v701 = vadd.f32 %v634, %v662
  %v702 = vadd.f32 %v635, %v662
  %v703 = vadd.f32 %v636, %v662
  %v704 = vadd.f32 %v637, %v662
  %v705 = vadd.f32 %v638, %v662
  %v706 = vadd.f32 %v639, %v662
  %v707 = vadd.f32 %v640, %v662
  %v708 = vadd.f32 %v641, %v662
  %v709 = vadd.f32 %v642, %v662
  %v710 = vadd.f32 %v643, %v662
  %v711 = vadd.f32 %v644, %v662
  %v712 = vadd.f32 %v645, %v662
  %v713 = vadd.f32 %v646, %v662
  %v714 = vadd.f32 %v647, %v662
  %v715 = vadd.f32 %v648, %v662
  %v716 = vadd.f32 %v649, %v662
  %v717 = vadd.f32 %v650, %v662
  %v718 = vadd.f32 %v651, %v662
  %v719 = vadd.f32 %v652, %v662
  %v720 = vadd.f32 %v653, %v662
  %v721 = vadd.f32 %v654, %v662
  %v722 = vadd.f32 %v655, %v662
  %v723 = vadd.f32 %v656, %v662
  %v724 = vadd.f32 %v657, %v662
  %v725 = vadd.f32 %v658, %v662
  %v726 = vadd.f32 %v659, %v662
  %v727 = vadd.f32 %v660, %v662
  %v728 = vmax.f32 %v664, 0.0
  %v729 = vmax.f32 %v665, 0.0
  %v730 = vmax.f32 %v666, 0.0
  %v731 = vmax.f32 %v667, 0.0
  %v732 = vmax.f32 %v668, 0.0
  %v733 = vmax.f32 %v669, 0.0
  %v734 = vmax.f32 %v670, 0.0
  %v735 = vmax.f32 %v671, 0.0
  %v736 = vmax.f32 %v672, 0.0
  %v737 = vmax.f32 %v673, 0.0
  %v738 = vmax.f32 %v674, 0.0
  %v739 = vmax.f32 %v675, 0.0
  %v740 = vmax.f32 %v676, 0.0
  %v741 = vmax.f32 %v677, 0.0
  %v742 = vmax.f32 %v678, 0.0
  %v743 = vmax.f32 %v679, 0.0
  %v744 = vmax.f32 %v680, 0.0
  %v745 = vmax.f32 %v681, 0.0
  %v746 = vmax.f32 %v682, 0.0
  %v747 = vmax.f32 %v683, 0.0
  %v748 = vmax.f32 %v684, 0.0
  %v749 = vmax.f32 %v685, 0.0
  %v750 = vmax.f32 %v686, 0.0
  %v751 = vmax.f32 %v687, 0.0
  %v752 = vmax.f32 %v688, 0.0
  %v753 = vmax.f32 %v689, 0.0
  %v754 = vmax.f32 %v690, 0.0
  %v755 = vmax.f32 %v691, 0.0
  %v756 = vmax.f32 %v692, 0.0
  %v757 = vmax.f32 %v693, 0.0
  %v758 = vmax.f32 %v694, 0.0
  %v759 = vmax.f32 %v695, 0.0
  %v760 = vmax.f32 %v696, 0.0
  %v761 = vmax.f32 %v697, 0.0
  %v762 = vmax.f32 %v698, 0.0
  %v763 = vmax.f32 %v699, 0.0
  %v764 = vmax.f32 %v700, 0.0
  %v765 = vmax.f32 %v701, 0.0
  %v766 = vmax.f32 %v702, 0.0
  %v767 = vmax.f32 %v703, 0.0
  %v768 = vmax.f32 %v704, 0.0
  %v769 = vmax.f32 %v705, 0.0
  %v770 = vmax.f32 %v706, 0.0
  %v771 = vmax.f32 %v707, 0.0
  %v772 = vmax.f32 %v708, 0.0
  %v773 = vmax.f32 %v709, 0.0
  %v774 = vmax.f32 %v710, 0.0
  %v775 = vmax.f32 %v711, 0.0
  %v776 = vmax.f32 %v712, 0.0
  %v777 = vmax.f32 %v713, 0.0
  %v778 = vmax.f32 %v714, 0.0
  %v779 = vmax.f32 %v715, 0.0
  %v780 = vmax.f32 %v716, 0.0
  %v781 = vmax.f32 %v717, 0.0
  %v782 = vmax.f32 %v718, 0.0
  %v783 = vmax.f32 %v719, 0.0
  %v784 = vmax.f32 %v720, 0.0
  %v785 = vmax.f32 %v721, 0.0
  %v786 = vmax.f32 %v722, 0.0
  %v787 = vmax.f32 %v723, 0.0
  %v788 = vmax.f32 %v724, 0.0
  %v789 = vmax.f32 %v725, 0.0
  %v790 = vmax.f32 %v726, 0.0
  %v791 = vmax.f32 %v727, 0.0
  %v792 = vpack.c.bf16 %v728, %v728
  %v793 = vpack.c.bf16 %v729, %v729
  %v794 = vpack.c.bf16 %v730, %v730
  %v795 = vpack.c.bf16 %v731, %v731
  %v796 = vpack.c.bf16 %v732, %v732
  %v797 = vpack.c.bf16 %v733, %v733
  %v798 = vpack.c.bf16 %v734, %v734
  %v799 = vpack.c.bf16 %v735, %v735
  %v800 = vpack.c.bf16 %v736, %v736
  %v801 = vpack.c.bf16 %v737, %v737
  %v802 = vpack.c.bf16 %v738, %v738
  %v803 = vpack.c.bf16 %v739, %v739
  %v804 = vpack.c.bf16 %v740, %v740
  %v805 = vpack.c.bf16 %v741, %v741
  %v806 = vpack.c.bf16 %v742, %v742
  %v807 = vpack.c.bf16 %v743, %v743
  %v808 = vpack.c.bf16 %v744, %v744
  %v809 = vpack.c.bf16 %v745, %v745
  %v810 = vpack.c.bf16 %v746, %v746
  %v811 = vpack.c.bf16 %v747, %v747
  %v812 = vpack.c.bf16 %v748, %v748
  %v813 = vpack.c.bf16 %v749, %v749
  %v814 = vpack.c.bf16 %v750, %v750
  %v815 = vpack.c.bf16 %v751, %v751
  %v816 = vpack.c.bf16 %v752, %v752
  %v817 = vpack.c.bf16 %v753, %v753
  %v818 = vpack.c.bf16 %v754, %v754
  %v819 = vpack.c.bf16 %v755, %v755
  %v820 = vpack.c.bf16 %v756, %v756
  %v821 = vpack.c.bf16 %v757, %v757
  %v822 = vpack.c.bf16 %v758, %v758
  %v823 = vpack.c.bf16 %v759, %v759
  %v824 = vpack.c.bf16 %v760, %v760
  %v825 = vpack.c.bf16 %v761, %v761
  %v826 = vpack.c.bf16 %v762, %v762
  %v827 = vpack.c.bf16 %v763, %v763
  %v828 = vpack.c.bf16 %v764, %v764
  %v829 = vpack.c.bf16 %v765, %v765
  %v830 = vpack.c.bf16 %v766, %v766
  %v831 = vpack.c.bf16 %v767, %v767
  %v832 = vpack.c.bf16 %v768, %v768
  %v833 = vpack.c.bf16 %v769, %v769
  %v834 = vpack.c.bf16 %v770, %v770
  %v835 = vpack.c.bf16 %v771, %v771
  %v836 = vpack.c.bf16 %v772, %v772
  %v837 = vpack.c.bf16 %v773, %v773
  %v838 = vpack.c.bf16 %v774, %v774
  %v839 = vpack.c.bf16 %v775, %v775
  %v840 = vpack.c.bf16 %v776, %v776
  %v841 = vpack.c.bf16 %v777, %v777
  %v842 = vpack.c.bf16 %v778, %v778
  %v843 = vpack.c.bf16 %v779, %v779
  %v844 = vpack.c.bf16 %v780, %v780
  %v845 = vpack.c.bf16 %v781, %v781
  %v846 = vpack.c.bf16 %v782, %v782
  %v847 = vpack.c.bf16 %v783, %v783
  %v848 = vpack.c.bf16 %v784, %v784
  %v849 = vpack.c.bf16 %v785, %v785
  %v850 = vpack.c.bf16 %v786, %v786
  %v851 = vpack.c.bf16 %v787, %v787
  %v852 = vpack.c.bf16 %v788, %v788
  %v853 = vpack.c.bf16 %v789, %v789
  %v854 = vpack.c.bf16 %v790, %v790
  %v855 = vpack.c.bf16 %v791, %v791
  %856 = vst [vmem:[#allocation2] sm:$0xf] 0
  %857 = vst [vmem:[#allocation2 + $0x4] sm:$0xf] 0
  %858 = vst [vmem:[#allocation2 + $0x8] sm:$0xf] 0
  %859 = vst [vmem:[#allocation2 + $0xc] sm:$0xf] 0
  %860 = vst [vmem:[#allocation2 + $0x10] sm:$0xf] %v792
  %861 = vst [vmem:[#allocation2 + $0x14] sm:$0xf] %v793
  %862 = vst [vmem:[#allocation2 + $0x18] sm:$0xf] %v794
  %863 = vst [vmem:[#allocation2 + $0x1c] sm:$0xf] %v795
  %864 = vst [vmem:[#allocation2 + $0x20] sm:$0xf] %v796
  %865 = vst [vmem:[#allocation2 + $0x24] sm:$0xf] %v797
  %866 = vst [vmem:[#allocation2 + $0x28] sm:$0xf] %v798
  %867 = vst [vmem:[#allocation2 + $0x2c] sm:$0xf] %v799
  %868 = vst [vmem:[#allocation2 + $0x30] sm:$0xf] %v800
  %869 = vst [vmem:[#allocation2 + $0x34] sm:$0xf] %v801
  %870 = vst [vmem:[#allocation2 + $0x38] sm:$0xf] %v802
  %871 = vst [vmem:[#allocation2 + $0x3c] sm:$0xf] %v803
  %872 = vst [vmem:[#allocation2 + $0x40] sm:$0xf] %v804
  %873 = vst [vmem:[#allocation2 + $0x44] sm:$0xf] %v805
  %874 = vst [vmem:[#allocation2 + $0x48] sm:$0xf] %v806
  %875 = vst [vmem:[#allocation2 + $0x4c] sm:$0xf] %v807
  %876 = vst [vmem:[#allocation2 + $0x50] sm:$0xf] %v808
  %877 = vst [vmem:[#allocation2 + $0x54] sm:$0xf] %v809
  %878 = vst [vmem:[#allocation2 + $0x58] sm:$0xf] %v810
  %879 = vst [vmem:[#allocation2 + $0x5c] sm:$0xf] %v811
  %880 = vst [vmem:[#allocation2 + $0x60] sm:$0xf] %v812
  %881 = vst [vmem:[#allocation2 + $0x64] sm:$0xf] %v813
  %882 = vst [vmem:[#allocation2 + $0x68] sm:$0xf] %v814
  %883 = vst [vmem:[#allocation2 + $0x6c] sm:$0xf] %v815
  %884 = vst [vmem:[#allocation2 + $0x70] sm:$0xf] %v816
  %885 = vst [vmem:[#allocation2 + $0x74] sm:$0xf] %v817
  %886 = vst [vmem:[#allocation2 + $0x78] sm:$0xf] %v818
  %887 = vst [vmem:[#allocation2 + $0x7c] sm:$0xf] %v819
  %888 = vst [vmem:[#allocation2 + $0x80] sm:$0xf] %v820
  %889 = vst [vmem:[#allocation2 + $0x84] sm:$0xf] %v821
  %890 = vst [vmem:[#allocation2 + $0x88] sm:$0xf] %v822
  %891 = vst [vmem:[#allocation2 + $0x8c] sm:$0xf] %v823
  %892 = vst [vmem:[#allocation2 + $0x90] sm:$0xf] 0
  %893 = vst [vmem:[#allocation2 + $0x94] sm:$0xf] 0
  %894 = vst [vmem:[#allocation2 + $0x98] sm:$0xf] 0
  %895 = vst [vmem:[#allocation2 + $0x9c] sm:$0xf] 0
  %896 = vst [vmem:[#allocation2 + $0xa0] sm:$0xf] %v824
  %897 = vst [vmem:[#allocation2 + $0xa4] sm:$0xf] %v825
  %898 = vst [vmem:[#allocation2 + $0xa8] sm:$0xf] %v826
  %899 = vst [vmem:[#allocation2 + $0xac] sm:$0xf] %v827
  %900 = vst [vmem:[#allocation2 + $0xb0] sm:$0xf] %v828
  %901 = vst [vmem:[#allocation2 + $0xb4] sm:$0xf] %v829
  %902 = vst [vmem:[#allocation2 + $0xb8] sm:$0xf] %v830
  %903 = vst [vmem:[#allocation2 + $0xbc] sm:$0xf] %v831
  %904 = vst [vmem:[#allocation2 + $0xc0] sm:$0xf] %v832
  %905 = vst [vmem:[#allocation2 + $0xc4] sm:$0xf] %v833
  %906 = vst [vmem:[#allocation2 + $0xc8] sm:$0xf] %v834
  %907 = vst [vmem:[#allocation2 + $0xcc] sm:$0xf] %v835
  %908 = vst [vmem:[#allocation2 + $0xd0] sm:$0xf] %v836
  %909 = vst [vmem:[#allocation2 + $0xd4] sm:$0xf] %v837
  %910 = vst [vmem:[#allocation2 + $0xd8] sm:$0xf] %v838
  %911 = vst [vmem:[#allocation2 + $0xdc] sm:$0xf] %v839
  %912 = vst [vmem:[#allocation2 + $0xe0] sm:$0xf] %v840
  %913 = vst [vmem:[#allocation2 + $0xe4] sm:$0xf] %v841
  %914 = vst [vmem:[#allocation2 + $0xe8] sm:$0xf] %v842
  %915 = vst [vmem:[#allocation2 + $0xec] sm:$0xf] %v843
  %916 = vst [vmem:[#allocation2 + $0xf0] sm:$0xf] %v844
  %917 = vst [vmem:[#allocation2 + $0xf4] sm:$0xf] %v845
  %918 = vst [vmem:[#allocation2 + $0xf8] sm:$0xf] %v846
  %919 = vst [vmem:[#allocation2 + $0xfc] sm:$0xf] %v847
  %920 = vst [vmem:[#allocation2 + $0x100] sm:$0xf] %v848
  %921 = vst [vmem:[#allocation2 + $0x104] sm:$0xf] %v849
  %922 = vst [vmem:[#allocation2 + $0x108] sm:$0xf] %v850
  %923 = vst [vmem:[#allocation2 + $0x10c] sm:$0xf] %v851
  %924 = vst [vmem:[#allocation2 + $0x110] sm:$0xf] %v852
  %925 = vst [vmem:[#allocation2 + $0x114] sm:$0xf] %v853
  %926 = vst [vmem:[#allocation2 + $0x118] sm:$0xf] %v854
  %927 = vst [vmem:[#allocation2 + $0x11c] sm:$0xf] %v855
  %928 = vst [vmem:[#allocation2 + $0x120] sm:$0xf] 0
  %929 = vst [vmem:[#allocation2 + $0x124] sm:$0xf] 0
  %930 = vst [vmem:[#allocation2 + $0x128] sm:$0xf] 0
  %931 = vst [vmem:[#allocation2 + $0x12c] sm:$0xf] 0
  %v932 = vld [vmem:[%s10] sm:$0xff]
  %v933 = vld [vmem:[%s10 + $0x8] sm:$0xff]
  %v934 = vld [vmem:[%s10 + $0x10] sm:$0xff]
  %v935 = vld [vmem:[%s10 + $0x18] sm:$0xff]
  %v936 = vld [vmem:[%s10 + $0x20] sm:$0xff]
  %v937 = vld [vmem:[%s10 + $0x28] sm:$0xff]
  %v938 = vld [vmem:[%s10 + $0x30] sm:$0xff]
  %v939 = vld [vmem:[%s10 + $0x38] sm:$0xff]
  %v940 = vld [vmem:[%s10 + $0x40] sm:$0xff]
  %v941 = vld [vmem:[%s10 + $0x48] sm:$0xff]
  %v942 = vld [vmem:[%s10 + $0x50] sm:$0xff]
  %v943 = vld [vmem:[%s10 + $0x58] sm:$0xff]
  %v944 = vld [vmem:[%s10 + $0x60] sm:$0xff]
  %v945 = vld [vmem:[%s10 + $0x68] sm:$0xff]
  %v946 = vld [vmem:[%s10 + $0x70] sm:$0xff]
  %v947 = vld [vmem:[%s10 + $0x78] sm:$0xff]
  %v948 = vld [vmem:[%s11] sm:$0xff]
  %v949 = vld [vmem:[%s11 + $0x8] sm:$0xff]
  %v950 = vld [vmem:[%s11 + $0x10] sm:$0xff]
  %v951 = vld [vmem:[%s11 + $0x18] sm:$0xff]
  %v952 = vld [vmem:[%s11 + $0x20] sm:$0xff]
  %v953 = vld [vmem:[%s11 + $0x28] sm:$0xff]
  %v954 = vld [vmem:[%s11 + $0x30] sm:$0xff]
  %v955 = vld [vmem:[%s11 + $0x38] sm:$0xff]
  %v956 = vld [vmem:[%s11 + $0x40] sm:$0xff]
  %v957 = vld [vmem:[%s11 + $0x48] sm:$0xff]
  %v958 = vld [vmem:[%s11 + $0x50] sm:$0xff]
  %v959 = vld [vmem:[%s11 + $0x58] sm:$0xff]
  %v960 = vld [vmem:[%s11 + $0x60] sm:$0xff]
  %v961 = vld [vmem:[%s11 + $0x68] sm:$0xff]
  %v962 = vld [vmem:[%s11 + $0x70] sm:$0xff]
  %v963 = vld [vmem:[%s11 + $0x78] sm:$0xff]
  %v964 = vld [vmem:[#allocation2 + $0x4] sm:$0x8]
  %v965 = vld [vmem:[#allocation2 + $0x8] sm:$0xf]
  %v966 = vld [vmem:[#allocation2 + $0xc] sm:$0xf]
  %v967 = vld [vmem:[#allocation2 + $0x10] sm:$0xf]
  %v968 = vld [vmem:[#allocation2 + $0x14] sm:$0xf]
  %v969 = vld [vmem:[#allocation2 + $0x18] sm:$0xf]
  %v970 = vld [vmem:[#allocation2 + $0x1c] sm:$0xf]
  %v971 = vld [vmem:[#allocation2 + $0x20] sm:$0xf]
  %v972 = vld [vmem:[#allocation2 + $0x24] sm:$0xf]
  %v973 = vld [vmem:[#allocation2 + $0x28] sm:$0xf]
  %v974 = vld [vmem:[#allocation2 + $0x2c] sm:$0xf]
  %v975 = vld [vmem:[#allocation2 + $0x30] sm:$0xf]
  %v976 = vld [vmem:[#allocation2 + $0x34] sm:$0xf]
  %v977 = vld [vmem:[#allocation2 + $0x38] sm:$0xf]
  %v978 = vld [vmem:[#allocation2 + $0x3c] sm:$0xf]
  %v979 = vld [vmem:[#allocation2 + $0x40] sm:$0xf]
  %v980 = vld [vmem:[#allocation2 + $0x44] sm:$0xf]
  %v981 = vld [vmem:[%s2] sm:$0xf]
  %v982 = vld [vmem:[%s2 + $0x4] sm:$0xf]
  %v983 = vld [vmem:[%s2 + $0x8] sm:$0xf]
  %v984 = vld [vmem:[%s2 + $0xc] sm:$0xf]
  %v985 = vld [vmem:[%s2 + $0x10] sm:$0xf]
  %v986 = vld [vmem:[%s2 + $0x14] sm:$0xf]
  %v987 = vld [vmem:[%s2 + $0x18] sm:$0xf]
  %v988 = vld [vmem:[%s2 + $0x1c] sm:$0xf]
  %v989 = vld [vmem:[%s2 + $0x20] sm:$0xf]
  %v990 = vld [vmem:[%s2 + $0x24] sm:$0xf]
  %v991 = vld [vmem:[%s2 + $0x28] sm:$0xf]
  %v992 = vld [vmem:[%s2 + $0x2c] sm:$0xf]
  %v993 = vld [vmem:[%s2 + $0x30] sm:$0xf]
  %v994 = vld [vmem:[%s2 + $0x34] sm:$0xf]
  %v995 = vld [vmem:[%s2 + $0x38] sm:$0xf]
  %v996 = vld [vmem:[%s2 + $0x3c] sm:$0xf]
  %v997 = vld [vmem:[#allocation2 + $0xc] sm:$0x8]
  %v998 = vld [vmem:[#allocation2 + $0x48] sm:$0xf]
  %v999 = vld [vmem:[#allocation2 + $0x4c] sm:$0xf]
  %s1000 = scalar_lea.vmem %s2, 192
  %v1001 = vld [vmem:[%s1000] sm:$0xf]
  %v1002 = vld [vmem:[%s1000 + $0x4] sm:$0xf]
  %v1003 = vld [vmem:[%s1000 + $0x8] sm:$0xf]
  %v1004 = vld [vmem:[%s1000 + $0xc] sm:$0xf]
  %v1005 = vld [vmem:[%s1000 + $0x10] sm:$0xf]
  %v1006 = vld [vmem:[%s1000 + $0x14] sm:$0xf]
  %v1007 = vld [vmem:[%s1000 + $0x18] sm:$0xf]
  %v1008 = vld [vmem:[%s1000 + $0x1c] sm:$0xf]
  %v1009 = vld [vmem:[%s1000 + $0x20] sm:$0xf]
  %v1010 = vld [vmem:[%s1000 + $0x24] sm:$0xf]
  %v1011 = vld [vmem:[%s1000 + $0x28] sm:$0xf]
  %v1012 = vld [vmem:[%s1000 + $0x2c] sm:$0xf]
  %v1013 = vld [vmem:[%s1000 + $0x30] sm:$0xf]
  %v1014 = vld [vmem:[%s1000 + $0x34] sm:$0xf]
  %v1015 = vld [vmem:[%s1000 + $0x38] sm:$0xf]
  %v1016 = vld [vmem:[%s1000 + $0x3c] sm:$0xf]
  %v1034 = vunpack.c.l.b16 %v997
  %v1035 = vunpack.c.l.b16 %v967
  %v1036 = vunpack.c.l.b16 %v968
  %v1037 = vunpack.c.l.b16 %v969
  %v1038 = vunpack.c.l.b16 %v970
  %v1039 = vunpack.c.l.b16 %v971
  %v1040 = vunpack.c.l.b16 %v972
  %v1041 = vunpack.c.l.b16 %v973
  %v1042 = vunpack.c.l.b16 %v974
  %v1043 = vunpack.c.l.b16 %v975
  %v1044 = vunpack.c.l.b16 %v976
  %v1045 = vunpack.c.l.b16 %v977
  %v1046 = vunpack.c.l.b16 %v978
  %v1047 = vunpack.c.l.b16 %v979
  %v1048 = vunpack.c.l.b16 %v980
  %v1049 = vunpack.c.l.b16 %v998
  %v1050 = vunpack.c.l.b16 %v999
  %v1051 = vpack.c.b16 %v1035, %v1034
  %v1052 = vpack.c.b16 %v1037, %v1036
  %v1053 = vpack.c.b16 %v1039, %v1038
  %v1054 = vpack.c.b16 %v1041, %v1040
  %v1055 = vpack.c.b16 %v1043, %v1042
  %v1056 = vpack.c.b16 %v1045, %v1044
  %v1057 = vpack.c.b16 %v1047, %v1046
  %v1058 = vpack.c.b16 %v1049, %v1048
  %v1059 = vpack.c.b16 %v1050, %v1050
  %vm1060 = vsmask.f32 4352
  %v1062 = vshrl.u32 %v1051, 16
  %v1064 = vrot.slane %v1062, 3
  %v1065 = vshll.u32 %v1051, 16
  %v1067 = vrot.slane %v1065, 4
  %v1068 = vor.u32 %v1064, %v1067
  %v1070 = vshrl.u32 %v1052, 16
  %v1072 = vrot.slane %v1070, 3
  %v1073 = vshll.u32 %v1052, 16
  %v1075 = vrot.slane %v1073, 4
  %v1076 = vor.u32 %v1072, %v1075
  %v1077 = vsel %vm1060, %v1068, %v1076
  %v1079 = vshrl.u32 %v1053, 16
  %v1081 = vrot.slane %v1079, 3
  %v1082 = vshll.u32 %v1053, 16
  %v1084 = vrot.slane %v1082, 4
  %v1085 = vor.u32 %v1081, %v1084
  %v1086 = vsel %vm1060, %v1076, %v1085
  %v1088 = vshrl.u32 %v1054, 16
  %v1090 = vrot.slane %v1088, 3
  %v1091 = vshll.u32 %v1054, 16
  %v1093 = vrot.slane %v1091, 4
  %v1094 = vor.u32 %v1090, %v1093
  %v1095 = vsel %vm1060, %v1085, %v1094
  %v1097 = vshrl.u32 %v1055, 16
  %v1099 = vrot.slane %v1097, 3
  %v1100 = vshll.u32 %v1055, 16
  %v1102 = vrot.slane %v1100, 4
  %v1103 = vor.u32 %v1099, %v1102
  %v1104 = vsel %vm1060, %v1094, %v1103
  %v1106 = vshrl.u32 %v1056, 16
  %v1108 = vrot.slane %v1106, 3
  %v1109 = vshll.u32 %v1056, 16
  %v1111 = vrot.slane %v1109, 4
  %v1112 = vor.u32 %v1108, %v1111
  %v1113 = vsel %vm1060, %v1103, %v1112
  %v1115 = vshrl.u32 %v1057, 16
  %v1117 = vrot.slane %v1115, 3
  %v1118 = vshll.u32 %v1057, 16
  %v1120 = vrot.slane %v1118, 4
  %v1121 = vor.u32 %v1117, %v1120
  %v1122 = vsel %vm1060, %v1112, %v1121
  %v1124 = vshrl.u32 %v1058, 16
  %v1126 = vrot.slane %v1124, 3
  %v1127 = vshll.u32 %v1058, 16
  %v1129 = vrot.slane %v1127, 4
  %v1130 = vor.u32 %v1126, %v1129
  %v1131 = vsel %vm1060, %v1121, %v1130
  %v1133 = vshrl.u32 %v1059, 16
  %v1135 = vrot.slane %v1133, 3
  %v1136 = vshll.u32 %v1059, 16
  %v1138 = vrot.slane %v1136, 4
  %v1139 = vor.u32 %v1135, %v1138
  %v1140 = vsel %vm1060, %v1130, %v1139
  %v1165 = vunpack.c.l.b16 %v1001
  %v1166 = vunpack.c.l.b16 %v1002
  %v1167 = vunpack.c.l.b16 %v1003
  %v1168 = vunpack.c.l.b16 %v1004
  %v1169 = vunpack.c.l.b16 %v1005
  %v1170 = vunpack.c.l.b16 %v1006
  %v1171 = vunpack.c.l.b16 %v1007
  %v1172 = vunpack.c.l.b16 %v1008
  %v1173 = vunpack.c.l.b16 %v1009
  %v1174 = vunpack.c.l.b16 %v1010
  %v1175 = vunpack.c.l.b16 %v1011
  %v1176 = vunpack.c.l.b16 %v1012
  %v1177 = vunpack.c.l.b16 %v1013
  %v1178 = vunpack.c.l.b16 %v1014
  %v1179 = vunpack.c.l.b16 %v1015
  %v1180 = vunpack.c.l.b16 %v1016
  %v1181 = vpack.c.b16 %v1166, %v1165
  %v1182 = vpack.c.b16 %v1168, %v1167
  %v1183 = vpack.c.b16 %v1170, %v1169
  %v1184 = vpack.c.b16 %v1172, %v1171
  %v1185 = vpack.c.b16 %v1174, %v1173
  %v1186 = vpack.c.b16 %v1176, %v1175
  %v1187 = vpack.c.b16 %v1178, %v1177
  %v1188 = vpack.c.b16 %v1180, %v1179
  %1197 = vmatpush.bf16.msra.mxu0 %v1188
  %1198 = vmatpush.bf16.msra.mxu0 %v1187
  %1199 = vmatpush.bf16.msra.mxu0 %v1186
  %1200 = vmatpush.bf16.msra.mxu0 %v1185
  %1201 = vmatpush.bf16.msra.mxu0 %v1184
  %1202 = vmatpush.bf16.msra.mxu0 %v1183
  %1203 = vmatpush.bf16.msra.mxu0 %v1182
  %1204 = vmatpush.bf16.msra.mxu0 %v1181
  %1205 = vmatmul.bf16.gmra.mxu0 %v1077
  %v1206 = vpop.f32.mrf.mxu0
  %v1207 = vadd.f32 0.0, %v1206
  %v1208 = vpop.f32.mrf.mxu0
  %v1209 = vadd.f32 0.0, %v1208
  %1210 = vmatmul.bf16.gmra.mxu0 %v1086
  %v1211 = vpop.f32.mrf.mxu0
  %v1212 = vadd.f32 0.0, %v1211
  %v1213 = vpop.f32.mrf.mxu0
  %v1214 = vadd.f32 0.0, %v1213
  %1215 = vmatmul.bf16.gmra.mxu0 %v1095
  %v1216 = vpop.f32.mrf.mxu0
  %v1217 = vadd.f32 0.0, %v1216
  %v1218 = vpop.f32.mrf.mxu0
  %v1219 = vadd.f32 0.0, %v1218
  %1220 = vmatmul.bf16.gmra.mxu0 %v1104
  %v1221 = vpop.f32.mrf.mxu0
  %v1222 = vadd.f32 0.0, %v1221
  %v1223 = vpop.f32.mrf.mxu0
  %v1224 = vadd.f32 0.0, %v1223
  %1225 = vmatmul.bf16.gmra.mxu0 %v1113
  %v1226 = vpop.f32.mrf.mxu0
  %v1227 = vadd.f32 0.0, %v1226
  %v1228 = vpop.f32.mrf.mxu0
  %v1229 = vadd.f32 0.0, %v1228
  %1230 = vmatmul.bf16.gmra.mxu0 %v1122
  %v1231 = vpop.f32.mrf.mxu0
  %v1232 = vadd.f32 0.0, %v1231
  %v1233 = vpop.f32.mrf.mxu0
  %v1234 = vadd.f32 0.0, %v1233
  %1235 = vmatmul.bf16.gmra.mxu0 %v1131
  %v1236 = vpop.f32.mrf.mxu0
  %v1237 = vadd.f32 0.0, %v1236
  %v1238 = vpop.f32.mrf.mxu0
  %v1239 = vadd.f32 0.0, %v1238
  %1240 = vmatmul.bf16.gmra.mxu0 %v1140
  %v1241 = vpop.f32.mrf.mxu0
  %v1242 = vadd.f32 0.0, %v1241
  %v1243 = vpop.f32.mrf.mxu0
  %v1244 = vadd.f32 0.0, %v1243
  %1245 = vdwg.mxu0
  %v1249 = vunpack.c.l.b16 %v964
  %v1250 = vunpack.c.l.b16 %v965
  %v1251 = vunpack.c.l.b16 %v966
  %v1252 = vpack.c.b16 %v1250, %v1249
  %v1253 = vpack.c.b16 %v1035, %v1251
  %v1254 = vpack.c.b16 %v1048, %v1048
  %v1256 = vshrl.u32 %v1252, 16
  %v1258 = vrot.slane %v1256, 3
  %v1259 = vshll.u32 %v1252, 16
  %v1261 = vrot.slane %v1259, 4
  %v1262 = vor.u32 %v1258, %v1261
  %v1264 = vshrl.u32 %v1253, 16
  %v1266 = vrot.slane %v1264, 3
  %v1267 = vshll.u32 %v1253, 16
  %v1269 = vrot.slane %v1267, 4
  %v1270 = vor.u32 %v1266, %v1269
  %v1271 = vsel %vm1060, %v1262, %v1270
  %v1272 = vsel %vm1060, %v1270, %v1076
  %v1274 = vshrl.u32 %v1254, 16
  %v1276 = vrot.slane %v1274, 3
  %v1277 = vshll.u32 %v1254, 16
  %v1279 = vrot.slane %v1277, 4
  %v1280 = vor.u32 %v1276, %v1279
  %v1281 = vsel %vm1060, %v1121, %v1280
  %v1301 = vunpack.c.l.b16 %v981
  %v1302 = vunpack.c.l.b16 %v982
  %v1303 = vunpack.c.l.b16 %v983
  %v1304 = vunpack.c.l.b16 %v984
  %v1305 = vunpack.c.l.b16 %v985
  %v1306 = vunpack.c.l.b16 %v986
  %v1307 = vunpack.c.l.b16 %v987
  %v1308 = vunpack.c.l.b16 %v988
  %v1309 = vunpack.c.l.b16 %v989
  %v1310 = vunpack.c.l.b16 %v990
  %v1311 = vunpack.c.l.b16 %v991
  %v1312 = vunpack.c.l.b16 %v992
  %v1313 = vunpack.c.l.b16 %v993
  %v1314 = vunpack.c.l.b16 %v994
  %v1315 = vunpack.c.l.b16 %v995
  %v1316 = vunpack.c.l.b16 %v996
  %v1317 = vpack.c.b16 %v1302, %v1301
  %v1318 = vpack.c.b16 %v1304, %v1303
  %v1319 = vpack.c.b16 %v1306, %v1305
  %v1320 = vpack.c.b16 %v1308, %v1307
  %v1321 = vpack.c.b16 %v1310, %v1309
  %v1322 = vpack.c.b16 %v1312, %v1311
  %v1323 = vpack.c.b16 %v1314, %v1313
  %v1324 = vpack.c.b16 %v1316, %v1315
  %1333 = vmatpush.bf16.msra.mxu0 %v1324
  %1334 = vmatpush.bf16.msra.mxu0 %v1323
  %1335 = vmatpush.bf16.msra.mxu0 %v1322
  %1336 = vmatpush.bf16.msra.mxu0 %v1321
  %1337 = vmatpush.bf16.msra.mxu0 %v1320
  %1338 = vmatpush.bf16.msra.mxu0 %v1319
  %1339 = vmatpush.bf16.msra.mxu0 %v1318
  %1340 = vmatpush.bf16.msra.mxu0 %v1317
  %1341 = vmatmul.bf16.gmra.mxu0 %v1271
  %v1342 = vpop.f32.mrf.mxu0
  %v1343 = vadd.f32 %v1207, %v1342
  %v1344 = vpop.f32.mrf.mxu0
  %v1345 = vadd.f32 %v1209, %v1344
  %1346 = vmatmul.bf16.gmra.mxu0 %v1272
  %v1347 = vpop.f32.mrf.mxu0
  %v1348 = vadd.f32 %v1212, %v1347
  %v1349 = vpop.f32.mrf.mxu0
  %v1350 = vadd.f32 %v1214, %v1349
  %1351 = vmatmul.bf16.gmra.mxu0 %v1086
  %v1352 = vpop.f32.mrf.mxu0
  %v1353 = vadd.f32 %v1217, %v1352
  %v1354 = vpop.f32.mrf.mxu0
  %v1355 = vadd.f32 %v1219, %v1354
  %1356 = vmatmul.bf16.gmra.mxu0 %v1095
  %v1357 = vpop.f32.mrf.mxu0
  %v1358 = vadd.f32 %v1222, %v1357
  %v1359 = vpop.f32.mrf.mxu0
  %v1360 = vadd.f32 %v1224, %v1359
  %1361 = vmatmul.bf16.gmra.mxu0 %v1104
  %v1362 = vpop.f32.mrf.mxu0
  %v1363 = vadd.f32 %v1227, %v1362
  %v1364 = vpop.f32.mrf.mxu0
  %v1365 = vadd.f32 %v1229, %v1364
  %1366 = vmatmul.bf16.gmra.mxu0 %v1113
  %v1367 = vpop.f32.mrf.mxu0
  %v1368 = vadd.f32 %v1232, %v1367
  %v1369 = vpop.f32.mrf.mxu0
  %v1370 = vadd.f32 %v1234, %v1369
  %1371 = vmatmul.bf16.gmra.mxu0 %v1122
  %v1372 = vpop.f32.mrf.mxu0
  %v1373 = vadd.f32 %v1237, %v1372
  %v1374 = vpop.f32.mrf.mxu0
  %v1375 = vadd.f32 %v1239, %v1374
  %1376 = vmatmul.bf16.gmra.mxu0 %v1281
  %v1377 = vpop.f32.mrf.mxu0
  %v1378 = vadd.f32 %v1242, %v1377
  %v1379 = vpop.f32.mrf.mxu0
  %v1380 = vadd.f32 %v1244, %v1379
  %1381 = vdwg.mxu0
  %v1382 = vld [vmem:[#allocation2 + $0x14] sm:$0x8]
  %v1383 = vld [vmem:[#allocation2 + $0x18] sm:$0xf]
  %v1384 = vld [vmem:[#allocation2 + $0x1c] sm:$0xf]
  %v1385 = vld [vmem:[#allocation2 + $0x20] sm:$0xf]
  %v1386 = vld [vmem:[#allocation2 + $0x24] sm:$0xf]
  %v1387 = vld [vmem:[#allocation2 + $0x28] sm:$0xf]
  %v1388 = vld [vmem:[#allocation2 + $0x2c] sm:$0xf]
  %v1389 = vld [vmem:[#allocation2 + $0x30] sm:$0xf]
  %v1390 = vld [vmem:[#allocation2 + $0x34] sm:$0xf]
  %v1391 = vld [vmem:[#allocation2 + $0x38] sm:$0xf]
  %v1392 = vld [vmem:[#allocation2 + $0x3c] sm:$0xf]
  %v1393 = vld [vmem:[#allocation2 + $0x40] sm:$0xf]
  %v1394 = vld [vmem:[#allocation2 + $0x44] sm:$0xf]
  %v1395 = vld [vmem:[#allocation2 + $0x48] sm:$0xf]
  %v1396 = vld [vmem:[#allocation2 + $0x4c] sm:$0xf]
  %v1397 = vld [vmem:[#allocation2 + $0x50] sm:$0xf]
  %v1398 = vld [vmem:[#allocation2 + $0x54] sm:$0xf]
  %s1399 = scalar_lea.vmem %s2, 384
  %v1400 = vld [vmem:[%s1399] sm:$0xf]
  %v1401 = vld [vmem:[%s1399 + $0x4] sm:$0xf]
  %v1402 = vld [vmem:[%s1399 + $0x8] sm:$0xf]
  %v1403 = vld [vmem:[%s1399 + $0xc] sm:$0xf]
  %v1404 = vld [vmem:[%s1399 + $0x10] sm:$0xf]
  %v1405 = vld [vmem:[%s1399 + $0x14] sm:$0xf]
  %v1406 = vld [vmem:[%s1399 + $0x18] sm:$0xf]
  %v1407 = vld [vmem:[%s1399 + $0x1c] sm:$0xf]
  %v1408 = vld [vmem:[%s1399 + $0x20] sm:$0xf]
  %v1409 = vld [vmem:[%s1399 + $0x24] sm:$0xf]
  %v1410 = vld [vmem:[%s1399 + $0x28] sm:$0xf]
  %v1411 = vld [vmem:[%s1399 + $0x2c] sm:$0xf]
  %v1412 = vld [vmem:[%s1399 + $0x30] sm:$0xf]
  %v1413 = vld [vmem:[%s1399 + $0x34] sm:$0xf]
  %v1414 = vld [vmem:[%s1399 + $0x38] sm:$0xf]
  %v1415 = vld [vmem:[%s1399 + $0x3c] sm:$0xf]
  %v1433 = vunpack.c.l.b16 %v1382
  %v1434 = vunpack.c.l.b16 %v1383
  %v1435 = vunpack.c.l.b16 %v1384
  %v1436 = vunpack.c.l.b16 %v1385
  %v1437 = vunpack.c.l.b16 %v1386
  %v1438 = vunpack.c.l.b16 %v1387
  %v1439 = vunpack.c.l.b16 %v1388
  %v1440 = vunpack.c.l.b16 %v1389
  %v1441 = vunpack.c.l.b16 %v1390
  %v1442 = vunpack.c.l.b16 %v1391
  %v1443 = vunpack.c.l.b16 %v1392
  %v1444 = vunpack.c.l.b16 %v1393
  %v1445 = vunpack.c.l.b16 %v1394
  %v1446 = vunpack.c.l.b16 %v1395
  %v1447 = vunpack.c.l.b16 %v1396
  %v1448 = vunpack.c.l.b16 %v1397
  %v1449 = vunpack.c.l.b16 %v1398
  %v1450 = vpack.c.b16 %v1434, %v1433
  %v1451 = vpack.c.b16 %v1436, %v1435
  %v1452 = vpack.c.b16 %v1438, %v1437
  %v1453 = vpack.c.b16 %v1440, %v1439
  %v1454 = vpack.c.b16 %v1442, %v1441
  %v1455 = vpack.c.b16 %v1444, %v1443
  %v1456 = vpack.c.b16 %v1446, %v1445
  %v1457 = vpack.c.b16 %v1448, %v1447
  %v1458 = vpack.c.b16 %v1449, %v1449
  %v1460 = vshrl.u32 %v1450, 16
  %v1462 = vrot.slane %v1460, 3
  %v1463 = vshll.u32 %v1450, 16
  %v1465 = vrot.slane %v1463, 4
  %v1466 = vor.u32 %v1462, %v1465
  %v1468 = vshrl.u32 %v1451, 16
  %v1470 = vrot.slane %v1468, 3
  %v1471 = vshll.u32 %v1451, 16
  %v1473 = vrot.slane %v1471, 4
  %v1474 = vor.u32 %v1470, %v1473
  %v1475 = vsel %vm1060, %v1466, %v1474
  %v1477 = vshrl.u32 %v1452, 16
  %v1479 = vrot.slane %v1477, 3
  %v1480 = vshll.u32 %v1452, 16
  %v1482 = vrot.slane %v1480, 4
  %v1483 = vor.u32 %v1479, %v1482
  %v1484 = vsel %vm1060, %v1474, %v1483
  %v1486 = vshrl.u32 %v1453, 16
  %v1488 = vrot.slane %v1486, 3
  %v1489 = vshll.u32 %v1453, 16
  %v1491 = vrot.slane %v1489, 4
  %v1492 = vor.u32 %v1488, %v1491
  %v1493 = vsel %vm1060, %v1483, %v1492
  %v1495 = vshrl.u32 %v1454, 16
  %v1497 = vrot.slane %v1495, 3
  %v1498 = vshll.u32 %v1454, 16
  %v1500 = vrot.slane %v1498, 4
  %v1501 = vor.u32 %v1497, %v1500
  %v1502 = vsel %vm1060, %v1492, %v1501
  %v1504 = vshrl.u32 %v1455, 16
  %v1506 = vrot.slane %v1504, 3
  %v1507 = vshll.u32 %v1455, 16
  %v1509 = vrot.slane %v1507, 4
  %v1510 = vor.u32 %v1506, %v1509
  %v1511 = vsel %vm1060, %v1501, %v1510
  %v1513 = vshrl.u32 %v1456, 16
  %v1515 = vrot.slane %v1513, 3
  %v1516 = vshll.u32 %v1456, 16
  %v1518 = vrot.slane %v1516, 4
  %v1519 = vor.u32 %v1515, %v1518
  %v1520 = vsel %vm1060, %v1510, %v1519
  %v1522 = vshrl.u32 %v1457, 16
  %v1524 = vrot.slane %v1522, 3
  %v1525 = vshll.u32 %v1457, 16
  %v1527 = vrot.slane %v1525, 4
  %v1528 = vor.u32 %v1524, %v1527
  %v1529 = vsel %vm1060, %v1519, %v1528
  %v1531 = vshrl.u32 %v1458, 16
  %v1533 = vrot.slane %v1531, 3
  %v1534 = vshll.u32 %v1458, 16
  %v1536 = vrot.slane %v1534, 4
  %v1537 = vor.u32 %v1533, %v1536
  %v1538 = vsel %vm1060, %v1528, %v1537
  %v1563 = vunpack.c.l.b16 %v1400
  %v1564 = vunpack.c.l.b16 %v1401
  %v1565 = vunpack.c.l.b16 %v1402
  %v1566 = vunpack.c.l.b16 %v1403
  %v1567 = vunpack.c.l.b16 %v1404
  %v1568 = vunpack.c.l.b16 %v1405
  %v1569 = vunpack.c.l.b16 %v1406
  %v1570 = vunpack.c.l.b16 %v1407
  %v1571 = vunpack.c.l.b16 %v1408
  %v1572 = vunpack.c.l.b16 %v1409
  %v1573 = vunpack.c.l.b16 %v1410
  %v1574 = vunpack.c.l.b16 %v1411
  %v1575 = vunpack.c.l.b16 %v1412
  %v1576 = vunpack.c.l.b16 %v1413
  %v1577 = vunpack.c.l.b16 %v1414
  %v1578 = vunpack.c.l.b16 %v1415
  %v1579 = vpack.c.b16 %v1564, %v1563
  %v1580 = vpack.c.b16 %v1566, %v1565
  %v1581 = vpack.c.b16 %v1568, %v1567
  %v1582 = vpack.c.b16 %v1570, %v1569
  %v1583 = vpack.c.b16 %v1572, %v1571
  %v1584 = vpack.c.b16 %v1574, %v1573
  %v1585 = vpack.c.b16 %v1576, %v1575
  %v1586 = vpack.c.b16 %v1578, %v1577
  %1595 = vmatpush.bf16.msra.mxu0 %v1586
  %1596 = vmatpush.bf16.msra.mxu0 %v1585
  %1597 = vmatpush.bf16.msra.mxu0 %v1584
  %1598 = vmatpush.bf16.msra.mxu0 %v1583
  %1599 = vmatpush.bf16.msra.mxu0 %v1582
  %1600 = vmatpush.bf16.msra.mxu0 %v1581
  %1601 = vmatpush.bf16.msra.mxu0 %v1580
  %1602 = vmatpush.bf16.msra.mxu0 %v1579
  %1603 = vmatmul.bf16.gmra.mxu0 %v1475
  %v1604 = vpop.f32.mrf.mxu0
  %v1605 = vadd.f32 0.0, %v1604
  %v1606 = vpop.f32.mrf.mxu0
  %v1607 = vadd.f32 0.0, %v1606
  %1608 = vmatmul.bf16.gmra.mxu0 %v1484
  %v1609 = vpop.f32.mrf.mxu0
  %v1610 = vadd.f32 0.0, %v1609
  %v1611 = vpop.f32.mrf.mxu0
  %v1612 = vadd.f32 0.0, %v1611
  %1613 = vmatmul.bf16.gmra.mxu0 %v1493
  %v1614 = vpop.f32.mrf.mxu0
  %v1615 = vadd.f32 0.0, %v1614
  %v1616 = vpop.f32.mrf.mxu0
  %v1617 = vadd.f32 0.0, %v1616
  %1618 = vmatmul.bf16.gmra.mxu0 %v1502
  %v1619 = vpop.f32.mrf.mxu0
  %v1620 = vadd.f32 0.0, %v1619
  %v1621 = vpop.f32.mrf.mxu0
  %v1622 = vadd.f32 0.0, %v1621
  %1623 = vmatmul.bf16.gmra.mxu0 %v1511
  %v1624 = vpop.f32.mrf.mxu0
  %v1625 = vadd.f32 0.0, %v1624
  %v1626 = vpop.f32.mrf.mxu0
  %v1627 = vadd.f32 0.0, %v1626
  %1628 = vmatmul.bf16.gmra.mxu0 %v1520
  %v1629 = vpop.f32.mrf.mxu0
  %v1630 = vadd.f32 0.0, %v1629
  %v1631 = vpop.f32.mrf.mxu0
  %v1632 = vadd.f32 0.0, %v1631
  %1633 = vmatmul.bf16.gmra.mxu0 %v1529
  %v1634 = vpop.f32.mrf.mxu0
  %v1635 = vadd.f32 0.0, %v1634
  %v1636 = vpop.f32.mrf.mxu0
  %v1637 = vadd.f32 0.0, %v1636
  %1638 = vmatmul.bf16.gmra.mxu0 %v1538
  %v1639 = vpop.f32.mrf.mxu0
  %v1640 = vadd.f32 0.0, %v1639
  %v1641 = vpop.f32.mrf.mxu0
  %v1642 = vadd.f32 0.0, %v1641
  %1643 = vdwg.mxu0
  %v1644 = vadd.f32 %v1343, %v1605
  %v1645 = vadd.f32 %v1345, %v1607
  %v1646 = vadd.f32 %v1348, %v1610
  %v1647 = vadd.f32 %v1350, %v1612
  %v1648 = vadd.f32 %v1353, %v1615
  %v1649 = vadd.f32 %v1355, %v1617
  %v1650 = vadd.f32 %v1358, %v1620
  %v1651 = vadd.f32 %v1360, %v1622
  %v1652 = vadd.f32 %v1363, %v1625
  %v1653 = vadd.f32 %v1365, %v1627
  %v1654 = vadd.f32 %v1368, %v1630
  %v1655 = vadd.f32 %v1370, %v1632
  %v1656 = vadd.f32 %v1373, %v1635
  %v1657 = vadd.f32 %v1375, %v1637
  %v1658 = vadd.f32 %v1378, %v1640
  %v1659 = vadd.f32 %v1380, %v1642
  %1661 = vset.pattern.permute.xlu0 0
  %1662 = vperm.xlu0 %1661, %v932
  %v1663 = vpop.permute.xlu0 %1662
  %1666 = vset.pattern.permute.xlu0 0
  %1667 = vperm.xlu0 %1666, %v933
  %v1668 = vpop.permute.xlu0 %1667
  %1671 = vset.pattern.permute.xlu0 0
  %1672 = vperm.xlu0 %1671, %v934
  %v1673 = vpop.permute.xlu0 %1672
  %1676 = vset.pattern.permute.xlu0 0
  %1677 = vperm.xlu0 %1676, %v935
  %v1678 = vpop.permute.xlu0 %1677
  %1681 = vset.pattern.permute.xlu0 0
  %1682 = vperm.xlu0 %1681, %v936
  %v1683 = vpop.permute.xlu0 %1682
  %1686 = vset.pattern.permute.xlu0 0
  %1687 = vperm.xlu0 %1686, %v937
  %v1688 = vpop.permute.xlu0 %1687
  %1691 = vset.pattern.permute.xlu0 0
  %1692 = vperm.xlu0 %1691, %v938
  %v1693 = vpop.permute.xlu0 %1692
  %1696 = vset.pattern.permute.xlu0 0
  %1697 = vperm.xlu0 %1696, %v939
  %v1698 = vpop.permute.xlu0 %1697
  %1701 = vset.pattern.permute.xlu0 0
  %1702 = vperm.xlu0 %1701, %v940
  %v1703 = vpop.permute.xlu0 %1702
  %1706 = vset.pattern.permute.xlu0 0
  %1707 = vperm.xlu0 %1706, %v941
  %v1708 = vpop.permute.xlu0 %1707
  %1711 = vset.pattern.permute.xlu0 0
  %1712 = vperm.xlu0 %1711, %v942
  %v1713 = vpop.permute.xlu0 %1712
  %1716 = vset.pattern.permute.xlu0 0
  %1717 = vperm.xlu0 %1716, %v943
  %v1718 = vpop.permute.xlu0 %1717
  %1721 = vset.pattern.permute.xlu0 0
  %1722 = vperm.xlu0 %1721, %v944
  %v1723 = vpop.permute.xlu0 %1722
  %1726 = vset.pattern.permute.xlu0 0
  %1727 = vperm.xlu0 %1726, %v945
  %v1728 = vpop.permute.xlu0 %1727
  %1731 = vset.pattern.permute.xlu0 0
  %1732 = vperm.xlu0 %1731, %v946
  %v1733 = vpop.permute.xlu0 %1732
  %1736 = vset.pattern.permute.xlu0 0
  %1737 = vperm.xlu0 %1736, %v947
  %v1738 = vpop.permute.xlu0 %1737
  %v1740 = vmul.f32 %v1644, %v1663
  %v1741 = vmul.f32 %v1645, %v1668
  %v1742 = vmul.f32 %v1646, %v1673
  %v1743 = vmul.f32 %v1647, %v1678
  %v1744 = vmul.f32 %v1648, %v1683
  %v1745 = vmul.f32 %v1649, %v1688
  %v1746 = vmul.f32 %v1650, %v1693
  %v1747 = vmul.f32 %v1651, %v1698
  %v1748 = vmul.f32 %v1652, %v1703
  %v1749 = vmul.f32 %v1653, %v1708
  %v1750 = vmul.f32 %v1654, %v1713
  %v1751 = vmul.f32 %v1655, %v1718
  %v1752 = vmul.f32 %v1656, %v1723
  %v1753 = vmul.f32 %v1657, %v1728
  %v1754 = vmul.f32 %v1658, %v1733
  %v1755 = vmul.f32 %v1659, %v1738
  %v1756 = vld [vmem:[#allocation2 + $0x8] sm:$0xf]
  %v1757 = vld [vmem:[#allocation2 + $0xc] sm:$0xf]
  %v1758 = vld [vmem:[#allocation2 + $0x10] sm:$0xf]
  %v1759 = vld [vmem:[#allocation2 + $0x14] sm:$0xf]
  %v1760 = vld [vmem:[#allocation2 + $0x18] sm:$0xf]
  %v1761 = vld [vmem:[#allocation2 + $0x1c] sm:$0xf]
  %v1762 = vld [vmem:[#allocation2 + $0x20] sm:$0xf]
  %v1763 = vld [vmem:[#allocation2 + $0x24] sm:$0xf]
  %v1764 = vld [vmem:[#allocation2 + $0x28] sm:$0xf]
  %v1765 = vld [vmem:[#allocation2 + $0x2c] sm:$0xf]
  %v1766 = vld [vmem:[#allocation2 + $0x30] sm:$0xf]
  %v1767 = vld [vmem:[#allocation2 + $0x34] sm:$0xf]
  %v1768 = vld [vmem:[#allocation2 + $0x38] sm:$0xf]
  %v1769 = vld [vmem:[#allocation2 + $0x3c] sm:$0xf]
  %v1770 = vld [vmem:[#allocation2 + $0x40] sm:$0xf]
  %v1771 = vld [vmem:[#allocation2 + $0x44] sm:$0xf]
  %v1772 = vld [vmem:[#allocation2 + $0x48] sm:$0x1]
  %s1773 = scalar_lea.vmem %s2, 128
  %v1774 = vld [vmem:[%s1773] sm:$0xf]
  %v1775 = vld [vmem:[%s1773 + $0x4] sm:$0xf]
  %v1776 = vld [vmem:[%s1773 + $0x8] sm:$0xf]
  %v1777 = vld [vmem:[%s1773 + $0xc] sm:$0xf]
  %v1778 = vld [vmem:[%s1773 + $0x10] sm:$0xf]
  %v1779 = vld [vmem:[%s1773 + $0x14] sm:$0xf]
  %v1780 = vld [vmem:[%s1773 + $0x18] sm:$0xf]
  %v1781 = vld [vmem:[%s1773 + $0x1c] sm:$0xf]
  %v1782 = vld [vmem:[%s1773 + $0x20] sm:$0xf]
  %v1783 = vld [vmem:[%s1773 + $0x24] sm:$0xf]
  %v1784 = vld [vmem:[%s1773 + $0x28] sm:$0xf]
  %v1785 = vld [vmem:[%s1773 + $0x2c] sm:$0xf]
  %v1786 = vld [vmem:[%s1773 + $0x30] sm:$0xf]
  %v1787 = vld [vmem:[%s1773 + $0x34] sm:$0xf]
  %v1788 = vld [vmem:[%s1773 + $0x38] sm:$0xf]
  %v1789 = vld [vmem:[%s1773 + $0x3c] sm:$0xf]
  %v1790 = vld [vmem:[#allocation2 + $0x48] sm:$0xf]
  %v1791 = vld [vmem:[#allocation2 + $0x4c] sm:$0xf]
  %v1792 = vld [vmem:[#allocation2 + $0x50] sm:$0x1]
  %s1793 = scalar_lea.vmem %s2, 320
  %v1794 = vld [vmem:[%s1793] sm:$0xf]
  %v1795 = vld [vmem:[%s1793 + $0x4] sm:$0xf]
  %v1796 = vld [vmem:[%s1793 + $0x8] sm:$0xf]
  %v1797 = vld [vmem:[%s1793 + $0xc] sm:$0xf]
  %v1798 = vld [vmem:[%s1793 + $0x10] sm:$0xf]
  %v1799 = vld [vmem:[%s1793 + $0x14] sm:$0xf]
  %v1800 = vld [vmem:[%s1793 + $0x18] sm:$0xf]
  %v1801 = vld [vmem:[%s1793 + $0x1c] sm:$0xf]
  %v1802 = vld [vmem:[%s1793 + $0x20] sm:$0xf]
  %v1803 = vld [vmem:[%s1793 + $0x24] sm:$0xf]
  %v1804 = vld [vmem:[%s1793 + $0x28] sm:$0xf]
  %v1805 = vld [vmem:[%s1793 + $0x2c] sm:$0xf]
  %v1806 = vld [vmem:[%s1793 + $0x30] sm:$0xf]
  %v1807 = vld [vmem:[%s1793 + $0x34] sm:$0xf]
  %v1808 = vld [vmem:[%s1793 + $0x38] sm:$0xf]
  %v1809 = vld [vmem:[%s1793 + $0x3c] sm:$0xf]
  %v1827 = vunpack.c.l.b16 %v1758
  %v1828 = vunpack.c.l.b16 %v1759
  %v1829 = vunpack.c.l.b16 %v1760
  %v1830 = vunpack.c.l.b16 %v1761
  %v1831 = vunpack.c.l.b16 %v1762
  %v1832 = vunpack.c.l.b16 %v1763
  %v1833 = vunpack.c.l.b16 %v1764
  %v1834 = vunpack.c.l.b16 %v1765
  %v1835 = vunpack.c.l.b16 %v1766
  %v1836 = vunpack.c.l.b16 %v1767
  %v1837 = vunpack.c.l.b16 %v1768
  %v1838 = vunpack.c.l.b16 %v1769
  %v1839 = vunpack.c.l.b16 %v1770
  %v1840 = vunpack.c.l.b16 %v1771
  %v1841 = vunpack.c.l.b16 %v1790
  %v1842 = vunpack.c.l.b16 %v1791
  %v1843 = vunpack.c.l.b16 %v1792
  %v1844 = vpack.c.b16 %v1828, %v1827
  %v1845 = vpack.c.b16 %v1830, %v1829
  %v1846 = vpack.c.b16 %v1832, %v1831
  %v1847 = vpack.c.b16 %v1834, %v1833
  %v1848 = vpack.c.b16 %v1836, %v1835
  %v1849 = vpack.c.b16 %v1838, %v1837
  %v1850 = vpack.c.b16 %v1840, %v1839
  %v1851 = vpack.c.b16 %v1842, %v1841
  %v1852 = vpack.c.b16 %v1843, %v1843
  %vm1853 = vsmask.f32 7424
  %v1855 = vshrl.u32 %v1844, 16
  %v1857 = vshll.u32 %v1844, 16
  %v1859 = vrot.slane %v1857, 1
  %v1860 = vor.u32 %v1855, %v1859
  %v1862 = vshll.u32 %v1845, 16
  %v1864 = vrot.slane %v1862, 1
  %v1865 = vsel %vm1853, %v1860, %v1864
  %v1866 = vshrl.u32 %v1845, 16
  %v1868 = vor.u32 %v1866, %v1864
  %v1870 = vshll.u32 %v1846, 16
  %v1872 = vrot.slane %v1870, 1
  %v1873 = vsel %vm1853, %v1868, %v1872
  %v1874 = vshrl.u32 %v1846, 16
  %v1876 = vor.u32 %v1874, %v1872
  %v1878 = vshll.u32 %v1847, 16
  %v1880 = vrot.slane %v1878, 1
  %v1881 = vsel %vm1853, %v1876, %v1880
  %v1882 = vshrl.u32 %v1847, 16
  %v1884 = vor.u32 %v1882, %v1880
  %v1886 = vshll.u32 %v1848, 16
  %v1888 = vrot.slane %v1886, 1
  %v1889 = vsel %vm1853, %v1884, %v1888
  %v1890 = vshrl.u32 %v1848, 16
  %v1892 = vor.u32 %v1890, %v1888
  %v1894 = vshll.u32 %v1849, 16
  %v1896 = vrot.slane %v1894, 1
  %v1897 = vsel %vm1853, %v1892, %v1896
  %v1898 = vshrl.u32 %v1849, 16
  %v1900 = vor.u32 %v1898, %v1896
  %v1902 = vshll.u32 %v1850, 16
  %v1904 = vrot.slane %v1902, 1
  %v1905 = vsel %vm1853, %v1900, %v1904
  %v1906 = vshrl.u32 %v1850, 16
  %v1908 = vor.u32 %v1906, %v1904
  %v1910 = vshll.u32 %v1851, 16
  %v1912 = vrot.slane %v1910, 1
  %v1913 = vsel %vm1853, %v1908, %v1912
  %v1914 = vshrl.u32 %v1851, 16
  %v1916 = vor.u32 %v1914, %v1912
  %v1918 = vshll.u32 %v1852, 16
  %v1920 = vrot.slane %v1918, 1
  %v1921 = vsel %vm1853, %v1916, %v1920
  %v1946 = vunpack.c.l.b16 %v1794
  %v1947 = vunpack.c.l.b16 %v1795
  %v1948 = vunpack.c.l.b16 %v1796
  %v1949 = vunpack.c.l.b16 %v1797
  %v1950 = vunpack.c.l.b16 %v1798
  %v1951 = vunpack.c.l.b16 %v1799
  %v1952 = vunpack.c.l.b16 %v1800
  %v1953 = vunpack.c.l.b16 %v1801
  %v1954 = vunpack.c.l.b16 %v1802
  %v1955 = vunpack.c.l.b16 %v1803
  %v1956 = vunpack.c.l.b16 %v1804
  %v1957 = vunpack.c.l.b16 %v1805
  %v1958 = vunpack.c.l.b16 %v1806
  %v1959 = vunpack.c.l.b16 %v1807
  %v1960 = vunpack.c.l.b16 %v1808
  %v1961 = vunpack.c.l.b16 %v1809
  %v1962 = vpack.c.b16 %v1947, %v1946
  %v1963 = vpack.c.b16 %v1949, %v1948
  %v1964 = vpack.c.b16 %v1951, %v1950
  %v1965 = vpack.c.b16 %v1953, %v1952
  %v1966 = vpack.c.b16 %v1955, %v1954
  %v1967 = vpack.c.b16 %v1957, %v1956
  %v1968 = vpack.c.b16 %v1959, %v1958
  %v1969 = vpack.c.b16 %v1961, %v1960
  %1978 = vmatpush.bf16.msra.mxu0 %v1969
  %1979 = vmatpush.bf16.msra.mxu0 %v1968
  %1980 = vmatpush.bf16.msra.mxu0 %v1967
  %1981 = vmatpush.bf16.msra.mxu0 %v1966
  %1982 = vmatpush.bf16.msra.mxu0 %v1965
  %1983 = vmatpush.bf16.msra.mxu0 %v1964
  %1984 = vmatpush.bf16.msra.mxu0 %v1963
  %1985 = vmatpush.bf16.msra.mxu0 %v1962
  %1986 = vmatmul.bf16.gmra.mxu0 %v1865
  %v1987 = vpop.f32.mrf.mxu0
  %v1988 = vadd.f32 0.0, %v1987
  %v1989 = vpop.f32.mrf.mxu0
  %v1990 = vadd.f32 0.0, %v1989
  %1991 = vmatmul.bf16.gmra.mxu0 %v1873
  %v1992 = vpop.f32.mrf.mxu0
  %v1993 = vadd.f32 0.0, %v1992
  %v1994 = vpop.f32.mrf.mxu0
  %v1995 = vadd.f32 0.0, %v1994
  %1996 = vmatmul.bf16.gmra.mxu0 %v1881
  %v1997 = vpop.f32.mrf.mxu0
  %v1998 = vadd.f32 0.0, %v1997
  %v1999 = vpop.f32.mrf.mxu0
  %v2000 = vadd.f32 0.0, %v1999
  %2001 = vmatmul.bf16.gmra.mxu0 %v1889
  %v2002 = vpop.f32.mrf.mxu0
  %v2003 = vadd.f32 0.0, %v2002
  %v2004 = vpop.f32.mrf.mxu0
  %v2005 = vadd.f32 0.0, %v2004
  %2006 = vmatmul.bf16.gmra.mxu0 %v1897
  %v2007 = vpop.f32.mrf.mxu0
  %v2008 = vadd.f32 0.0, %v2007
  %v2009 = vpop.f32.mrf.mxu0
  %v2010 = vadd.f32 0.0, %v2009
  %2011 = vmatmul.bf16.gmra.mxu0 %v1905
  %v2012 = vpop.f32.mrf.mxu0
  %v2013 = vadd.f32 0.0, %v2012
  %v2014 = vpop.f32.mrf.mxu0
  %v2015 = vadd.f32 0.0, %v2014
  %2016 = vmatmul.bf16.gmra.mxu0 %v1913
  %v2017 = vpop.f32.mrf.mxu0
  %v2018 = vadd.f32 0.0, %v2017
  %v2019 = vpop.f32.mrf.mxu0
  %v2020 = vadd.f32 0.0, %v2019
  %2021 = vmatmul.bf16.gmra.mxu0 %v1921
  %v2022 = vpop.f32.mrf.mxu0
  %v2023 = vadd.f32 0.0, %v2022
  %v2024 = vpop.f32.mrf.mxu0
  %v2025 = vadd.f32 0.0, %v2024
  %2026 = vdwg.mxu0
  %v2030 = vunpack.c.l.b16 %v1756
  %v2031 = vunpack.c.l.b16 %v1757
  %v2032 = vunpack.c.l.b16 %v1772
  %v2033 = vpack.c.b16 %v2031, %v2030
  %v2034 = vpack.c.b16 %v2032, %v2032
  %v2036 = vshrl.u32 %v2033, 16
  %v2038 = vshll.u32 %v2033, 16
  %v2040 = vrot.slane %v2038, 1
  %v2041 = vor.u32 %v2036, %v2040
  %v2042 = vsel %vm1853, %v2041, %v1859
  %v2044 = vshll.u32 %v2034, 16
  %v2046 = vrot.slane %v2044, 1
  %v2047 = vsel %vm1853, %v1908, %v2046
  %v2066 = vunpack.c.l.b16 %v1774
  %v2067 = vunpack.c.l.b16 %v1775
  %v2068 = vunpack.c.l.b16 %v1776
  %v2069 = vunpack.c.l.b16 %v1777
  %v2070 = vunpack.c.l.b16 %v1778
  %v2071 = vunpack.c.l.b16 %v1779
  %v2072 = vunpack.c.l.b16 %v1780
  %v2073 = vunpack.c.l.b16 %v1781
  %v2074 = vunpack.c.l.b16 %v1782
  %v2075 = vunpack.c.l.b16 %v1783
  %v2076 = vunpack.c.l.b16 %v1784
  %v2077 = vunpack.c.l.b16 %v1785
  %v2078 = vunpack.c.l.b16 %v1786
  %v2079 = vunpack.c.l.b16 %v1787
  %v2080 = vunpack.c.l.b16 %v1788
  %v2081 = vunpack.c.l.b16 %v1789
  %v2082 = vpack.c.b16 %v2067, %v2066
  %v2083 = vpack.c.b16 %v2069, %v2068
  %v2084 = vpack.c.b16 %v2071, %v2070
  %v2085 = vpack.c.b16 %v2073, %v2072
  %v2086 = vpack.c.b16 %v2075, %v2074
  %v2087 = vpack.c.b16 %v2077, %v2076
  %v2088 = vpack.c.b16 %v2079, %v2078
  %v2089 = vpack.c.b16 %v2081, %v2080
  %2098 = vmatpush.bf16.msra.mxu0 %v2089
  %2099 = vmatpush.bf16.msra.mxu0 %v2088
  %2100 = vmatpush.bf16.msra.mxu0 %v2087
  %2101 = vmatpush.bf16.msra.mxu0 %v2086
  %2102 = vmatpush.bf16.msra.mxu0 %v2085
  %2103 = vmatpush.bf16.msra.mxu0 %v2084
  %2104 = vmatpush.bf16.msra.mxu0 %v2083
  %2105 = vmatpush.bf16.msra.mxu0 %v2082
  %2106 = vmatmul.bf16.gmra.mxu0 %v2042
  %v2107 = vpop.f32.mrf.mxu0
  %v2108 = vadd.f32 %v1988, %v2107
  %v2109 = vpop.f32.mrf.mxu0
  %v2110 = vadd.f32 %v1990, %v2109
  %2111 = vmatmul.bf16.gmra.mxu0 %v1865
  %v2112 = vpop.f32.mrf.mxu0
  %v2113 = vadd.f32 %v1993, %v2112
  %v2114 = vpop.f32.mrf.mxu0
  %v2115 = vadd.f32 %v1995, %v2114
  %2116 = vmatmul.bf16.gmra.mxu0 %v1873
  %v2117 = vpop.f32.mrf.mxu0
  %v2118 = vadd.f32 %v1998, %v2117
  %v2119 = vpop.f32.mrf.mxu0
  %v2120 = vadd.f32 %v2000, %v2119
  %2121 = vmatmul.bf16.gmra.mxu0 %v1881
  %v2122 = vpop.f32.mrf.mxu0
  %v2123 = vadd.f32 %v2003, %v2122
  %v2124 = vpop.f32.mrf.mxu0
  %v2125 = vadd.f32 %v2005, %v2124
  %2126 = vmatmul.bf16.gmra.mxu0 %v1889
  %v2127 = vpop.f32.mrf.mxu0
  %v2128 = vadd.f32 %v2008, %v2127
  %v2129 = vpop.f32.mrf.mxu0
  %v2130 = vadd.f32 %v2010, %v2129
  %2131 = vmatmul.bf16.gmra.mxu0 %v1897
  %v2132 = vpop.f32.mrf.mxu0
  %v2133 = vadd.f32 %v2013, %v2132
  %v2134 = vpop.f32.mrf.mxu0
  %v2135 = vadd.f32 %v2015, %v2134
  %2136 = vmatmul.bf16.gmra.mxu0 %v1905
  %v2137 = vpop.f32.mrf.mxu0
  %v2138 = vadd.f32 %v2018, %v2137
  %v2139 = vpop.f32.mrf.mxu0
  %v2140 = vadd.f32 %v2020, %v2139
  %2141 = vmatmul.bf16.gmra.mxu0 %v2047
  %v2142 = vpop.f32.mrf.mxu0
  %v2143 = vadd.f32 %v2023, %v2142
  %v2144 = vpop.f32.mrf.mxu0
  %v2145 = vadd.f32 %v2025, %v2144
  %2146 = vdwg.mxu0
  %v2147 = vld [vmem:[#allocation2 + $0x18] sm:$0xf]
  %v2148 = vld [vmem:[#allocation2 + $0x1c] sm:$0xf]
  %v2149 = vld [vmem:[#allocation2 + $0x20] sm:$0xf]
  %v2150 = vld [vmem:[#allocation2 + $0x24] sm:$0xf]
  %v2151 = vld [vmem:[#allocation2 + $0x28] sm:$0xf]
  %v2152 = vld [vmem:[#allocation2 + $0x2c] sm:$0xf]
  %v2153 = vld [vmem:[#allocation2 + $0x30] sm:$0xf]
  %v2154 = vld [vmem:[#allocation2 + $0x34] sm:$0xf]
  %v2155 = vld [vmem:[#allocation2 + $0x38] sm:$0xf]
  %v2156 = vld [vmem:[#allocation2 + $0x3c] sm:$0xf]
  %v2157 = vld [vmem:[#allocation2 + $0x40] sm:$0xf]
  %v2158 = vld [vmem:[#allocation2 + $0x44] sm:$0xf]
  %v2159 = vld [vmem:[#allocation2 + $0x48] sm:$0xf]
  %v2160 = vld [vmem:[#allocation2 + $0x4c] sm:$0xf]
  %v2161 = vld [vmem:[#allocation2 + $0x50] sm:$0xf]
  %v2162 = vld [vmem:[#allocation2 + $0x54] sm:$0xf]
  %v2163 = vld [vmem:[#allocation2 + $0x58] sm:$0x1]
  %s2164 = scalar_lea.vmem %s2, 512
  %v2165 = vld [vmem:[%s2164] sm:$0xf]
  %v2166 = vld [vmem:[%s2164 + $0x4] sm:$0xf]
  %v2167 = vld [vmem:[%s2164 + $0x8] sm:$0xf]
  %v2168 = vld [vmem:[%s2164 + $0xc] sm:$0xf]
  %v2169 = vld [vmem:[%s2164 + $0x10] sm:$0xf]
  %v2170 = vld [vmem:[%s2164 + $0x14] sm:$0xf]
  %v2171 = vld [vmem:[%s2164 + $0x18] sm:$0xf]
  %v2172 = vld [vmem:[%s2164 + $0x1c] sm:$0xf]
  %v2173 = vld [vmem:[%s2164 + $0x20] sm:$0xf]
  %v2174 = vld [vmem:[%s2164 + $0x24] sm:$0xf]
  %v2175 = vld [vmem:[%s2164 + $0x28] sm:$0xf]
  %v2176 = vld [vmem:[%s2164 + $0x2c] sm:$0xf]
  %v2177 = vld [vmem:[%s2164 + $0x30] sm:$0xf]
  %v2178 = vld [vmem:[%s2164 + $0x34] sm:$0xf]
  %v2179 = vld [vmem:[%s2164 + $0x38] sm:$0xf]
  %v2180 = vld [vmem:[%s2164 + $0x3c] sm:$0xf]
  %v2198 = vunpack.c.l.b16 %v2147
  %v2199 = vunpack.c.l.b16 %v2148
  %v2200 = vunpack.c.l.b16 %v2149
  %v2201 = vunpack.c.l.b16 %v2150
  %v2202 = vunpack.c.l.b16 %v2151
  %v2203 = vunpack.c.l.b16 %v2152
  %v2204 = vunpack.c.l.b16 %v2153
  %v2205 = vunpack.c.l.b16 %v2154
  %v2206 = vunpack.c.l.b16 %v2155
  %v2207 = vunpack.c.l.b16 %v2156
  %v2208 = vunpack.c.l.b16 %v2157
  %v2209 = vunpack.c.l.b16 %v2158
  %v2210 = vunpack.c.l.b16 %v2159
  %v2211 = vunpack.c.l.b16 %v2160
  %v2212 = vunpack.c.l.b16 %v2161
  %v2213 = vunpack.c.l.b16 %v2162
  %v2214 = vunpack.c.l.b16 %v2163
  %v2215 = vpack.c.b16 %v2199, %v2198
  %v2216 = vpack.c.b16 %v2201, %v2200
  %v2217 = vpack.c.b16 %v2203, %v2202
  %v2218 = vpack.c.b16 %v2205, %v2204
  %v2219 = vpack.c.b16 %v2207, %v2206
  %v2220 = vpack.c.b16 %v2209, %v2208
  %v2221 = vpack.c.b16 %v2211, %v2210
  %v2222 = vpack.c.b16 %v2213, %v2212
  %v2223 = vpack.c.b16 %v2214, %v2214
  %v2225 = vshrl.u32 %v2215, 16
  %v2227 = vshll.u32 %v2215, 16
  %v2229 = vrot.slane %v2227, 1
  %v2230 = vor.u32 %v2225, %v2229
  %v2232 = vshll.u32 %v2216, 16
  %v2234 = vrot.slane %v2232, 1
  %v2235 = vsel %vm1853, %v2230, %v2234
  %v2236 = vshrl.u32 %v2216, 16
  %v2238 = vor.u32 %v2236, %v2234
  %v2240 = vshll.u32 %v2217, 16
  %v2242 = vrot.slane %v2240, 1
  %v2243 = vsel %vm1853, %v2238, %v2242
  %v2244 = vshrl.u32 %v2217, 16
  %v2246 = vor.u32 %v2244, %v2242
  %v2248 = vshll.u32 %v2218, 16
  %v2250 = vrot.slane %v2248, 1
  %v2251 = vsel %vm1853, %v2246, %v2250
  %v2252 = vshrl.u32 %v2218, 16
  %v2254 = vor.u32 %v2252, %v2250
  %v2256 = vshll.u32 %v2219, 16
  %v2258 = vrot.slane %v2256, 1
  %v2259 = vsel %vm1853, %v2254, %v2258
  %v2260 = vshrl.u32 %v2219, 16
  %v2262 = vor.u32 %v2260, %v2258
  %v2264 = vshll.u32 %v2220, 16
  %v2266 = vrot.slane %v2264, 1
  %v2267 = vsel %vm1853, %v2262, %v2266
  %v2268 = vshrl.u32 %v2220, 16
  %v2270 = vor.u32 %v2268, %v2266
  %v2272 = vshll.u32 %v2221, 16
  %v2274 = vrot.slane %v2272, 1
  %v2275 = vsel %vm1853, %v2270, %v2274
  %v2276 = vshrl.u32 %v2221, 16
  %v2278 = vor.u32 %v2276, %v2274
  %v2280 = vshll.u32 %v2222, 16
  %v2282 = vrot.slane %v2280, 1
  %v2283 = vsel %vm1853, %v2278, %v2282
  %v2284 = vshrl.u32 %v2222, 16
  %v2286 = vor.u32 %v2284, %v2282
  %v2288 = vshll.u32 %v2223, 16
  %v2290 = vrot.slane %v2288, 1
  %v2291 = vsel %vm1853, %v2286, %v2290
  %v2316 = vunpack.c.l.b16 %v2165
  %v2317 = vunpack.c.l.b16 %v2166
  %v2318 = vunpack.c.l.b16 %v2167
  %v2319 = vunpack.c.l.b16 %v2168
  %v2320 = vunpack.c.l.b16 %v2169
  %v2321 = vunpack.c.l.b16 %v2170
  %v2322 = vunpack.c.l.b16 %v2171
  %v2323 = vunpack.c.l.b16 %v2172
  %v2324 = vunpack.c.l.b16 %v2173
  %v2325 = vunpack.c.l.b16 %v2174
  %v2326 = vunpack.c.l.b16 %v2175
  %v2327 = vunpack.c.l.b16 %v2176
  %v2328 = vunpack.c.l.b16 %v2177
  %v2329 = vunpack.c.l.b16 %v2178
  %v2330 = vunpack.c.l.b16 %v2179
  %v2331 = vunpack.c.l.b16 %v2180
  %v2332 = vpack.c.b16 %v2317, %v2316
  %v2333 = vpack.c.b16 %v2319, %v2318
  %v2334 = vpack.c.b16 %v2321, %v2320
  %v2335 = vpack.c.b16 %v2323, %v2322
  %v2336 = vpack.c.b16 %v2325, %v2324
  %v2337 = vpack.c.b16 %v2327, %v2326
  %v2338 = vpack.c.b16 %v2329, %v2328
  %v2339 = vpack.c.b16 %v2331, %v2330
  %2348 = vmatpush.bf16.msra.mxu0 %v2339
  %2349 = vmatpush.bf16.msra.mxu0 %v2338
  %2350 = vmatpush.bf16.msra.mxu0 %v2337
  %2351 = vmatpush.bf16.msra.mxu0 %v2336
  %2352 = vmatpush.bf16.msra.mxu0 %v2335
  %2353 = vmatpush.bf16.msra.mxu0 %v2334
  %2354 = vmatpush.bf16.msra.mxu0 %v2333
  %2355 = vmatpush.bf16.msra.mxu0 %v2332
  %2356 = vmatmul.bf16.gmra.mxu0 %v2235
  %v2357 = vpop.f32.mrf.mxu0
  %v2358 = vadd.f32 0.0, %v2357
  %v2359 = vpop.f32.mrf.mxu0
  %v2360 = vadd.f32 0.0, %v2359
  %2361 = vmatmul.bf16.gmra.mxu0 %v2243
  %v2362 = vpop.f32.mrf.mxu0
  %v2363 = vadd.f32 0.0, %v2362
  %v2364 = vpop.f32.mrf.mxu0
  %v2365 = vadd.f32 0.0, %v2364
  %2366 = vmatmul.bf16.gmra.mxu0 %v2251
  %v2367 = vpop.f32.mrf.mxu0
  %v2368 = vadd.f32 0.0, %v2367
  %v2369 = vpop.f32.mrf.mxu0
  %v2370 = vadd.f32 0.0, %v2369
  %2371 = vmatmul.bf16.gmra.mxu0 %v2259
  %v2372 = vpop.f32.mrf.mxu0
  %v2373 = vadd.f32 0.0, %v2372
  %v2374 = vpop.f32.mrf.mxu0
  %v2375 = vadd.f32 0.0, %v2374
  %2376 = vmatmul.bf16.gmra.mxu0 %v2267
  %v2377 = vpop.f32.mrf.mxu0
  %v2378 = vadd.f32 0.0, %v2377
  %v2379 = vpop.f32.mrf.mxu0
  %v2380 = vadd.f32 0.0, %v2379
  %2381 = vmatmul.bf16.gmra.mxu0 %v2275
  %v2382 = vpop.f32.mrf.mxu0
  %v2383 = vadd.f32 0.0, %v2382
  %v2384 = vpop.f32.mrf.mxu0
  %v2385 = vadd.f32 0.0, %v2384
  %2386 = vmatmul.bf16.gmra.mxu0 %v2283
  %v2387 = vpop.f32.mrf.mxu0
  %v2388 = vadd.f32 0.0, %v2387
  %v2389 = vpop.f32.mrf.mxu0
  %v2390 = vadd.f32 0.0, %v2389
  %2391 = vmatmul.bf16.gmra.mxu0 %v2291
  %v2392 = vpop.f32.mrf.mxu0
  %v2393 = vadd.f32 0.0, %v2392
  %v2394 = vpop.f32.mrf.mxu0
  %v2395 = vadd.f32 0.0, %v2394
  %2396 = vdwg.mxu0
  %v2397 = vadd.f32 %v2108, %v2358
  %v2398 = vadd.f32 %v2110, %v2360
  %v2399 = vadd.f32 %v2113, %v2363
  %v2400 = vadd.f32 %v2115, %v2365
  %v2401 = vadd.f32 %v2118, %v2368
  %v2402 = vadd.f32 %v2120, %v2370
  %v2403 = vadd.f32 %v2123, %v2373
  %v2404 = vadd.f32 %v2125, %v2375
  %v2405 = vadd.f32 %v2128, %v2378
  %v2406 = vadd.f32 %v2130, %v2380
  %v2407 = vadd.f32 %v2133, %v2383
  %v2408 = vadd.f32 %v2135, %v2385
  %v2409 = vadd.f32 %v2138, %v2388
  %v2410 = vadd.f32 %v2140, %v2390
  %v2411 = vadd.f32 %v2143, %v2393
  %v2412 = vadd.f32 %v2145, %v2395
  %2414 = vset.pattern.permute.xlu0 0
  %2415 = vperm.xlu0 %2414, %v948
  %v2416 = vpop.permute.xlu0 %2415
  %2419 = vset.pattern.permute.xlu0 0
  %2420 = vperm.xlu0 %2419, %v949
  %v2421 = vpop.permute.xlu0 %2420
  %2424 = vset.pattern.permute.xlu0 0
  %2425 = vperm.xlu0 %2424, %v950
  %v2426 = vpop.permute.xlu0 %2425
  %2429 = vset.pattern.permute.xlu0 0
  %2430 = vperm.xlu0 %2429, %v951
  %v2431 = vpop.permute.xlu0 %2430
  %2434 = vset.pattern.permute.xlu0 0
  %2435 = vperm.xlu0 %2434, %v952
  %v2436 = vpop.permute.xlu0 %2435
  %2439 = vset.pattern.permute.xlu0 0
  %2440 = vperm.xlu0 %2439, %v953
  %v2441 = vpop.permute.xlu0 %2440
  %2444 = vset.pattern.permute.xlu0 0
  %2445 = vperm.xlu0 %2444, %v954
  %v2446 = vpop.permute.xlu0 %2445
  %2449 = vset.pattern.permute.xlu0 0
  %2450 = vperm.xlu0 %2449, %v955
  %v2451 = vpop.permute.xlu0 %2450
  %2454 = vset.pattern.permute.xlu0 0
  %2455 = vperm.xlu0 %2454, %v956
  %v2456 = vpop.permute.xlu0 %2455
  %2459 = vset.pattern.permute.xlu0 0
  %2460 = vperm.xlu0 %2459, %v957
  %v2461 = vpop.permute.xlu0 %2460
  %2464 = vset.pattern.permute.xlu0 0
  %2465 = vperm.xlu0 %2464, %v958
  %v2466 = vpop.permute.xlu0 %2465
  %2469 = vset.pattern.permute.xlu0 0
  %2470 = vperm.xlu0 %2469, %v959
  %v2471 = vpop.permute.xlu0 %2470
  %2474 = vset.pattern.permute.xlu0 0
  %2475 = vperm.xlu0 %2474, %v960
  %v2476 = vpop.permute.xlu0 %2475
  %2479 = vset.pattern.permute.xlu0 0
  %2480 = vperm.xlu0 %2479, %v961
  %v2481 = vpop.permute.xlu0 %2480
  %2484 = vset.pattern.permute.xlu0 0
  %2485 = vperm.xlu0 %2484, %v962
  %v2486 = vpop.permute.xlu0 %2485
  %2489 = vset.pattern.permute.xlu0 0
  %2490 = vperm.xlu0 %2489, %v963
  %v2491 = vpop.permute.xlu0 %2490
  %v2493 = vmul.f32 %v2397, %v2416
  %v2494 = vmul.f32 %v2398, %v2421
  %v2495 = vmul.f32 %v2399, %v2426
  %v2496 = vmul.f32 %v2400, %v2431
  %v2497 = vmul.f32 %v2401, %v2436
  %v2498 = vmul.f32 %v2402, %v2441
  %v2499 = vmul.f32 %v2403, %v2446
  %v2500 = vmul.f32 %v2404, %v2451
  %v2501 = vmul.f32 %v2405, %v2456
  %v2502 = vmul.f32 %v2406, %v2461
  %v2503 = vmul.f32 %v2407, %v2466
  %v2504 = vmul.f32 %v2408, %v2471
  %v2505 = vmul.f32 %v2409, %v2476
  %v2506 = vmul.f32 %v2410, %v2481
  %v2507 = vmul.f32 %v2411, %v2486
  %v2508 = vmul.f32 %v2412, %v2491
  %v2509 = vadd.f32 %v1740, %v2493
  %v2510 = vadd.f32 %v1741, %v2494
  %v2511 = vadd.f32 %v1742, %v2495
  %v2512 = vadd.f32 %v1743, %v2496
  %v2513 = vadd.f32 %v1744, %v2497
  %v2514 = vadd.f32 %v1745, %v2498
  %v2515 = vadd.f32 %v1746, %v2499
  %v2516 = vadd.f32 %v1747, %v2500
  %v2517 = vadd.f32 %v1748, %v2501
  %v2518 = vadd.f32 %v1749, %v2502
  %v2519 = vadd.f32 %v1750, %v2503
  %v2520 = vadd.f32 %v1751, %v2504
  %v2521 = vadd.f32 %v1752, %v2505
  %v2522 = vadd.f32 %v1753, %v2506
  %v2523 = vadd.f32 %v1754, %v2507
  %v2524 = vadd.f32 %v1755, %v2508
  %s2525 = scalar_lea.vmem %s2, 64
  %v2526 = vld [vmem:[%s2525] sm:$0xf]
  %v2527 = vld [vmem:[%s2525 + $0x4] sm:$0xf]
  %v2528 = vld [vmem:[%s2525 + $0x8] sm:$0xf]
  %v2529 = vld [vmem:[%s2525 + $0xc] sm:$0xf]
  %v2530 = vld [vmem:[%s2525 + $0x10] sm:$0xf]
  %v2531 = vld [vmem:[%s2525 + $0x14] sm:$0xf]
  %v2532 = vld [vmem:[%s2525 + $0x18] sm:$0xf]
  %v2533 = vld [vmem:[%s2525 + $0x1c] sm:$0xf]
  %v2534 = vld [vmem:[%s2525 + $0x20] sm:$0xf]
  %v2535 = vld [vmem:[%s2525 + $0x24] sm:$0xf]
  %v2536 = vld [vmem:[%s2525 + $0x28] sm:$0xf]
  %v2537 = vld [vmem:[%s2525 + $0x2c] sm:$0xf]
  %v2538 = vld [vmem:[%s2525 + $0x30] sm:$0xf]
  %v2539 = vld [vmem:[%s2525 + $0x34] sm:$0xf]
  %v2540 = vld [vmem:[%s2525 + $0x38] sm:$0xf]
  %v2541 = vld [vmem:[%s2525 + $0x3c] sm:$0xf]
  %v2542 = vpack.c.b16 %v1251, %v1250
  %v2543 = vpack.c.b16 %v1036, %v1035
  %v2544 = vpack.c.b16 %v1038, %v1037
  %v2545 = vpack.c.b16 %v1040, %v1039
  %v2546 = vpack.c.b16 %v1042, %v1041
  %v2547 = vpack.c.b16 %v1044, %v1043
  %v2548 = vpack.c.b16 %v1046, %v1045
  %v2549 = vpack.c.b16 %v1048, %v1047
  %v2574 = vunpack.c.l.b16 %v2526
  %v2575 = vunpack.c.l.b16 %v2527
  %v2576 = vunpack.c.l.b16 %v2528
  %v2577 = vunpack.c.l.b16 %v2529
  %v2578 = vunpack.c.l.b16 %v2530
  %v2579 = vunpack.c.l.b16 %v2531
  %v2580 = vunpack.c.l.b16 %v2532
  %v2581 = vunpack.c.l.b16 %v2533
  %v2582 = vunpack.c.l.b16 %v2534
  %v2583 = vunpack.c.l.b16 %v2535
  %v2584 = vunpack.c.l.b16 %v2536
  %v2585 = vunpack.c.l.b16 %v2537
  %v2586 = vunpack.c.l.b16 %v2538
  %v2587 = vunpack.c.l.b16 %v2539
  %v2588 = vunpack.c.l.b16 %v2540
  %v2589 = vunpack.c.l.b16 %v2541
  %v2590 = vpack.c.b16 %v2575, %v2574
  %v2591 = vpack.c.b16 %v2577, %v2576
  %v2592 = vpack.c.b16 %v2579, %v2578
  %v2593 = vpack.c.b16 %v2581, %v2580
  %v2594 = vpack.c.b16 %v2583, %v2582
  %v2595 = vpack.c.b16 %v2585, %v2584
  %v2596 = vpack.c.b16 %v2587, %v2586
  %v2597 = vpack.c.b16 %v2589, %v2588
  %2606 = vmatpush.bf16.msra.mxu0 %v2597
  %2607 = vmatpush.bf16.msra.mxu0 %v2596
  %2608 = vmatpush.bf16.msra.mxu0 %v2595
  %2609 = vmatpush.bf16.msra.mxu0 %v2594
  %2610 = vmatpush.bf16.msra.mxu0 %v2593
  %2611 = vmatpush.bf16.msra.mxu0 %v2592
  %2612 = vmatpush.bf16.msra.mxu0 %v2591
  %2613 = vmatpush.bf16.msra.mxu0 %v2590
  %2614 = vmatmul.bf16.gmra.mxu0 %v2542
  %v2615 = vpop.f32.mrf.mxu0
  %v2616 = vadd.f32 0.0, %v2615
  %v2617 = vpop.f32.mrf.mxu0
  %v2618 = vadd.f32 0.0, %v2617
  %2619 = vmatmul.bf16.gmra.mxu0 %v2543
  %v2620 = vpop.f32.mrf.mxu0
  %v2621 = vadd.f32 0.0, %v2620
  %v2622 = vpop.f32.mrf.mxu0
  %v2623 = vadd.f32 0.0, %v2622
  %2624 = vmatmul.bf16.gmra.mxu0 %v2544
  %v2625 = vpop.f32.mrf.mxu0
  %v2626 = vadd.f32 0.0, %v2625
  %v2627 = vpop.f32.mrf.mxu0
  %v2628 = vadd.f32 0.0, %v2627
  %2629 = vmatmul.bf16.gmra.mxu0 %v2545
  %v2630 = vpop.f32.mrf.mxu0
  %v2631 = vadd.f32 0.0, %v2630
  %v2632 = vpop.f32.mrf.mxu0
  %v2633 = vadd.f32 0.0, %v2632
  %2634 = vmatmul.bf16.gmra.mxu0 %v2546
  %v2635 = vpop.f32.mrf.mxu0
  %v2636 = vadd.f32 0.0, %v2635
  %v2637 = vpop.f32.mrf.mxu0
  %v2638 = vadd.f32 0.0, %v2637
  %2639 = vmatmul.bf16.gmra.mxu0 %v2547
  %v2640 = vpop.f32.mrf.mxu0
  %v2641 = vadd.f32 0.0, %v2640
  %v2642 = vpop.f32.mrf.mxu0
  %v2643 = vadd.f32 0.0, %v2642
  %2644 = vmatmul.bf16.gmra.mxu0 %v2548
  %v2645 = vpop.f32.mrf.mxu0
  %v2646 = vadd.f32 0.0, %v2645
  %v2647 = vpop.f32.mrf.mxu0
  %v2648 = vadd.f32 0.0, %v2647
  %2649 = vmatmul.bf16.gmra.mxu0 %v2549
  %v2650 = vpop.f32.mrf.mxu0
  %v2651 = vadd.f32 0.0, %v2650
  %v2652 = vpop.f32.mrf.mxu0
  %v2653 = vadd.f32 0.0, %v2652
  %2654 = vdwg.mxu0
  %v2655 = vadd.f32 %v2509, %v2616
  %v2656 = vadd.f32 %v2510, %v2618
  %v2657 = vadd.f32 %v2511, %v2621
  %v2658 = vadd.f32 %v2512, %v2623
  %v2659 = vadd.f32 %v2513, %v2626
  %v2660 = vadd.f32 %v2514, %v2628
  %v2661 = vadd.f32 %v2515, %v2631
  %v2662 = vadd.f32 %v2516, %v2633
  %v2663 = vadd.f32 %v2517, %v2636
  %v2664 = vadd.f32 %v2518, %v2638
  %v2665 = vadd.f32 %v2519, %v2641
  %v2666 = vadd.f32 %v2520, %v2643
  %v2667 = vadd.f32 %v2521, %v2646
  %v2668 = vadd.f32 %v2522, %v2648
  %v2669 = vadd.f32 %v2523, %v2651
  %v2670 = vadd.f32 %v2524, %v2653
  %s2671 = scalar_lea.vmem %s2, 256
  %v2672 = vld [vmem:[%s2671] sm:$0xf]
  %v2673 = vld [vmem:[%s2671 + $0x4] sm:$0xf]
  %v2674 = vld [vmem:[%s2671 + $0x8] sm:$0xf]
  %v2675 = vld [vmem:[%s2671 + $0xc] sm:$0xf]
  %v2676 = vld [vmem:[%s2671 + $0x10] sm:$0xf]
  %v2677 = vld [vmem:[%s2671 + $0x14] sm:$0xf]
  %v2678 = vld [vmem:[%s2671 + $0x18] sm:$0xf]
  %v2679 = vld [vmem:[%s2671 + $0x1c] sm:$0xf]
  %v2680 = vld [vmem:[%s2671 + $0x20] sm:$0xf]
  %v2681 = vld [vmem:[%s2671 + $0x24] sm:$0xf]
  %v2682 = vld [vmem:[%s2671 + $0x28] sm:$0xf]
  %v2683 = vld [vmem:[%s2671 + $0x2c] sm:$0xf]
  %v2684 = vld [vmem:[%s2671 + $0x30] sm:$0xf]
  %v2685 = vld [vmem:[%s2671 + $0x34] sm:$0xf]
  %v2686 = vld [vmem:[%s2671 + $0x38] sm:$0xf]
  %v2687 = vld [vmem:[%s2671 + $0x3c] sm:$0xf]
  %v2688 = vpack.c.b16 %v1050, %v1049
  %v2706 = vunpack.c.l.b16 %v2672
  %v2707 = vunpack.c.l.b16 %v2673
  %v2708 = vunpack.c.l.b16 %v2674
  %v2709 = vunpack.c.l.b16 %v2675
  %v2710 = vunpack.c.l.b16 %v2676
  %v2711 = vunpack.c.l.b16 %v2677
  %v2712 = vunpack.c.l.b16 %v2678
  %v2713 = vunpack.c.l.b16 %v2679
  %v2714 = vunpack.c.l.b16 %v2680
  %v2715 = vunpack.c.l.b16 %v2681
  %v2716 = vunpack.c.l.b16 %v2682
  %v2717 = vunpack.c.l.b16 %v2683
  %v2718 = vunpack.c.l.b16 %v2684
  %v2719 = vunpack.c.l.b16 %v2685
  %v2720 = vunpack.c.l.b16 %v2686
  %v2721 = vunpack.c.l.b16 %v2687
  %v2722 = vpack.c.b16 %v2707, %v2706
  %v2723 = vpack.c.b16 %v2709, %v2708
  %v2724 = vpack.c.b16 %v2711, %v2710
  %v2725 = vpack.c.b16 %v2713, %v2712
  %v2726 = vpack.c.b16 %v2715, %v2714
  %v2727 = vpack.c.b16 %v2717, %v2716
  %v2728 = vpack.c.b16 %v2719, %v2718
  %v2729 = vpack.c.b16 %v2721, %v2720
  %2738 = vmatpush.bf16.msra.mxu0 %v2729
  %2739 = vmatpush.bf16.msra.mxu0 %v2728
  %2740 = vmatpush.bf16.msra.mxu0 %v2727
  %2741 = vmatpush.bf16.msra.mxu0 %v2726
  %2742 = vmatpush.bf16.msra.mxu0 %v2725
  %2743 = vmatpush.bf16.msra.mxu0 %v2724
  %2744 = vmatpush.bf16.msra.mxu0 %v2723
  %2745 = vmatpush.bf16.msra.mxu0 %v2722
  %2746 = vmatmul.bf16.gmra.mxu0 %v2543
  %v2747 = vpop.f32.mrf.mxu0
  %v2748 = vadd.f32 0.0, %v2747
  %v2749 = vpop.f32.mrf.mxu0
  %v2750 = vadd.f32 0.0, %v2749
  %2751 = vmatmul.bf16.gmra.mxu0 %v2544
  %v2752 = vpop.f32.mrf.mxu0
  %v2753 = vadd.f32 0.0, %v2752
  %v2754 = vpop.f32.mrf.mxu0
  %v2755 = vadd.f32 0.0, %v2754
  %2756 = vmatmul.bf16.gmra.mxu0 %v2545
  %v2757 = vpop.f32.mrf.mxu0
  %v2758 = vadd.f32 0.0, %v2757
  %v2759 = vpop.f32.mrf.mxu0
  %v2760 = vadd.f32 0.0, %v2759
  %2761 = vmatmul.bf16.gmra.mxu0 %v2546
  %v2762 = vpop.f32.mrf.mxu0
  %v2763 = vadd.f32 0.0, %v2762
  %v2764 = vpop.f32.mrf.mxu0
  %v2765 = vadd.f32 0.0, %v2764
  %2766 = vmatmul.bf16.gmra.mxu0 %v2547
  %v2767 = vpop.f32.mrf.mxu0
  %v2768 = vadd.f32 0.0, %v2767
  %v2769 = vpop.f32.mrf.mxu0
  %v2770 = vadd.f32 0.0, %v2769
  %2771 = vmatmul.bf16.gmra.mxu0 %v2548
  %v2772 = vpop.f32.mrf.mxu0
  %v2773 = vadd.f32 0.0, %v2772
  %v2774 = vpop.f32.mrf.mxu0
  %v2775 = vadd.f32 0.0, %v2774
  %2776 = vmatmul.bf16.gmra.mxu0 %v2549
  %v2777 = vpop.f32.mrf.mxu0
  %v2778 = vadd.f32 0.0, %v2777
  %v2779 = vpop.f32.mrf.mxu0
  %v2780 = vadd.f32 0.0, %v2779
  %2781 = vmatmul.bf16.gmra.mxu0 %v2688
  %v2782 = vpop.f32.mrf.mxu0
  %v2783 = vadd.f32 0.0, %v2782
  %v2784 = vpop.f32.mrf.mxu0
  %v2785 = vadd.f32 0.0, %v2784
  %2786 = vdwg.mxu0
  %v2787 = vadd.f32 %v2655, %v2748
  %v2788 = vadd.f32 %v2656, %v2750
  %v2789 = vadd.f32 %v2657, %v2753
  %v2790 = vadd.f32 %v2658, %v2755
  %v2791 = vadd.f32 %v2659, %v2758
  %v2792 = vadd.f32 %v2660, %v2760
  %v2793 = vadd.f32 %v2661, %v2763
  %v2794 = vadd.f32 %v2662, %v2765
  %v2795 = vadd.f32 %v2663, %v2768
  %v2796 = vadd.f32 %v2664, %v2770
  %v2797 = vadd.f32 %v2665, %v2773
  %v2798 = vadd.f32 %v2666, %v2775
  %v2799 = vadd.f32 %v2667, %v2778
  %v2800 = vadd.f32 %v2668, %v2780
  %v2801 = vadd.f32 %v2669, %v2783
  %v2802 = vadd.f32 %v2670, %v2785
  %s2803 = scalar_lea.vmem %s2, 448
  %v2804 = vld [vmem:[%s2803] sm:$0xf]
  %v2805 = vld [vmem:[%s2803 + $0x4] sm:$0xf]
  %v2806 = vld [vmem:[%s2803 + $0x8] sm:$0xf]
  %v2807 = vld [vmem:[%s2803 + $0xc] sm:$0xf]
  %v2808 = vld [vmem:[%s2803 + $0x10] sm:$0xf]
  %v2809 = vld [vmem:[%s2803 + $0x14] sm:$0xf]
  %v2810 = vld [vmem:[%s2803 + $0x18] sm:$0xf]
  %v2811 = vld [vmem:[%s2803 + $0x1c] sm:$0xf]
  %v2812 = vld [vmem:[%s2803 + $0x20] sm:$0xf]
  %v2813 = vld [vmem:[%s2803 + $0x24] sm:$0xf]
  %v2814 = vld [vmem:[%s2803 + $0x28] sm:$0xf]
  %v2815 = vld [vmem:[%s2803 + $0x2c] sm:$0xf]
  %v2816 = vld [vmem:[%s2803 + $0x30] sm:$0xf]
  %v2817 = vld [vmem:[%s2803 + $0x34] sm:$0xf]
  %v2818 = vld [vmem:[%s2803 + $0x38] sm:$0xf]
  %v2819 = vld [vmem:[%s2803 + $0x3c] sm:$0xf]
  %v2820 = vpack.c.b16 %v1435, %v1434
  %v2821 = vpack.c.b16 %v1437, %v1436
  %v2822 = vpack.c.b16 %v1439, %v1438
  %v2823 = vpack.c.b16 %v1441, %v1440
  %v2824 = vpack.c.b16 %v1443, %v1442
  %v2825 = vpack.c.b16 %v1445, %v1444
  %v2826 = vpack.c.b16 %v1447, %v1446
  %v2827 = vpack.c.b16 %v1449, %v1448
  %v2852 = vunpack.c.l.b16 %v2804
  %v2853 = vunpack.c.l.b16 %v2805
  %v2854 = vunpack.c.l.b16 %v2806
  %v2855 = vunpack.c.l.b16 %v2807
  %v2856 = vunpack.c.l.b16 %v2808
  %v2857 = vunpack.c.l.b16 %v2809
  %v2858 = vunpack.c.l.b16 %v2810
  %v2859 = vunpack.c.l.b16 %v2811
  %v2860 = vunpack.c.l.b16 %v2812
  %v2861 = vunpack.c.l.b16 %v2813
  %v2862 = vunpack.c.l.b16 %v2814
  %v2863 = vunpack.c.l.b16 %v2815
  %v2864 = vunpack.c.l.b16 %v2816
  %v2865 = vunpack.c.l.b16 %v2817
  %v2866 = vunpack.c.l.b16 %v2818
  %v2867 = vunpack.c.l.b16 %v2819
  %v2868 = vpack.c.b16 %v2853, %v2852
  %v2869 = vpack.c.b16 %v2855, %v2854
  %v2870 = vpack.c.b16 %v2857, %v2856
  %v2871 = vpack.c.b16 %v2859, %v2858
  %v2872 = vpack.c.b16 %v2861, %v2860
  %v2873 = vpack.c.b16 %v2863, %v2862
  %v2874 = vpack.c.b16 %v2865, %v2864
  %v2875 = vpack.c.b16 %v2867, %v2866
  %2884 = vmatpush.bf16.msra.mxu0 %v2875
  %2885 = vmatpush.bf16.msra.mxu0 %v2874
  %2886 = vmatpush.bf16.msra.mxu0 %v2873
  %2887 = vmatpush.bf16.msra.mxu0 %v2872
  %2888 = vmatpush.bf16.msra.mxu0 %v2871
  %2889 = vmatpush.bf16.msra.mxu0 %v2870
  %2890 = vmatpush.bf16.msra.mxu0 %v2869
  %2891 = vmatpush.bf16.msra.mxu0 %v2868
  %2892 = vmatmul.bf16.gmra.mxu0 %v2820
  %v2893 = vpop.f32.mrf.mxu0
  %v2894 = vadd.f32 0.0, %v2893
  %v2895 = vpop.f32.mrf.mxu0
  %v2896 = vadd.f32 0.0, %v2895
  %2897 = vmatmul.bf16.gmra.mxu0 %v2821
  %v2898 = vpop.f32.mrf.mxu0
  %v2899 = vadd.f32 0.0, %v2898
  %v2900 = vpop.f32.mrf.mxu0
  %v2901 = vadd.f32 0.0, %v2900
  %2902 = vmatmul.bf16.gmra.mxu0 %v2822
  %v2903 = vpop.f32.mrf.mxu0
  %v2904 = vadd.f32 0.0, %v2903
  %v2905 = vpop.f32.mrf.mxu0
  %v2906 = vadd.f32 0.0, %v2905
  %2907 = vmatmul.bf16.gmra.mxu0 %v2823
  %v2908 = vpop.f32.mrf.mxu0
  %v2909 = vadd.f32 0.0, %v2908
  %v2910 = vpop.f32.mrf.mxu0
  %v2911 = vadd.f32 0.0, %v2910
  %2912 = vmatmul.bf16.gmra.mxu0 %v2824
  %v2913 = vpop.f32.mrf.mxu0
  %v2914 = vadd.f32 0.0, %v2913
  %v2915 = vpop.f32.mrf.mxu0
  %v2916 = vadd.f32 0.0, %v2915
  %2917 = vmatmul.bf16.gmra.mxu0 %v2825
  %v2918 = vpop.f32.mrf.mxu0
  %v2919 = vadd.f32 0.0, %v2918
  %v2920 = vpop.f32.mrf.mxu0
  %v2921 = vadd.f32 0.0, %v2920
  %2922 = vmatmul.bf16.gmra.mxu0 %v2826
  %v2923 = vpop.f32.mrf.mxu0
  %v2924 = vadd.f32 0.0, %v2923
  %v2925 = vpop.f32.mrf.mxu0
  %v2926 = vadd.f32 0.0, %v2925
  %2927 = vmatmul.bf16.gmra.mxu0 %v2827
  %v2928 = vpop.f32.mrf.mxu0
  %v2929 = vadd.f32 0.0, %v2928
  %v2930 = vpop.f32.mrf.mxu0
  %v2931 = vadd.f32 0.0, %v2930
  %2932 = vdwg.mxu0
  %v2933 = vadd.f32 %v2787, %v2894
  %v2934 = vadd.f32 %v2788, %v2896
  %v2935 = vadd.f32 %v2789, %v2899
  %v2936 = vadd.f32 %v2790, %v2901
  %v2937 = vadd.f32 %v2791, %v2904
  %v2938 = vadd.f32 %v2792, %v2906
  %v2939 = vadd.f32 %v2793, %v2909
  %v2940 = vadd.f32 %v2794, %v2911
  %v2941 = vadd.f32 %v2795, %v2914
  %v2942 = vadd.f32 %v2796, %v2916
  %v2943 = vadd.f32 %v2797, %v2919
  %v2944 = vadd.f32 %v2798, %v2921
  %v2945 = vadd.f32 %v2799, %v2924
  %v2946 = vadd.f32 %v2800, %v2926
  %v2947 = vadd.f32 %v2801, %v2929
  %v2948 = vadd.f32 %v2802, %v2931
  %v2949 = vadd.f32 %v2933, %v2934
  %v2950 = vadd.f32 %v2949, %v2935
  %v2951 = vadd.f32 %v2950, %v2936
  %v2952 = vadd.f32 %v2951, %v2937
  %v2953 = vadd.f32 %v2952, %v2938
  %v2954 = vadd.f32 %v2953, %v2939
  %v2955 = vadd.f32 %v2954, %v2940
  %v2956 = vadd.f32 %v2955, %v2941
  %v2957 = vadd.f32 %v2956, %v2942
  %v2958 = vadd.f32 %v2957, %v2943
  %v2959 = vadd.f32 %v2958, %v2944
  %v2960 = vadd.f32 %v2959, %v2945
  %v2961 = vadd.f32 %v2960, %v2946
  %v2962 = vadd.f32 %v2961, %v2947
  %v2963 = vadd.f32 %v2962, %v2948
  %v2964 = vrot.slane %v2963, 4
  %v2965 = vadd.f32 %v2963, %v2964
  %v2966 = vrot.slane %v2965, 2
  %v2967 = vadd.f32 %v2965, %v2966
  %v2968 = vrot.slane %v2967, 1
  %v2969 = vadd.f32 %v2967, %v2968
  %v2970 = vadd.f32 %v2969, 0.0
  %v2971 = vmul.f32 %v2933, %v2933
  %v2972 = vmul.f32 %v2934, %v2934
  %v2973 = vmul.f32 %v2935, %v2935
  %v2974 = vmul.f32 %v2936, %v2936
  %v2975 = vmul.f32 %v2937, %v2937
  %v2976 = vmul.f32 %v2938, %v2938
  %v2977 = vmul.f32 %v2939, %v2939
  %v2978 = vmul.f32 %v2940, %v2940
  %v2979 = vmul.f32 %v2941, %v2941
  %v2980 = vmul.f32 %v2942, %v2942
  %v2981 = vmul.f32 %v2943, %v2943
  %v2982 = vmul.f32 %v2944, %v2944
  %v2983 = vmul.f32 %v2945, %v2945
  %v2984 = vmul.f32 %v2946, %v2946
  %v2985 = vmul.f32 %v2947, %v2947
  %v2986 = vmul.f32 %v2948, %v2948
  %v2987 = vadd.f32 %v2971, %v2972
  %v2988 = vadd.f32 %v2987, %v2973
  %v2989 = vadd.f32 %v2988, %v2974
  %v2990 = vadd.f32 %v2989, %v2975
  %v2991 = vadd.f32 %v2990, %v2976
  %v2992 = vadd.f32 %v2991, %v2977
  %v2993 = vadd.f32 %v2992, %v2978
  %v2994 = vadd.f32 %v2993, %v2979
  %v2995 = vadd.f32 %v2994, %v2980
  %v2996 = vadd.f32 %v2995, %v2981
  %v2997 = vadd.f32 %v2996, %v2982
  %v2998 = vadd.f32 %v2997, %v2983
  %v2999 = vadd.f32 %v2998, %v2984
  %v3000 = vadd.f32 %v2999, %v2985
  %v3001 = vadd.f32 %v3000, %v2986
  %v3002 = vrot.slane %v3001, 4
  %v3003 = vadd.f32 %v3001, %v3002
  %v3004 = vrot.slane %v3003, 2
  %v3005 = vadd.f32 %v3003, %v3004
  %v3006 = vrot.slane %v3005, 1
  %v3007 = vadd.f32 %v3005, %v3006
  %v3008 = vadd.f32 %v3007, 0.0
  %3009 = vst [vmem:[#allocation3] sm:$0xff] %v2933
  %3010 = vst [vmem:[#allocation3 + $0x8] sm:$0xff] %v2934
  %3011 = vst [vmem:[#allocation3 + $0x10] sm:$0xff] %v2935
  %3012 = vst [vmem:[#allocation3 + $0x18] sm:$0xff] %v2936
  %3013 = vst [vmem:[#allocation3 + $0x20] sm:$0xff] %v2937
  %3014 = vst [vmem:[#allocation3 + $0x28] sm:$0xff] %v2938
  %3015 = vst [vmem:[#allocation3 + $0x30] sm:$0xff] %v2939
  %3016 = vst [vmem:[#allocation3 + $0x38] sm:$0xff] %v2940
  %3017 = vst [vmem:[#allocation3 + $0x40] sm:$0xff] %v2941
  %3018 = vst [vmem:[#allocation3 + $0x48] sm:$0xff] %v2942
  %3019 = vst [vmem:[#allocation3 + $0x50] sm:$0xff] %v2943
  %3020 = vst [vmem:[#allocation3 + $0x58] sm:$0xff] %v2944
  %3021 = vst [vmem:[#allocation3 + $0x60] sm:$0xff] %v2945
  %3022 = vst [vmem:[#allocation3 + $0x68] sm:$0xff] %v2946
  %3023 = vst [vmem:[#allocation3 + $0x70] sm:$0xff] %v2947
  %3024 = vst [vmem:[#allocation3 + $0x78] sm:$0xff] %v2948
  %v3025 = vld [vmem:[#allocation2 + $0x44] sm:$0x8]
  %v3026 = vld [vmem:[#allocation2 + $0x48] sm:$0xf]
  %v3027 = vld [vmem:[#allocation2 + $0x4c] sm:$0xf]
  %v3028 = vld [vmem:[#allocation2 + $0x50] sm:$0xf]
  %v3029 = vld [vmem:[#allocation2 + $0x54] sm:$0xf]
  %v3030 = vld [vmem:[#allocation2 + $0x58] sm:$0xf]
  %v3031 = vld [vmem:[#allocation2 + $0x5c] sm:$0xf]
  %v3032 = vld [vmem:[#allocation2 + $0x60] sm:$0xf]
  %v3033 = vld [vmem:[#allocation2 + $0x64] sm:$0xf]
  %v3034 = vld [vmem:[#allocation2 + $0x68] sm:$0xf]
  %v3035 = vld [vmem:[#allocation2 + $0x6c] sm:$0xf]
  %v3036 = vld [vmem:[#allocation2 + $0x70] sm:$0xf]
  %v3037 = vld [vmem:[#allocation2 + $0x74] sm:$0xf]
  %v3038 = vld [vmem:[#allocation2 + $0x78] sm:$0xf]
  %v3039 = vld [vmem:[#allocation2 + $0x7c] sm:$0xf]
  %v3040 = vld [vmem:[#allocation2 + $0x80] sm:$0xf]
  %v3041 = vld [vmem:[#allocation2 + $0x84] sm:$0xf]
  %v3042 = vld [vmem:[%s2] sm:$0xf]
  %v3043 = vld [vmem:[%s2 + $0x4] sm:$0xf]
  %v3044 = vld [vmem:[%s2 + $0x8] sm:$0xf]
  %v3045 = vld [vmem:[%s2 + $0xc] sm:$0xf]
  %v3046 = vld [vmem:[%s2 + $0x10] sm:$0xf]
  %v3047 = vld [vmem:[%s2 + $0x14] sm:$0xf]
  %v3048 = vld [vmem:[%s2 + $0x18] sm:$0xf]
  %v3049 = vld [vmem:[%s2 + $0x1c] sm:$0xf]
  %v3050 = vld [vmem:[%s2 + $0x20] sm:$0xf]
  %v3051 = vld [vmem:[%s2 + $0x24] sm:$0xf]
  %v3052 = vld [vmem:[%s2 + $0x28] sm:$0xf]
  %v3053 = vld [vmem:[%s2 + $0x2c] sm:$0xf]
  %v3054 = vld [vmem:[%s2 + $0x30] sm:$0xf]
  %v3055 = vld [vmem:[%s2 + $0x34] sm:$0xf]
  %v3056 = vld [vmem:[%s2 + $0x38] sm:$0xf]
  %v3057 = vld [vmem:[%s2 + $0x3c] sm:$0xf]
  %v3058 = vld [vmem:[#allocation2 + $0x4c] sm:$0x8]
  %v3059 = vld [vmem:[#allocation2 + $0x88] sm:$0xf]
  %v3060 = vld [vmem:[#allocation2 + $0x8c] sm:$0xf]
  %v3061 = vld [vmem:[%s1000] sm:$0xf]
  %v3062 = vld [vmem:[%s1000 + $0x4] sm:$0xf]
  %v3063 = vld [vmem:[%s1000 + $0x8] sm:$0xf]
  %v3064 = vld [vmem:[%s1000 + $0xc] sm:$0xf]
  %v3065 = vld [vmem:[%s1000 + $0x10] sm:$0xf]
  %v3066 = vld [vmem:[%s1000 + $0x14] sm:$0xf]
  %v3067 = vld [vmem:[%s1000 + $0x18] sm:$0xf]
  %v3068 = vld [vmem:[%s1000 + $0x1c] sm:$0xf]
  %v3069 = vld [vmem:[%s1000 + $0x20] sm:$0xf]
  %v3070 = vld [vmem:[%s1000 + $0x24] sm:$0xf]
  %v3071 = vld [vmem:[%s1000 + $0x28] sm:$0xf]
  %v3072 = vld [vmem:[%s1000 + $0x2c] sm:$0xf]
  %v3073 = vld [vmem:[%s1000 + $0x30] sm:$0xf]
  %v3074 = vld [vmem:[%s1000 + $0x34] sm:$0xf]
  %v3075 = vld [vmem:[%s1000 + $0x38] sm:$0xf]
  %v3076 = vld [vmem:[%s1000 + $0x3c] sm:$0xf]
  %v3094 = vunpack.c.l.b16 %v3058
  %v3095 = vunpack.c.l.b16 %v3028
  %v3096 = vunpack.c.l.b16 %v3029
  %v3097 = vunpack.c.l.b16 %v3030
  %v3098 = vunpack.c.l.b16 %v3031
  %v3099 = vunpack.c.l.b16 %v3032
  %v3100 = vunpack.c.l.b16 %v3033
  %v3101 = vunpack.c.l.b16 %v3034
  %v3102 = vunpack.c.l.b16 %v3035
  %v3103 = vunpack.c.l.b16 %v3036
  %v3104 = vunpack.c.l.b16 %v3037
  %v3105 = vunpack.c.l.b16 %v3038
  %v3106 = vunpack.c.l.b16 %v3039
  %v3107 = vunpack.c.l.b16 %v3040
  %v3108 = vunpack.c.l.b16 %v3041
  %v3109 = vunpack.c.l.b16 %v3059
  %v3110 = vunpack.c.l.b16 %v3060
  %v3111 = vpack.c.b16 %v3095, %v3094
  %v3112 = vpack.c.b16 %v3097, %v3096
  %v3113 = vpack.c.b16 %v3099, %v3098
  %v3114 = vpack.c.b16 %v3101, %v3100
  %v3115 = vpack.c.b16 %v3103, %v3102
  %v3116 = vpack.c.b16 %v3105, %v3104
  %v3117 = vpack.c.b16 %v3107, %v3106
  %v3118 = vpack.c.b16 %v3109, %v3108
  %v3119 = vpack.c.b16 %v3110, %v3110
  %v3121 = vshrl.u32 %v3111, 16
  %v3123 = vrot.slane %v3121, 3
  %v3124 = vshll.u32 %v3111, 16
  %v3126 = vrot.slane %v3124, 4
  %v3127 = vor.u32 %v3123, %v3126
  %v3129 = vshrl.u32 %v3112, 16
  %v3131 = vrot.slane %v3129, 3
  %v3132 = vshll.u32 %v3112, 16
  %v3134 = vrot.slane %v3132, 4
  %v3135 = vor.u32 %v3131, %v3134
  %v3136 = vsel %vm1060, %v3127, %v3135
  %v3138 = vshrl.u32 %v3113, 16
  %v3140 = vrot.slane %v3138, 3
  %v3141 = vshll.u32 %v3113, 16
  %v3143 = vrot.slane %v3141, 4
  %v3144 = vor.u32 %v3140, %v3143
  %v3145 = vsel %vm1060, %v3135, %v3144
  %v3147 = vshrl.u32 %v3114, 16
  %v3149 = vrot.slane %v3147, 3
  %v3150 = vshll.u32 %v3114, 16
  %v3152 = vrot.slane %v3150, 4
  %v3153 = vor.u32 %v3149, %v3152
  %v3154 = vsel %vm1060, %v3144, %v3153
  %v3156 = vshrl.u32 %v3115, 16
  %v3158 = vrot.slane %v3156, 3
  %v3159 = vshll.u32 %v3115, 16
  %v3161 = vrot.slane %v3159, 4
  %v3162 = vor.u32 %v3158, %v3161
  %v3163 = vsel %vm1060, %v3153, %v3162
  %v3165 = vshrl.u32 %v3116, 16
  %v3167 = vrot.slane %v3165, 3
  %v3168 = vshll.u32 %v3116, 16
  %v3170 = vrot.slane %v3168, 4
  %v3171 = vor.u32 %v3167, %v3170
  %v3172 = vsel %vm1060, %v3162, %v3171
  %v3174 = vshrl.u32 %v3117, 16
  %v3176 = vrot.slane %v3174, 3
  %v3177 = vshll.u32 %v3117, 16
  %v3179 = vrot.slane %v3177, 4
  %v3180 = vor.u32 %v3176, %v3179
  %v3181 = vsel %vm1060, %v3171, %v3180
  %v3183 = vshrl.u32 %v3118, 16
  %v3185 = vrot.slane %v3183, 3
  %v3186 = vshll.u32 %v3118, 16
  %v3188 = vrot.slane %v3186, 4
  %v3189 = vor.u32 %v3185, %v3188
  %v3190 = vsel %vm1060, %v3180, %v3189
  %v3192 = vshrl.u32 %v3119, 16
  %v3194 = vrot.slane %v3192, 3
  %v3195 = vshll.u32 %v3119, 16
  %v3197 = vrot.slane %v3195, 4
  %v3198 = vor.u32 %v3194, %v3197
  %v3199 = vsel %vm1060, %v3189, %v3198
  %v3224 = vunpack.c.l.b16 %v3061
  %v3225 = vunpack.c.l.b16 %v3062
  %v3226 = vunpack.c.l.b16 %v3063
  %v3227 = vunpack.c.l.b16 %v3064
  %v3228 = vunpack.c.l.b16 %v3065
  %v3229 = vunpack.c.l.b16 %v3066
  %v3230 = vunpack.c.l.b16 %v3067
  %v3231 = vunpack.c.l.b16 %v3068
  %v3232 = vunpack.c.l.b16 %v3069
  %v3233 = vunpack.c.l.b16 %v3070
  %v3234 = vunpack.c.l.b16 %v3071
  %v3235 = vunpack.c.l.b16 %v3072
  %v3236 = vunpack.c.l.b16 %v3073
  %v3237 = vunpack.c.l.b16 %v3074
  %v3238 = vunpack.c.l.b16 %v3075
  %v3239 = vunpack.c.l.b16 %v3076
  %v3240 = vpack.c.b16 %v3225, %v3224
  %v3241 = vpack.c.b16 %v3227, %v3226
  %v3242 = vpack.c.b16 %v3229, %v3228
  %v3243 = vpack.c.b16 %v3231, %v3230
  %v3244 = vpack.c.b16 %v3233, %v3232
  %v3245 = vpack.c.b16 %v3235, %v3234
  %v3246 = vpack.c.b16 %v3237, %v3236
  %v3247 = vpack.c.b16 %v3239, %v3238
  %3256 = vmatpush.bf16.msra.mxu0 %v3247
  %3257 = vmatpush.bf16.msra.mxu0 %v3246
  %3258 = vmatpush.bf16.msra.mxu0 %v3245
  %3259 = vmatpush.bf16.msra.mxu0 %v3244
  %3260 = vmatpush.bf16.msra.mxu0 %v3243
  %3261 = vmatpush.bf16.msra.mxu0 %v3242
  %3262 = vmatpush.bf16.msra.mxu0 %v3241
  %3263 = vmatpush.bf16.msra.mxu0 %v3240
  %3264 = vmatmul.bf16.gmra.mxu0 %v3136
  %v3265 = vpop.f32.mrf.mxu0
  %v3266 = vadd.f32 0.0, %v3265
  %v3267 = vpop.f32.mrf.mxu0
  %v3268 = vadd.f32 0.0, %v3267
  %3269 = vmatmul.bf16.gmra.mxu0 %v3145
  %v3270 = vpop.f32.mrf.mxu0
  %v3271 = vadd.f32 0.0, %v3270
  %v3272 = vpop.f32.mrf.mxu0
  %v3273 = vadd.f32 0.0, %v3272
  %3274 = vmatmul.bf16.gmra.mxu0 %v3154
  %v3275 = vpop.f32.mrf.mxu0
  %v3276 = vadd.f32 0.0, %v3275
  %v3277 = vpop.f32.mrf.mxu0
  %v3278 = vadd.f32 0.0, %v3277
  %3279 = vmatmul.bf16.gmra.mxu0 %v3163
  %v3280 = vpop.f32.mrf.mxu0
  %v3281 = vadd.f32 0.0, %v3280
  %v3282 = vpop.f32.mrf.mxu0
  %v3283 = vadd.f32 0.0, %v3282
  %3284 = vmatmul.bf16.gmra.mxu0 %v3172
  %v3285 = vpop.f32.mrf.mxu0
  %v3286 = vadd.f32 0.0, %v3285
  %v3287 = vpop.f32.mrf.mxu0
  %v3288 = vadd.f32 0.0, %v3287
  %3289 = vmatmul.bf16.gmra.mxu0 %v3181
  %v3290 = vpop.f32.mrf.mxu0
  %v3291 = vadd.f32 0.0, %v3290
  %v3292 = vpop.f32.mrf.mxu0
  %v3293 = vadd.f32 0.0, %v3292
  %3294 = vmatmul.bf16.gmra.mxu0 %v3190
  %v3295 = vpop.f32.mrf.mxu0
  %v3296 = vadd.f32 0.0, %v3295
  %v3297 = vpop.f32.mrf.mxu0
  %v3298 = vadd.f32 0.0, %v3297
  %3299 = vmatmul.bf16.gmra.mxu0 %v3199
  %v3300 = vpop.f32.mrf.mxu0
  %v3301 = vadd.f32 0.0, %v3300
  %v3302 = vpop.f32.mrf.mxu0
  %v3303 = vadd.f32 0.0, %v3302
  %3304 = vdwg.mxu0
  %v3308 = vunpack.c.l.b16 %v3025
  %v3309 = vunpack.c.l.b16 %v3026
  %v3310 = vunpack.c.l.b16 %v3027
  %v3311 = vpack.c.b16 %v3309, %v3308
  %v3312 = vpack.c.b16 %v3095, %v3310
  %v3313 = vpack.c.b16 %v3108, %v3108
  %v3315 = vshrl.u32 %v3311, 16
  %v3317 = vrot.slane %v3315, 3
  %v3318 = vshll.u32 %v3311, 16
  %v3320 = vrot.slane %v3318, 4
  %v3321 = vor.u32 %v3317, %v3320
  %v3323 = vshrl.u32 %v3312, 16
  %v3325 = vrot.slane %v3323, 3
  %v3326 = vshll.u32 %v3312, 16
  %v3328 = vrot.slane %v3326, 4
  %v3329 = vor.u32 %v3325, %v3328
  %v3330 = vsel %vm1060, %v3321, %v3329
  %v3331 = vsel %vm1060, %v3329, %v3135
  %v3333 = vshrl.u32 %v3313, 16
  %v3335 = vrot.slane %v3333, 3
  %v3336 = vshll.u32 %v3313, 16
  %v3338 = vrot.slane %v3336, 4
  %v3339 = vor.u32 %v3335, %v3338
  %v3340 = vsel %vm1060, %v3180, %v3339
  %v3360 = vunpack.c.l.b16 %v3042
  %v3361 = vunpack.c.l.b16 %v3043
  %v3362 = vunpack.c.l.b16 %v3044
  %v3363 = vunpack.c.l.b16 %v3045
  %v3364 = vunpack.c.l.b16 %v3046
  %v3365 = vunpack.c.l.b16 %v3047
  %v3366 = vunpack.c.l.b16 %v3048
  %v3367 = vunpack.c.l.b16 %v3049
  %v3368 = vunpack.c.l.b16 %v3050
  %v3369 = vunpack.c.l.b16 %v3051
  %v3370 = vunpack.c.l.b16 %v3052
  %v3371 = vunpack.c.l.b16 %v3053
  %v3372 = vunpack.c.l.b16 %v3054
  %v3373 = vunpack.c.l.b16 %v3055
  %v3374 = vunpack.c.l.b16 %v3056
  %v3375 = vunpack.c.l.b16 %v3057
  %v3376 = vpack.c.b16 %v3361, %v3360
  %v3377 = vpack.c.b16 %v3363, %v3362
  %v3378 = vpack.c.b16 %v3365, %v3364
  %v3379 = vpack.c.b16 %v3367, %v3366
  %v3380 = vpack.c.b16 %v3369, %v3368
  %v3381 = vpack.c.b16 %v3371, %v3370
  %v3382 = vpack.c.b16 %v3373, %v3372
  %v3383 = vpack.c.b16 %v3375, %v3374
  %3392 = vmatpush.bf16.msra.mxu0 %v3383
  %3393 = vmatpush.bf16.msra.mxu0 %v3382
  %3394 = vmatpush.bf16.msra.mxu0 %v3381
  %3395 = vmatpush.bf16.msra.mxu0 %v3380
  %3396 = vmatpush.bf16.msra.mxu0 %v3379
  %3397 = vmatpush.bf16.msra.mxu0 %v3378
  %3398 = vmatpush.bf16.msra.mxu0 %v3377
  %3399 = vmatpush.bf16.msra.mxu0 %v3376
  %3400 = vmatmul.bf16.gmra.mxu0 %v3330
  %v3401 = vpop.f32.mrf.mxu0
  %v3402 = vadd.f32 %v3266, %v3401
  %v3403 = vpop.f32.mrf.mxu0
  %v3404 = vadd.f32 %v3268, %v3403
  %3405 = vmatmul.bf16.gmra.mxu0 %v3331
  %v3406 = vpop.f32.mrf.mxu0
  %v3407 = vadd.f32 %v3271, %v3406
  %v3408 = vpop.f32.mrf.mxu0
  %v3409 = vadd.f32 %v3273, %v3408
  %3410 = vmatmul.bf16.gmra.mxu0 %v3145
  %v3411 = vpop.f32.mrf.mxu0
  %v3412 = vadd.f32 %v3276, %v3411
  %v3413 = vpop.f32.mrf.mxu0
  %v3414 = vadd.f32 %v3278, %v3413
  %3415 = vmatmul.bf16.gmra.mxu0 %v3154
  %v3416 = vpop.f32.mrf.mxu0
  %v3417 = vadd.f32 %v3281, %v3416
  %v3418 = vpop.f32.mrf.mxu0
  %v3419 = vadd.f32 %v3283, %v3418
  %3420 = vmatmul.bf16.gmra.mxu0 %v3163
  %v3421 = vpop.f32.mrf.mxu0
  %v3422 = vadd.f32 %v3286, %v3421
  %v3423 = vpop.f32.mrf.mxu0
  %v3424 = vadd.f32 %v3288, %v3423
  %3425 = vmatmul.bf16.gmra.mxu0 %v3172
  %v3426 = vpop.f32.mrf.mxu0
  %v3427 = vadd.f32 %v3291, %v3426
  %v3428 = vpop.f32.mrf.mxu0
  %v3429 = vadd.f32 %v3293, %v3428
  %3430 = vmatmul.bf16.gmra.mxu0 %v3181
  %v3431 = vpop.f32.mrf.mxu0
  %v3432 = vadd.f32 %v3296, %v3431
  %v3433 = vpop.f32.mrf.mxu0
  %v3434 = vadd.f32 %v3298, %v3433
  %3435 = vmatmul.bf16.gmra.mxu0 %v3340
  %v3436 = vpop.f32.mrf.mxu0
  %v3437 = vadd.f32 %v3301, %v3436
  %v3438 = vpop.f32.mrf.mxu0
  %v3439 = vadd.f32 %v3303, %v3438
  %3440 = vdwg.mxu0
  %v3441 = vld [vmem:[#allocation2 + $0x54] sm:$0x8]
  %v3442 = vld [vmem:[#allocation2 + $0x58] sm:$0xf]
  %v3443 = vld [vmem:[#allocation2 + $0x5c] sm:$0xf]
  %v3444 = vld [vmem:[#allocation2 + $0x60] sm:$0xf]
  %v3445 = vld [vmem:[#allocation2 + $0x64] sm:$0xf]
  %v3446 = vld [vmem:[#allocation2 + $0x68] sm:$0xf]
  %v3447 = vld [vmem:[#allocation2 + $0x6c] sm:$0xf]
  %v3448 = vld [vmem:[#allocation2 + $0x70] sm:$0xf]
  %v3449 = vld [vmem:[#allocation2 + $0x74] sm:$0xf]
  %v3450 = vld [vmem:[#allocation2 + $0x78] sm:$0xf]
  %v3451 = vld [vmem:[#allocation2 + $0x7c] sm:$0xf]
  %v3452 = vld [vmem:[#allocation2 + $0x80] sm:$0xf]
  %v3453 = vld [vmem:[#allocation2 + $0x84] sm:$0xf]
  %v3454 = vld [vmem:[#allocation2 + $0x88] sm:$0xf]
  %v3455 = vld [vmem:[#allocation2 + $0x8c] sm:$0xf]
  %v3456 = vld [vmem:[#allocation2 + $0x90] sm:$0xf]
  %v3457 = vld [vmem:[#allocation2 + $0x94] sm:$0xf]
  %v3458 = vld [vmem:[%s1399] sm:$0xf]
  %v3459 = vld [vmem:[%s1399 + $0x4] sm:$0xf]
  %v3460 = vld [vmem:[%s1399 + $0x8] sm:$0xf]
  %v3461 = vld [vmem:[%s1399 + $0xc] sm:$0xf]
  %v3462 = vld [vmem:[%s1399 + $0x10] sm:$0xf]
  %v3463 = vld [vmem:[%s1399 + $0x14] sm:$0xf]
  %v3464 = vld [vmem:[%s1399 + $0x18] sm:$0xf]
  %v3465 = vld [vmem:[%s1399 + $0x1c] sm:$0xf]
  %v3466 = vld [vmem:[%s1399 + $0x20] sm:$0xf]
  %v3467 = vld [vmem:[%s1399 + $0x24] sm:$0xf]
  %v3468 = vld [vmem:[%s1399 + $0x28] sm:$0xf]
  %v3469 = vld [vmem:[%s1399 + $0x2c] sm:$0xf]
  %v3470 = vld [vmem:[%s1399 + $0x30] sm:$0xf]
  %v3471 = vld [vmem:[%s1399 + $0x34] sm:$0xf]
  %v3472 = vld [vmem:[%s1399 + $0x38] sm:$0xf]
  %v3473 = vld [vmem:[%s1399 + $0x3c] sm:$0xf]
  %v3491 = vunpack.c.l.b16 %v3441
  %v3492 = vunpack.c.l.b16 %v3442
  %v3493 = vunpack.c.l.b16 %v3443
  %v3494 = vunpack.c.l.b16 %v3444
  %v3495 = vunpack.c.l.b16 %v3445
  %v3496 = vunpack.c.l.b16 %v3446
  %v3497 = vunpack.c.l.b16 %v3447
  %v3498 = vunpack.c.l.b16 %v3448
  %v3499 = vunpack.c.l.b16 %v3449
  %v3500 = vunpack.c.l.b16 %v3450
  %v3501 = vunpack.c.l.b16 %v3451
  %v3502 = vunpack.c.l.b16 %v3452
  %v3503 = vunpack.c.l.b16 %v3453
  %v3504 = vunpack.c.l.b16 %v3454
  %v3505 = vunpack.c.l.b16 %v3455
  %v3506 = vunpack.c.l.b16 %v3456
  %v3507 = vunpack.c.l.b16 %v3457
  %v3508 = vpack.c.b16 %v3492, %v3491
  %v3509 = vpack.c.b16 %v3494, %v3493
  %v3510 = vpack.c.b16 %v3496, %v3495
  %v3511 = vpack.c.b16 %v3498, %v3497
  %v3512 = vpack.c.b16 %v3500, %v3499
  %v3513 = vpack.c.b16 %v3502, %v3501
  %v3514 = vpack.c.b16 %v3504, %v3503
  %v3515 = vpack.c.b16 %v3506, %v3505
  %v3516 = vpack.c.b16 %v3507, %v3507
  %v3518 = vshrl.u32 %v3508, 16
  %v3520 = vrot.slane %v3518, 3
  %v3521 = vshll.u32 %v3508, 16
  %v3523 = vrot.slane %v3521, 4
  %v3524 = vor.u32 %v3520, %v3523
  %v3526 = vshrl.u32 %v3509, 16
  %v3528 = vrot.slane %v3526, 3
  %v3529 = vshll.u32 %v3509, 16
  %v3531 = vrot.slane %v3529, 4
  %v3532 = vor.u32 %v3528, %v3531
  %v3533 = vsel %vm1060, %v3524, %v3532
  %v3535 = vshrl.u32 %v3510, 16
  %v3537 = vrot.slane %v3535, 3
  %v3538 = vshll.u32 %v3510, 16
  %v3540 = vrot.slane %v3538, 4
  %v3541 = vor.u32 %v3537, %v3540
  %v3542 = vsel %vm1060, %v3532, %v3541
  %v3544 = vshrl.u32 %v3511, 16
  %v3546 = vrot.slane %v3544, 3
  %v3547 = vshll.u32 %v3511, 16
  %v3549 = vrot.slane %v3547, 4
  %v3550 = vor.u32 %v3546, %v3549
  %v3551 = vsel %vm1060, %v3541, %v3550
  %v3553 = vshrl.u32 %v3512, 16
  %v3555 = vrot.slane %v3553, 3
  %v3556 = vshll.u32 %v3512, 16
  %v3558 = vrot.slane %v3556, 4
  %v3559 = vor.u32 %v3555, %v3558
  %v3560 = vsel %vm1060, %v3550, %v3559
  %v3562 = vshrl.u32 %v3513, 16
  %v3564 = vrot.slane %v3562, 3
  %v3565 = vshll.u32 %v3513, 16
  %v3567 = vrot.slane %v3565, 4
  %v3568 = vor.u32 %v3564, %v3567
  %v3569 = vsel %vm1060, %v3559, %v3568
  %v3571 = vshrl.u32 %v3514, 16
  %v3573 = vrot.slane %v3571, 3
  %v3574 = vshll.u32 %v3514, 16
  %v3576 = vrot.slane %v3574, 4
  %v3577 = vor.u32 %v3573, %v3576
  %v3578 = vsel %vm1060, %v3568, %v3577
  %v3580 = vshrl.u32 %v3515, 16
  %v3582 = vrot.slane %v3580, 3
  %v3583 = vshll.u32 %v3515, 16
  %v3585 = vrot.slane %v3583, 4
  %v3586 = vor.u32 %v3582, %v3585
  %v3587 = vsel %vm1060, %v3577, %v3586
  %v3589 = vshrl.u32 %v3516, 16
  %v3591 = vrot.slane %v3589, 3
  %v3592 = vshll.u32 %v3516, 16
  %v3594 = vrot.slane %v3592, 4
  %v3595 = vor.u32 %v3591, %v3594
  %v3596 = vsel %vm1060, %v3586, %v3595
  %v3621 = vunpack.c.l.b16 %v3458
  %v3622 = vunpack.c.l.b16 %v3459
  %v3623 = vunpack.c.l.b16 %v3460
  %v3624 = vunpack.c.l.b16 %v3461
  %v3625 = vunpack.c.l.b16 %v3462
  %v3626 = vunpack.c.l.b16 %v3463
  %v3627 = vunpack.c.l.b16 %v3464
  %v3628 = vunpack.c.l.b16 %v3465
  %v3629 = vunpack.c.l.b16 %v3466
  %v3630 = vunpack.c.l.b16 %v3467
  %v3631 = vunpack.c.l.b16 %v3468
  %v3632 = vunpack.c.l.b16 %v3469
  %v3633 = vunpack.c.l.b16 %v3470
  %v3634 = vunpack.c.l.b16 %v3471
  %v3635 = vunpack.c.l.b16 %v3472
  %v3636 = vunpack.c.l.b16 %v3473
  %v3637 = vpack.c.b16 %v3622, %v3621
  %v3638 = vpack.c.b16 %v3624, %v3623
  %v3639 = vpack.c.b16 %v3626, %v3625
  %v3640 = vpack.c.b16 %v3628, %v3627
  %v3641 = vpack.c.b16 %v3630, %v3629
  %v3642 = vpack.c.b16 %v3632, %v3631
  %v3643 = vpack.c.b16 %v3634, %v3633
  %v3644 = vpack.c.b16 %v3636, %v3635
  %3653 = vmatpush.bf16.msra.mxu0 %v3644
  %3654 = vmatpush.bf16.msra.mxu0 %v3643
  %3655 = vmatpush.bf16.msra.mxu0 %v3642
  %3656 = vmatpush.bf16.msra.mxu0 %v3641
  %3657 = vmatpush.bf16.msra.mxu0 %v3640
  %3658 = vmatpush.bf16.msra.mxu0 %v3639
  %3659 = vmatpush.bf16.msra.mxu0 %v3638
  %3660 = vmatpush.bf16.msra.mxu0 %v3637
  %3661 = vmatmul.bf16.gmra.mxu0 %v3533
  %v3662 = vpop.f32.mrf.mxu0
  %v3663 = vadd.f32 0.0, %v3662
  %v3664 = vpop.f32.mrf.mxu0
  %v3665 = vadd.f32 0.0, %v3664
  %3666 = vmatmul.bf16.gmra.mxu0 %v3542
  %v3667 = vpop.f32.mrf.mxu0
  %v3668 = vadd.f32 0.0, %v3667
  %v3669 = vpop.f32.mrf.mxu0
  %v3670 = vadd.f32 0.0, %v3669
  %3671 = vmatmul.bf16.gmra.mxu0 %v3551
  %v3672 = vpop.f32.mrf.mxu0
  %v3673 = vadd.f32 0.0, %v3672
  %v3674 = vpop.f32.mrf.mxu0
  %v3675 = vadd.f32 0.0, %v3674
  %3676 = vmatmul.bf16.gmra.mxu0 %v3560
  %v3677 = vpop.f32.mrf.mxu0
  %v3678 = vadd.f32 0.0, %v3677
  %v3679 = vpop.f32.mrf.mxu0
  %v3680 = vadd.f32 0.0, %v3679
  %3681 = vmatmul.bf16.gmra.mxu0 %v3569
  %v3682 = vpop.f32.mrf.mxu0
  %v3683 = vadd.f32 0.0, %v3682
  %v3684 = vpop.f32.mrf.mxu0
  %v3685 = vadd.f32 0.0, %v3684
  %3686 = vmatmul.bf16.gmra.mxu0 %v3578
  %v3687 = vpop.f32.mrf.mxu0
  %v3688 = vadd.f32 0.0, %v3687
  %v3689 = vpop.f32.mrf.mxu0
  %v3690 = vadd.f32 0.0, %v3689
  %3691 = vmatmul.bf16.gmra.mxu0 %v3587
  %v3692 = vpop.f32.mrf.mxu0
  %v3693 = vadd.f32 0.0, %v3692
  %v3694 = vpop.f32.mrf.mxu0
  %v3695 = vadd.f32 0.0, %v3694
  %3696 = vmatmul.bf16.gmra.mxu0 %v3596
  %v3697 = vpop.f32.mrf.mxu0
  %v3698 = vadd.f32 0.0, %v3697
  %v3699 = vpop.f32.mrf.mxu0
  %v3700 = vadd.f32 0.0, %v3699
  %3701 = vdwg.mxu0
  %v3702 = vadd.f32 %v3402, %v3663
  %v3703 = vadd.f32 %v3404, %v3665
  %v3704 = vadd.f32 %v3407, %v3668
  %v3705 = vadd.f32 %v3409, %v3670
  %v3706 = vadd.f32 %v3412, %v3673
  %v3707 = vadd.f32 %v3414, %v3675
  %v3708 = vadd.f32 %v3417, %v3678
  %v3709 = vadd.f32 %v3419, %v3680
  %v3710 = vadd.f32 %v3422, %v3683
  %v3711 = vadd.f32 %v3424, %v3685
  %v3712 = vadd.f32 %v3427, %v3688
  %v3713 = vadd.f32 %v3429, %v3690
  %v3714 = vadd.f32 %v3432, %v3693
  %v3715 = vadd.f32 %v3434, %v3695
  %v3716 = vadd.f32 %v3437, %v3698
  %v3717 = vadd.f32 %v3439, %v3700
  %v3718 = vmul.f32 %v3702, %v1663
  %v3719 = vmul.f32 %v3703, %v1668
  %v3720 = vmul.f32 %v3704, %v1673
  %v3721 = vmul.f32 %v3705, %v1678
  %v3722 = vmul.f32 %v3706, %v1683
  %v3723 = vmul.f32 %v3707, %v1688
  %v3724 = vmul.f32 %v3708, %v1693
  %v3725 = vmul.f32 %v3709, %v1698
  %v3726 = vmul.f32 %v3710, %v1703
  %v3727 = vmul.f32 %v3711, %v1708
  %v3728 = vmul.f32 %v3712, %v1713
  %v3729 = vmul.f32 %v3713, %v1718
  %v3730 = vmul.f32 %v3714, %v1723
  %v3731 = vmul.f32 %v3715, %v1728
  %v3732 = vmul.f32 %v3716, %v1733
  %v3733 = vmul.f32 %v3717, %v1738
  %v3734 = vld [vmem:[#allocation2 + $0x48] sm:$0xf]
  %v3735 = vld [vmem:[#allocation2 + $0x4c] sm:$0xf]
  %v3736 = vld [vmem:[#allocation2 + $0x50] sm:$0xf]
  %v3737 = vld [vmem:[#allocation2 + $0x54] sm:$0xf]
  %v3738 = vld [vmem:[#allocation2 + $0x58] sm:$0xf]
  %v3739 = vld [vmem:[#allocation2 + $0x5c] sm:$0xf]
  %v3740 = vld [vmem:[#allocation2 + $0x60] sm:$0xf]
  %v3741 = vld [vmem:[#allocation2 + $0x64] sm:$0xf]
  %v3742 = vld [vmem:[#allocation2 + $0x68] sm:$0xf]
  %v3743 = vld [vmem:[#allocation2 + $0x6c] sm:$0xf]
  %v3744 = vld [vmem:[#allocation2 + $0x70] sm:$0xf]
  %v3745 = vld [vmem:[#allocation2 + $0x74] sm:$0xf]
  %v3746 = vld [vmem:[#allocation2 + $0x78] sm:$0xf]
  %v3747 = vld [vmem:[#allocation2 + $0x7c] sm:$0xf]
  %v3748 = vld [vmem:[#allocation2 + $0x80] sm:$0xf]
  %v3749 = vld [vmem:[#allocation2 + $0x84] sm:$0xf]
  %v3750 = vld [vmem:[#allocation2 + $0x88] sm:$0x1]
  %v3751 = vld [vmem:[%s1773] sm:$0xf]
  %v3752 = vld [vmem:[%s1773 + $0x4] sm:$0xf]
  %v3753 = vld [vmem:[%s1773 + $0x8] sm:$0xf]
  %v3754 = vld [vmem:[%s1773 + $0xc] sm:$0xf]
  %v3755 = vld [vmem:[%s1773 + $0x10] sm:$0xf]
  %v3756 = vld [vmem:[%s1773 + $0x14] sm:$0xf]
  %v3757 = vld [vmem:[%s1773 + $0x18] sm:$0xf]
  %v3758 = vld [vmem:[%s1773 + $0x1c] sm:$0xf]
  %v3759 = vld [vmem:[%s1773 + $0x20] sm:$0xf]
  %v3760 = vld [vmem:[%s1773 + $0x24] sm:$0xf]
  %v3761 = vld [vmem:[%s1773 + $0x28] sm:$0xf]
  %v3762 = vld [vmem:[%s1773 + $0x2c] sm:$0xf]
  %v3763 = vld [vmem:[%s1773 + $0x30] sm:$0xf]
  %v3764 = vld [vmem:[%s1773 + $0x34] sm:$0xf]
  %v3765 = vld [vmem:[%s1773 + $0x38] sm:$0xf]
  %v3766 = vld [vmem:[%s1773 + $0x3c] sm:$0xf]
  %v3767 = vld [vmem:[#allocation2 + $0x88] sm:$0xf]
  %v3768 = vld [vmem:[#allocation2 + $0x8c] sm:$0xf]
  %v3769 = vld [vmem:[#allocation2 + $0x90] sm:$0x1]
  %v3770 = vld [vmem:[%s1793] sm:$0xf]
  %v3771 = vld [vmem:[%s1793 + $0x4] sm:$0xf]
  %v3772 = vld [vmem:[%s1793 + $0x8] sm:$0xf]
  %v3773 = vld [vmem:[%s1793 + $0xc] sm:$0xf]
  %v3774 = vld [vmem:[%s1793 + $0x10] sm:$0xf]
  %v3775 = vld [vmem:[%s1793 + $0x14] sm:$0xf]
  %v3776 = vld [vmem:[%s1793 + $0x18] sm:$0xf]
  %v3777 = vld [vmem:[%s1793 + $0x1c] sm:$0xf]
  %v3778 = vld [vmem:[%s1793 + $0x20] sm:$0xf]
  %v3779 = vld [vmem:[%s1793 + $0x24] sm:$0xf]
  %v3780 = vld [vmem:[%s1793 + $0x28] sm:$0xf]
  %v3781 = vld [vmem:[%s1793 + $0x2c] sm:$0xf]
  %v3782 = vld [vmem:[%s1793 + $0x30] sm:$0xf]
  %v3783 = vld [vmem:[%s1793 + $0x34] sm:$0xf]
  %v3784 = vld [vmem:[%s1793 + $0x38] sm:$0xf]
  %v3785 = vld [vmem:[%s1793 + $0x3c] sm:$0xf]
  %v3803 = vunpack.c.l.b16 %v3736
  %v3804 = vunpack.c.l.b16 %v3737
  %v3805 = vunpack.c.l.b16 %v3738
  %v3806 = vunpack.c.l.b16 %v3739
  %v3807 = vunpack.c.l.b16 %v3740
  %v3808 = vunpack.c.l.b16 %v3741
  %v3809 = vunpack.c.l.b16 %v3742
  %v3810 = vunpack.c.l.b16 %v3743
  %v3811 = vunpack.c.l.b16 %v3744
  %v3812 = vunpack.c.l.b16 %v3745
  %v3813 = vunpack.c.l.b16 %v3746
  %v3814 = vunpack.c.l.b16 %v3747
  %v3815 = vunpack.c.l.b16 %v3748
  %v3816 = vunpack.c.l.b16 %v3749
  %v3817 = vunpack.c.l.b16 %v3767
  %v3818 = vunpack.c.l.b16 %v3768
  %v3819 = vunpack.c.l.b16 %v3769
  %v3820 = vpack.c.b16 %v3804, %v3803
  %v3821 = vpack.c.b16 %v3806, %v3805
  %v3822 = vpack.c.b16 %v3808, %v3807
  %v3823 = vpack.c.b16 %v3810, %v3809
  %v3824 = vpack.c.b16 %v3812, %v3811
  %v3825 = vpack.c.b16 %v3814, %v3813
  %v3826 = vpack.c.b16 %v3816, %v3815
  %v3827 = vpack.c.b16 %v3818, %v3817
  %v3828 = vpack.c.b16 %v3819, %v3819
  %v3830 = vshrl.u32 %v3820, 16
  %v3832 = vshll.u32 %v3820, 16
  %v3834 = vrot.slane %v3832, 1
  %v3835 = vor.u32 %v3830, %v3834
  %v3837 = vshll.u32 %v3821, 16
  %v3839 = vrot.slane %v3837, 1
  %v3840 = vsel %vm1853, %v3835, %v3839
  %v3841 = vshrl.u32 %v3821, 16
  %v3843 = vor.u32 %v3841, %v3839
  %v3845 = vshll.u32 %v3822, 16
  %v3847 = vrot.slane %v3845, 1
  %v3848 = vsel %vm1853, %v3843, %v3847
  %v3849 = vshrl.u32 %v3822, 16
  %v3851 = vor.u32 %v3849, %v3847
  %v3853 = vshll.u32 %v3823, 16
  %v3855 = vrot.slane %v3853, 1
  %v3856 = vsel %vm1853, %v3851, %v3855
  %v3857 = vshrl.u32 %v3823, 16
  %v3859 = vor.u32 %v3857, %v3855
  %v3861 = vshll.u32 %v3824, 16
  %v3863 = vrot.slane %v3861, 1
  %v3864 = vsel %vm1853, %v3859, %v3863
  %v3865 = vshrl.u32 %v3824, 16
  %v3867 = vor.u32 %v3865, %v3863
  %v3869 = vshll.u32 %v3825, 16
  %v3871 = vrot.slane %v3869, 1
  %v3872 = vsel %vm1853, %v3867, %v3871
  %v3873 = vshrl.u32 %v3825, 16
  %v3875 = vor.u32 %v3873, %v3871
  %v3877 = vshll.u32 %v3826, 16
  %v3879 = vrot.slane %v3877, 1
  %v3880 = vsel %vm1853, %v3875, %v3879
  %v3881 = vshrl.u32 %v3826, 16
  %v3883 = vor.u32 %v3881, %v3879
  %v3885 = vshll.u32 %v3827, 16
  %v3887 = vrot.slane %v3885, 1
  %v3888 = vsel %vm1853, %v3883, %v3887
  %v3889 = vshrl.u32 %v3827, 16
  %v3891 = vor.u32 %v3889, %v3887
  %v3893 = vshll.u32 %v3828, 16
  %v3895 = vrot.slane %v3893, 1
  %v3896 = vsel %vm1853, %v3891, %v3895
  %v3921 = vunpack.c.l.b16 %v3770
  %v3922 = vunpack.c.l.b16 %v3771
  %v3923 = vunpack.c.l.b16 %v3772
  %v3924 = vunpack.c.l.b16 %v3773
  %v3925 = vunpack.c.l.b16 %v3774
  %v3926 = vunpack.c.l.b16 %v3775
  %v3927 = vunpack.c.l.b16 %v3776
  %v3928 = vunpack.c.l.b16 %v3777
  %v3929 = vunpack.c.l.b16 %v3778
  %v3930 = vunpack.c.l.b16 %v3779
  %v3931 = vunpack.c.l.b16 %v3780
  %v3932 = vunpack.c.l.b16 %v3781
  %v3933 = vunpack.c.l.b16 %v3782
  %v3934 = vunpack.c.l.b16 %v3783
  %v3935 = vunpack.c.l.b16 %v3784
  %v3936 = vunpack.c.l.b16 %v3785
  %v3937 = vpack.c.b16 %v3922, %v3921
  %v3938 = vpack.c.b16 %v3924, %v3923
  %v3939 = vpack.c.b16 %v3926, %v3925
  %v3940 = vpack.c.b16 %v3928, %v3927
  %v3941 = vpack.c.b16 %v3930, %v3929
  %v3942 = vpack.c.b16 %v3932, %v3931
  %v3943 = vpack.c.b16 %v3934, %v3933
  %v3944 = vpack.c.b16 %v3936, %v3935
  %3953 = vmatpush.bf16.msra.mxu0 %v3944
  %3954 = vmatpush.bf16.msra.mxu0 %v3943
  %3955 = vmatpush.bf16.msra.mxu0 %v3942
  %3956 = vmatpush.bf16.msra.mxu0 %v3941
  %3957 = vmatpush.bf16.msra.mxu0 %v3940
  %3958 = vmatpush.bf16.msra.mxu0 %v3939
  %3959 = vmatpush.bf16.msra.mxu0 %v3938
  %3960 = vmatpush.bf16.msra.mxu0 %v3937
  %3961 = vmatmul.bf16.gmra.mxu0 %v3840
  %v3962 = vpop.f32.mrf.mxu0
  %v3963 = vadd.f32 0.0, %v3962
  %v3964 = vpop.f32.mrf.mxu0
  %v3965 = vadd.f32 0.0, %v3964
  %3966 = vmatmul.bf16.gmra.mxu0 %v3848
  %v3967 = vpop.f32.mrf.mxu0
  %v3968 = vadd.f32 0.0, %v3967
  %v3969 = vpop.f32.mrf.mxu0
  %v3970 = vadd.f32 0.0, %v3969
  %3971 = vmatmul.bf16.gmra.mxu0 %v3856
  %v3972 = vpop.f32.mrf.mxu0
  %v3973 = vadd.f32 0.0, %v3972
  %v3974 = vpop.f32.mrf.mxu0
  %v3975 = vadd.f32 0.0, %v3974
  %3976 = vmatmul.bf16.gmra.mxu0 %v3864
  %v3977 = vpop.f32.mrf.mxu0
  %v3978 = vadd.f32 0.0, %v3977
  %v3979 = vpop.f32.mrf.mxu0
  %v3980 = vadd.f32 0.0, %v3979
  %3981 = vmatmul.bf16.gmra.mxu0 %v3872
  %v3982 = vpop.f32.mrf.mxu0
  %v3983 = vadd.f32 0.0, %v3982
  %v3984 = vpop.f32.mrf.mxu0
  %v3985 = vadd.f32 0.0, %v3984
  %3986 = vmatmul.bf16.gmra.mxu0 %v3880
  %v3987 = vpop.f32.mrf.mxu0
  %v3988 = vadd.f32 0.0, %v3987
  %v3989 = vpop.f32.mrf.mxu0
  %v3990 = vadd.f32 0.0, %v3989
  %3991 = vmatmul.bf16.gmra.mxu0 %v3888
  %v3992 = vpop.f32.mrf.mxu0
  %v3993 = vadd.f32 0.0, %v3992
  %v3994 = vpop.f32.mrf.mxu0
  %v3995 = vadd.f32 0.0, %v3994
  %3996 = vmatmul.bf16.gmra.mxu0 %v3896
  %v3997 = vpop.f32.mrf.mxu0
  %v3998 = vadd.f32 0.0, %v3997
  %v3999 = vpop.f32.mrf.mxu0
  %v4000 = vadd.f32 0.0, %v3999
  %4001 = vdwg.mxu0
  %v4005 = vunpack.c.l.b16 %v3734
  %v4006 = vunpack.c.l.b16 %v3735
  %v4007 = vunpack.c.l.b16 %v3750
  %v4008 = vpack.c.b16 %v4006, %v4005
  %v4009 = vpack.c.b16 %v4007, %v4007
  %v4011 = vshrl.u32 %v4008, 16
  %v4013 = vshll.u32 %v4008, 16
  %v4015 = vrot.slane %v4013, 1
  %v4016 = vor.u32 %v4011, %v4015
  %v4017 = vsel %vm1853, %v4016, %v3834
  %v4019 = vshll.u32 %v4009, 16
  %v4021 = vrot.slane %v4019, 1
  %v4022 = vsel %vm1853, %v3883, %v4021
  %v4041 = vunpack.c.l.b16 %v3751
  %v4042 = vunpack.c.l.b16 %v3752
  %v4043 = vunpack.c.l.b16 %v3753
  %v4044 = vunpack.c.l.b16 %v3754
  %v4045 = vunpack.c.l.b16 %v3755
  %v4046 = vunpack.c.l.b16 %v3756
  %v4047 = vunpack.c.l.b16 %v3757
  %v4048 = vunpack.c.l.b16 %v3758
  %v4049 = vunpack.c.l.b16 %v3759
  %v4050 = vunpack.c.l.b16 %v3760
  %v4051 = vunpack.c.l.b16 %v3761
  %v4052 = vunpack.c.l.b16 %v3762
  %v4053 = vunpack.c.l.b16 %v3763
  %v4054 = vunpack.c.l.b16 %v3764
  %v4055 = vunpack.c.l.b16 %v3765
  %v4056 = vunpack.c.l.b16 %v3766
  %v4057 = vpack.c.b16 %v4042, %v4041
  %v4058 = vpack.c.b16 %v4044, %v4043
  %v4059 = vpack.c.b16 %v4046, %v4045
  %v4060 = vpack.c.b16 %v4048, %v4047
  %v4061 = vpack.c.b16 %v4050, %v4049
  %v4062 = vpack.c.b16 %v4052, %v4051
  %v4063 = vpack.c.b16 %v4054, %v4053
  %v4064 = vpack.c.b16 %v4056, %v4055
  %4073 = vmatpush.bf16.msra.mxu0 %v4064
  %4074 = vmatpush.bf16.msra.mxu0 %v4063
  %4075 = vmatpush.bf16.msra.mxu0 %v4062
  %4076 = vmatpush.bf16.msra.mxu0 %v4061
  %4077 = vmatpush.bf16.msra.mxu0 %v4060
  %4078 = vmatpush.bf16.msra.mxu0 %v4059
  %4079 = vmatpush.bf16.msra.mxu0 %v4058
  %4080 = vmatpush.bf16.msra.mxu0 %v4057
  %4081 = vmatmul.bf16.gmra.mxu0 %v4017
  %v4082 = vpop.f32.mrf.mxu0
  %v4083 = vadd.f32 %v3963, %v4082
  %v4084 = vpop.f32.mrf.mxu0
  %v4085 = vadd.f32 %v3965, %v4084
  %4086 = vmatmul.bf16.gmra.mxu0 %v3840
  %v4087 = vpop.f32.mrf.mxu0
  %v4088 = vadd.f32 %v3968, %v4087
  %v4089 = vpop.f32.mrf.mxu0
  %v4090 = vadd.f32 %v3970, %v4089
  %4091 = vmatmul.bf16.gmra.mxu0 %v3848
  %v4092 = vpop.f32.mrf.mxu0
  %v4093 = vadd.f32 %v3973, %v4092
  %v4094 = vpop.f32.mrf.mxu0
  %v4095 = vadd.f32 %v3975, %v4094
  %4096 = vmatmul.bf16.gmra.mxu0 %v3856
  %v4097 = vpop.f32.mrf.mxu0
  %v4098 = vadd.f32 %v3978, %v4097
  %v4099 = vpop.f32.mrf.mxu0
  %v4100 = vadd.f32 %v3980, %v4099
  %4101 = vmatmul.bf16.gmra.mxu0 %v3864
  %v4102 = vpop.f32.mrf.mxu0
  %v4103 = vadd.f32 %v3983, %v4102
  %v4104 = vpop.f32.mrf.mxu0
  %v4105 = vadd.f32 %v3985, %v4104
  %4106 = vmatmul.bf16.gmra.mxu0 %v3872
  %v4107 = vpop.f32.mrf.mxu0
  %v4108 = vadd.f32 %v3988, %v4107
  %v4109 = vpop.f32.mrf.mxu0
  %v4110 = vadd.f32 %v3990, %v4109
  %4111 = vmatmul.bf16.gmra.mxu0 %v3880
  %v4112 = vpop.f32.mrf.mxu0
  %v4113 = vadd.f32 %v3993, %v4112
  %v4114 = vpop.f32.mrf.mxu0
  %v4115 = vadd.f32 %v3995, %v4114
  %4116 = vmatmul.bf16.gmra.mxu0 %v4022
  %v4117 = vpop.f32.mrf.mxu0
  %v4118 = vadd.f32 %v3998, %v4117
  %v4119 = vpop.f32.mrf.mxu0
  %v4120 = vadd.f32 %v4000, %v4119
  %4121 = vdwg.mxu0
  %v4122 = vld [vmem:[#allocation2 + $0x58] sm:$0xf]
  %v4123 = vld [vmem:[#allocation2 + $0x5c] sm:$0xf]
  %v4124 = vld [vmem:[#allocation2 + $0x60] sm:$0xf]
  %v4125 = vld [vmem:[#allocation2 + $0x64] sm:$0xf]
  %v4126 = vld [vmem:[#allocation2 + $0x68] sm:$0xf]
  %v4127 = vld [vmem:[#allocation2 + $0x6c] sm:$0xf]
  %v4128 = vld [vmem:[#allocation2 + $0x70] sm:$0xf]
  %v4129 = vld [vmem:[#allocation2 + $0x74] sm:$0xf]
  %v4130 = vld [vmem:[#allocation2 + $0x78] sm:$0xf]
  %v4131 = vld [vmem:[#allocation2 + $0x7c] sm:$0xf]
  %v4132 = vld [vmem:[#allocation2 + $0x80] sm:$0xf]
  %v4133 = vld [vmem:[#allocation2 + $0x84] sm:$0xf]
  %v4134 = vld [vmem:[#allocation2 + $0x88] sm:$0xf]
  %v4135 = vld [vmem:[#allocation2 + $0x8c] sm:$0xf]
  %v4136 = vld [vmem:[#allocation2 + $0x90] sm:$0xf]
  %v4137 = vld [vmem:[#allocation2 + $0x94] sm:$0xf]
  %v4138 = vld [vmem:[#allocation2 + $0x98] sm:$0x1]
  %v4139 = vld [vmem:[%s2164] sm:$0xf]
  %v4140 = vld [vmem:[%s2164 + $0x4] sm:$0xf]
  %v4141 = vld [vmem:[%s2164 + $0x8] sm:$0xf]
  %v4142 = vld [vmem:[%s2164 + $0xc] sm:$0xf]
  %v4143 = vld [vmem:[%s2164 + $0x10] sm:$0xf]
  %v4144 = vld [vmem:[%s2164 + $0x14] sm:$0xf]
  %v4145 = vld [vmem:[%s2164 + $0x18] sm:$0xf]
  %v4146 = vld [vmem:[%s2164 + $0x1c] sm:$0xf]
  %v4147 = vld [vmem:[%s2164 + $0x20] sm:$0xf]
  %v4148 = vld [vmem:[%s2164 + $0x24] sm:$0xf]
  %v4149 = vld [vmem:[%s2164 + $0x28] sm:$0xf]
  %v4150 = vld [vmem:[%s2164 + $0x2c] sm:$0xf]
  %v4151 = vld [vmem:[%s2164 + $0x30] sm:$0xf]
  %v4152 = vld [vmem:[%s2164 + $0x34] sm:$0xf]
  %v4153 = vld [vmem:[%s2164 + $0x38] sm:$0xf]
  %v4154 = vld [vmem:[%s2164 + $0x3c] sm:$0xf]
  %v4172 = vunpack.c.l.b16 %v4122
  %v4173 = vunpack.c.l.b16 %v4123
  %v4174 = vunpack.c.l.b16 %v4124
  %v4175 = vunpack.c.l.b16 %v4125
  %v4176 = vunpack.c.l.b16 %v4126
  %v4177 = vunpack.c.l.b16 %v4127
  %v4178 = vunpack.c.l.b16 %v4128
  %v4179 = vunpack.c.l.b16 %v4129
  %v4180 = vunpack.c.l.b16 %v4130
  %v4181 = vunpack.c.l.b16 %v4131
  %v4182 = vunpack.c.l.b16 %v4132
  %v4183 = vunpack.c.l.b16 %v4133
  %v4184 = vunpack.c.l.b16 %v4134
  %v4185 = vunpack.c.l.b16 %v4135
  %v4186 = vunpack.c.l.b16 %v4136
  %v4187 = vunpack.c.l.b16 %v4137
  %v4188 = vunpack.c.l.b16 %v4138
  %v4189 = vpack.c.b16 %v4173, %v4172
  %v4190 = vpack.c.b16 %v4175, %v4174
  %v4191 = vpack.c.b16 %v4177, %v4176
  %v4192 = vpack.c.b16 %v4179, %v4178
  %v4193 = vpack.c.b16 %v4181, %v4180
  %v4194 = vpack.c.b16 %v4183, %v4182
  %v4195 = vpack.c.b16 %v4185, %v4184
  %v4196 = vpack.c.b16 %v4187, %v4186
  %v4197 = vpack.c.b16 %v4188, %v4188
  %v4199 = vshrl.u32 %v4189, 16
  %v4201 = vshll.u32 %v4189, 16
  %v4203 = vrot.slane %v4201, 1
  %v4204 = vor.u32 %v4199, %v4203
  %v4206 = vshll.u32 %v4190, 16
  %v4208 = vrot.slane %v4206, 1
  %v4209 = vsel %vm1853, %v4204, %v4208
  %v4210 = vshrl.u32 %v4190, 16
  %v4212 = vor.u32 %v4210, %v4208
  %v4214 = vshll.u32 %v4191, 16
  %v4216 = vrot.slane %v4214, 1
  %v4217 = vsel %vm1853, %v4212, %v4216
  %v4218 = vshrl.u32 %v4191, 16
  %v4220 = vor.u32 %v4218, %v4216
  %v4222 = vshll.u32 %v4192, 16
  %v4224 = vrot.slane %v4222, 1
  %v4225 = vsel %vm1853, %v4220, %v4224
  %v4226 = vshrl.u32 %v4192, 16
  %v4228 = vor.u32 %v4226, %v4224
  %v4230 = vshll.u32 %v4193, 16
  %v4232 = vrot.slane %v4230, 1
  %v4233 = vsel %vm1853, %v4228, %v4232
  %v4234 = vshrl.u32 %v4193, 16
  %v4236 = vor.u32 %v4234, %v4232
  %v4238 = vshll.u32 %v4194, 16
  %v4240 = vrot.slane %v4238, 1
  %v4241 = vsel %vm1853, %v4236, %v4240
  %v4242 = vshrl.u32 %v4194, 16
  %v4244 = vor.u32 %v4242, %v4240
  %v4246 = vshll.u32 %v4195, 16
  %v4248 = vrot.slane %v4246, 1
  %v4249 = vsel %vm1853, %v4244, %v4248
  %v4250 = vshrl.u32 %v4195, 16
  %v4252 = vor.u32 %v4250, %v4248
  %v4254 = vshll.u32 %v4196, 16
  %v4256 = vrot.slane %v4254, 1
  %v4257 = vsel %vm1853, %v4252, %v4256
  %v4258 = vshrl.u32 %v4196, 16
  %v4260 = vor.u32 %v4258, %v4256
  %v4262 = vshll.u32 %v4197, 16
  %v4264 = vrot.slane %v4262, 1
  %v4265 = vsel %vm1853, %v4260, %v4264
  %v4290 = vunpack.c.l.b16 %v4139
  %v4291 = vunpack.c.l.b16 %v4140
  %v4292 = vunpack.c.l.b16 %v4141
  %v4293 = vunpack.c.l.b16 %v4142
  %v4294 = vunpack.c.l.b16 %v4143
  %v4295 = vunpack.c.l.b16 %v4144
  %v4296 = vunpack.c.l.b16 %v4145
  %v4297 = vunpack.c.l.b16 %v4146
  %v4298 = vunpack.c.l.b16 %v4147
  %v4299 = vunpack.c.l.b16 %v4148
  %v4300 = vunpack.c.l.b16 %v4149
  %v4301 = vunpack.c.l.b16 %v4150
  %v4302 = vunpack.c.l.b16 %v4151
  %v4303 = vunpack.c.l.b16 %v4152
  %v4304 = vunpack.c.l.b16 %v4153
  %v4305 = vunpack.c.l.b16 %v4154
  %v4306 = vpack.c.b16 %v4291, %v4290
  %v4307 = vpack.c.b16 %v4293, %v4292
  %v4308 = vpack.c.b16 %v4295, %v4294
  %v4309 = vpack.c.b16 %v4297, %v4296
  %v4310 = vpack.c.b16 %v4299, %v4298
  %v4311 = vpack.c.b16 %v4301, %v4300
  %v4312 = vpack.c.b16 %v4303, %v4302
  %v4313 = vpack.c.b16 %v4305, %v4304
  %4322 = vmatpush.bf16.msra.mxu0 %v4313
  %4323 = vmatpush.bf16.msra.mxu0 %v4312
  %4324 = vmatpush.bf16.msra.mxu0 %v4311
  %4325 = vmatpush.bf16.msra.mxu0 %v4310
  %4326 = vmatpush.bf16.msra.mxu0 %v4309
  %4327 = vmatpush.bf16.msra.mxu0 %v4308
  %4328 = vmatpush.bf16.msra.mxu0 %v4307
  %4329 = vmatpush.bf16.msra.mxu0 %v4306
  %4330 = vmatmul.bf16.gmra.mxu0 %v4209
  %v4331 = vpop.f32.mrf.mxu0
  %v4332 = vadd.f32 0.0, %v4331
  %v4333 = vpop.f32.mrf.mxu0
  %v4334 = vadd.f32 0.0, %v4333
  %4335 = vmatmul.bf16.gmra.mxu0 %v4217
  %v4336 = vpop.f32.mrf.mxu0
  %v4337 = vadd.f32 0.0, %v4336
  %v4338 = vpop.f32.mrf.mxu0
  %v4339 = vadd.f32 0.0, %v4338
  %4340 = vmatmul.bf16.gmra.mxu0 %v4225
  %v4341 = vpop.f32.mrf.mxu0
  %v4342 = vadd.f32 0.0, %v4341
  %v4343 = vpop.f32.mrf.mxu0
  %v4344 = vadd.f32 0.0, %v4343
  %4345 = vmatmul.bf16.gmra.mxu0 %v4233
  %v4346 = vpop.f32.mrf.mxu0
  %v4347 = vadd.f32 0.0, %v4346
  %v4348 = vpop.f32.mrf.mxu0
  %v4349 = vadd.f32 0.0, %v4348
  %4350 = vmatmul.bf16.gmra.mxu0 %v4241
  %v4351 = vpop.f32.mrf.mxu0
  %v4352 = vadd.f32 0.0, %v4351
  %v4353 = vpop.f32.mrf.mxu0
  %v4354 = vadd.f32 0.0, %v4353
  %4355 = vmatmul.bf16.gmra.mxu0 %v4249
  %v4356 = vpop.f32.mrf.mxu0
  %v4357 = vadd.f32 0.0, %v4356
  %v4358 = vpop.f32.mrf.mxu0
  %v4359 = vadd.f32 0.0, %v4358
  %4360 = vmatmul.bf16.gmra.mxu0 %v4257
  %v4361 = vpop.f32.mrf.mxu0
  %v4362 = vadd.f32 0.0, %v4361
  %v4363 = vpop.f32.mrf.mxu0
  %v4364 = vadd.f32 0.0, %v4363
  %4365 = vmatmul.bf16.gmra.mxu0 %v4265
  %v4366 = vpop.f32.mrf.mxu0
  %v4367 = vadd.f32 0.0, %v4366
  %v4368 = vpop.f32.mrf.mxu0
  %v4369 = vadd.f32 0.0, %v4368
  %4370 = vdwg.mxu0
  %v4371 = vadd.f32 %v4083, %v4332
  %v4372 = vadd.f32 %v4085, %v4334
  %v4373 = vadd.f32 %v4088, %v4337
  %v4374 = vadd.f32 %v4090, %v4339
  %v4375 = vadd.f32 %v4093, %v4342
  %v4376 = vadd.f32 %v4095, %v4344
  %v4377 = vadd.f32 %v4098, %v4347
  %v4378 = vadd.f32 %v4100, %v4349
  %v4379 = vadd.f32 %v4103, %v4352
  %v4380 = vadd.f32 %v4105, %v4354
  %v4381 = vadd.f32 %v4108, %v4357
  %v4382 = vadd.f32 %v4110, %v4359
  %v4383 = vadd.f32 %v4113, %v4362
  %v4384 = vadd.f32 %v4115, %v4364
  %v4385 = vadd.f32 %v4118, %v4367
  %v4386 = vadd.f32 %v4120, %v4369
  %v4387 = vmul.f32 %v4371, %v2416
  %v4388 = vmul.f32 %v4372, %v2421
  %v4389 = vmul.f32 %v4373, %v2426
  %v4390 = vmul.f32 %v4374, %v2431
  %v4391 = vmul.f32 %v4375, %v2436
  %v4392 = vmul.f32 %v4376, %v2441
  %v4393 = vmul.f32 %v4377, %v2446
  %v4394 = vmul.f32 %v4378, %v2451
  %v4395 = vmul.f32 %v4379, %v2456
  %v4396 = vmul.f32 %v4380, %v2461
  %v4397 = vmul.f32 %v4381, %v2466
  %v4398 = vmul.f32 %v4382, %v2471
  %v4399 = vmul.f32 %v4383, %v2476
  %v4400 = vmul.f32 %v4384, %v2481
  %v4401 = vmul.f32 %v4385, %v2486
  %v4402 = vmul.f32 %v4386, %v2491
  %v4403 = vadd.f32 %v3718, %v4387
  %v4404 = vadd.f32 %v3719, %v4388
  %v4405 = vadd.f32 %v3720, %v4389
  %v4406 = vadd.f32 %v3721, %v4390
  %v4407 = vadd.f32 %v3722, %v4391
  %v4408 = vadd.f32 %v3723, %v4392
  %v4409 = vadd.f32 %v3724, %v4393
  %v4410 = vadd.f32 %v3725, %v4394
  %v4411 = vadd.f32 %v3726, %v4395
  %v4412 = vadd.f32 %v3727, %v4396
  %v4413 = vadd.f32 %v3728, %v4397
  %v4414 = vadd.f32 %v3729, %v4398
  %v4415 = vadd.f32 %v3730, %v4399
  %v4416 = vadd.f32 %v3731, %v4400
  %v4417 = vadd.f32 %v3732, %v4401
  %v4418 = vadd.f32 %v3733, %v4402
  %v4419 = vld [vmem:[%s2525] sm:$0xf]
  %v4420 = vld [vmem:[%s2525 + $0x4] sm:$0xf]
  %v4421 = vld [vmem:[%s2525 + $0x8] sm:$0xf]
  %v4422 = vld [vmem:[%s2525 + $0xc] sm:$0xf]
  %v4423 = vld [vmem:[%s2525 + $0x10] sm:$0xf]
  %v4424 = vld [vmem:[%s2525 + $0x14] sm:$0xf]
  %v4425 = vld [vmem:[%s2525 + $0x18] sm:$0xf]
  %v4426 = vld [vmem:[%s2525 + $0x1c] sm:$0xf]
  %v4427 = vld [vmem:[%s2525 + $0x20] sm:$0xf]
  %v4428 = vld [vmem:[%s2525 + $0x24] sm:$0xf]
  %v4429 = vld [vmem:[%s2525 + $0x28] sm:$0xf]
  %v4430 = vld [vmem:[%s2525 + $0x2c] sm:$0xf]
  %v4431 = vld [vmem:[%s2525 + $0x30] sm:$0xf]
  %v4432 = vld [vmem:[%s2525 + $0x34] sm:$0xf]
  %v4433 = vld [vmem:[%s2525 + $0x38] sm:$0xf]
  %v4434 = vld [vmem:[%s2525 + $0x3c] sm:$0xf]
  %v4435 = vpack.c.b16 %v3310, %v3309
  %v4436 = vpack.c.b16 %v3096, %v3095
  %v4437 = vpack.c.b16 %v3098, %v3097
  %v4438 = vpack.c.b16 %v3100, %v3099
  %v4439 = vpack.c.b16 %v3102, %v3101
  %v4440 = vpack.c.b16 %v3104, %v3103
  %v4441 = vpack.c.b16 %v3106, %v3105
  %v4442 = vpack.c.b16 %v3108, %v3107
  %v4467 = vunpack.c.l.b16 %v4419
  %v4468 = vunpack.c.l.b16 %v4420
  %v4469 = vunpack.c.l.b16 %v4421
  %v4470 = vunpack.c.l.b16 %v4422
  %v4471 = vunpack.c.l.b16 %v4423
  %v4472 = vunpack.c.l.b16 %v4424
  %v4473 = vunpack.c.l.b16 %v4425
  %v4474 = vunpack.c.l.b16 %v4426
  %v4475 = vunpack.c.l.b16 %v4427
  %v4476 = vunpack.c.l.b16 %v4428
  %v4477 = vunpack.c.l.b16 %v4429
  %v4478 = vunpack.c.l.b16 %v4430
  %v4479 = vunpack.c.l.b16 %v4431
  %v4480 = vunpack.c.l.b16 %v4432
  %v4481 = vunpack.c.l.b16 %v4433
  %v4482 = vunpack.c.l.b16 %v4434
  %v4483 = vpack.c.b16 %v4468, %v4467
  %v4484 = vpack.c.b16 %v4470, %v4469
  %v4485 = vpack.c.b16 %v4472, %v4471
  %v4486 = vpack.c.b16 %v4474, %v4473
  %v4487 = vpack.c.b16 %v4476, %v4475
  %v4488 = vpack.c.b16 %v4478, %v4477
  %v4489 = vpack.c.b16 %v4480, %v4479
  %v4490 = vpack.c.b16 %v4482, %v4481
  %4499 = vmatpush.bf16.msra.mxu0 %v4490
  %4500 = vmatpush.bf16.msra.mxu0 %v4489
  %4501 = vmatpush.bf16.msra.mxu0 %v4488
  %4502 = vmatpush.bf16.msra.mxu0 %v4487
  %4503 = vmatpush.bf16.msra.mxu0 %v4486
  %4504 = vmatpush.bf16.msra.mxu0 %v4485
  %4505 = vmatpush.bf16.msra.mxu0 %v4484
  %4506 = vmatpush.bf16.msra.mxu0 %v4483
  %4507 = vmatmul.bf16.gmra.mxu0 %v4435
  %v4508 = vpop.f32.mrf.mxu0
  %v4509 = vadd.f32 0.0, %v4508
  %v4510 = vpop.f32.mrf.mxu0
  %v4511 = vadd.f32 0.0, %v4510
  %4512 = vmatmul.bf16.gmra.mxu0 %v4436
  %v4513 = vpop.f32.mrf.mxu0
  %v4514 = vadd.f32 0.0, %v4513
  %v4515 = vpop.f32.mrf.mxu0
  %v4516 = vadd.f32 0.0, %v4515
  %4517 = vmatmul.bf16.gmra.mxu0 %v4437
  %v4518 = vpop.f32.mrf.mxu0
  %v4519 = vadd.f32 0.0, %v4518
  %v4520 = vpop.f32.mrf.mxu0
  %v4521 = vadd.f32 0.0, %v4520
  %4522 = vmatmul.bf16.gmra.mxu0 %v4438
  %v4523 = vpop.f32.mrf.mxu0
  %v4524 = vadd.f32 0.0, %v4523
  %v4525 = vpop.f32.mrf.mxu0
  %v4526 = vadd.f32 0.0, %v4525
  %4527 = vmatmul.bf16.gmra.mxu0 %v4439
  %v4528 = vpop.f32.mrf.mxu0
  %v4529 = vadd.f32 0.0, %v4528
  %v4530 = vpop.f32.mrf.mxu0
  %v4531 = vadd.f32 0.0, %v4530
  %4532 = vmatmul.bf16.gmra.mxu0 %v4440
  %v4533 = vpop.f32.mrf.mxu0
  %v4534 = vadd.f32 0.0, %v4533
  %v4535 = vpop.f32.mrf.mxu0
  %v4536 = vadd.f32 0.0, %v4535
  %4537 = vmatmul.bf16.gmra.mxu0 %v4441
  %v4538 = vpop.f32.mrf.mxu0
  %v4539 = vadd.f32 0.0, %v4538
  %v4540 = vpop.f32.mrf.mxu0
  %v4541 = vadd.f32 0.0, %v4540
  %4542 = vmatmul.bf16.gmra.mxu0 %v4442
  %v4543 = vpop.f32.mrf.mxu0
  %v4544 = vadd.f32 0.0, %v4543
  %v4545 = vpop.f32.mrf.mxu0
  %v4546 = vadd.f32 0.0, %v4545
  %4547 = vdwg.mxu0
  %v4548 = vadd.f32 %v4403, %v4509
  %v4549 = vadd.f32 %v4404, %v4511
  %v4550 = vadd.f32 %v4405, %v4514
  %v4551 = vadd.f32 %v4406, %v4516
  %v4552 = vadd.f32 %v4407, %v4519
  %v4553 = vadd.f32 %v4408, %v4521
  %v4554 = vadd.f32 %v4409, %v4524
  %v4555 = vadd.f32 %v4410, %v4526
  %v4556 = vadd.f32 %v4411, %v4529
  %v4557 = vadd.f32 %v4412, %v4531
  %v4558 = vadd.f32 %v4413, %v4534
  %v4559 = vadd.f32 %v4414, %v4536
  %v4560 = vadd.f32 %v4415, %v4539
  %v4561 = vadd.f32 %v4416, %v4541
  %v4562 = vadd.f32 %v4417, %v4544
  %v4563 = vadd.f32 %v4418, %v4546
  %v4564 = vld [vmem:[%s2671] sm:$0xf]
  %v4565 = vld [vmem:[%s2671 + $0x4] sm:$0xf]
  %v4566 = vld [vmem:[%s2671 + $0x8] sm:$0xf]
  %v4567 = vld [vmem:[%s2671 + $0xc] sm:$0xf]
  %v4568 = vld [vmem:[%s2671 + $0x10] sm:$0xf]
  %v4569 = vld [vmem:[%s2671 + $0x14] sm:$0xf]
  %v4570 = vld [vmem:[%s2671 + $0x18] sm:$0xf]
  %v4571 = vld [vmem:[%s2671 + $0x1c] sm:$0xf]
  %v4572 = vld [vmem:[%s2671 + $0x20] sm:$0xf]
  %v4573 = vld [vmem:[%s2671 + $0x24] sm:$0xf]
  %v4574 = vld [vmem:[%s2671 + $0x28] sm:$0xf]
  %v4575 = vld [vmem:[%s2671 + $0x2c] sm:$0xf]
  %v4576 = vld [vmem:[%s2671 + $0x30] sm:$0xf]
  %v4577 = vld [vmem:[%s2671 + $0x34] sm:$0xf]
  %v4578 = vld [vmem:[%s2671 + $0x38] sm:$0xf]
  %v4579 = vld [vmem:[%s2671 + $0x3c] sm:$0xf]
  %v4580 = vpack.c.b16 %v3110, %v3109
  %v4598 = vunpack.c.l.b16 %v4564
  %v4599 = vunpack.c.l.b16 %v4565
  %v4600 = vunpack.c.l.b16 %v4566
  %v4601 = vunpack.c.l.b16 %v4567
  %v4602 = vunpack.c.l.b16 %v4568
  %v4603 = vunpack.c.l.b16 %v4569
  %v4604 = vunpack.c.l.b16 %v4570
  %v4605 = vunpack.c.l.b16 %v4571
  %v4606 = vunpack.c.l.b16 %v4572
  %v4607 = vunpack.c.l.b16 %v4573
  %v4608 = vunpack.c.l.b16 %v4574
  %v4609 = vunpack.c.l.b16 %v4575
  %v4610 = vunpack.c.l.b16 %v4576
  %v4611 = vunpack.c.l.b16 %v4577
  %v4612 = vunpack.c.l.b16 %v4578
  %v4613 = vunpack.c.l.b16 %v4579
  %v4614 = vpack.c.b16 %v4599, %v4598
  %v4615 = vpack.c.b16 %v4601, %v4600
  %v4616 = vpack.c.b16 %v4603, %v4602
  %v4617 = vpack.c.b16 %v4605, %v4604
  %v4618 = vpack.c.b16 %v4607, %v4606
  %v4619 = vpack.c.b16 %v4609, %v4608
  %v4620 = vpack.c.b16 %v4611, %v4610
  %v4621 = vpack.c.b16 %v4613, %v4612
  %4630 = vmatpush.bf16.msra.mxu0 %v4621
  %4631 = vmatpush.bf16.msra.mxu0 %v4620
  %4632 = vmatpush.bf16.msra.mxu0 %v4619
  %4633 = vmatpush.bf16.msra.mxu0 %v4618
  %4634 = vmatpush.bf16.msra.mxu0 %v4617
  %4635 = vmatpush.bf16.msra.mxu0 %v4616
  %4636 = vmatpush.bf16.msra.mxu0 %v4615
  %4637 = vmatpush.bf16.msra.mxu0 %v4614
  %4638 = vmatmul.bf16.gmra.mxu0 %v4436
  %v4639 = vpop.f32.mrf.mxu0
  %v4640 = vadd.f32 0.0, %v4639
  %v4641 = vpop.f32.mrf.mxu0
  %v4642 = vadd.f32 0.0, %v4641
  %4643 = vmatmul.bf16.gmra.mxu0 %v4437
  %v4644 = vpop.f32.mrf.mxu0
  %v4645 = vadd.f32 0.0, %v4644
  %v4646 = vpop.f32.mrf.mxu0
  %v4647 = vadd.f32 0.0, %v4646
  %4648 = vmatmul.bf16.gmra.mxu0 %v4438
  %v4649 = vpop.f32.mrf.mxu0
  %v4650 = vadd.f32 0.0, %v4649
  %v4651 = vpop.f32.mrf.mxu0
  %v4652 = vadd.f32 0.0, %v4651
  %4653 = vmatmul.bf16.gmra.mxu0 %v4439
  %v4654 = vpop.f32.mrf.mxu0
  %v4655 = vadd.f32 0.0, %v4654
  %v4656 = vpop.f32.mrf.mxu0
  %v4657 = vadd.f32 0.0, %v4656
  %4658 = vmatmul.bf16.gmra.mxu0 %v4440
  %v4659 = vpop.f32.mrf.mxu0
  %v4660 = vadd.f32 0.0, %v4659
  %v4661 = vpop.f32.mrf.mxu0
  %v4662 = vadd.f32 0.0, %v4661
  %4663 = vmatmul.bf16.gmra.mxu0 %v4441
  %v4664 = vpop.f32.mrf.mxu0
  %v4665 = vadd.f32 0.0, %v4664
  %v4666 = vpop.f32.mrf.mxu0
  %v4667 = vadd.f32 0.0, %v4666
  %4668 = vmatmul.bf16.gmra.mxu0 %v4442
  %v4669 = vpop.f32.mrf.mxu0
  %v4670 = vadd.f32 0.0, %v4669
  %v4671 = vpop.f32.mrf.mxu0
  %v4672 = vadd.f32 0.0, %v4671
  %4673 = vmatmul.bf16.gmra.mxu0 %v4580
  %v4674 = vpop.f32.mrf.mxu0
  %v4675 = vadd.f32 0.0, %v4674
  %v4676 = vpop.f32.mrf.mxu0
  %v4677 = vadd.f32 0.0, %v4676
  %4678 = vdwg.mxu0
  %v4679 = vadd.f32 %v4548, %v4640
  %v4680 = vadd.f32 %v4549, %v4642
  %v4681 = vadd.f32 %v4550, %v4645
  %v4682 = vadd.f32 %v4551, %v4647
  %v4683 = vadd.f32 %v4552, %v4650
  %v4684 = vadd.f32 %v4553, %v4652
  %v4685 = vadd.f32 %v4554, %v4655
  %v4686 = vadd.f32 %v4555, %v4657
  %v4687 = vadd.f32 %v4556, %v4660
  %v4688 = vadd.f32 %v4557, %v4662
  %v4689 = vadd.f32 %v4558, %v4665
  %v4690 = vadd.f32 %v4559, %v4667
  %v4691 = vadd.f32 %v4560, %v4670
  %v4692 = vadd.f32 %v4561, %v4672
  %v4693 = vadd.f32 %v4562, %v4675
  %v4694 = vadd.f32 %v4563, %v4677
  %v4695 = vld [vmem:[%s2803] sm:$0xf]
  %v4696 = vld [vmem:[%s2803 + $0x4] sm:$0xf]
  %v4697 = vld [vmem:[%s2803 + $0x8] sm:$0xf]
  %v4698 = vld [vmem:[%s2803 + $0xc] sm:$0xf]
  %v4699 = vld [vmem:[%s2803 + $0x10] sm:$0xf]
  %v4700 = vld [vmem:[%s2803 + $0x14] sm:$0xf]
  %v4701 = vld [vmem:[%s2803 + $0x18] sm:$0xf]
  %v4702 = vld [vmem:[%s2803 + $0x1c] sm:$0xf]
  %v4703 = vld [vmem:[%s2803 + $0x20] sm:$0xf]
  %v4704 = vld [vmem:[%s2803 + $0x24] sm:$0xf]
  %v4705 = vld [vmem:[%s2803 + $0x28] sm:$0xf]
  %v4706 = vld [vmem:[%s2803 + $0x2c] sm:$0xf]
  %v4707 = vld [vmem:[%s2803 + $0x30] sm:$0xf]
  %v4708 = vld [vmem:[%s2803 + $0x34] sm:$0xf]
  %v4709 = vld [vmem:[%s2803 + $0x38] sm:$0xf]
  %v4710 = vld [vmem:[%s2803 + $0x3c] sm:$0xf]
  %v4711 = vpack.c.b16 %v3493, %v3492
  %v4712 = vpack.c.b16 %v3495, %v3494
  %v4713 = vpack.c.b16 %v3497, %v3496
  %v4714 = vpack.c.b16 %v3499, %v3498
  %v4715 = vpack.c.b16 %v3501, %v3500
  %v4716 = vpack.c.b16 %v3503, %v3502
  %v4717 = vpack.c.b16 %v3505, %v3504
  %v4718 = vpack.c.b16 %v3507, %v3506
  %v4743 = vunpack.c.l.b16 %v4695
  %v4744 = vunpack.c.l.b16 %v4696
  %v4745 = vunpack.c.l.b16 %v4697
  %v4746 = vunpack.c.l.b16 %v4698
  %v4747 = vunpack.c.l.b16 %v4699
  %v4748 = vunpack.c.l.b16 %v4700
  %v4749 = vunpack.c.l.b16 %v4701
  %v4750 = vunpack.c.l.b16 %v4702
  %v4751 = vunpack.c.l.b16 %v4703
  %v4752 = vunpack.c.l.b16 %v4704
  %v4753 = vunpack.c.l.b16 %v4705
  %v4754 = vunpack.c.l.b16 %v4706
  %v4755 = vunpack.c.l.b16 %v4707
  %v4756 = vunpack.c.l.b16 %v4708
  %v4757 = vunpack.c.l.b16 %v4709
  %v4758 = vunpack.c.l.b16 %v4710
  %v4759 = vpack.c.b16 %v4744, %v4743
  %v4760 = vpack.c.b16 %v4746, %v4745
  %v4761 = vpack.c.b16 %v4748, %v4747
  %v4762 = vpack.c.b16 %v4750, %v4749
  %v4763 = vpack.c.b16 %v4752, %v4751
  %v4764 = vpack.c.b16 %v4754, %v4753
  %v4765 = vpack.c.b16 %v4756, %v4755
  %v4766 = vpack.c.b16 %v4758, %v4757
  %4775 = vmatpush.bf16.msra.mxu0 %v4766
  %4776 = vmatpush.bf16.msra.mxu0 %v4765
  %4777 = vmatpush.bf16.msra.mxu0 %v4764
  %4778 = vmatpush.bf16.msra.mxu0 %v4763
  %4779 = vmatpush.bf16.msra.mxu0 %v4762
  %4780 = vmatpush.bf16.msra.mxu0 %v4761
  %4781 = vmatpush.bf16.msra.mxu0 %v4760
  %4782 = vmatpush.bf16.msra.mxu0 %v4759
  %4783 = vmatmul.bf16.gmra.mxu0 %v4711
  %v4784 = vpop.f32.mrf.mxu0
  %v4785 = vadd.f32 0.0, %v4784
  %v4786 = vpop.f32.mrf.mxu0
  %v4787 = vadd.f32 0.0, %v4786
  %4788 = vmatmul.bf16.gmra.mxu0 %v4712
  %v4789 = vpop.f32.mrf.mxu0
  %v4790 = vadd.f32 0.0, %v4789
  %v4791 = vpop.f32.mrf.mxu0
  %v4792 = vadd.f32 0.0, %v4791
  %4793 = vmatmul.bf16.gmra.mxu0 %v4713
  %v4794 = vpop.f32.mrf.mxu0
  %v4795 = vadd.f32 0.0, %v4794
  %v4796 = vpop.f32.mrf.mxu0
  %v4797 = vadd.f32 0.0, %v4796
  %4798 = vmatmul.bf16.gmra.mxu0 %v4714
  %v4799 = vpop.f32.mrf.mxu0
  %v4800 = vadd.f32 0.0, %v4799
  %v4801 = vpop.f32.mrf.mxu0
  %v4802 = vadd.f32 0.0, %v4801
  %4803 = vmatmul.bf16.gmra.mxu0 %v4715
  %v4804 = vpop.f32.mrf.mxu0
  %v4805 = vadd.f32 0.0, %v4804
  %v4806 = vpop.f32.mrf.mxu0
  %v4807 = vadd.f32 0.0, %v4806
  %4808 = vmatmul.bf16.gmra.mxu0 %v4716
  %v4809 = vpop.f32.mrf.mxu0
  %v4810 = vadd.f32 0.0, %v4809
  %v4811 = vpop.f32.mrf.mxu0
  %v4812 = vadd.f32 0.0, %v4811
  %4813 = vmatmul.bf16.gmra.mxu0 %v4717
  %v4814 = vpop.f32.mrf.mxu0
  %v4815 = vadd.f32 0.0, %v4814
  %v4816 = vpop.f32.mrf.mxu0
  %v4817 = vadd.f32 0.0, %v4816
  %4818 = vmatmul.bf16.gmra.mxu0 %v4718
  %v4819 = vpop.f32.mrf.mxu0
  %v4820 = vadd.f32 0.0, %v4819
  %v4821 = vpop.f32.mrf.mxu0
  %v4822 = vadd.f32 0.0, %v4821
  %4823 = vdwg.mxu0
  %v4824 = vadd.f32 %v4679, %v4785
  %v4825 = vadd.f32 %v4680, %v4787
  %v4826 = vadd.f32 %v4681, %v4790
  %v4827 = vadd.f32 %v4682, %v4792
  %v4828 = vadd.f32 %v4683, %v4795
  %v4829 = vadd.f32 %v4684, %v4797
  %v4830 = vadd.f32 %v4685, %v4800
  %v4831 = vadd.f32 %v4686, %v4802
  %v4832 = vadd.f32 %v4687, %v4805
  %v4833 = vadd.f32 %v4688, %v4807
  %v4834 = vadd.f32 %v4689, %v4810
  %v4835 = vadd.f32 %v4690, %v4812
  %v4836 = vadd.f32 %v4691, %v4815
  %v4837 = vadd.f32 %v4692, %v4817
  %v4838 = vadd.f32 %v4693, %v4820
  %v4839 = vadd.f32 %v4694, %v4822
  %v4840 = vadd.f32 %v4824, %v4825
  %v4841 = vadd.f32 %v4840, %v4826
  %v4842 = vadd.f32 %v4841, %v4827
  %v4843 = vadd.f32 %v4842, %v4828
  %v4844 = vadd.f32 %v4843, %v4829
  %v4845 = vadd.f32 %v4844, %v4830
  %v4846 = vadd.f32 %v4845, %v4831
  %v4847 = vadd.f32 %v4846, %v4832
  %v4848 = vadd.f32 %v4847, %v4833
  %v4849 = vadd.f32 %v4848, %v4834
  %v4850 = vadd.f32 %v4849, %v4835
  %v4851 = vadd.f32 %v4850, %v4836
  %v4852 = vadd.f32 %v4851, %v4837
  %v4853 = vadd.f32 %v4852, %v4838
  %v4854 = vadd.f32 %v4853, %v4839
  %v4855 = vrot.slane %v4854, 4
  %v4856 = vadd.f32 %v4854, %v4855
  %v4857 = vrot.slane %v4856, 2
  %v4858 = vadd.f32 %v4856, %v4857
  %v4859 = vrot.slane %v4858, 1
  %v4860 = vadd.f32 %v4858, %v4859
  %v4861 = vadd.f32 %v2970, %v4860
  %v4862 = vmul.f32 %v4824, %v4824
  %v4863 = vmul.f32 %v4825, %v4825
  %v4864 = vmul.f32 %v4826, %v4826
  %v4865 = vmul.f32 %v4827, %v4827
  %v4866 = vmul.f32 %v4828, %v4828
  %v4867 = vmul.f32 %v4829, %v4829
  %v4868 = vmul.f32 %v4830, %v4830
  %v4869 = vmul.f32 %v4831, %v4831
  %v4870 = vmul.f32 %v4832, %v4832
  %v4871 = vmul.f32 %v4833, %v4833
  %v4872 = vmul.f32 %v4834, %v4834
  %v4873 = vmul.f32 %v4835, %v4835
  %v4874 = vmul.f32 %v4836, %v4836
  %v4875 = vmul.f32 %v4837, %v4837
  %v4876 = vmul.f32 %v4838, %v4838
  %v4877 = vmul.f32 %v4839, %v4839
  %v4878 = vadd.f32 %v4862, %v4863
  %v4879 = vadd.f32 %v4878, %v4864
  %v4880 = vadd.f32 %v4879, %v4865
  %v4881 = vadd.f32 %v4880, %v4866
  %v4882 = vadd.f32 %v4881, %v4867
  %v4883 = vadd.f32 %v4882, %v4868
  %v4884 = vadd.f32 %v4883, %v4869
  %v4885 = vadd.f32 %v4884, %v4870
  %v4886 = vadd.f32 %v4885, %v4871
  %v4887 = vadd.f32 %v4886, %v4872
  %v4888 = vadd.f32 %v4887, %v4873
  %v4889 = vadd.f32 %v4888, %v4874
  %v4890 = vadd.f32 %v4889, %v4875
  %v4891 = vadd.f32 %v4890, %v4876
  %v4892 = vadd.f32 %v4891, %v4877
  %v4893 = vrot.slane %v4892, 4
  %v4894 = vadd.f32 %v4892, %v4893
  %v4895 = vrot.slane %v4894, 2
  %v4896 = vadd.f32 %v4894, %v4895
  %v4897 = vrot.slane %v4896, 1
  %v4898 = vadd.f32 %v4896, %v4897
  %v4899 = vadd.f32 %v3008, %v4898
  %4900 = vst [vmem:[#allocation3 + $0x80] sm:$0xff] %v4824
  %4901 = vst [vmem:[#allocation3 + $0x88] sm:$0xff] %v4825
  %4902 = vst [vmem:[#allocation3 + $0x90] sm:$0xff] %v4826
  %4903 = vst [vmem:[#allocation3 + $0x98] sm:$0xff] %v4827
  %4904 = vst [vmem:[#allocation3 + $0xa0] sm:$0xff] %v4828
  %4905 = vst [vmem:[#allocation3 + $0xa8] sm:$0xff] %v4829
  %4906 = vst [vmem:[#allocation3 + $0xb0] sm:$0xff] %v4830
  %4907 = vst [vmem:[#allocation3 + $0xb8] sm:$0xff] %v4831
  %4908 = vst [vmem:[#allocation3 + $0xc0] sm:$0xff] %v4832
  %4909 = vst [vmem:[#allocation3 + $0xc8] sm:$0xff] %v4833
  %4910 = vst [vmem:[#allocation3 + $0xd0] sm:$0xff] %v4834
  %4911 = vst [vmem:[#allocation3 + $0xd8] sm:$0xff] %v4835
  %4912 = vst [vmem:[#allocation3 + $0xe0] sm:$0xff] %v4836
  %4913 = vst [vmem:[#allocation3 + $0xe8] sm:$0xff] %v4837
  %4914 = vst [vmem:[#allocation3 + $0xf0] sm:$0xff] %v4838
  %4915 = vst [vmem:[#allocation3 + $0xf8] sm:$0xff] %v4839
  %v4916 = vld [vmem:[#allocation2 + $0x94] sm:$0x8]
  %v4917 = vld [vmem:[#allocation2 + $0x98] sm:$0xf]
  %v4918 = vld [vmem:[#allocation2 + $0x9c] sm:$0xf]
  %v4919 = vld [vmem:[#allocation2 + $0xa0] sm:$0xf]
  %v4920 = vld [vmem:[#allocation2 + $0xa4] sm:$0xf]
  %v4921 = vld [vmem:[#allocation2 + $0xa8] sm:$0xf]
  %v4922 = vld [vmem:[#allocation2 + $0xac] sm:$0xf]
  %v4923 = vld [vmem:[#allocation2 + $0xb0] sm:$0xf]
  %v4924 = vld [vmem:[#allocation2 + $0xb4] sm:$0xf]
  %v4925 = vld [vmem:[#allocation2 + $0xb8] sm:$0xf]
  %v4926 = vld [vmem:[#allocation2 + $0xbc] sm:$0xf]
  %v4927 = vld [vmem:[#allocation2 + $0xc0] sm:$0xf]
  %v4928 = vld [vmem:[#allocation2 + $0xc4] sm:$0xf]
  %v4929 = vld [vmem:[#allocation2 + $0xc8] sm:$0xf]
  %v4930 = vld [vmem:[#allocation2 + $0xcc] sm:$0xf]
  %v4931 = vld [vmem:[#allocation2 + $0xd0] sm:$0xf]
  %v4932 = vld [vmem:[#allocation2 + $0xd4] sm:$0xf]
  %v4933 = vld [vmem:[%s2] sm:$0xf]
  %v4934 = vld [vmem:[%s2 + $0x4] sm:$0xf]
  %v4935 = vld [vmem:[%s2 + $0x8] sm:$0xf]
  %v4936 = vld [vmem:[%s2 + $0xc] sm:$0xf]
  %v4937 = vld [vmem:[%s2 + $0x10] sm:$0xf]
  %v4938 = vld [vmem:[%s2 + $0x14] sm:$0xf]
  %v4939 = vld [vmem:[%s2 + $0x18] sm:$0xf]
  %v4940 = vld [vmem:[%s2 + $0x1c] sm:$0xf]
  %v4941 = vld [vmem:[%s2 + $0x20] sm:$0xf]
  %v4942 = vld [vmem:[%s2 + $0x24] sm:$0xf]
  %v4943 = vld [vmem:[%s2 + $0x28] sm:$0xf]
  %v4944 = vld [vmem:[%s2 + $0x2c] sm:$0xf]
  %v4945 = vld [vmem:[%s2 + $0x30] sm:$0xf]
  %v4946 = vld [vmem:[%s2 + $0x34] sm:$0xf]
  %v4947 = vld [vmem:[%s2 + $0x38] sm:$0xf]
  %v4948 = vld [vmem:[%s2 + $0x3c] sm:$0xf]
  %v4949 = vld [vmem:[#allocation2 + $0x9c] sm:$0x8]
  %v4950 = vld [vmem:[#allocation2 + $0xd8] sm:$0xf]
  %v4951 = vld [vmem:[#allocation2 + $0xdc] sm:$0xf]
  %v4952 = vld [vmem:[%s1000] sm:$0xf]
  %v4953 = vld [vmem:[%s1000 + $0x4] sm:$0xf]
  %v4954 = vld [vmem:[%s1000 + $0x8] sm:$0xf]
  %v4955 = vld [vmem:[%s1000 + $0xc] sm:$0xf]
  %v4956 = vld [vmem:[%s1000 + $0x10] sm:$0xf]
  %v4957 = vld [vmem:[%s1000 + $0x14] sm:$0xf]
  %v4958 = vld [vmem:[%s1000 + $0x18] sm:$0xf]
  %v4959 = vld [vmem:[%s1000 + $0x1c] sm:$0xf]
  %v4960 = vld [vmem:[%s1000 + $0x20] sm:$0xf]
  %v4961 = vld [vmem:[%s1000 + $0x24] sm:$0xf]
  %v4962 = vld [vmem:[%s1000 + $0x28] sm:$0xf]
  %v4963 = vld [vmem:[%s1000 + $0x2c] sm:$0xf]
  %v4964 = vld [vmem:[%s1000 + $0x30] sm:$0xf]
  %v4965 = vld [vmem:[%s1000 + $0x34] sm:$0xf]
  %v4966 = vld [vmem:[%s1000 + $0x38] sm:$0xf]
  %v4967 = vld [vmem:[%s1000 + $0x3c] sm:$0xf]
  %v4985 = vunpack.c.l.b16 %v4949
  %v4986 = vunpack.c.l.b16 %v4919
  %v4987 = vunpack.c.l.b16 %v4920
  %v4988 = vunpack.c.l.b16 %v4921
  %v4989 = vunpack.c.l.b16 %v4922
  %v4990 = vunpack.c.l.b16 %v4923
  %v4991 = vunpack.c.l.b16 %v4924
  %v4992 = vunpack.c.l.b16 %v4925
  %v4993 = vunpack.c.l.b16 %v4926
  %v4994 = vunpack.c.l.b16 %v4927
  %v4995 = vunpack.c.l.b16 %v4928
  %v4996 = vunpack.c.l.b16 %v4929
  %v4997 = vunpack.c.l.b16 %v4930
  %v4998 = vunpack.c.l.b16 %v4931
  %v4999 = vunpack.c.l.b16 %v4932
  %v5000 = vunpack.c.l.b16 %v4950
  %v5001 = vunpack.c.l.b16 %v4951
  %v5002 = vpack.c.b16 %v4986, %v4985
  %v5003 = vpack.c.b16 %v4988, %v4987
  %v5004 = vpack.c.b16 %v4990, %v4989
  %v5005 = vpack.c.b16 %v4992, %v4991
  %v5006 = vpack.c.b16 %v4994, %v4993
  %v5007 = vpack.c.b16 %v4996, %v4995
  %v5008 = vpack.c.b16 %v4998, %v4997
  %v5009 = vpack.c.b16 %v5000, %v4999
  %v5010 = vpack.c.b16 %v5001, %v5001
  %v5012 = vshrl.u32 %v5002, 16
  %v5014 = vrot.slane %v5012, 3
  %v5015 = vshll.u32 %v5002, 16
  %v5017 = vrot.slane %v5015, 4
  %v5018 = vor.u32 %v5014, %v5017
  %v5020 = vshrl.u32 %v5003, 16
  %v5022 = vrot.slane %v5020, 3
  %v5023 = vshll.u32 %v5003, 16
  %v5025 = vrot.slane %v5023, 4
  %v5026 = vor.u32 %v5022, %v5025
  %v5027 = vsel %vm1060, %v5018, %v5026
  %v5029 = vshrl.u32 %v5004, 16
  %v5031 = vrot.slane %v5029, 3
  %v5032 = vshll.u32 %v5004, 16
  %v5034 = vrot.slane %v5032, 4
  %v5035 = vor.u32 %v5031, %v5034
  %v5036 = vsel %vm1060, %v5026, %v5035
  %v5038 = vshrl.u32 %v5005, 16
  %v5040 = vrot.slane %v5038, 3
  %v5041 = vshll.u32 %v5005, 16
  %v5043 = vrot.slane %v5041, 4
  %v5044 = vor.u32 %v5040, %v5043
  %v5045 = vsel %vm1060, %v5035, %v5044
  %v5047 = vshrl.u32 %v5006, 16
  %v5049 = vrot.slane %v5047, 3
  %v5050 = vshll.u32 %v5006, 16
  %v5052 = vrot.slane %v5050, 4
  %v5053 = vor.u32 %v5049, %v5052
  %v5054 = vsel %vm1060, %v5044, %v5053
  %v5056 = vshrl.u32 %v5007, 16
  %v5058 = vrot.slane %v5056, 3
  %v5059 = vshll.u32 %v5007, 16
  %v5061 = vrot.slane %v5059, 4
  %v5062 = vor.u32 %v5058, %v5061
  %v5063 = vsel %vm1060, %v5053, %v5062
  %v5065 = vshrl.u32 %v5008, 16
  %v5067 = vrot.slane %v5065, 3
  %v5068 = vshll.u32 %v5008, 16
  %v5070 = vrot.slane %v5068, 4
  %v5071 = vor.u32 %v5067, %v5070
  %v5072 = vsel %vm1060, %v5062, %v5071
  %v5074 = vshrl.u32 %v5009, 16
  %v5076 = vrot.slane %v5074, 3
  %v5077 = vshll.u32 %v5009, 16
  %v5079 = vrot.slane %v5077, 4
  %v5080 = vor.u32 %v5076, %v5079
  %v5081 = vsel %vm1060, %v5071, %v5080
  %v5083 = vshrl.u32 %v5010, 16
  %v5085 = vrot.slane %v5083, 3
  %v5086 = vshll.u32 %v5010, 16
  %v5088 = vrot.slane %v5086, 4
  %v5089 = vor.u32 %v5085, %v5088
  %v5090 = vsel %vm1060, %v5080, %v5089
  %v5115 = vunpack.c.l.b16 %v4952
  %v5116 = vunpack.c.l.b16 %v4953
  %v5117 = vunpack.c.l.b16 %v4954
  %v5118 = vunpack.c.l.b16 %v4955
  %v5119 = vunpack.c.l.b16 %v4956
  %v5120 = vunpack.c.l.b16 %v4957
  %v5121 = vunpack.c.l.b16 %v4958
  %v5122 = vunpack.c.l.b16 %v4959
  %v5123 = vunpack.c.l.b16 %v4960
  %v5124 = vunpack.c.l.b16 %v4961
  %v5125 = vunpack.c.l.b16 %v4962
  %v5126 = vunpack.c.l.b16 %v4963
  %v5127 = vunpack.c.l.b16 %v4964
  %v5128 = vunpack.c.l.b16 %v4965
  %v5129 = vunpack.c.l.b16 %v4966
  %v5130 = vunpack.c.l.b16 %v4967
  %v5131 = vpack.c.b16 %v5116, %v5115
  %v5132 = vpack.c.b16 %v5118, %v5117
  %v5133 = vpack.c.b16 %v5120, %v5119
  %v5134 = vpack.c.b16 %v5122, %v5121
  %v5135 = vpack.c.b16 %v5124, %v5123
  %v5136 = vpack.c.b16 %v5126, %v5125
  %v5137 = vpack.c.b16 %v5128, %v5127
  %v5138 = vpack.c.b16 %v5130, %v5129
  %5147 = vmatpush.bf16.msra.mxu0 %v5138
  %5148 = vmatpush.bf16.msra.mxu0 %v5137
  %5149 = vmatpush.bf16.msra.mxu0 %v5136
  %5150 = vmatpush.bf16.msra.mxu0 %v5135
  %5151 = vmatpush.bf16.msra.mxu0 %v5134
  %5152 = vmatpush.bf16.msra.mxu0 %v5133
  %5153 = vmatpush.bf16.msra.mxu0 %v5132
  %5154 = vmatpush.bf16.msra.mxu0 %v5131
  %5155 = vmatmul.bf16.gmra.mxu0 %v5027
  %v5156 = vpop.f32.mrf.mxu0
  %v5157 = vadd.f32 0.0, %v5156
  %v5158 = vpop.f32.mrf.mxu0
  %v5159 = vadd.f32 0.0, %v5158
  %5160 = vmatmul.bf16.gmra.mxu0 %v5036
  %v5161 = vpop.f32.mrf.mxu0
  %v5162 = vadd.f32 0.0, %v5161
  %v5163 = vpop.f32.mrf.mxu0
  %v5164 = vadd.f32 0.0, %v5163
  %5165 = vmatmul.bf16.gmra.mxu0 %v5045
  %v5166 = vpop.f32.mrf.mxu0
  %v5167 = vadd.f32 0.0, %v5166
  %v5168 = vpop.f32.mrf.mxu0
  %v5169 = vadd.f32 0.0, %v5168
  %5170 = vmatmul.bf16.gmra.mxu0 %v5054
  %v5171 = vpop.f32.mrf.mxu0
  %v5172 = vadd.f32 0.0, %v5171
  %v5173 = vpop.f32.mrf.mxu0
  %v5174 = vadd.f32 0.0, %v5173
  %5175 = vmatmul.bf16.gmra.mxu0 %v5063
  %v5176 = vpop.f32.mrf.mxu0
  %v5177 = vadd.f32 0.0, %v5176
  %v5178 = vpop.f32.mrf.mxu0
  %v5179 = vadd.f32 0.0, %v5178
  %5180 = vmatmul.bf16.gmra.mxu0 %v5072
  %v5181 = vpop.f32.mrf.mxu0
  %v5182 = vadd.f32 0.0, %v5181
  %v5183 = vpop.f32.mrf.mxu0
  %v5184 = vadd.f32 0.0, %v5183
  %5185 = vmatmul.bf16.gmra.mxu0 %v5081
  %v5186 = vpop.f32.mrf.mxu0
  %v5187 = vadd.f32 0.0, %v5186
  %v5188 = vpop.f32.mrf.mxu0
  %v5189 = vadd.f32 0.0, %v5188
  %5190 = vmatmul.bf16.gmra.mxu0 %v5090
  %v5191 = vpop.f32.mrf.mxu0
  %v5192 = vadd.f32 0.0, %v5191
  %v5193 = vpop.f32.mrf.mxu0
  %v5194 = vadd.f32 0.0, %v5193
  %5195 = vdwg.mxu0
  %v5199 = vunpack.c.l.b16 %v4916
  %v5200 = vunpack.c.l.b16 %v4917
  %v5201 = vunpack.c.l.b16 %v4918
  %v5202 = vpack.c.b16 %v5200, %v5199
  %v5203 = vpack.c.b16 %v4986, %v5201
  %v5204 = vpack.c.b16 %v4999, %v4999
  %v5206 = vshrl.u32 %v5202, 16
  %v5208 = vrot.slane %v5206, 3
  %v5209 = vshll.u32 %v5202, 16
  %v5211 = vrot.slane %v5209, 4
  %v5212 = vor.u32 %v5208, %v5211
  %v5214 = vshrl.u32 %v5203, 16
  %v5216 = vrot.slane %v5214, 3
  %v5217 = vshll.u32 %v5203, 16
  %v5219 = vrot.slane %v5217, 4
  %v5220 = vor.u32 %v5216, %v5219
  %v5221 = vsel %vm1060, %v5212, %v5220
  %v5222 = vsel %vm1060, %v5220, %v5026
  %v5224 = vshrl.u32 %v5204, 16
  %v5226 = vrot.slane %v5224, 3
  %v5227 = vshll.u32 %v5204, 16
  %v5229 = vrot.slane %v5227, 4
  %v5230 = vor.u32 %v5226, %v5229
  %v5231 = vsel %vm1060, %v5071, %v5230
  %v5251 = vunpack.c.l.b16 %v4933
  %v5252 = vunpack.c.l.b16 %v4934
  %v5253 = vunpack.c.l.b16 %v4935
  %v5254 = vunpack.c.l.b16 %v4936
  %v5255 = vunpack.c.l.b16 %v4937
  %v5256 = vunpack.c.l.b16 %v4938
  %v5257 = vunpack.c.l.b16 %v4939
  %v5258 = vunpack.c.l.b16 %v4940
  %v5259 = vunpack.c.l.b16 %v4941
  %v5260 = vunpack.c.l.b16 %v4942
  %v5261 = vunpack.c.l.b16 %v4943
  %v5262 = vunpack.c.l.b16 %v4944
  %v5263 = vunpack.c.l.b16 %v4945
  %v5264 = vunpack.c.l.b16 %v4946
  %v5265 = vunpack.c.l.b16 %v4947
  %v5266 = vunpack.c.l.b16 %v4948
  %v5267 = vpack.c.b16 %v5252, %v5251
  %v5268 = vpack.c.b16 %v5254, %v5253
  %v5269 = vpack.c.b16 %v5256, %v5255
  %v5270 = vpack.c.b16 %v5258, %v5257
  %v5271 = vpack.c.b16 %v5260, %v5259
  %v5272 = vpack.c.b16 %v5262, %v5261
  %v5273 = vpack.c.b16 %v5264, %v5263
  %v5274 = vpack.c.b16 %v5266, %v5265
  %5283 = vmatpush.bf16.msra.mxu0 %v5274
  %5284 = vmatpush.bf16.msra.mxu0 %v5273
  %5285 = vmatpush.bf16.msra.mxu0 %v5272
  %5286 = vmatpush.bf16.msra.mxu0 %v5271
  %5287 = vmatpush.bf16.msra.mxu0 %v5270
  %5288 = vmatpush.bf16.msra.mxu0 %v5269
  %5289 = vmatpush.bf16.msra.mxu0 %v5268
  %5290 = vmatpush.bf16.msra.mxu0 %v5267
  %5291 = vmatmul.bf16.gmra.mxu0 %v5221
  %v5292 = vpop.f32.mrf.mxu0
  %v5293 = vadd.f32 %v5157, %v5292
  %v5294 = vpop.f32.mrf.mxu0
  %v5295 = vadd.f32 %v5159, %v5294
  %5296 = vmatmul.bf16.gmra.mxu0 %v5222
  %v5297 = vpop.f32.mrf.mxu0
  %v5298 = vadd.f32 %v5162, %v5297
  %v5299 = vpop.f32.mrf.mxu0
  %v5300 = vadd.f32 %v5164, %v5299
  %5301 = vmatmul.bf16.gmra.mxu0 %v5036
  %v5302 = vpop.f32.mrf.mxu0
  %v5303 = vadd.f32 %v5167, %v5302
  %v5304 = vpop.f32.mrf.mxu0
  %v5305 = vadd.f32 %v5169, %v5304
  %5306 = vmatmul.bf16.gmra.mxu0 %v5045
  %v5307 = vpop.f32.mrf.mxu0
  %v5308 = vadd.f32 %v5172, %v5307
  %v5309 = vpop.f32.mrf.mxu0
  %v5310 = vadd.f32 %v5174, %v5309
  %5311 = vmatmul.bf16.gmra.mxu0 %v5054
  %v5312 = vpop.f32.mrf.mxu0
  %v5313 = vadd.f32 %v5177, %v5312
  %v5314 = vpop.f32.mrf.mxu0
  %v5315 = vadd.f32 %v5179, %v5314
  %5316 = vmatmul.bf16.gmra.mxu0 %v5063
  %v5317 = vpop.f32.mrf.mxu0
  %v5318 = vadd.f32 %v5182, %v5317
  %v5319 = vpop.f32.mrf.mxu0
  %v5320 = vadd.f32 %v5184, %v5319
  %5321 = vmatmul.bf16.gmra.mxu0 %v5072
  %v5322 = vpop.f32.mrf.mxu0
  %v5323 = vadd.f32 %v5187, %v5322
  %v5324 = vpop.f32.mrf.mxu0
  %v5325 = vadd.f32 %v5189, %v5324
  %5326 = vmatmul.bf16.gmra.mxu0 %v5231
  %v5327 = vpop.f32.mrf.mxu0
  %v5328 = vadd.f32 %v5192, %v5327
  %v5329 = vpop.f32.mrf.mxu0
  %v5330 = vadd.f32 %v5194, %v5329
  %5331 = vdwg.mxu0
  %v5332 = vld [vmem:[#allocation2 + $0xa4] sm:$0x8]
  %v5333 = vld [vmem:[#allocation2 + $0xa8] sm:$0xf]
  %v5334 = vld [vmem:[#allocation2 + $0xac] sm:$0xf]
  %v5335 = vld [vmem:[#allocation2 + $0xb0] sm:$0xf]
  %v5336 = vld [vmem:[#allocation2 + $0xb4] sm:$0xf]
  %v5337 = vld [vmem:[#allocation2 + $0xb8] sm:$0xf]
  %v5338 = vld [vmem:[#allocation2 + $0xbc] sm:$0xf]
  %v5339 = vld [vmem:[#allocation2 + $0xc0] sm:$0xf]
  %v5340 = vld [vmem:[#allocation2 + $0xc4] sm:$0xf]
  %v5341 = vld [vmem:[#allocation2 + $0xc8] sm:$0xf]
  %v5342 = vld [vmem:[#allocation2 + $0xcc] sm:$0xf]
  %v5343 = vld [vmem:[#allocation2 + $0xd0] sm:$0xf]
  %v5344 = vld [vmem:[#allocation2 + $0xd4] sm:$0xf]
  %v5345 = vld [vmem:[#allocation2 + $0xd8] sm:$0xf]
  %v5346 = vld [vmem:[#allocation2 + $0xdc] sm:$0xf]
  %v5347 = vld [vmem:[#allocation2 + $0xe0] sm:$0xf]
  %v5348 = vld [vmem:[#allocation2 + $0xe4] sm:$0xf]
  %v5349 = vld [vmem:[%s1399] sm:$0xf]
  %v5350 = vld [vmem:[%s1399 + $0x4] sm:$0xf]
  %v5351 = vld [vmem:[%s1399 + $0x8] sm:$0xf]
  %v5352 = vld [vmem:[%s1399 + $0xc] sm:$0xf]
  %v5353 = vld [vmem:[%s1399 + $0x10] sm:$0xf]
  %v5354 = vld [vmem:[%s1399 + $0x14] sm:$0xf]
  %v5355 = vld [vmem:[%s1399 + $0x18] sm:$0xf]
  %v5356 = vld [vmem:[%s1399 + $0x1c] sm:$0xf]
  %v5357 = vld [vmem:[%s1399 + $0x20] sm:$0xf]
  %v5358 = vld [vmem:[%s1399 + $0x24] sm:$0xf]
  %v5359 = vld [vmem:[%s1399 + $0x28] sm:$0xf]
  %v5360 = vld [vmem:[%s1399 + $0x2c] sm:$0xf]
  %v5361 = vld [vmem:[%s1399 + $0x30] sm:$0xf]
  %v5362 = vld [vmem:[%s1399 + $0x34] sm:$0xf]
  %v5363 = vld [vmem:[%s1399 + $0x38] sm:$0xf]
  %v5364 = vld [vmem:[%s1399 + $0x3c] sm:$0xf]
  %v5382 = vunpack.c.l.b16 %v5332
  %v5383 = vunpack.c.l.b16 %v5333
  %v5384 = vunpack.c.l.b16 %v5334
  %v5385 = vunpack.c.l.b16 %v5335
  %v5386 = vunpack.c.l.b16 %v5336
  %v5387 = vunpack.c.l.b16 %v5337
  %v5388 = vunpack.c.l.b16 %v5338
  %v5389 = vunpack.c.l.b16 %v5339
  %v5390 = vunpack.c.l.b16 %v5340
  %v5391 = vunpack.c.l.b16 %v5341
  %v5392 = vunpack.c.l.b16 %v5342
  %v5393 = vunpack.c.l.b16 %v5343
  %v5394 = vunpack.c.l.b16 %v5344
  %v5395 = vunpack.c.l.b16 %v5345
  %v5396 = vunpack.c.l.b16 %v5346
  %v5397 = vunpack.c.l.b16 %v5347
  %v5398 = vunpack.c.l.b16 %v5348
  %v5399 = vpack.c.b16 %v5383, %v5382
  %v5400 = vpack.c.b16 %v5385, %v5384
  %v5401 = vpack.c.b16 %v5387, %v5386
  %v5402 = vpack.c.b16 %v5389, %v5388
  %v5403 = vpack.c.b16 %v5391, %v5390
  %v5404 = vpack.c.b16 %v5393, %v5392
  %v5405 = vpack.c.b16 %v5395, %v5394
  %v5406 = vpack.c.b16 %v5397, %v5396
  %v5407 = vpack.c.b16 %v5398, %v5398
  %v5409 = vshrl.u32 %v5399, 16
  %v5411 = vrot.slane %v5409, 3
  %v5412 = vshll.u32 %v5399, 16
  %v5414 = vrot.slane %v5412, 4
  %v5415 = vor.u32 %v5411, %v5414
  %v5417 = vshrl.u32 %v5400, 16
  %v5419 = vrot.slane %v5417, 3
  %v5420 = vshll.u32 %v5400, 16
  %v5422 = vrot.slane %v5420, 4
  %v5423 = vor.u32 %v5419, %v5422
  %v5424 = vsel %vm1060, %v5415, %v5423
  %v5426 = vshrl.u32 %v5401, 16
  %v5428 = vrot.slane %v5426, 3
  %v5429 = vshll.u32 %v5401, 16
  %v5431 = vrot.slane %v5429, 4
  %v5432 = vor.u32 %v5428, %v5431
  %v5433 = vsel %vm1060, %v5423, %v5432
  %v5435 = vshrl.u32 %v5402, 16
  %v5437 = vrot.slane %v5435, 3
  %v5438 = vshll.u32 %v5402, 16
  %v5440 = vrot.slane %v5438, 4
  %v5441 = vor.u32 %v5437, %v5440
  %v5442 = vsel %vm1060, %v5432, %v5441
  %v5444 = vshrl.u32 %v5403, 16
  %v5446 = vrot.slane %v5444, 3
  %v5447 = vshll.u32 %v5403, 16
  %v5449 = vrot.slane %v5447, 4
  %v5450 = vor.u32 %v5446, %v5449
  %v5451 = vsel %vm1060, %v5441, %v5450
  %v5453 = vshrl.u32 %v5404, 16
  %v5455 = vrot.slane %v5453, 3
  %v5456 = vshll.u32 %v5404, 16
  %v5458 = vrot.slane %v5456, 4
  %v5459 = vor.u32 %v5455, %v5458
  %v5460 = vsel %vm1060, %v5450, %v5459
  %v5462 = vshrl.u32 %v5405, 16
  %v5464 = vrot.slane %v5462, 3
  %v5465 = vshll.u32 %v5405, 16
  %v5467 = vrot.slane %v5465, 4
  %v5468 = vor.u32 %v5464, %v5467
  %v5469 = vsel %vm1060, %v5459, %v5468
  %v5471 = vshrl.u32 %v5406, 16
  %v5473 = vrot.slane %v5471, 3
  %v5474 = vshll.u32 %v5406, 16
  %v5476 = vrot.slane %v5474, 4
  %v5477 = vor.u32 %v5473, %v5476
  %v5478 = vsel %vm1060, %v5468, %v5477
  %v5480 = vshrl.u32 %v5407, 16
  %v5482 = vrot.slane %v5480, 3
  %v5483 = vshll.u32 %v5407, 16
  %v5485 = vrot.slane %v5483, 4
  %v5486 = vor.u32 %v5482, %v5485
  %v5487 = vsel %vm1060, %v5477, %v5486
  %v5512 = vunpack.c.l.b16 %v5349
  %v5513 = vunpack.c.l.b16 %v5350
  %v5514 = vunpack.c.l.b16 %v5351
  %v5515 = vunpack.c.l.b16 %v5352
  %v5516 = vunpack.c.l.b16 %v5353
  %v5517 = vunpack.c.l.b16 %v5354
  %v5518 = vunpack.c.l.b16 %v5355
  %v5519 = vunpack.c.l.b16 %v5356
  %v5520 = vunpack.c.l.b16 %v5357
  %v5521 = vunpack.c.l.b16 %v5358
  %v5522 = vunpack.c.l.b16 %v5359
  %v5523 = vunpack.c.l.b16 %v5360
  %v5524 = vunpack.c.l.b16 %v5361
  %v5525 = vunpack.c.l.b16 %v5362
  %v5526 = vunpack.c.l.b16 %v5363
  %v5527 = vunpack.c.l.b16 %v5364
  %v5528 = vpack.c.b16 %v5513, %v5512
  %v5529 = vpack.c.b16 %v5515, %v5514
  %v5530 = vpack.c.b16 %v5517, %v5516
  %v5531 = vpack.c.b16 %v5519, %v5518
  %v5532 = vpack.c.b16 %v5521, %v5520
  %v5533 = vpack.c.b16 %v5523, %v5522
  %v5534 = vpack.c.b16 %v5525, %v5524
  %v5535 = vpack.c.b16 %v5527, %v5526
  %5544 = vmatpush.bf16.msra.mxu0 %v5535
  %5545 = vmatpush.bf16.msra.mxu0 %v5534
  %5546 = vmatpush.bf16.msra.mxu0 %v5533
  %5547 = vmatpush.bf16.msra.mxu0 %v5532
  %5548 = vmatpush.bf16.msra.mxu0 %v5531
  %5549 = vmatpush.bf16.msra.mxu0 %v5530
  %5550 = vmatpush.bf16.msra.mxu0 %v5529
  %5551 = vmatpush.bf16.msra.mxu0 %v5528
  %5552 = vmatmul.bf16.gmra.mxu0 %v5424
  %v5553 = vpop.f32.mrf.mxu0
  %v5554 = vadd.f32 0.0, %v5553
  %v5555 = vpop.f32.mrf.mxu0
  %v5556 = vadd.f32 0.0, %v5555
  %5557 = vmatmul.bf16.gmra.mxu0 %v5433
  %v5558 = vpop.f32.mrf.mxu0
  %v5559 = vadd.f32 0.0, %v5558
  %v5560 = vpop.f32.mrf.mxu0
  %v5561 = vadd.f32 0.0, %v5560
  %5562 = vmatmul.bf16.gmra.mxu0 %v5442
  %v5563 = vpop.f32.mrf.mxu0
  %v5564 = vadd.f32 0.0, %v5563
  %v5565 = vpop.f32.mrf.mxu0
  %v5566 = vadd.f32 0.0, %v5565
  %5567 = vmatmul.bf16.gmra.mxu0 %v5451
  %v5568 = vpop.f32.mrf.mxu0
  %v5569 = vadd.f32 0.0, %v5568
  %v5570 = vpop.f32.mrf.mxu0
  %v5571 = vadd.f32 0.0, %v5570
  %5572 = vmatmul.bf16.gmra.mxu0 %v5460
  %v5573 = vpop.f32.mrf.mxu0
  %v5574 = vadd.f32 0.0, %v5573
  %v5575 = vpop.f32.mrf.mxu0
  %v5576 = vadd.f32 0.0, %v5575
  %5577 = vmatmul.bf16.gmra.mxu0 %v5469
  %v5578 = vpop.f32.mrf.mxu0
  %v5579 = vadd.f32 0.0, %v5578
  %v5580 = vpop.f32.mrf.mxu0
  %v5581 = vadd.f32 0.0, %v5580
  %5582 = vmatmul.bf16.gmra.mxu0 %v5478
  %v5583 = vpop.f32.mrf.mxu0
  %v5584 = vadd.f32 0.0, %v5583
  %v5585 = vpop.f32.mrf.mxu0
  %v5586 = vadd.f32 0.0, %v5585
  %5587 = vmatmul.bf16.gmra.mxu0 %v5487
  %v5588 = vpop.f32.mrf.mxu0
  %v5589 = vadd.f32 0.0, %v5588
  %v5590 = vpop.f32.mrf.mxu0
  %v5591 = vadd.f32 0.0, %v5590
  %5592 = vdwg.mxu0
  %v5593 = vadd.f32 %v5293, %v5554
  %v5594 = vadd.f32 %v5295, %v5556
  %v5595 = vadd.f32 %v5298, %v5559
  %v5596 = vadd.f32 %v5300, %v5561
  %v5597 = vadd.f32 %v5303, %v5564
  %v5598 = vadd.f32 %v5305, %v5566
  %v5599 = vadd.f32 %v5308, %v5569
  %v5600 = vadd.f32 %v5310, %v5571
  %v5601 = vadd.f32 %v5313, %v5574
  %v5602 = vadd.f32 %v5315, %v5576
  %v5603 = vadd.f32 %v5318, %v5579
  %v5604 = vadd.f32 %v5320, %v5581
  %v5605 = vadd.f32 %v5323, %v5584
  %v5606 = vadd.f32 %v5325, %v5586
  %v5607 = vadd.f32 %v5328, %v5589
  %v5608 = vadd.f32 %v5330, %v5591
  %v5609 = vmul.f32 %v5593, %v1663
  %v5610 = vmul.f32 %v5594, %v1668
  %v5611 = vmul.f32 %v5595, %v1673
  %v5612 = vmul.f32 %v5596, %v1678
  %v5613 = vmul.f32 %v5597, %v1683
  %v5614 = vmul.f32 %v5598, %v1688
  %v5615 = vmul.f32 %v5599, %v1693
  %v5616 = vmul.f32 %v5600, %v1698
  %v5617 = vmul.f32 %v5601, %v1703
  %v5618 = vmul.f32 %v5602, %v1708
  %v5619 = vmul.f32 %v5603, %v1713
  %v5620 = vmul.f32 %v5604, %v1718
  %v5621 = vmul.f32 %v5605, %v1723
  %v5622 = vmul.f32 %v5606, %v1728
  %v5623 = vmul.f32 %v5607, %v1733
  %v5624 = vmul.f32 %v5608, %v1738
  %v5625 = vld [vmem:[#allocation2 + $0x98] sm:$0xf]
  %v5626 = vld [vmem:[#allocation2 + $0x9c] sm:$0xf]
  %v5627 = vld [vmem:[#allocation2 + $0xa0] sm:$0xf]
  %v5628 = vld [vmem:[#allocation2 + $0xa4] sm:$0xf]
  %v5629 = vld [vmem:[#allocation2 + $0xa8] sm:$0xf]
  %v5630 = vld [vmem:[#allocation2 + $0xac] sm:$0xf]
  %v5631 = vld [vmem:[#allocation2 + $0xb0] sm:$0xf]
  %v5632 = vld [vmem:[#allocation2 + $0xb4] sm:$0xf]
  %v5633 = vld [vmem:[#allocation2 + $0xb8] sm:$0xf]
  %v5634 = vld [vmem:[#allocation2 + $0xbc] sm:$0xf]
  %v5635 = vld [vmem:[#allocation2 + $0xc0] sm:$0xf]
  %v5636 = vld [vmem:[#allocation2 + $0xc4] sm:$0xf]
  %v5637 = vld [vmem:[#allocation2 + $0xc8] sm:$0xf]
  %v5638 = vld [vmem:[#allocation2 + $0xcc] sm:$0xf]
  %v5639 = vld [vmem:[#allocation2 + $0xd0] sm:$0xf]
  %v5640 = vld [vmem:[#allocation2 + $0xd4] sm:$0xf]
  %v5641 = vld [vmem:[#allocation2 + $0xd8] sm:$0x1]
  %v5642 = vld [vmem:[%s1773] sm:$0xf]
  %v5643 = vld [vmem:[%s1773 + $0x4] sm:$0xf]
  %v5644 = vld [vmem:[%s1773 + $0x8] sm:$0xf]
  %v5645 = vld [vmem:[%s1773 + $0xc] sm:$0xf]
  %v5646 = vld [vmem:[%s1773 + $0x10] sm:$0xf]
  %v5647 = vld [vmem:[%s1773 + $0x14] sm:$0xf]
  %v5648 = vld [vmem:[%s1773 + $0x18] sm:$0xf]
  %v5649 = vld [vmem:[%s1773 + $0x1c] sm:$0xf]
  %v5650 = vld [vmem:[%s1773 + $0x20] sm:$0xf]
  %v5651 = vld [vmem:[%s1773 + $0x24] sm:$0xf]
  %v5652 = vld [vmem:[%s1773 + $0x28] sm:$0xf]
  %v5653 = vld [vmem:[%s1773 + $0x2c] sm:$0xf]
  %v5654 = vld [vmem:[%s1773 + $0x30] sm:$0xf]
  %v5655 = vld [vmem:[%s1773 + $0x34] sm:$0xf]
  %v5656 = vld [vmem:[%s1773 + $0x38] sm:$0xf]
  %v5657 = vld [vmem:[%s1773 + $0x3c] sm:$0xf]
  %v5658 = vld [vmem:[#allocation2 + $0xd8] sm:$0xf]
  %v5659 = vld [vmem:[#allocation2 + $0xdc] sm:$0xf]
  %v5660 = vld [vmem:[#allocation2 + $0xe0] sm:$0x1]
  %v5661 = vld [vmem:[%s1793] sm:$0xf]
  %v5662 = vld [vmem:[%s1793 + $0x4] sm:$0xf]
  %v5663 = vld [vmem:[%s1793 + $0x8] sm:$0xf]
  %v5664 = vld [vmem:[%s1793 + $0xc] sm:$0xf]
  %v5665 = vld [vmem:[%s1793 + $0x10] sm:$0xf]
  %v5666 = vld [vmem:[%s1793 + $0x14] sm:$0xf]
  %v5667 = vld [vmem:[%s1793 + $0x18] sm:$0xf]
  %v5668 = vld [vmem:[%s1793 + $0x1c] sm:$0xf]
  %v5669 = vld [vmem:[%s1793 + $0x20] sm:$0xf]
  %v5670 = vld [vmem:[%s1793 + $0x24] sm:$0xf]
  %v5671 = vld [vmem:[%s1793 + $0x28] sm:$0xf]
  %v5672 = vld [vmem:[%s1793 + $0x2c] sm:$0xf]
  %v5673 = vld [vmem:[%s1793 + $0x30] sm:$0xf]
  %v5674 = vld [vmem:[%s1793 + $0x34] sm:$0xf]
  %v5675 = vld [vmem:[%s1793 + $0x38] sm:$0xf]
  %v5676 = vld [vmem:[%s1793 + $0x3c] sm:$0xf]
  %v5694 = vunpack.c.l.b16 %v5627
  %v5695 = vunpack.c.l.b16 %v5628
  %v5696 = vunpack.c.l.b16 %v5629
  %v5697 = vunpack.c.l.b16 %v5630
  %v5698 = vunpack.c.l.b16 %v5631
  %v5699 = vunpack.c.l.b16 %v5632
  %v5700 = vunpack.c.l.b16 %v5633
  %v5701 = vunpack.c.l.b16 %v5634
  %v5702 = vunpack.c.l.b16 %v5635
  %v5703 = vunpack.c.l.b16 %v5636
  %v5704 = vunpack.c.l.b16 %v5637
  %v5705 = vunpack.c.l.b16 %v5638
  %v5706 = vunpack.c.l.b16 %v5639
  %v5707 = vunpack.c.l.b16 %v5640
  %v5708 = vunpack.c.l.b16 %v5658
  %v5709 = vunpack.c.l.b16 %v5659
  %v5710 = vunpack.c.l.b16 %v5660
  %v5711 = vpack.c.b16 %v5695, %v5694
  %v5712 = vpack.c.b16 %v5697, %v5696
  %v5713 = vpack.c.b16 %v5699, %v5698
  %v5714 = vpack.c.b16 %v5701, %v5700
  %v5715 = vpack.c.b16 %v5703, %v5702
  %v5716 = vpack.c.b16 %v5705, %v5704
  %v5717 = vpack.c.b16 %v5707, %v5706
  %v5718 = vpack.c.b16 %v5709, %v5708
  %v5719 = vpack.c.b16 %v5710, %v5710
  %v5721 = vshrl.u32 %v5711, 16
  %v5723 = vshll.u32 %v5711, 16
  %v5725 = vrot.slane %v5723, 1
  %v5726 = vor.u32 %v5721, %v5725
  %v5728 = vshll.u32 %v5712, 16
  %v5730 = vrot.slane %v5728, 1
  %v5731 = vsel %vm1853, %v5726, %v5730
  %v5732 = vshrl.u32 %v5712, 16
  %v5734 = vor.u32 %v5732, %v5730
  %v5736 = vshll.u32 %v5713, 16
  %v5738 = vrot.slane %v5736, 1
  %v5739 = vsel %vm1853, %v5734, %v5738
  %v5740 = vshrl.u32 %v5713, 16
  %v5742 = vor.u32 %v5740, %v5738
  %v5744 = vshll.u32 %v5714, 16
  %v5746 = vrot.slane %v5744, 1
  %v5747 = vsel %vm1853, %v5742, %v5746
  %v5748 = vshrl.u32 %v5714, 16
  %v5750 = vor.u32 %v5748, %v5746
  %v5752 = vshll.u32 %v5715, 16
  %v5754 = vrot.slane %v5752, 1
  %v5755 = vsel %vm1853, %v5750, %v5754
  %v5756 = vshrl.u32 %v5715, 16
  %v5758 = vor.u32 %v5756, %v5754
  %v5760 = vshll.u32 %v5716, 16
  %v5762 = vrot.slane %v5760, 1
  %v5763 = vsel %vm1853, %v5758, %v5762
  %v5764 = vshrl.u32 %v5716, 16
  %v5766 = vor.u32 %v5764, %v5762
  %v5768 = vshll.u32 %v5717, 16
  %v5770 = vrot.slane %v5768, 1
  %v5771 = vsel %vm1853, %v5766, %v5770
  %v5772 = vshrl.u32 %v5717, 16
  %v5774 = vor.u32 %v5772, %v5770
  %v5776 = vshll.u32 %v5718, 16
  %v5778 = vrot.slane %v5776, 1
  %v5779 = vsel %vm1853, %v5774, %v5778
  %v5780 = vshrl.u32 %v5718, 16
  %v5782 = vor.u32 %v5780, %v5778
  %v5784 = vshll.u32 %v5719, 16
  %v5786 = vrot.slane %v5784, 1
  %v5787 = vsel %vm1853, %v5782, %v5786
  %v5812 = vunpack.c.l.b16 %v5661
  %v5813 = vunpack.c.l.b16 %v5662
  %v5814 = vunpack.c.l.b16 %v5663
  %v5815 = vunpack.c.l.b16 %v5664
  %v5816 = vunpack.c.l.b16 %v5665
  %v5817 = vunpack.c.l.b16 %v5666
  %v5818 = vunpack.c.l.b16 %v5667
  %v5819 = vunpack.c.l.b16 %v5668
  %v5820 = vunpack.c.l.b16 %v5669
  %v5821 = vunpack.c.l.b16 %v5670
  %v5822 = vunpack.c.l.b16 %v5671
  %v5823 = vunpack.c.l.b16 %v5672
  %v5824 = vunpack.c.l.b16 %v5673
  %v5825 = vunpack.c.l.b16 %v5674
  %v5826 = vunpack.c.l.b16 %v5675
  %v5827 = vunpack.c.l.b16 %v5676
  %v5828 = vpack.c.b16 %v5813, %v5812
  %v5829 = vpack.c.b16 %v5815, %v5814
  %v5830 = vpack.c.b16 %v5817, %v5816
  %v5831 = vpack.c.b16 %v5819, %v5818
  %v5832 = vpack.c.b16 %v5821, %v5820
  %v5833 = vpack.c.b16 %v5823, %v5822
  %v5834 = vpack.c.b16 %v5825, %v5824
  %v5835 = vpack.c.b16 %v5827, %v5826
  %5844 = vmatpush.bf16.msra.mxu0 %v5835
  %5845 = vmatpush.bf16.msra.mxu0 %v5834
  %5846 = vmatpush.bf16.msra.mxu0 %v5833
  %5847 = vmatpush.bf16.msra.mxu0 %v5832
  %5848 = vmatpush.bf16.msra.mxu0 %v5831
  %5849 = vmatpush.bf16.msra.mxu0 %v5830
  %5850 = vmatpush.bf16.msra.mxu0 %v5829
  %5851 = vmatpush.bf16.msra.mxu0 %v5828
  %5852 = vmatmul.bf16.gmra.mxu0 %v5731
  %v5853 = vpop.f32.mrf.mxu0
  %v5854 = vadd.f32 0.0, %v5853
  %v5855 = vpop.f32.mrf.mxu0
  %v5856 = vadd.f32 0.0, %v5855
  %5857 = vmatmul.bf16.gmra.mxu0 %v5739
  %v5858 = vpop.f32.mrf.mxu0
  %v5859 = vadd.f32 0.0, %v5858
  %v5860 = vpop.f32.mrf.mxu0
  %v5861 = vadd.f32 0.0, %v5860
  %5862 = vmatmul.bf16.gmra.mxu0 %v5747
  %v5863 = vpop.f32.mrf.mxu0
  %v5864 = vadd.f32 0.0, %v5863
  %v5865 = vpop.f32.mrf.mxu0
  %v5866 = vadd.f32 0.0, %v5865
  %5867 = vmatmul.bf16.gmra.mxu0 %v5755
  %v5868 = vpop.f32.mrf.mxu0
  %v5869 = vadd.f32 0.0, %v5868
  %v5870 = vpop.f32.mrf.mxu0
  %v5871 = vadd.f32 0.0, %v5870
  %5872 = vmatmul.bf16.gmra.mxu0 %v5763
  %v5873 = vpop.f32.mrf.mxu0
  %v5874 = vadd.f32 0.0, %v5873
  %v5875 = vpop.f32.mrf.mxu0
  %v5876 = vadd.f32 0.0, %v5875
  %5877 = vmatmul.bf16.gmra.mxu0 %v5771
  %v5878 = vpop.f32.mrf.mxu0
  %v5879 = vadd.f32 0.0, %v5878
  %v5880 = vpop.f32.mrf.mxu0
  %v5881 = vadd.f32 0.0, %v5880
  %5882 = vmatmul.bf16.gmra.mxu0 %v5779
  %v5883 = vpop.f32.mrf.mxu0
  %v5884 = vadd.f32 0.0, %v5883
  %v5885 = vpop.f32.mrf.mxu0
  %v5886 = vadd.f32 0.0, %v5885
  %5887 = vmatmul.bf16.gmra.mxu0 %v5787
  %v5888 = vpop.f32.mrf.mxu0
  %v5889 = vadd.f32 0.0, %v5888
  %v5890 = vpop.f32.mrf.mxu0
  %v5891 = vadd.f32 0.0, %v5890
  %5892 = vdwg.mxu0
  %v5896 = vunpack.c.l.b16 %v5625
  %v5897 = vunpack.c.l.b16 %v5626
  %v5898 = vunpack.c.l.b16 %v5641
  %v5899 = vpack.c.b16 %v5897, %v5896
  %v5900 = vpack.c.b16 %v5898, %v5898
  %v5902 = vshrl.u32 %v5899, 16
  %v5904 = vshll.u32 %v5899, 16
  %v5906 = vrot.slane %v5904, 1
  %v5907 = vor.u32 %v5902, %v5906
  %v5908 = vsel %vm1853, %v5907, %v5725
  %v5910 = vshll.u32 %v5900, 16
  %v5912 = vrot.slane %v5910, 1
  %v5913 = vsel %vm1853, %v5774, %v5912
  %v5932 = vunpack.c.l.b16 %v5642
  %v5933 = vunpack.c.l.b16 %v5643
  %v5934 = vunpack.c.l.b16 %v5644
  %v5935 = vunpack.c.l.b16 %v5645
  %v5936 = vunpack.c.l.b16 %v5646
  %v5937 = vunpack.c.l.b16 %v5647
  %v5938 = vunpack.c.l.b16 %v5648
  %v5939 = vunpack.c.l.b16 %v5649
  %v5940 = vunpack.c.l.b16 %v5650
  %v5941 = vunpack.c.l.b16 %v5651
  %v5942 = vunpack.c.l.b16 %v5652
  %v5943 = vunpack.c.l.b16 %v5653
  %v5944 = vunpack.c.l.b16 %v5654
  %v5945 = vunpack.c.l.b16 %v5655
  %v5946 = vunpack.c.l.b16 %v5656
  %v5947 = vunpack.c.l.b16 %v5657
  %v5948 = vpack.c.b16 %v5933, %v5932
  %v5949 = vpack.c.b16 %v5935, %v5934
  %v5950 = vpack.c.b16 %v5937, %v5936
  %v5951 = vpack.c.b16 %v5939, %v5938
  %v5952 = vpack.c.b16 %v5941, %v5940
  %v5953 = vpack.c.b16 %v5943, %v5942
  %v5954 = vpack.c.b16 %v5945, %v5944
  %v5955 = vpack.c.b16 %v5947, %v5946
  %5964 = vmatpush.bf16.msra.mxu0 %v5955
  %5965 = vmatpush.bf16.msra.mxu0 %v5954
  %5966 = vmatpush.bf16.msra.mxu0 %v5953
  %5967 = vmatpush.bf16.msra.mxu0 %v5952
  %5968 = vmatpush.bf16.msra.mxu0 %v5951
  %5969 = vmatpush.bf16.msra.mxu0 %v5950
  %5970 = vmatpush.bf16.msra.mxu0 %v5949
  %5971 = vmatpush.bf16.msra.mxu0 %v5948
  %5972 = vmatmul.bf16.gmra.mxu0 %v5908
  %v5973 = vpop.f32.mrf.mxu0
  %v5974 = vadd.f32 %v5854, %v5973
  %v5975 = vpop.f32.mrf.mxu0
  %v5976 = vadd.f32 %v5856, %v5975
  %5977 = vmatmul.bf16.gmra.mxu0 %v5731
  %v5978 = vpop.f32.mrf.mxu0
  %v5979 = vadd.f32 %v5859, %v5978
  %v5980 = vpop.f32.mrf.mxu0
  %v5981 = vadd.f32 %v5861, %v5980
  %5982 = vmatmul.bf16.gmra.mxu0 %v5739
  %v5983 = vpop.f32.mrf.mxu0
  %v5984 = vadd.f32 %v5864, %v5983
  %v5985 = vpop.f32.mrf.mxu0
  %v5986 = vadd.f32 %v5866, %v5985
  %5987 = vmatmul.bf16.gmra.mxu0 %v5747
  %v5988 = vpop.f32.mrf.mxu0
  %v5989 = vadd.f32 %v5869, %v5988
  %v5990 = vpop.f32.mrf.mxu0
  %v5991 = vadd.f32 %v5871, %v5990
  %5992 = vmatmul.bf16.gmra.mxu0 %v5755
  %v5993 = vpop.f32.mrf.mxu0
  %v5994 = vadd.f32 %v5874, %v5993
  %v5995 = vpop.f32.mrf.mxu0
  %v5996 = vadd.f32 %v5876, %v5995
  %5997 = vmatmul.bf16.gmra.mxu0 %v5763
  %v5998 = vpop.f32.mrf.mxu0
  %v5999 = vadd.f32 %v5879, %v5998
  %v6000 = vpop.f32.mrf.mxu0
  %v6001 = vadd.f32 %v5881, %v6000
  %6002 = vmatmul.bf16.gmra.mxu0 %v5771
  %v6003 = vpop.f32.mrf.mxu0
  %v6004 = vadd.f32 %v5884, %v6003
  %v6005 = vpop.f32.mrf.mxu0
  %v6006 = vadd.f32 %v5886, %v6005
  %6007 = vmatmul.bf16.gmra.mxu0 %v5913
  %v6008 = vpop.f32.mrf.mxu0
  %v6009 = vadd.f32 %v5889, %v6008
  %v6010 = vpop.f32.mrf.mxu0
  %v6011 = vadd.f32 %v5891, %v6010
  %6012 = vdwg.mxu0
  %v6013 = vld [vmem:[#allocation2 + $0xa8] sm:$0xf]
  %v6014 = vld [vmem:[#allocation2 + $0xac] sm:$0xf]
  %v6015 = vld [vmem:[#allocation2 + $0xb0] sm:$0xf]
  %v6016 = vld [vmem:[#allocation2 + $0xb4] sm:$0xf]
  %v6017 = vld [vmem:[#allocation2 + $0xb8] sm:$0xf]
  %v6018 = vld [vmem:[#allocation2 + $0xbc] sm:$0xf]
  %v6019 = vld [vmem:[#allocation2 + $0xc0] sm:$0xf]
  %v6020 = vld [vmem:[#allocation2 + $0xc4] sm:$0xf]
  %v6021 = vld [vmem:[#allocation2 + $0xc8] sm:$0xf]
  %v6022 = vld [vmem:[#allocation2 + $0xcc] sm:$0xf]
  %v6023 = vld [vmem:[#allocation2 + $0xd0] sm:$0xf]
  %v6024 = vld [vmem:[#allocation2 + $0xd4] sm:$0xf]
  %v6025 = vld [vmem:[#allocation2 + $0xd8] sm:$0xf]
  %v6026 = vld [vmem:[#allocation2 + $0xdc] sm:$0xf]
  %v6027 = vld [vmem:[#allocation2 + $0xe0] sm:$0xf]
  %v6028 = vld [vmem:[#allocation2 + $0xe4] sm:$0xf]
  %v6029 = vld [vmem:[#allocation2 + $0xe8] sm:$0x1]
  %v6030 = vld [vmem:[%s2164] sm:$0xf]
  %v6031 = vld [vmem:[%s2164 + $0x4] sm:$0xf]
  %v6032 = vld [vmem:[%s2164 + $0x8] sm:$0xf]
  %v6033 = vld [vmem:[%s2164 + $0xc] sm:$0xf]
  %v6034 = vld [vmem:[%s2164 + $0x10] sm:$0xf]
  %v6035 = vld [vmem:[%s2164 + $0x14] sm:$0xf]
  %v6036 = vld [vmem:[%s2164 + $0x18] sm:$0xf]
  %v6037 = vld [vmem:[%s2164 + $0x1c] sm:$0xf]
  %v6038 = vld [vmem:[%s2164 + $0x20] sm:$0xf]
  %v6039 = vld [vmem:[%s2164 + $0x24] sm:$0xf]
  %v6040 = vld [vmem:[%s2164 + $0x28] sm:$0xf]
  %v6041 = vld [vmem:[%s2164 + $0x2c] sm:$0xf]
  %v6042 = vld [vmem:[%s2164 + $0x30] sm:$0xf]
  %v6043 = vld [vmem:[%s2164 + $0x34] sm:$0xf]
  %v6044 = vld [vmem:[%s2164 + $0x38] sm:$0xf]
  %v6045 = vld [vmem:[%s2164 + $0x3c] sm:$0xf]
  %v6063 = vunpack.c.l.b16 %v6013
  %v6064 = vunpack.c.l.b16 %v6014
  %v6065 = vunpack.c.l.b16 %v6015
  %v6066 = vunpack.c.l.b16 %v6016
  %v6067 = vunpack.c.l.b16 %v6017
  %v6068 = vunpack.c.l.b16 %v6018
  %v6069 = vunpack.c.l.b16 %v6019
  %v6070 = vunpack.c.l.b16 %v6020
  %v6071 = vunpack.c.l.b16 %v6021
  %v6072 = vunpack.c.l.b16 %v6022
  %v6073 = vunpack.c.l.b16 %v6023
  %v6074 = vunpack.c.l.b16 %v6024
  %v6075 = vunpack.c.l.b16 %v6025
  %v6076 = vunpack.c.l.b16 %v6026
  %v6077 = vunpack.c.l.b16 %v6027
  %v6078 = vunpack.c.l.b16 %v6028
  %v6079 = vunpack.c.l.b16 %v6029
  %v6080 = vpack.c.b16 %v6064, %v6063
  %v6081 = vpack.c.b16 %v6066, %v6065
  %v6082 = vpack.c.b16 %v6068, %v6067
  %v6083 = vpack.c.b16 %v6070, %v6069
  %v6084 = vpack.c.b16 %v6072, %v6071
  %v6085 = vpack.c.b16 %v6074, %v6073
  %v6086 = vpack.c.b16 %v6076, %v6075
  %v6087 = vpack.c.b16 %v6078, %v6077
  %v6088 = vpack.c.b16 %v6079, %v6079
  %v6090 = vshrl.u32 %v6080, 16
  %v6092 = vshll.u32 %v6080, 16
  %v6094 = vrot.slane %v6092, 1
  %v6095 = vor.u32 %v6090, %v6094
  %v6097 = vshll.u32 %v6081, 16
  %v6099 = vrot.slane %v6097, 1
  %v6100 = vsel %vm1853, %v6095, %v6099
  %v6101 = vshrl.u32 %v6081, 16
  %v6103 = vor.u32 %v6101, %v6099
  %v6105 = vshll.u32 %v6082, 16
  %v6107 = vrot.slane %v6105, 1
  %v6108 = vsel %vm1853, %v6103, %v6107
  %v6109 = vshrl.u32 %v6082, 16
  %v6111 = vor.u32 %v6109, %v6107
  %v6113 = vshll.u32 %v6083, 16
  %v6115 = vrot.slane %v6113, 1
  %v6116 = vsel %vm1853, %v6111, %v6115
  %v6117 = vshrl.u32 %v6083, 16
  %v6119 = vor.u32 %v6117, %v6115
  %v6121 = vshll.u32 %v6084, 16
  %v6123 = vrot.slane %v6121, 1
  %v6124 = vsel %vm1853, %v6119, %v6123
  %v6125 = vshrl.u32 %v6084, 16
  %v6127 = vor.u32 %v6125, %v6123
  %v6129 = vshll.u32 %v6085, 16
  %v6131 = vrot.slane %v6129, 1
  %v6132 = vsel %vm1853, %v6127, %v6131
  %v6133 = vshrl.u32 %v6085, 16
  %v6135 = vor.u32 %v6133, %v6131
  %v6137 = vshll.u32 %v6086, 16
  %v6139 = vrot.slane %v6137, 1
  %v6140 = vsel %vm1853, %v6135, %v6139
  %v6141 = vshrl.u32 %v6086, 16
  %v6143 = vor.u32 %v6141, %v6139
  %v6145 = vshll.u32 %v6087, 16
  %v6147 = vrot.slane %v6145, 1
  %v6148 = vsel %vm1853, %v6143, %v6147
  %v6149 = vshrl.u32 %v6087, 16
  %v6151 = vor.u32 %v6149, %v6147
  %v6153 = vshll.u32 %v6088, 16
  %v6155 = vrot.slane %v6153, 1
  %v6156 = vsel %vm1853, %v6151, %v6155
  %v6181 = vunpack.c.l.b16 %v6030
  %v6182 = vunpack.c.l.b16 %v6031
  %v6183 = vunpack.c.l.b16 %v6032
  %v6184 = vunpack.c.l.b16 %v6033
  %v6185 = vunpack.c.l.b16 %v6034
  %v6186 = vunpack.c.l.b16 %v6035
  %v6187 = vunpack.c.l.b16 %v6036
  %v6188 = vunpack.c.l.b16 %v6037
  %v6189 = vunpack.c.l.b16 %v6038
  %v6190 = vunpack.c.l.b16 %v6039
  %v6191 = vunpack.c.l.b16 %v6040
  %v6192 = vunpack.c.l.b16 %v6041
  %v6193 = vunpack.c.l.b16 %v6042
  %v6194 = vunpack.c.l.b16 %v6043
  %v6195 = vunpack.c.l.b16 %v6044
  %v6196 = vunpack.c.l.b16 %v6045
  %v6197 = vpack.c.b16 %v6182, %v6181
  %v6198 = vpack.c.b16 %v6184, %v6183
  %v6199 = vpack.c.b16 %v6186, %v6185
  %v6200 = vpack.c.b16 %v6188, %v6187
  %v6201 = vpack.c.b16 %v6190, %v6189
  %v6202 = vpack.c.b16 %v6192, %v6191
  %v6203 = vpack.c.b16 %v6194, %v6193
  %v6204 = vpack.c.b16 %v6196, %v6195
  %6213 = vmatpush.bf16.msra.mxu0 %v6204
  %6214 = vmatpush.bf16.msra.mxu0 %v6203
  %6215 = vmatpush.bf16.msra.mxu0 %v6202
  %6216 = vmatpush.bf16.msra.mxu0 %v6201
  %6217 = vmatpush.bf16.msra.mxu0 %v6200
  %6218 = vmatpush.bf16.msra.mxu0 %v6199
  %6219 = vmatpush.bf16.msra.mxu0 %v6198
  %6220 = vmatpush.bf16.msra.mxu0 %v6197
  %6221 = vmatmul.bf16.gmra.mxu0 %v6100
  %v6222 = vpop.f32.mrf.mxu0
  %v6223 = vadd.f32 0.0, %v6222
  %v6224 = vpop.f32.mrf.mxu0
  %v6225 = vadd.f32 0.0, %v6224
  %6226 = vmatmul.bf16.gmra.mxu0 %v6108
  %v6227 = vpop.f32.mrf.mxu0
  %v6228 = vadd.f32 0.0, %v6227
  %v6229 = vpop.f32.mrf.mxu0
  %v6230 = vadd.f32 0.0, %v6229
  %6231 = vmatmul.bf16.gmra.mxu0 %v6116
  %v6232 = vpop.f32.mrf.mxu0
  %v6233 = vadd.f32 0.0, %v6232
  %v6234 = vpop.f32.mrf.mxu0
  %v6235 = vadd.f32 0.0, %v6234
  %6236 = vmatmul.bf16.gmra.mxu0 %v6124
  %v6237 = vpop.f32.mrf.mxu0
  %v6238 = vadd.f32 0.0, %v6237
  %v6239 = vpop.f32.mrf.mxu0
  %v6240 = vadd.f32 0.0, %v6239
  %6241 = vmatmul.bf16.gmra.mxu0 %v6132
  %v6242 = vpop.f32.mrf.mxu0
  %v6243 = vadd.f32 0.0, %v6242
  %v6244 = vpop.f32.mrf.mxu0
  %v6245 = vadd.f32 0.0, %v6244
  %6246 = vmatmul.bf16.gmra.mxu0 %v6140
  %v6247 = vpop.f32.mrf.mxu0
  %v6248 = vadd.f32 0.0, %v6247
  %v6249 = vpop.f32.mrf.mxu0
  %v6250 = vadd.f32 0.0, %v6249
  %6251 = vmatmul.bf16.gmra.mxu0 %v6148
  %v6252 = vpop.f32.mrf.mxu0
  %v6253 = vadd.f32 0.0, %v6252
  %v6254 = vpop.f32.mrf.mxu0
  %v6255 = vadd.f32 0.0, %v6254
  %6256 = vmatmul.bf16.gmra.mxu0 %v6156
  %v6257 = vpop.f32.mrf.mxu0
  %v6258 = vadd.f32 0.0, %v6257
  %v6259 = vpop.f32.mrf.mxu0
  %v6260 = vadd.f32 0.0, %v6259
  %6261 = vdwg.mxu0
  %v6262 = vadd.f32 %v5974, %v6223
  %v6263 = vadd.f32 %v5976, %v6225
  %v6264 = vadd.f32 %v5979, %v6228
  %v6265 = vadd.f32 %v5981, %v6230
  %v6266 = vadd.f32 %v5984, %v6233
  %v6267 = vadd.f32 %v5986, %v6235
  %v6268 = vadd.f32 %v5989, %v6238
  %v6269 = vadd.f32 %v5991, %v6240
  %v6270 = vadd.f32 %v5994, %v6243
  %v6271 = vadd.f32 %v5996, %v6245
  %v6272 = vadd.f32 %v5999, %v6248
  %v6273 = vadd.f32 %v6001, %v6250
  %v6274 = vadd.f32 %v6004, %v6253
  %v6275 = vadd.f32 %v6006, %v6255
  %v6276 = vadd.f32 %v6009, %v6258
  %v6277 = vadd.f32 %v6011, %v6260
  %v6278 = vmul.f32 %v6262, %v2416
  %v6279 = vmul.f32 %v6263, %v2421
  %v6280 = vmul.f32 %v6264, %v2426
  %v6281 = vmul.f32 %v6265, %v2431
  %v6282 = vmul.f32 %v6266, %v2436
  %v6283 = vmul.f32 %v6267, %v2441
  %v6284 = vmul.f32 %v6268, %v2446
  %v6285 = vmul.f32 %v6269, %v2451
  %v6286 = vmul.f32 %v6270, %v2456
  %v6287 = vmul.f32 %v6271, %v2461
  %v6288 = vmul.f32 %v6272, %v2466
  %v6289 = vmul.f32 %v6273, %v2471
  %v6290 = vmul.f32 %v6274, %v2476
  %v6291 = vmul.f32 %v6275, %v2481
  %v6292 = vmul.f32 %v6276, %v2486
  %v6293 = vmul.f32 %v6277, %v2491
  %v6294 = vadd.f32 %v5609, %v6278
  %v6295 = vadd.f32 %v5610, %v6279
  %v6296 = vadd.f32 %v5611, %v6280
  %v6297 = vadd.f32 %v5612, %v6281
  %v6298 = vadd.f32 %v5613, %v6282
  %v6299 = vadd.f32 %v5614, %v6283
  %v6300 = vadd.f32 %v5615, %v6284
  %v6301 = vadd.f32 %v5616, %v6285
  %v6302 = vadd.f32 %v5617, %v6286
  %v6303 = vadd.f32 %v5618, %v6287
  %v6304 = vadd.f32 %v5619, %v6288
  %v6305 = vadd.f32 %v5620, %v6289
  %v6306 = vadd.f32 %v5621, %v6290
  %v6307 = vadd.f32 %v5622, %v6291
  %v6308 = vadd.f32 %v5623, %v6292
  %v6309 = vadd.f32 %v5624, %v6293
  %v6310 = vld [vmem:[%s2525] sm:$0xf]
  %v6311 = vld [vmem:[%s2525 + $0x4] sm:$0xf]
  %v6312 = vld [vmem:[%s2525 + $0x8] sm:$0xf]
  %v6313 = vld [vmem:[%s2525 + $0xc] sm:$0xf]
  %v6314 = vld [vmem:[%s2525 + $0x10] sm:$0xf]
  %v6315 = vld [vmem:[%s2525 + $0x14] sm:$0xf]
  %v6316 = vld [vmem:[%s2525 + $0x18] sm:$0xf]
  %v6317 = vld [vmem:[%s2525 + $0x1c] sm:$0xf]
  %v6318 = vld [vmem:[%s2525 + $0x20] sm:$0xf]
  %v6319 = vld [vmem:[%s2525 + $0x24] sm:$0xf]
  %v6320 = vld [vmem:[%s2525 + $0x28] sm:$0xf]
  %v6321 = vld [vmem:[%s2525 + $0x2c] sm:$0xf]
  %v6322 = vld [vmem:[%s2525 + $0x30] sm:$0xf]
  %v6323 = vld [vmem:[%s2525 + $0x34] sm:$0xf]
  %v6324 = vld [vmem:[%s2525 + $0x38] sm:$0xf]
  %v6325 = vld [vmem:[%s2525 + $0x3c] sm:$0xf]
  %v6326 = vpack.c.b16 %v5201, %v5200
  %v6327 = vpack.c.b16 %v4987, %v4986
  %v6328 = vpack.c.b16 %v4989, %v4988
  %v6329 = vpack.c.b16 %v4991, %v4990
  %v6330 = vpack.c.b16 %v4993, %v4992
  %v6331 = vpack.c.b16 %v4995, %v4994
  %v6332 = vpack.c.b16 %v4997, %v4996
  %v6333 = vpack.c.b16 %v4999, %v4998
  %v6358 = vunpack.c.l.b16 %v6310
  %v6359 = vunpack.c.l.b16 %v6311
  %v6360 = vunpack.c.l.b16 %v6312
  %v6361 = vunpack.c.l.b16 %v6313
  %v6362 = vunpack.c.l.b16 %v6314
  %v6363 = vunpack.c.l.b16 %v6315
  %v6364 = vunpack.c.l.b16 %v6316
  %v6365 = vunpack.c.l.b16 %v6317
  %v6366 = vunpack.c.l.b16 %v6318
  %v6367 = vunpack.c.l.b16 %v6319
  %v6368 = vunpack.c.l.b16 %v6320
  %v6369 = vunpack.c.l.b16 %v6321
  %v6370 = vunpack.c.l.b16 %v6322
  %v6371 = vunpack.c.l.b16 %v6323
  %v6372 = vunpack.c.l.b16 %v6324
  %v6373 = vunpack.c.l.b16 %v6325
  %v6374 = vpack.c.b16 %v6359, %v6358
  %v6375 = vpack.c.b16 %v6361, %v6360
  %v6376 = vpack.c.b16 %v6363, %v6362
  %v6377 = vpack.c.b16 %v6365, %v6364
  %v6378 = vpack.c.b16 %v6367, %v6366
  %v6379 = vpack.c.b16 %v6369, %v6368
  %v6380 = vpack.c.b16 %v6371, %v6370
  %v6381 = vpack.c.b16 %v6373, %v6372
  %6390 = vmatpush.bf16.msra.mxu0 %v6381
  %6391 = vmatpush.bf16.msra.mxu0 %v6380
  %6392 = vmatpush.bf16.msra.mxu0 %v6379
  %6393 = vmatpush.bf16.msra.mxu0 %v6378
  %6394 = vmatpush.bf16.msra.mxu0 %v6377
  %6395 = vmatpush.bf16.msra.mxu0 %v6376
  %6396 = vmatpush.bf16.msra.mxu0 %v6375
  %6397 = vmatpush.bf16.msra.mxu0 %v6374
  %6398 = vmatmul.bf16.gmra.mxu0 %v6326
  %v6399 = vpop.f32.mrf.mxu0
  %v6400 = vadd.f32 0.0, %v6399
  %v6401 = vpop.f32.mrf.mxu0
  %v6402 = vadd.f32 0.0, %v6401
  %6403 = vmatmul.bf16.gmra.mxu0 %v6327
  %v6404 = vpop.f32.mrf.mxu0
  %v6405 = vadd.f32 0.0, %v6404
  %v6406 = vpop.f32.mrf.mxu0
  %v6407 = vadd.f32 0.0, %v6406
  %6408 = vmatmul.bf16.gmra.mxu0 %v6328
  %v6409 = vpop.f32.mrf.mxu0
  %v6410 = vadd.f32 0.0, %v6409
  %v6411 = vpop.f32.mrf.mxu0
  %v6412 = vadd.f32 0.0, %v6411
  %6413 = vmatmul.bf16.gmra.mxu0 %v6329
  %v6414 = vpop.f32.mrf.mxu0
  %v6415 = vadd.f32 0.0, %v6414
  %v6416 = vpop.f32.mrf.mxu0
  %v6417 = vadd.f32 0.0, %v6416
  %6418 = vmatmul.bf16.gmra.mxu0 %v6330
  %v6419 = vpop.f32.mrf.mxu0
  %v6420 = vadd.f32 0.0, %v6419
  %v6421 = vpop.f32.mrf.mxu0
  %v6422 = vadd.f32 0.0, %v6421
  %6423 = vmatmul.bf16.gmra.mxu0 %v6331
  %v6424 = vpop.f32.mrf.mxu0
  %v6425 = vadd.f32 0.0, %v6424
  %v6426 = vpop.f32.mrf.mxu0
  %v6427 = vadd.f32 0.0, %v6426
  %6428 = vmatmul.bf16.gmra.mxu0 %v6332
  %v6429 = vpop.f32.mrf.mxu0
  %v6430 = vadd.f32 0.0, %v6429
  %v6431 = vpop.f32.mrf.mxu0
  %v6432 = vadd.f32 0.0, %v6431
  %6433 = vmatmul.bf16.gmra.mxu0 %v6333
  %v6434 = vpop.f32.mrf.mxu0
  %v6435 = vadd.f32 0.0, %v6434
  %v6436 = vpop.f32.mrf.mxu0
  %v6437 = vadd.f32 0.0, %v6436
  %6438 = vdwg.mxu0
  %v6439 = vadd.f32 %v6294, %v6400
  %v6440 = vadd.f32 %v6295, %v6402
  %v6441 = vadd.f32 %v6296, %v6405
  %v6442 = vadd.f32 %v6297, %v6407
  %v6443 = vadd.f32 %v6298, %v6410
  %v6444 = vadd.f32 %v6299, %v6412
  %v6445 = vadd.f32 %v6300, %v6415
  %v6446 = vadd.f32 %v6301, %v6417
  %v6447 = vadd.f32 %v6302, %v6420
  %v6448 = vadd.f32 %v6303, %v6422
  %v6449 = vadd.f32 %v6304, %v6425
  %v6450 = vadd.f32 %v6305, %v6427
  %v6451 = vadd.f32 %v6306, %v6430
  %v6452 = vadd.f32 %v6307, %v6432
  %v6453 = vadd.f32 %v6308, %v6435
  %v6454 = vadd.f32 %v6309, %v6437
  %v6455 = vld [vmem:[%s2671] sm:$0xf]
  %v6456 = vld [vmem:[%s2671 + $0x4] sm:$0xf]
  %v6457 = vld [vmem:[%s2671 + $0x8] sm:$0xf]
  %v6458 = vld [vmem:[%s2671 + $0xc] sm:$0xf]
  %v6459 = vld [vmem:[%s2671 + $0x10] sm:$0xf]
  %v6460 = vld [vmem:[%s2671 + $0x14] sm:$0xf]
  %v6461 = vld [vmem:[%s2671 + $0x18] sm:$0xf]
  %v6462 = vld [vmem:[%s2671 + $0x1c] sm:$0xf]
  %v6463 = vld [vmem:[%s2671 + $0x20] sm:$0xf]
  %v6464 = vld [vmem:[%s2671 + $0x24] sm:$0xf]
  %v6465 = vld [vmem:[%s2671 + $0x28] sm:$0xf]
  %v6466 = vld [vmem:[%s2671 + $0x2c] sm:$0xf]
  %v6467 = vld [vmem:[%s2671 + $0x30] sm:$0xf]
  %v6468 = vld [vmem:[%s2671 + $0x34] sm:$0xf]
  %v6469 = vld [vmem:[%s2671 + $0x38] sm:$0xf]
  %v6470 = vld [vmem:[%s2671 + $0x3c] sm:$0xf]
  %v6471 = vpack.c.b16 %v5001, %v5000
  %v6489 = vunpack.c.l.b16 %v6455
  %v6490 = vunpack.c.l.b16 %v6456
  %v6491 = vunpack.c.l.b16 %v6457
  %v6492 = vunpack.c.l.b16 %v6458
  %v6493 = vunpack.c.l.b16 %v6459
  %v6494 = vunpack.c.l.b16 %v6460
  %v6495 = vunpack.c.l.b16 %v6461
  %v6496 = vunpack.c.l.b16 %v6462
  %v6497 = vunpack.c.l.b16 %v6463
  %v6498 = vunpack.c.l.b16 %v6464
  %v6499 = vunpack.c.l.b16 %v6465
  %v6500 = vunpack.c.l.b16 %v6466
  %v6501 = vunpack.c.l.b16 %v6467
  %v6502 = vunpack.c.l.b16 %v6468
  %v6503 = vunpack.c.l.b16 %v6469
  %v6504 = vunpack.c.l.b16 %v6470
  %v6505 = vpack.c.b16 %v6490, %v6489
  %v6506 = vpack.c.b16 %v6492, %v6491
  %v6507 = vpack.c.b16 %v6494, %v6493
  %v6508 = vpack.c.b16 %v6496, %v6495
  %v6509 = vpack.c.b16 %v6498, %v6497
  %v6510 = vpack.c.b16 %v6500, %v6499
  %v6511 = vpack.c.b16 %v6502, %v6501
  %v6512 = vpack.c.b16 %v6504, %v6503
  %6521 = vmatpush.bf16.msra.mxu0 %v6512
  %6522 = vmatpush.bf16.msra.mxu0 %v6511
  %6523 = vmatpush.bf16.msra.mxu0 %v6510
  %6524 = vmatpush.bf16.msra.mxu0 %v6509
  %6525 = vmatpush.bf16.msra.mxu0 %v6508
  %6526 = vmatpush.bf16.msra.mxu0 %v6507
  %6527 = vmatpush.bf16.msra.mxu0 %v6506
  %6528 = vmatpush.bf16.msra.mxu0 %v6505
  %6529 = vmatmul.bf16.gmra.mxu0 %v6327
  %v6530 = vpop.f32.mrf.mxu0
  %v6531 = vadd.f32 0.0, %v6530
  %v6532 = vpop.f32.mrf.mxu0
  %v6533 = vadd.f32 0.0, %v6532
  %6534 = vmatmul.bf16.gmra.mxu0 %v6328
  %v6535 = vpop.f32.mrf.mxu0
  %v6536 = vadd.f32 0.0, %v6535
  %v6537 = vpop.f32.mrf.mxu0
  %v6538 = vadd.f32 0.0, %v6537
  %6539 = vmatmul.bf16.gmra.mxu0 %v6329
  %v6540 = vpop.f32.mrf.mxu0
  %v6541 = vadd.f32 0.0, %v6540
  %v6542 = vpop.f32.mrf.mxu0
  %v6543 = vadd.f32 0.0, %v6542
  %6544 = vmatmul.bf16.gmra.mxu0 %v6330
  %v6545 = vpop.f32.mrf.mxu0
  %v6546 = vadd.f32 0.0, %v6545
  %v6547 = vpop.f32.mrf.mxu0
  %v6548 = vadd.f32 0.0, %v6547
  %6549 = vmatmul.bf16.gmra.mxu0 %v6331
  %v6550 = vpop.f32.mrf.mxu0
  %v6551 = vadd.f32 0.0, %v6550
  %v6552 = vpop.f32.mrf.mxu0
  %v6553 = vadd.f32 0.0, %v6552
  %6554 = vmatmul.bf16.gmra.mxu0 %v6332
  %v6555 = vpop.f32.mrf.mxu0
  %v6556 = vadd.f32 0.0, %v6555
  %v6557 = vpop.f32.mrf.mxu0
  %v6558 = vadd.f32 0.0, %v6557
  %6559 = vmatmul.bf16.gmra.mxu0 %v6333
  %v6560 = vpop.f32.mrf.mxu0
  %v6561 = vadd.f32 0.0, %v6560
  %v6562 = vpop.f32.mrf.mxu0
  %v6563 = vadd.f32 0.0, %v6562
  %6564 = vmatmul.bf16.gmra.mxu0 %v6471
  %v6565 = vpop.f32.mrf.mxu0
  %v6566 = vadd.f32 0.0, %v6565
  %v6567 = vpop.f32.mrf.mxu0
  %v6568 = vadd.f32 0.0, %v6567
  %6569 = vdwg.mxu0
  %v6570 = vadd.f32 %v6439, %v6531
  %v6571 = vadd.f32 %v6440, %v6533
  %v6572 = vadd.f32 %v6441, %v6536
  %v6573 = vadd.f32 %v6442, %v6538
  %v6574 = vadd.f32 %v6443, %v6541
  %v6575 = vadd.f32 %v6444, %v6543
  %v6576 = vadd.f32 %v6445, %v6546
  %v6577 = vadd.f32 %v6446, %v6548
  %v6578 = vadd.f32 %v6447, %v6551
  %v6579 = vadd.f32 %v6448, %v6553
  %v6580 = vadd.f32 %v6449, %v6556
  %v6581 = vadd.f32 %v6450, %v6558
  %v6582 = vadd.f32 %v6451, %v6561
  %v6583 = vadd.f32 %v6452, %v6563
  %v6584 = vadd.f32 %v6453, %v6566
  %v6585 = vadd.f32 %v6454, %v6568
  %v6586 = vld [vmem:[%s2803] sm:$0xf]
  %v6587 = vld [vmem:[%s2803 + $0x4] sm:$0xf]
  %v6588 = vld [vmem:[%s2803 + $0x8] sm:$0xf]
  %v6589 = vld [vmem:[%s2803 + $0xc] sm:$0xf]
  %v6590 = vld [vmem:[%s2803 + $0x10] sm:$0xf]
  %v6591 = vld [vmem:[%s2803 + $0x14] sm:$0xf]
  %v6592 = vld [vmem:[%s2803 + $0x18] sm:$0xf]
  %v6593 = vld [vmem:[%s2803 + $0x1c] sm:$0xf]
  %v6594 = vld [vmem:[%s2803 + $0x20] sm:$0xf]
  %v6595 = vld [vmem:[%s2803 + $0x24] sm:$0xf]
  %v6596 = vld [vmem:[%s2803 + $0x28] sm:$0xf]
  %v6597 = vld [vmem:[%s2803 + $0x2c] sm:$0xf]
  %v6598 = vld [vmem:[%s2803 + $0x30] sm:$0xf]
  %v6599 = vld [vmem:[%s2803 + $0x34] sm:$0xf]
  %v6600 = vld [vmem:[%s2803 + $0x38] sm:$0xf]
  %v6601 = vld [vmem:[%s2803 + $0x3c] sm:$0xf]
  %v6602 = vpack.c.b16 %v5384, %v5383
  %v6603 = vpack.c.b16 %v5386, %v5385
  %v6604 = vpack.c.b16 %v5388, %v5387
  %v6605 = vpack.c.b16 %v5390, %v5389
  %v6606 = vpack.c.b16 %v5392, %v5391
  %v6607 = vpack.c.b16 %v5394, %v5393
  %v6608 = vpack.c.b16 %v5396, %v5395
  %v6609 = vpack.c.b16 %v5398, %v5397
  %v6634 = vunpack.c.l.b16 %v6586
  %v6635 = vunpack.c.l.b16 %v6587
  %v6636 = vunpack.c.l.b16 %v6588
  %v6637 = vunpack.c.l.b16 %v6589
  %v6638 = vunpack.c.l.b16 %v6590
  %v6639 = vunpack.c.l.b16 %v6591
  %v6640 = vunpack.c.l.b16 %v6592
  %v6641 = vunpack.c.l.b16 %v6593
  %v6642 = vunpack.c.l.b16 %v6594
  %v6643 = vunpack.c.l.b16 %v6595
  %v6644 = vunpack.c.l.b16 %v6596
  %v6645 = vunpack.c.l.b16 %v6597
  %v6646 = vunpack.c.l.b16 %v6598
  %v6647 = vunpack.c.l.b16 %v6599
  %v6648 = vunpack.c.l.b16 %v6600
  %v6649 = vunpack.c.l.b16 %v6601
  %v6650 = vpack.c.b16 %v6635, %v6634
  %v6651 = vpack.c.b16 %v6637, %v6636
  %v6652 = vpack.c.b16 %v6639, %v6638
  %v6653 = vpack.c.b16 %v6641, %v6640
  %v6654 = vpack.c.b16 %v6643, %v6642
  %v6655 = vpack.c.b16 %v6645, %v6644
  %v6656 = vpack.c.b16 %v6647, %v6646
  %v6657 = vpack.c.b16 %v6649, %v6648
  %6666 = vmatpush.bf16.msra.mxu0 %v6657
  %6667 = vmatpush.bf16.msra.mxu0 %v6656
  %6668 = vmatpush.bf16.msra.mxu0 %v6655
  %6669 = vmatpush.bf16.msra.mxu0 %v6654
  %6670 = vmatpush.bf16.msra.mxu0 %v6653
  %6671 = vmatpush.bf16.msra.mxu0 %v6652
  %6672 = vmatpush.bf16.msra.mxu0 %v6651
  %6673 = vmatpush.bf16.msra.mxu0 %v6650
  %6674 = vmatmul.bf16.gmra.mxu0 %v6602
  %v6675 = vpop.f32.mrf.mxu0
  %v6676 = vadd.f32 0.0, %v6675
  %v6677 = vpop.f32.mrf.mxu0
  %v6678 = vadd.f32 0.0, %v6677
  %6679 = vmatmul.bf16.gmra.mxu0 %v6603
  %v6680 = vpop.f32.mrf.mxu0
  %v6681 = vadd.f32 0.0, %v6680
  %v6682 = vpop.f32.mrf.mxu0
  %v6683 = vadd.f32 0.0, %v6682
  %6684 = vmatmul.bf16.gmra.mxu0 %v6604
  %v6685 = vpop.f32.mrf.mxu0
  %v6686 = vadd.f32 0.0, %v6685
  %v6687 = vpop.f32.mrf.mxu0
  %v6688 = vadd.f32 0.0, %v6687
  %6689 = vmatmul.bf16.gmra.mxu0 %v6605
  %v6690 = vpop.f32.mrf.mxu0
  %v6691 = vadd.f32 0.0, %v6690
  %v6692 = vpop.f32.mrf.mxu0
  %v6693 = vadd.f32 0.0, %v6692
  %6694 = vmatmul.bf16.gmra.mxu0 %v6606
  %v6695 = vpop.f32.mrf.mxu0
  %v6696 = vadd.f32 0.0, %v6695
  %v6697 = vpop.f32.mrf.mxu0
  %v6698 = vadd.f32 0.0, %v6697
  %6699 = vmatmul.bf16.gmra.mxu0 %v6607
  %v6700 = vpop.f32.mrf.mxu0
  %v6701 = vadd.f32 0.0, %v6700
  %v6702 = vpop.f32.mrf.mxu0
  %v6703 = vadd.f32 0.0, %v6702
  %6704 = vmatmul.bf16.gmra.mxu0 %v6608
  %v6705 = vpop.f32.mrf.mxu0
  %v6706 = vadd.f32 0.0, %v6705
  %v6707 = vpop.f32.mrf.mxu0
  %v6708 = vadd.f32 0.0, %v6707
  %6709 = vmatmul.bf16.gmra.mxu0 %v6609
  %v6710 = vpop.f32.mrf.mxu0
  %v6711 = vadd.f32 0.0, %v6710
  %v6712 = vpop.f32.mrf.mxu0
  %v6713 = vadd.f32 0.0, %v6712
  %6714 = vdwg.mxu0
  %v6715 = vadd.f32 %v6570, %v6676
  %v6716 = vadd.f32 %v6571, %v6678
  %v6717 = vadd.f32 %v6572, %v6681
  %v6718 = vadd.f32 %v6573, %v6683
  %v6719 = vadd.f32 %v6574, %v6686
  %v6720 = vadd.f32 %v6575, %v6688
  %v6721 = vadd.f32 %v6576, %v6691
  %v6722 = vadd.f32 %v6577, %v6693
  %v6723 = vadd.f32 %v6578, %v6696
  %v6724 = vadd.f32 %v6579, %v6698
  %v6725 = vadd.f32 %v6580, %v6701
  %v6726 = vadd.f32 %v6581, %v6703
  %v6727 = vadd.f32 %v6582, %v6706
  %v6728 = vadd.f32 %v6583, %v6708
  %v6729 = vadd.f32 %v6584, %v6711
  %v6730 = vadd.f32 %v6585, %v6713
  %v6731 = vadd.f32 %v6715, %v6716
  %v6732 = vadd.f32 %v6731, %v6717
  %v6733 = vadd.f32 %v6732, %v6718
  %v6734 = vadd.f32 %v6733, %v6719
  %v6735 = vadd.f32 %v6734, %v6720
  %v6736 = vadd.f32 %v6735, %v6721
  %v6737 = vadd.f32 %v6736, %v6722
  %v6738 = vadd.f32 %v6737, %v6723
  %v6739 = vadd.f32 %v6738, %v6724
  %v6740 = vadd.f32 %v6739, %v6725
  %v6741 = vadd.f32 %v6740, %v6726
  %v6742 = vadd.f32 %v6741, %v6727
  %v6743 = vadd.f32 %v6742, %v6728
  %v6744 = vadd.f32 %v6743, %v6729
  %v6745 = vadd.f32 %v6744, %v6730
  %v6746 = vrot.slane %v6745, 4
  %v6747 = vadd.f32 %v6745, %v6746
  %v6748 = vrot.slane %v6747, 2
  %v6749 = vadd.f32 %v6747, %v6748
  %v6750 = vrot.slane %v6749, 1
  %v6751 = vadd.f32 %v6749, %v6750
  %v6752 = vadd.f32 %v4861, %v6751
  %v6753 = vmul.f32 %v6715, %v6715
  %v6754 = vmul.f32 %v6716, %v6716
  %v6755 = vmul.f32 %v6717, %v6717
  %v6756 = vmul.f32 %v6718, %v6718
  %v6757 = vmul.f32 %v6719, %v6719
  %v6758 = vmul.f32 %v6720, %v6720
  %v6759 = vmul.f32 %v6721, %v6721
  %v6760 = vmul.f32 %v6722, %v6722
  %v6761 = vmul.f32 %v6723, %v6723
  %v6762 = vmul.f32 %v6724, %v6724
  %v6763 = vmul.f32 %v6725, %v6725
  %v6764 = vmul.f32 %v6726, %v6726
  %v6765 = vmul.f32 %v6727, %v6727
  %v6766 = vmul.f32 %v6728, %v6728
  %v6767 = vmul.f32 %v6729, %v6729
  %v6768 = vmul.f32 %v6730, %v6730
  %v6769 = vadd.f32 %v6753, %v6754
  %v6770 = vadd.f32 %v6769, %v6755
  %v6771 = vadd.f32 %v6770, %v6756
  %v6772 = vadd.f32 %v6771, %v6757
  %v6773 = vadd.f32 %v6772, %v6758
  %v6774 = vadd.f32 %v6773, %v6759
  %v6775 = vadd.f32 %v6774, %v6760
  %v6776 = vadd.f32 %v6775, %v6761
  %v6777 = vadd.f32 %v6776, %v6762
  %v6778 = vadd.f32 %v6777, %v6763
  %v6779 = vadd.f32 %v6778, %v6764
  %v6780 = vadd.f32 %v6779, %v6765
  %v6781 = vadd.f32 %v6780, %v6766
  %v6782 = vadd.f32 %v6781, %v6767
  %v6783 = vadd.f32 %v6782, %v6768
  %v6784 = vrot.slane %v6783, 4
  %v6785 = vadd.f32 %v6783, %v6784
  %v6786 = vrot.slane %v6785, 2
  %v6787 = vadd.f32 %v6785, %v6786
  %v6788 = vrot.slane %v6787, 1
  %v6789 = vadd.f32 %v6787, %v6788
  %v6790 = vadd.f32 %v4899, %v6789
  %6791 = vst [vmem:[#allocation3 + $0x100] sm:$0xff] %v6715
  %6792 = vst [vmem:[#allocation3 + $0x108] sm:$0xff] %v6716
  %6793 = vst [vmem:[#allocation3 + $0x110] sm:$0xff] %v6717
  %6794 = vst [vmem:[#allocation3 + $0x118] sm:$0xff] %v6718
  %6795 = vst [vmem:[#allocation3 + $0x120] sm:$0xff] %v6719
  %6796 = vst [vmem:[#allocation3 + $0x128] sm:$0xff] %v6720
  %6797 = vst [vmem:[#allocation3 + $0x130] sm:$0xff] %v6721
  %6798 = vst [vmem:[#allocation3 + $0x138] sm:$0xff] %v6722
  %6799 = vst [vmem:[#allocation3 + $0x140] sm:$0xff] %v6723
  %6800 = vst [vmem:[#allocation3 + $0x148] sm:$0xff] %v6724
  %6801 = vst [vmem:[#allocation3 + $0x150] sm:$0xff] %v6725
  %6802 = vst [vmem:[#allocation3 + $0x158] sm:$0xff] %v6726
  %6803 = vst [vmem:[#allocation3 + $0x160] sm:$0xff] %v6727
  %6804 = vst [vmem:[#allocation3 + $0x168] sm:$0xff] %v6728
  %6805 = vst [vmem:[#allocation3 + $0x170] sm:$0xff] %v6729
  %6806 = vst [vmem:[#allocation3 + $0x178] sm:$0xff] %v6730
  %v6807 = vld [vmem:[#allocation2 + $0xd4] sm:$0x8]
  %v6808 = vld [vmem:[#allocation2 + $0xd8] sm:$0xf]
  %v6809 = vld [vmem:[#allocation2 + $0xdc] sm:$0xf]
  %v6810 = vld [vmem:[#allocation2 + $0xe0] sm:$0xf]
  %v6811 = vld [vmem:[#allocation2 + $0xe4] sm:$0xf]
  %v6812 = vld [vmem:[#allocation2 + $0xe8] sm:$0xf]
  %v6813 = vld [vmem:[#allocation2 + $0xec] sm:$0xf]
  %v6814 = vld [vmem:[#allocation2 + $0xf0] sm:$0xf]
  %v6815 = vld [vmem:[#allocation2 + $0xf4] sm:$0xf]
  %v6816 = vld [vmem:[#allocation2 + $0xf8] sm:$0xf]
  %v6817 = vld [vmem:[#allocation2 + $0xfc] sm:$0xf]
  %v6818 = vld [vmem:[#allocation2 + $0x100] sm:$0xf]
  %v6819 = vld [vmem:[#allocation2 + $0x104] sm:$0xf]
  %v6820 = vld [vmem:[#allocation2 + $0x108] sm:$0xf]
  %v6821 = vld [vmem:[#allocation2 + $0x10c] sm:$0xf]
  %v6822 = vld [vmem:[#allocation2 + $0x110] sm:$0xf]
  %v6823 = vld [vmem:[#allocation2 + $0x114] sm:$0xf]
  %v6824 = vld [vmem:[%s2] sm:$0xf]
  %v6825 = vld [vmem:[%s2 + $0x4] sm:$0xf]
  %v6826 = vld [vmem:[%s2 + $0x8] sm:$0xf]
  %v6827 = vld [vmem:[%s2 + $0xc] sm:$0xf]
  %v6828 = vld [vmem:[%s2 + $0x10] sm:$0xf]
  %v6829 = vld [vmem:[%s2 + $0x14] sm:$0xf]
  %v6830 = vld [vmem:[%s2 + $0x18] sm:$0xf]
  %v6831 = vld [vmem:[%s2 + $0x1c] sm:$0xf]
  %v6832 = vld [vmem:[%s2 + $0x20] sm:$0xf]
  %v6833 = vld [vmem:[%s2 + $0x24] sm:$0xf]
  %v6834 = vld [vmem:[%s2 + $0x28] sm:$0xf]
  %v6835 = vld [vmem:[%s2 + $0x2c] sm:$0xf]
  %v6836 = vld [vmem:[%s2 + $0x30] sm:$0xf]
  %v6837 = vld [vmem:[%s2 + $0x34] sm:$0xf]
  %v6838 = vld [vmem:[%s2 + $0x38] sm:$0xf]
  %v6839 = vld [vmem:[%s2 + $0x3c] sm:$0xf]
  %v6840 = vld [vmem:[#allocation2 + $0xdc] sm:$0x8]
  %v6841 = vld [vmem:[#allocation2 + $0x118] sm:$0xf]
  %v6842 = vld [vmem:[#allocation2 + $0x11c] sm:$0xf]
  %v6843 = vld [vmem:[%s1000] sm:$0xf]
  %v6844 = vld [vmem:[%s1000 + $0x4] sm:$0xf]
  %v6845 = vld [vmem:[%s1000 + $0x8] sm:$0xf]
  %v6846 = vld [vmem:[%s1000 + $0xc] sm:$0xf]
  %v6847 = vld [vmem:[%s1000 + $0x10] sm:$0xf]
  %v6848 = vld [vmem:[%s1000 + $0x14] sm:$0xf]
  %v6849 = vld [vmem:[%s1000 + $0x18] sm:$0xf]
  %v6850 = vld [vmem:[%s1000 + $0x1c] sm:$0xf]
  %v6851 = vld [vmem:[%s1000 + $0x20] sm:$0xf]
  %v6852 = vld [vmem:[%s1000 + $0x24] sm:$0xf]
  %v6853 = vld [vmem:[%s1000 + $0x28] sm:$0xf]
  %v6854 = vld [vmem:[%s1000 + $0x2c] sm:$0xf]
  %v6855 = vld [vmem:[%s1000 + $0x30] sm:$0xf]
  %v6856 = vld [vmem:[%s1000 + $0x34] sm:$0xf]
  %v6857 = vld [vmem:[%s1000 + $0x38] sm:$0xf]
  %v6858 = vld [vmem:[%s1000 + $0x3c] sm:$0xf]
  %v6876 = vunpack.c.l.b16 %v6840
  %v6877 = vunpack.c.l.b16 %v6810
  %v6878 = vunpack.c.l.b16 %v6811
  %v6879 = vunpack.c.l.b16 %v6812
  %v6880 = vunpack.c.l.b16 %v6813
  %v6881 = vunpack.c.l.b16 %v6814
  %v6882 = vunpack.c.l.b16 %v6815
  %v6883 = vunpack.c.l.b16 %v6816
  %v6884 = vunpack.c.l.b16 %v6817
  %v6885 = vunpack.c.l.b16 %v6818
  %v6886 = vunpack.c.l.b16 %v6819
  %v6887 = vunpack.c.l.b16 %v6820
  %v6888 = vunpack.c.l.b16 %v6821
  %v6889 = vunpack.c.l.b16 %v6822
  %v6890 = vunpack.c.l.b16 %v6823
  %v6891 = vunpack.c.l.b16 %v6841
  %v6892 = vunpack.c.l.b16 %v6842
  %v6893 = vpack.c.b16 %v6877, %v6876
  %v6894 = vpack.c.b16 %v6879, %v6878
  %v6895 = vpack.c.b16 %v6881, %v6880
  %v6896 = vpack.c.b16 %v6883, %v6882
  %v6897 = vpack.c.b16 %v6885, %v6884
  %v6898 = vpack.c.b16 %v6887, %v6886
  %v6899 = vpack.c.b16 %v6889, %v6888
  %v6900 = vpack.c.b16 %v6891, %v6890
  %v6901 = vpack.c.b16 %v6892, %v6892
  %v6903 = vshrl.u32 %v6893, 16
  %v6905 = vrot.slane %v6903, 3
  %v6906 = vshll.u32 %v6893, 16
  %v6908 = vrot.slane %v6906, 4
  %v6909 = vor.u32 %v6905, %v6908
  %v6911 = vshrl.u32 %v6894, 16
  %v6913 = vrot.slane %v6911, 3
  %v6914 = vshll.u32 %v6894, 16
  %v6916 = vrot.slane %v6914, 4
  %v6917 = vor.u32 %v6913, %v6916
  %v6918 = vsel %vm1060, %v6909, %v6917
  %v6920 = vshrl.u32 %v6895, 16
  %v6922 = vrot.slane %v6920, 3
  %v6923 = vshll.u32 %v6895, 16
  %v6925 = vrot.slane %v6923, 4
  %v6926 = vor.u32 %v6922, %v6925
  %v6927 = vsel %vm1060, %v6917, %v6926
  %v6929 = vshrl.u32 %v6896, 16
  %v6931 = vrot.slane %v6929, 3
  %v6932 = vshll.u32 %v6896, 16
  %v6934 = vrot.slane %v6932, 4
  %v6935 = vor.u32 %v6931, %v6934
  %v6936 = vsel %vm1060, %v6926, %v6935
  %v6938 = vshrl.u32 %v6897, 16
  %v6940 = vrot.slane %v6938, 3
  %v6941 = vshll.u32 %v6897, 16
  %v6943 = vrot.slane %v6941, 4
  %v6944 = vor.u32 %v6940, %v6943
  %v6945 = vsel %vm1060, %v6935, %v6944
  %v6947 = vshrl.u32 %v6898, 16
  %v6949 = vrot.slane %v6947, 3
  %v6950 = vshll.u32 %v6898, 16
  %v6952 = vrot.slane %v6950, 4
  %v6953 = vor.u32 %v6949, %v6952
  %v6954 = vsel %vm1060, %v6944, %v6953
  %v6956 = vshrl.u32 %v6899, 16
  %v6958 = vrot.slane %v6956, 3
  %v6959 = vshll.u32 %v6899, 16
  %v6961 = vrot.slane %v6959, 4
  %v6962 = vor.u32 %v6958, %v6961
  %v6963 = vsel %vm1060, %v6953, %v6962
  %v6965 = vshrl.u32 %v6900, 16
  %v6967 = vrot.slane %v6965, 3
  %v6968 = vshll.u32 %v6900, 16
  %v6970 = vrot.slane %v6968, 4
  %v6971 = vor.u32 %v6967, %v6970
  %v6972 = vsel %vm1060, %v6962, %v6971
  %v6974 = vshrl.u32 %v6901, 16
  %v6976 = vrot.slane %v6974, 3
  %v6977 = vshll.u32 %v6901, 16
  %v6979 = vrot.slane %v6977, 4
  %v6980 = vor.u32 %v6976, %v6979
  %v6981 = vsel %vm1060, %v6971, %v6980
  %v7006 = vunpack.c.l.b16 %v6843
  %v7007 = vunpack.c.l.b16 %v6844
  %v7008 = vunpack.c.l.b16 %v6845
  %v7009 = vunpack.c.l.b16 %v6846
  %v7010 = vunpack.c.l.b16 %v6847
  %v7011 = vunpack.c.l.b16 %v6848
  %v7012 = vunpack.c.l.b16 %v6849
  %v7013 = vunpack.c.l.b16 %v6850
  %v7014 = vunpack.c.l.b16 %v6851
  %v7015 = vunpack.c.l.b16 %v6852
  %v7016 = vunpack.c.l.b16 %v6853
  %v7017 = vunpack.c.l.b16 %v6854
  %v7018 = vunpack.c.l.b16 %v6855
  %v7019 = vunpack.c.l.b16 %v6856
  %v7020 = vunpack.c.l.b16 %v6857
  %v7021 = vunpack.c.l.b16 %v6858
  %v7022 = vpack.c.b16 %v7007, %v7006
  %v7023 = vpack.c.b16 %v7009, %v7008
  %v7024 = vpack.c.b16 %v7011, %v7010
  %v7025 = vpack.c.b16 %v7013, %v7012
  %v7026 = vpack.c.b16 %v7015, %v7014
  %v7027 = vpack.c.b16 %v7017, %v7016
  %v7028 = vpack.c.b16 %v7019, %v7018
  %v7029 = vpack.c.b16 %v7021, %v7020
  %7038 = vmatpush.bf16.msra.mxu0 %v7029
  %7039 = vmatpush.bf16.msra.mxu0 %v7028
  %7040 = vmatpush.bf16.msra.mxu0 %v7027
  %7041 = vmatpush.bf16.msra.mxu0 %v7026
  %7042 = vmatpush.bf16.msra.mxu0 %v7025
  %7043 = vmatpush.bf16.msra.mxu0 %v7024
  %7044 = vmatpush.bf16.msra.mxu0 %v7023
  %7045 = vmatpush.bf16.msra.mxu0 %v7022
  %7046 = vmatmul.bf16.gmra.mxu0 %v6918
  %v7047 = vpop.f32.mrf.mxu0
  %v7048 = vadd.f32 0.0, %v7047
  %v7049 = vpop.f32.mrf.mxu0
  %v7050 = vadd.f32 0.0, %v7049
  %7051 = vmatmul.bf16.gmra.mxu0 %v6927
  %v7052 = vpop.f32.mrf.mxu0
  %v7053 = vadd.f32 0.0, %v7052
  %v7054 = vpop.f32.mrf.mxu0
  %v7055 = vadd.f32 0.0, %v7054
  %7056 = vmatmul.bf16.gmra.mxu0 %v6936
  %v7057 = vpop.f32.mrf.mxu0
  %v7058 = vadd.f32 0.0, %v7057
  %v7059 = vpop.f32.mrf.mxu0
  %v7060 = vadd.f32 0.0, %v7059
  %7061 = vmatmul.bf16.gmra.mxu0 %v6945
  %v7062 = vpop.f32.mrf.mxu0
  %v7063 = vadd.f32 0.0, %v7062
  %v7064 = vpop.f32.mrf.mxu0
  %v7065 = vadd.f32 0.0, %v7064
  %7066 = vmatmul.bf16.gmra.mxu0 %v6954
  %v7067 = vpop.f32.mrf.mxu0
  %v7068 = vadd.f32 0.0, %v7067
  %v7069 = vpop.f32.mrf.mxu0
  %v7070 = vadd.f32 0.0, %v7069
  %7071 = vmatmul.bf16.gmra.mxu0 %v6963
  %v7072 = vpop.f32.mrf.mxu0
  %v7073 = vadd.f32 0.0, %v7072
  %v7074 = vpop.f32.mrf.mxu0
  %v7075 = vadd.f32 0.0, %v7074
  %7076 = vmatmul.bf16.gmra.mxu0 %v6972
  %v7077 = vpop.f32.mrf.mxu0
  %v7078 = vadd.f32 0.0, %v7077
  %v7079 = vpop.f32.mrf.mxu0
  %v7080 = vadd.f32 0.0, %v7079
  %7081 = vmatmul.bf16.gmra.mxu0 %v6981
  %v7082 = vpop.f32.mrf.mxu0
  %v7083 = vadd.f32 0.0, %v7082
  %v7084 = vpop.f32.mrf.mxu0
  %v7085 = vadd.f32 0.0, %v7084
  %7086 = vdwg.mxu0
  %v7090 = vunpack.c.l.b16 %v6807
  %v7091 = vunpack.c.l.b16 %v6808
  %v7092 = vunpack.c.l.b16 %v6809
  %v7093 = vpack.c.b16 %v7091, %v7090
  %v7094 = vpack.c.b16 %v6877, %v7092
  %v7095 = vpack.c.b16 %v6890, %v6890
  %v7097 = vshrl.u32 %v7093, 16
  %v7099 = vrot.slane %v7097, 3
  %v7100 = vshll.u32 %v7093, 16
  %v7102 = vrot.slane %v7100, 4
  %v7103 = vor.u32 %v7099, %v7102
  %v7105 = vshrl.u32 %v7094, 16
  %v7107 = vrot.slane %v7105, 3
  %v7108 = vshll.u32 %v7094, 16
  %v7110 = vrot.slane %v7108, 4
  %v7111 = vor.u32 %v7107, %v7110
  %v7112 = vsel %vm1060, %v7103, %v7111
  %v7113 = vsel %vm1060, %v7111, %v6917
  %v7115 = vshrl.u32 %v7095, 16
  %v7117 = vrot.slane %v7115, 3
  %v7118 = vshll.u32 %v7095, 16
  %v7120 = vrot.slane %v7118, 4
  %v7121 = vor.u32 %v7117, %v7120
  %v7122 = vsel %vm1060, %v6962, %v7121
  %v7142 = vunpack.c.l.b16 %v6824
  %v7143 = vunpack.c.l.b16 %v6825
  %v7144 = vunpack.c.l.b16 %v6826
  %v7145 = vunpack.c.l.b16 %v6827
  %v7146 = vunpack.c.l.b16 %v6828
  %v7147 = vunpack.c.l.b16 %v6829
  %v7148 = vunpack.c.l.b16 %v6830
  %v7149 = vunpack.c.l.b16 %v6831
  %v7150 = vunpack.c.l.b16 %v6832
  %v7151 = vunpack.c.l.b16 %v6833
  %v7152 = vunpack.c.l.b16 %v6834
  %v7153 = vunpack.c.l.b16 %v6835
  %v7154 = vunpack.c.l.b16 %v6836
  %v7155 = vunpack.c.l.b16 %v6837
  %v7156 = vunpack.c.l.b16 %v6838
  %v7157 = vunpack.c.l.b16 %v6839
  %v7158 = vpack.c.b16 %v7143, %v7142
  %v7159 = vpack.c.b16 %v7145, %v7144
  %v7160 = vpack.c.b16 %v7147, %v7146
  %v7161 = vpack.c.b16 %v7149, %v7148
  %v7162 = vpack.c.b16 %v7151, %v7150
  %v7163 = vpack.c.b16 %v7153, %v7152
  %v7164 = vpack.c.b16 %v7155, %v7154
  %v7165 = vpack.c.b16 %v7157, %v7156
  %7174 = vmatpush.bf16.msra.mxu0 %v7165
  %7175 = vmatpush.bf16.msra.mxu0 %v7164
  %7176 = vmatpush.bf16.msra.mxu0 %v7163
  %7177 = vmatpush.bf16.msra.mxu0 %v7162
  %7178 = vmatpush.bf16.msra.mxu0 %v7161
  %7179 = vmatpush.bf16.msra.mxu0 %v7160
  %7180 = vmatpush.bf16.msra.mxu0 %v7159
  %7181 = vmatpush.bf16.msra.mxu0 %v7158
  %7182 = vmatmul.bf16.gmra.mxu0 %v7112
  %v7183 = vpop.f32.mrf.mxu0
  %v7184 = vadd.f32 %v7048, %v7183
  %v7185 = vpop.f32.mrf.mxu0
  %v7186 = vadd.f32 %v7050, %v7185
  %7187 = vmatmul.bf16.gmra.mxu0 %v7113
  %v7188 = vpop.f32.mrf.mxu0
  %v7189 = vadd.f32 %v7053, %v7188
  %v7190 = vpop.f32.mrf.mxu0
  %v7191 = vadd.f32 %v7055, %v7190
  %7192 = vmatmul.bf16.gmra.mxu0 %v6927
  %v7193 = vpop.f32.mrf.mxu0
  %v7194 = vadd.f32 %v7058, %v7193
  %v7195 = vpop.f32.mrf.mxu0
  %v7196 = vadd.f32 %v7060, %v7195
  %7197 = vmatmul.bf16.gmra.mxu0 %v6936
  %v7198 = vpop.f32.mrf.mxu0
  %v7199 = vadd.f32 %v7063, %v7198
  %v7200 = vpop.f32.mrf.mxu0
  %v7201 = vadd.f32 %v7065, %v7200
  %7202 = vmatmul.bf16.gmra.mxu0 %v6945
  %v7203 = vpop.f32.mrf.mxu0
  %v7204 = vadd.f32 %v7068, %v7203
  %v7205 = vpop.f32.mrf.mxu0
  %v7206 = vadd.f32 %v7070, %v7205
  %7207 = vmatmul.bf16.gmra.mxu0 %v6954
  %v7208 = vpop.f32.mrf.mxu0
  %v7209 = vadd.f32 %v7073, %v7208
  %v7210 = vpop.f32.mrf.mxu0
  %v7211 = vadd.f32 %v7075, %v7210
  %7212 = vmatmul.bf16.gmra.mxu0 %v6963
  %v7213 = vpop.f32.mrf.mxu0
  %v7214 = vadd.f32 %v7078, %v7213
  %v7215 = vpop.f32.mrf.mxu0
  %v7216 = vadd.f32 %v7080, %v7215
  %7217 = vmatmul.bf16.gmra.mxu0 %v7122
  %v7218 = vpop.f32.mrf.mxu0
  %v7219 = vadd.f32 %v7083, %v7218
  %v7220 = vpop.f32.mrf.mxu0
  %v7221 = vadd.f32 %v7085, %v7220
  %7222 = vdwg.mxu0
  %v7223 = vld [vmem:[#allocation2 + $0xe4] sm:$0x8]
  %v7224 = vld [vmem:[#allocation2 + $0xe8] sm:$0xf]
  %v7225 = vld [vmem:[#allocation2 + $0xec] sm:$0xf]
  %v7226 = vld [vmem:[#allocation2 + $0xf0] sm:$0xf]
  %v7227 = vld [vmem:[#allocation2 + $0xf4] sm:$0xf]
  %v7228 = vld [vmem:[#allocation2 + $0xf8] sm:$0xf]
  %v7229 = vld [vmem:[#allocation2 + $0xfc] sm:$0xf]
  %v7230 = vld [vmem:[#allocation2 + $0x100] sm:$0xf]
  %v7231 = vld [vmem:[#allocation2 + $0x104] sm:$0xf]
  %v7232 = vld [vmem:[#allocation2 + $0x108] sm:$0xf]
  %v7233 = vld [vmem:[#allocation2 + $0x10c] sm:$0xf]
  %v7234 = vld [vmem:[#allocation2 + $0x110] sm:$0xf]
  %v7235 = vld [vmem:[#allocation2 + $0x114] sm:$0xf]
  %v7236 = vld [vmem:[#allocation2 + $0x118] sm:$0xf]
  %v7237 = vld [vmem:[#allocation2 + $0x11c] sm:$0xf]
  %v7238 = vld [vmem:[#allocation2 + $0x120] sm:$0xf]
  %v7239 = vld [vmem:[#allocation2 + $0x124] sm:$0xf]
  %v7240 = vld [vmem:[%s1399] sm:$0xf]
  %v7241 = vld [vmem:[%s1399 + $0x4] sm:$0xf]
  %v7242 = vld [vmem:[%s1399 + $0x8] sm:$0xf]
  %v7243 = vld [vmem:[%s1399 + $0xc] sm:$0xf]
  %v7244 = vld [vmem:[%s1399 + $0x10] sm:$0xf]
  %v7245 = vld [vmem:[%s1399 + $0x14] sm:$0xf]
  %v7246 = vld [vmem:[%s1399 + $0x18] sm:$0xf]
  %v7247 = vld [vmem:[%s1399 + $0x1c] sm:$0xf]
  %v7248 = vld [vmem:[%s1399 + $0x20] sm:$0xf]
  %v7249 = vld [vmem:[%s1399 + $0x24] sm:$0xf]
  %v7250 = vld [vmem:[%s1399 + $0x28] sm:$0xf]
  %v7251 = vld [vmem:[%s1399 + $0x2c] sm:$0xf]
  %v7252 = vld [vmem:[%s1399 + $0x30] sm:$0xf]
  %v7253 = vld [vmem:[%s1399 + $0x34] sm:$0xf]
  %v7254 = vld [vmem:[%s1399 + $0x38] sm:$0xf]
  %v7255 = vld [vmem:[%s1399 + $0x3c] sm:$0xf]
  %v7273 = vunpack.c.l.b16 %v7223
  %v7274 = vunpack.c.l.b16 %v7224
  %v7275 = vunpack.c.l.b16 %v7225
  %v7276 = vunpack.c.l.b16 %v7226
  %v7277 = vunpack.c.l.b16 %v7227
  %v7278 = vunpack.c.l.b16 %v7228
  %v7279 = vunpack.c.l.b16 %v7229
  %v7280 = vunpack.c.l.b16 %v7230
  %v7281 = vunpack.c.l.b16 %v7231
  %v7282 = vunpack.c.l.b16 %v7232
  %v7283 = vunpack.c.l.b16 %v7233
  %v7284 = vunpack.c.l.b16 %v7234
  %v7285 = vunpack.c.l.b16 %v7235
  %v7286 = vunpack.c.l.b16 %v7236
  %v7287 = vunpack.c.l.b16 %v7237
  %v7288 = vunpack.c.l.b16 %v7238
  %v7289 = vunpack.c.l.b16 %v7239
  %v7290 = vpack.c.b16 %v7274, %v7273
  %v7291 = vpack.c.b16 %v7276, %v7275
  %v7292 = vpack.c.b16 %v7278, %v7277
  %v7293 = vpack.c.b16 %v7280, %v7279
  %v7294 = vpack.c.b16 %v7282, %v7281
  %v7295 = vpack.c.b16 %v7284, %v7283
  %v7296 = vpack.c.b16 %v7286, %v7285
  %v7297 = vpack.c.b16 %v7288, %v7287
  %v7298 = vpack.c.b16 %v7289, %v7289
  %v7300 = vshrl.u32 %v7290, 16
  %v7302 = vrot.slane %v7300, 3
  %v7303 = vshll.u32 %v7290, 16
  %v7305 = vrot.slane %v7303, 4
  %v7306 = vor.u32 %v7302, %v7305
  %v7308 = vshrl.u32 %v7291, 16
  %v7310 = vrot.slane %v7308, 3
  %v7311 = vshll.u32 %v7291, 16
  %v7313 = vrot.slane %v7311, 4
  %v7314 = vor.u32 %v7310, %v7313
  %v7315 = vsel %vm1060, %v7306, %v7314
  %v7317 = vshrl.u32 %v7292, 16
  %v7319 = vrot.slane %v7317, 3
  %v7320 = vshll.u32 %v7292, 16
  %v7322 = vrot.slane %v7320, 4
  %v7323 = vor.u32 %v7319, %v7322
  %v7324 = vsel %vm1060, %v7314, %v7323
  %v7326 = vshrl.u32 %v7293, 16
  %v7328 = vrot.slane %v7326, 3
  %v7329 = vshll.u32 %v7293, 16
  %v7331 = vrot.slane %v7329, 4
  %v7332 = vor.u32 %v7328, %v7331
  %v7333 = vsel %vm1060, %v7323, %v7332
  %v7335 = vshrl.u32 %v7294, 16
  %v7337 = vrot.slane %v7335, 3
  %v7338 = vshll.u32 %v7294, 16
  %v7340 = vrot.slane %v7338, 4
  %v7341 = vor.u32 %v7337, %v7340
  %v7342 = vsel %vm1060, %v7332, %v7341
  %v7344 = vshrl.u32 %v7295, 16
  %v7346 = vrot.slane %v7344, 3
  %v7347 = vshll.u32 %v7295, 16
  %v7349 = vrot.slane %v7347, 4
  %v7350 = vor.u32 %v7346, %v7349
  %v7351 = vsel %vm1060, %v7341, %v7350
  %v7353 = vshrl.u32 %v7296, 16
  %v7355 = vrot.slane %v7353, 3
  %v7356 = vshll.u32 %v7296, 16
  %v7358 = vrot.slane %v7356, 4
  %v7359 = vor.u32 %v7355, %v7358
  %v7360 = vsel %vm1060, %v7350, %v7359
  %v7362 = vshrl.u32 %v7297, 16
  %v7364 = vrot.slane %v7362, 3
  %v7365 = vshll.u32 %v7297, 16
  %v7367 = vrot.slane %v7365, 4
  %v7368 = vor.u32 %v7364, %v7367
  %v7369 = vsel %vm1060, %v7359, %v7368
  %v7371 = vshrl.u32 %v7298, 16
  %v7373 = vrot.slane %v7371, 3
  %v7374 = vshll.u32 %v7298, 16
  %v7376 = vrot.slane %v7374, 4
  %v7377 = vor.u32 %v7373, %v7376
  %v7378 = vsel %vm1060, %v7368, %v7377
  %v7403 = vunpack.c.l.b16 %v7240
  %v7404 = vunpack.c.l.b16 %v7241
  %v7405 = vunpack.c.l.b16 %v7242
  %v7406 = vunpack.c.l.b16 %v7243
  %v7407 = vunpack.c.l.b16 %v7244
  %v7408 = vunpack.c.l.b16 %v7245
  %v7409 = vunpack.c.l.b16 %v7246
  %v7410 = vunpack.c.l.b16 %v7247
  %v7411 = vunpack.c.l.b16 %v7248
  %v7412 = vunpack.c.l.b16 %v7249
  %v7413 = vunpack.c.l.b16 %v7250
  %v7414 = vunpack.c.l.b16 %v7251
  %v7415 = vunpack.c.l.b16 %v7252
  %v7416 = vunpack.c.l.b16 %v7253
  %v7417 = vunpack.c.l.b16 %v7254
  %v7418 = vunpack.c.l.b16 %v7255
  %v7419 = vpack.c.b16 %v7404, %v7403
  %v7420 = vpack.c.b16 %v7406, %v7405
  %v7421 = vpack.c.b16 %v7408, %v7407
  %v7422 = vpack.c.b16 %v7410, %v7409
  %v7423 = vpack.c.b16 %v7412, %v7411
  %v7424 = vpack.c.b16 %v7414, %v7413
  %v7425 = vpack.c.b16 %v7416, %v7415
  %v7426 = vpack.c.b16 %v7418, %v7417
  %7435 = vmatpush.bf16.msra.mxu0 %v7426
  %7436 = vmatpush.bf16.msra.mxu0 %v7425
  %7437 = vmatpush.bf16.msra.mxu0 %v7424
  %7438 = vmatpush.bf16.msra.mxu0 %v7423
  %7439 = vmatpush.bf16.msra.mxu0 %v7422
  %7440 = vmatpush.bf16.msra.mxu0 %v7421
  %7441 = vmatpush.bf16.msra.mxu0 %v7420
  %7442 = vmatpush.bf16.msra.mxu0 %v7419
  %7443 = vmatmul.bf16.gmra.mxu0 %v7315
  %v7444 = vpop.f32.mrf.mxu0
  %v7445 = vadd.f32 0.0, %v7444
  %v7446 = vpop.f32.mrf.mxu0
  %v7447 = vadd.f32 0.0, %v7446
  %7448 = vmatmul.bf16.gmra.mxu0 %v7324
  %v7449 = vpop.f32.mrf.mxu0
  %v7450 = vadd.f32 0.0, %v7449
  %v7451 = vpop.f32.mrf.mxu0
  %v7452 = vadd.f32 0.0, %v7451
  %7453 = vmatmul.bf16.gmra.mxu0 %v7333
  %v7454 = vpop.f32.mrf.mxu0
  %v7455 = vadd.f32 0.0, %v7454
  %v7456 = vpop.f32.mrf.mxu0
  %v7457 = vadd.f32 0.0, %v7456
  %7458 = vmatmul.bf16.gmra.mxu0 %v7342
  %v7459 = vpop.f32.mrf.mxu0
  %v7460 = vadd.f32 0.0, %v7459
  %v7461 = vpop.f32.mrf.mxu0
  %v7462 = vadd.f32 0.0, %v7461
  %7463 = vmatmul.bf16.gmra.mxu0 %v7351
  %v7464 = vpop.f32.mrf.mxu0
  %v7465 = vadd.f32 0.0, %v7464
  %v7466 = vpop.f32.mrf.mxu0
  %v7467 = vadd.f32 0.0, %v7466
  %7468 = vmatmul.bf16.gmra.mxu0 %v7360
  %v7469 = vpop.f32.mrf.mxu0
  %v7470 = vadd.f32 0.0, %v7469
  %v7471 = vpop.f32.mrf.mxu0
  %v7472 = vadd.f32 0.0, %v7471
  %7473 = vmatmul.bf16.gmra.mxu0 %v7369
  %v7474 = vpop.f32.mrf.mxu0
  %v7475 = vadd.f32 0.0, %v7474
  %v7476 = vpop.f32.mrf.mxu0
  %v7477 = vadd.f32 0.0, %v7476
  %7478 = vmatmul.bf16.gmra.mxu0 %v7378
  %v7479 = vpop.f32.mrf.mxu0
  %v7480 = vadd.f32 0.0, %v7479
  %v7481 = vpop.f32.mrf.mxu0
  %v7482 = vadd.f32 0.0, %v7481
  %7483 = vdwg.mxu0
  %v7484 = vadd.f32 %v7184, %v7445
  %v7485 = vadd.f32 %v7186, %v7447
  %v7486 = vadd.f32 %v7189, %v7450
  %v7487 = vadd.f32 %v7191, %v7452
  %v7488 = vadd.f32 %v7194, %v7455
  %v7489 = vadd.f32 %v7196, %v7457
  %v7490 = vadd.f32 %v7199, %v7460
  %v7491 = vadd.f32 %v7201, %v7462
  %v7492 = vadd.f32 %v7204, %v7465
  %v7493 = vadd.f32 %v7206, %v7467
  %v7494 = vadd.f32 %v7209, %v7470
  %v7495 = vadd.f32 %v7211, %v7472
  %v7496 = vadd.f32 %v7214, %v7475
  %v7497 = vadd.f32 %v7216, %v7477
  %v7498 = vadd.f32 %v7219, %v7480
  %v7499 = vadd.f32 %v7221, %v7482
  %v7500 = vmul.f32 %v7484, %v1663
  %v7501 = vmul.f32 %v7485, %v1668
  %v7502 = vmul.f32 %v7486, %v1673
  %v7503 = vmul.f32 %v7487, %v1678
  %v7504 = vmul.f32 %v7488, %v1683
  %v7505 = vmul.f32 %v7489, %v1688
  %v7506 = vmul.f32 %v7490, %v1693
  %v7507 = vmul.f32 %v7491, %v1698
  %v7508 = vmul.f32 %v7492, %v1703
  %v7509 = vmul.f32 %v7493, %v1708
  %v7510 = vmul.f32 %v7494, %v1713
  %v7511 = vmul.f32 %v7495, %v1718
  %v7512 = vmul.f32 %v7496, %v1723
  %v7513 = vmul.f32 %v7497, %v1728
  %v7514 = vmul.f32 %v7498, %v1733
  %v7515 = vmul.f32 %v7499, %v1738
  %v7516 = vld [vmem:[#allocation2 + $0xd8] sm:$0xf]
  %v7517 = vld [vmem:[#allocation2 + $0xdc] sm:$0xf]
  %v7518 = vld [vmem:[#allocation2 + $0xe0] sm:$0xf]
  %v7519 = vld [vmem:[#allocation2 + $0xe4] sm:$0xf]
  %v7520 = vld [vmem:[#allocation2 + $0xe8] sm:$0xf]
  %v7521 = vld [vmem:[#allocation2 + $0xec] sm:$0xf]
  %v7522 = vld [vmem:[#allocation2 + $0xf0] sm:$0xf]
  %v7523 = vld [vmem:[#allocation2 + $0xf4] sm:$0xf]
  %v7524 = vld [vmem:[#allocation2 + $0xf8] sm:$0xf]
  %v7525 = vld [vmem:[#allocation2 + $0xfc] sm:$0xf]
  %v7526 = vld [vmem:[#allocation2 + $0x100] sm:$0xf]
  %v7527 = vld [vmem:[#allocation2 + $0x104] sm:$0xf]
  %v7528 = vld [vmem:[#allocation2 + $0x108] sm:$0xf]
  %v7529 = vld [vmem:[#allocation2 + $0x10c] sm:$0xf]
  %v7530 = vld [vmem:[#allocation2 + $0x110] sm:$0xf]
  %v7531 = vld [vmem:[#allocation2 + $0x114] sm:$0xf]
  %v7532 = vld [vmem:[#allocation2 + $0x118] sm:$0x1]
  %v7533 = vld [vmem:[%s1773] sm:$0xf]
  %v7534 = vld [vmem:[%s1773 + $0x4] sm:$0xf]
  %v7535 = vld [vmem:[%s1773 + $0x8] sm:$0xf]
  %v7536 = vld [vmem:[%s1773 + $0xc] sm:$0xf]
  %v7537 = vld [vmem:[%s1773 + $0x10] sm:$0xf]
  %v7538 = vld [vmem:[%s1773 + $0x14] sm:$0xf]
  %v7539 = vld [vmem:[%s1773 + $0x18] sm:$0xf]
  %v7540 = vld [vmem:[%s1773 + $0x1c] sm:$0xf]
  %v7541 = vld [vmem:[%s1773 + $0x20] sm:$0xf]
  %v7542 = vld [vmem:[%s1773 + $0x24] sm:$0xf]
  %v7543 = vld [vmem:[%s1773 + $0x28] sm:$0xf]
  %v7544 = vld [vmem:[%s1773 + $0x2c] sm:$0xf]
  %v7545 = vld [vmem:[%s1773 + $0x30] sm:$0xf]
  %v7546 = vld [vmem:[%s1773 + $0x34] sm:$0xf]
  %v7547 = vld [vmem:[%s1773 + $0x38] sm:$0xf]
  %v7548 = vld [vmem:[%s1773 + $0x3c] sm:$0xf]
  %v7549 = vld [vmem:[#allocation2 + $0x118] sm:$0xf]
  %v7550 = vld [vmem:[#allocation2 + $0x11c] sm:$0xf]
  %v7551 = vld [vmem:[#allocation2 + $0x120] sm:$0x1]
  %v7552 = vld [vmem:[%s1793] sm:$0xf]
  %v7553 = vld [vmem:[%s1793 + $0x4] sm:$0xf]
  %v7554 = vld [vmem:[%s1793 + $0x8] sm:$0xf]
  %v7555 = vld [vmem:[%s1793 + $0xc] sm:$0xf]
  %v7556 = vld [vmem:[%s1793 + $0x10] sm:$0xf]
  %v7557 = vld [vmem:[%s1793 + $0x14] sm:$0xf]
  %v7558 = vld [vmem:[%s1793 + $0x18] sm:$0xf]
  %v7559 = vld [vmem:[%s1793 + $0x1c] sm:$0xf]
  %v7560 = vld [vmem:[%s1793 + $0x20] sm:$0xf]
  %v7561 = vld [vmem:[%s1793 + $0x24] sm:$0xf]
  %v7562 = vld [vmem:[%s1793 + $0x28] sm:$0xf]
  %v7563 = vld [vmem:[%s1793 + $0x2c] sm:$0xf]
  %v7564 = vld [vmem:[%s1793 + $0x30] sm:$0xf]
  %v7565 = vld [vmem:[%s1793 + $0x34] sm:$0xf]
  %v7566 = vld [vmem:[%s1793 + $0x38] sm:$0xf]
  %v7567 = vld [vmem:[%s1793 + $0x3c] sm:$0xf]
  %v7585 = vunpack.c.l.b16 %v7518
  %v7586 = vunpack.c.l.b16 %v7519
  %v7587 = vunpack.c.l.b16 %v7520
  %v7588 = vunpack.c.l.b16 %v7521
  %v7589 = vunpack.c.l.b16 %v7522
  %v7590 = vunpack.c.l.b16 %v7523
  %v7591 = vunpack.c.l.b16 %v7524
  %v7592 = vunpack.c.l.b16 %v7525
  %v7593 = vunpack.c.l.b16 %v7526
  %v7594 = vunpack.c.l.b16 %v7527
  %v7595 = vunpack.c.l.b16 %v7528
  %v7596 = vunpack.c.l.b16 %v7529
  %v7597 = vunpack.c.l.b16 %v7530
  %v7598 = vunpack.c.l.b16 %v7531
  %v7599 = vunpack.c.l.b16 %v7549
  %v7600 = vunpack.c.l.b16 %v7550
  %v7601 = vunpack.c.l.b16 %v7551
  %v7602 = vpack.c.b16 %v7586, %v7585
  %v7603 = vpack.c.b16 %v7588, %v7587
  %v7604 = vpack.c.b16 %v7590, %v7589
  %v7605 = vpack.c.b16 %v7592, %v7591
  %v7606 = vpack.c.b16 %v7594, %v7593
  %v7607 = vpack.c.b16 %v7596, %v7595
  %v7608 = vpack.c.b16 %v7598, %v7597
  %v7609 = vpack.c.b16 %v7600, %v7599
  %v7610 = vpack.c.b16 %v7601, %v7601
  %v7612 = vshrl.u32 %v7602, 16
  %v7614 = vshll.u32 %v7602, 16
  %v7616 = vrot.slane %v7614, 1
  %v7617 = vor.u32 %v7612, %v7616
  %v7619 = vshll.u32 %v7603, 16
  %v7621 = vrot.slane %v7619, 1
  %v7622 = vsel %vm1853, %v7617, %v7621
  %v7623 = vshrl.u32 %v7603, 16
  %v7625 = vor.u32 %v7623, %v7621
  %v7627 = vshll.u32 %v7604, 16
  %v7629 = vrot.slane %v7627, 1
  %v7630 = vsel %vm1853, %v7625, %v7629
  %v7631 = vshrl.u32 %v7604, 16
  %v7633 = vor.u32 %v7631, %v7629
  %v7635 = vshll.u32 %v7605, 16
  %v7637 = vrot.slane %v7635, 1
  %v7638 = vsel %vm1853, %v7633, %v7637
  %v7639 = vshrl.u32 %v7605, 16
  %v7641 = vor.u32 %v7639, %v7637
  %v7643 = vshll.u32 %v7606, 16
  %v7645 = vrot.slane %v7643, 1
  %v7646 = vsel %vm1853, %v7641, %v7645
  %v7647 = vshrl.u32 %v7606, 16
  %v7649 = vor.u32 %v7647, %v7645
  %v7651 = vshll.u32 %v7607, 16
  %v7653 = vrot.slane %v7651, 1
  %v7654 = vsel %vm1853, %v7649, %v7653
  %v7655 = vshrl.u32 %v7607, 16
  %v7657 = vor.u32 %v7655, %v7653
  %v7659 = vshll.u32 %v7608, 16
  %v7661 = vrot.slane %v7659, 1
  %v7662 = vsel %vm1853, %v7657, %v7661
  %v7663 = vshrl.u32 %v7608, 16
  %v7665 = vor.u32 %v7663, %v7661
  %v7667 = vshll.u32 %v7609, 16
  %v7669 = vrot.slane %v7667, 1
  %v7670 = vsel %vm1853, %v7665, %v7669
  %v7671 = vshrl.u32 %v7609, 16
  %v7673 = vor.u32 %v7671, %v7669
  %v7675 = vshll.u32 %v7610, 16
  %v7677 = vrot.slane %v7675, 1
  %v7678 = vsel %vm1853, %v7673, %v7677
  %v7703 = vunpack.c.l.b16 %v7552
  %v7704 = vunpack.c.l.b16 %v7553
  %v7705 = vunpack.c.l.b16 %v7554
  %v7706 = vunpack.c.l.b16 %v7555
  %v7707 = vunpack.c.l.b16 %v7556
  %v7708 = vunpack.c.l.b16 %v7557
  %v7709 = vunpack.c.l.b16 %v7558
  %v7710 = vunpack.c.l.b16 %v7559
  %v7711 = vunpack.c.l.b16 %v7560
  %v7712 = vunpack.c.l.b16 %v7561
  %v7713 = vunpack.c.l.b16 %v7562
  %v7714 = vunpack.c.l.b16 %v7563
  %v7715 = vunpack.c.l.b16 %v7564
  %v7716 = vunpack.c.l.b16 %v7565
  %v7717 = vunpack.c.l.b16 %v7566
  %v7718 = vunpack.c.l.b16 %v7567
  %v7719 = vpack.c.b16 %v7704, %v7703
  %v7720 = vpack.c.b16 %v7706, %v7705
  %v7721 = vpack.c.b16 %v7708, %v7707
  %v7722 = vpack.c.b16 %v7710, %v7709
  %v7723 = vpack.c.b16 %v7712, %v7711
  %v7724 = vpack.c.b16 %v7714, %v7713
  %v7725 = vpack.c.b16 %v7716, %v7715
  %v7726 = vpack.c.b16 %v7718, %v7717
  %7735 = vmatpush.bf16.msra.mxu0 %v7726
  %7736 = vmatpush.bf16.msra.mxu0 %v7725
  %7737 = vmatpush.bf16.msra.mxu0 %v7724
  %7738 = vmatpush.bf16.msra.mxu0 %v7723
  %7739 = vmatpush.bf16.msra.mxu0 %v7722
  %7740 = vmatpush.bf16.msra.mxu0 %v7721
  %7741 = vmatpush.bf16.msra.mxu0 %v7720
  %7742 = vmatpush.bf16.msra.mxu0 %v7719
  %7743 = vmatmul.bf16.gmra.mxu0 %v7622
  %v7744 = vpop.f32.mrf.mxu0
  %v7745 = vadd.f32 0.0, %v7744
  %v7746 = vpop.f32.mrf.mxu0
  %v7747 = vadd.f32 0.0, %v7746
  %7748 = vmatmul.bf16.gmra.mxu0 %v7630
  %v7749 = vpop.f32.mrf.mxu0
  %v7750 = vadd.f32 0.0, %v7749
  %v7751 = vpop.f32.mrf.mxu0
  %v7752 = vadd.f32 0.0, %v7751
  %7753 = vmatmul.bf16.gmra.mxu0 %v7638
  %v7754 = vpop.f32.mrf.mxu0
  %v7755 = vadd.f32 0.0, %v7754
  %v7756 = vpop.f32.mrf.mxu0
  %v7757 = vadd.f32 0.0, %v7756
  %7758 = vmatmul.bf16.gmra.mxu0 %v7646
  %v7759 = vpop.f32.mrf.mxu0
  %v7760 = vadd.f32 0.0, %v7759
  %v7761 = vpop.f32.mrf.mxu0
  %v7762 = vadd.f32 0.0, %v7761
  %7763 = vmatmul.bf16.gmra.mxu0 %v7654
  %v7764 = vpop.f32.mrf.mxu0
  %v7765 = vadd.f32 0.0, %v7764
  %v7766 = vpop.f32.mrf.mxu0
  %v7767 = vadd.f32 0.0, %v7766
  %7768 = vmatmul.bf16.gmra.mxu0 %v7662
  %v7769 = vpop.f32.mrf.mxu0
  %v7770 = vadd.f32 0.0, %v7769
  %v7771 = vpop.f32.mrf.mxu0
  %v7772 = vadd.f32 0.0, %v7771
  %7773 = vmatmul.bf16.gmra.mxu0 %v7670
  %v7774 = vpop.f32.mrf.mxu0
  %v7775 = vadd.f32 0.0, %v7774
  %v7776 = vpop.f32.mrf.mxu0
  %v7777 = vadd.f32 0.0, %v7776
  %7778 = vmatmul.bf16.gmra.mxu0 %v7678
  %v7779 = vpop.f32.mrf.mxu0
  %v7780 = vadd.f32 0.0, %v7779
  %v7781 = vpop.f32.mrf.mxu0
  %v7782 = vadd.f32 0.0, %v7781
  %7783 = vdwg.mxu0
  %v7787 = vunpack.c.l.b16 %v7516
  %v7788 = vunpack.c.l.b16 %v7517
  %v7789 = vunpack.c.l.b16 %v7532
  %v7790 = vpack.c.b16 %v7788, %v7787
  %v7791 = vpack.c.b16 %v7789, %v7789
  %v7793 = vshrl.u32 %v7790, 16
  %v7795 = vshll.u32 %v7790, 16
  %v7797 = vrot.slane %v7795, 1
  %v7798 = vor.u32 %v7793, %v7797
  %v7799 = vsel %vm1853, %v7798, %v7616
  %v7801 = vshll.u32 %v7791, 16
  %v7803 = vrot.slane %v7801, 1
  %v7804 = vsel %vm1853, %v7665, %v7803
  %v7823 = vunpack.c.l.b16 %v7533
  %v7824 = vunpack.c.l.b16 %v7534
  %v7825 = vunpack.c.l.b16 %v7535
  %v7826 = vunpack.c.l.b16 %v7536
  %v7827 = vunpack.c.l.b16 %v7537
  %v7828 = vunpack.c.l.b16 %v7538
  %v7829 = vunpack.c.l.b16 %v7539
  %v7830 = vunpack.c.l.b16 %v7540
  %v7831 = vunpack.c.l.b16 %v7541
  %v7832 = vunpack.c.l.b16 %v7542
  %v7833 = vunpack.c.l.b16 %v7543
  %v7834 = vunpack.c.l.b16 %v7544
  %v7835 = vunpack.c.l.b16 %v7545
  %v7836 = vunpack.c.l.b16 %v7546
  %v7837 = vunpack.c.l.b16 %v7547
  %v7838 = vunpack.c.l.b16 %v7548
  %v7839 = vpack.c.b16 %v7824, %v7823
  %v7840 = vpack.c.b16 %v7826, %v7825
  %v7841 = vpack.c.b16 %v7828, %v7827
  %v7842 = vpack.c.b16 %v7830, %v7829
  %v7843 = vpack.c.b16 %v7832, %v7831
  %v7844 = vpack.c.b16 %v7834, %v7833
  %v7845 = vpack.c.b16 %v7836, %v7835
  %v7846 = vpack.c.b16 %v7838, %v7837
  %7855 = vmatpush.bf16.msra.mxu0 %v7846
  %7856 = vmatpush.bf16.msra.mxu0 %v7845
  %7857 = vmatpush.bf16.msra.mxu0 %v7844
  %7858 = vmatpush.bf16.msra.mxu0 %v7843
  %7859 = vmatpush.bf16.msra.mxu0 %v7842
  %7860 = vmatpush.bf16.msra.mxu0 %v7841
  %7861 = vmatpush.bf16.msra.mxu0 %v7840
  %7862 = vmatpush.bf16.msra.mxu0 %v7839
  %7863 = vmatmul.bf16.gmra.mxu0 %v7799
  %v7864 = vpop.f32.mrf.mxu0
  %v7865 = vadd.f32 %v7745, %v7864
  %v7866 = vpop.f32.mrf.mxu0
  %v7867 = vadd.f32 %v7747, %v7866
  %7868 = vmatmul.bf16.gmra.mxu0 %v7622
  %v7869 = vpop.f32.mrf.mxu0
  %v7870 = vadd.f32 %v7750, %v7869
  %v7871 = vpop.f32.mrf.mxu0
  %v7872 = vadd.f32 %v7752, %v7871
  %7873 = vmatmul.bf16.gmra.mxu0 %v7630
  %v7874 = vpop.f32.mrf.mxu0
  %v7875 = vadd.f32 %v7755, %v7874
  %v7876 = vpop.f32.mrf.mxu0
  %v7877 = vadd.f32 %v7757, %v7876
  %7878 = vmatmul.bf16.gmra.mxu0 %v7638
  %v7879 = vpop.f32.mrf.mxu0
  %v7880 = vadd.f32 %v7760, %v7879
  %v7881 = vpop.f32.mrf.mxu0
  %v7882 = vadd.f32 %v7762, %v7881
  %7883 = vmatmul.bf16.gmra.mxu0 %v7646
  %v7884 = vpop.f32.mrf.mxu0
  %v7885 = vadd.f32 %v7765, %v7884
  %v7886 = vpop.f32.mrf.mxu0
  %v7887 = vadd.f32 %v7767, %v7886
  %7888 = vmatmul.bf16.gmra.mxu0 %v7654
  %v7889 = vpop.f32.mrf.mxu0
  %v7890 = vadd.f32 %v7770, %v7889
  %v7891 = vpop.f32.mrf.mxu0
  %v7892 = vadd.f32 %v7772, %v7891
  %7893 = vmatmul.bf16.gmra.mxu0 %v7662
  %v7894 = vpop.f32.mrf.mxu0
  %v7895 = vadd.f32 %v7775, %v7894
  %v7896 = vpop.f32.mrf.mxu0
  %v7897 = vadd.f32 %v7777, %v7896
  %7898 = vmatmul.bf16.gmra.mxu0 %v7804
  %v7899 = vpop.f32.mrf.mxu0
  %v7900 = vadd.f32 %v7780, %v7899
  %v7901 = vpop.f32.mrf.mxu0
  %v7902 = vadd.f32 %v7782, %v7901
  %7903 = vdwg.mxu0
  %v7904 = vld [vmem:[#allocation2 + $0xe8] sm:$0xf]
  %v7905 = vld [vmem:[#allocation2 + $0xec] sm:$0xf]
  %v7906 = vld [vmem:[#allocation2 + $0xf0] sm:$0xf]
  %v7907 = vld [vmem:[#allocation2 + $0xf4] sm:$0xf]
  %v7908 = vld [vmem:[#allocation2 + $0xf8] sm:$0xf]
  %v7909 = vld [vmem:[#allocation2 + $0xfc] sm:$0xf]
  %v7910 = vld [vmem:[#allocation2 + $0x100] sm:$0xf]
  %v7911 = vld [vmem:[#allocation2 + $0x104] sm:$0xf]
  %v7912 = vld [vmem:[#allocation2 + $0x108] sm:$0xf]
  %v7913 = vld [vmem:[#allocation2 + $0x10c] sm:$0xf]
  %v7914 = vld [vmem:[#allocation2 + $0x110] sm:$0xf]
  %v7915 = vld [vmem:[#allocation2 + $0x114] sm:$0xf]
  %v7916 = vld [vmem:[#allocation2 + $0x118] sm:$0xf]
  %v7917 = vld [vmem:[#allocation2 + $0x11c] sm:$0xf]
  %v7918 = vld [vmem:[#allocation2 + $0x120] sm:$0xf]
  %v7919 = vld [vmem:[#allocation2 + $0x124] sm:$0xf]
  %v7920 = vld [vmem:[#allocation2 + $0x128] sm:$0x1]
  %v7921 = vld [vmem:[%s2164] sm:$0xf]
  %v7922 = vld [vmem:[%s2164 + $0x4] sm:$0xf]
  %v7923 = vld [vmem:[%s2164 + $0x8] sm:$0xf]
  %v7924 = vld [vmem:[%s2164 + $0xc] sm:$0xf]
  %v7925 = vld [vmem:[%s2164 + $0x10] sm:$0xf]
  %v7926 = vld [vmem:[%s2164 + $0x14] sm:$0xf]
  %v7927 = vld [vmem:[%s2164 + $0x18] sm:$0xf]
  %v7928 = vld [vmem:[%s2164 + $0x1c] sm:$0xf]
  %v7929 = vld [vmem:[%s2164 + $0x20] sm:$0xf]
  %v7930 = vld [vmem:[%s2164 + $0x24] sm:$0xf]
  %v7931 = vld [vmem:[%s2164 + $0x28] sm:$0xf]
  %v7932 = vld [vmem:[%s2164 + $0x2c] sm:$0xf]
  %v7933 = vld [vmem:[%s2164 + $0x30] sm:$0xf]
  %v7934 = vld [vmem:[%s2164 + $0x34] sm:$0xf]
  %v7935 = vld [vmem:[%s2164 + $0x38] sm:$0xf]
  %v7936 = vld [vmem:[%s2164 + $0x3c] sm:$0xf]
  %v7954 = vunpack.c.l.b16 %v7904
  %v7955 = vunpack.c.l.b16 %v7905
  %v7956 = vunpack.c.l.b16 %v7906
  %v7957 = vunpack.c.l.b16 %v7907
  %v7958 = vunpack.c.l.b16 %v7908
  %v7959 = vunpack.c.l.b16 %v7909
  %v7960 = vunpack.c.l.b16 %v7910
  %v7961 = vunpack.c.l.b16 %v7911
  %v7962 = vunpack.c.l.b16 %v7912
  %v7963 = vunpack.c.l.b16 %v7913
  %v7964 = vunpack.c.l.b16 %v7914
  %v7965 = vunpack.c.l.b16 %v7915
  %v7966 = vunpack.c.l.b16 %v7916
  %v7967 = vunpack.c.l.b16 %v7917
  %v7968 = vunpack.c.l.b16 %v7918
  %v7969 = vunpack.c.l.b16 %v7919
  %v7970 = vunpack.c.l.b16 %v7920
  %v7971 = vpack.c.b16 %v7955, %v7954
  %v7972 = vpack.c.b16 %v7957, %v7956
  %v7973 = vpack.c.b16 %v7959, %v7958
  %v7974 = vpack.c.b16 %v7961, %v7960
  %v7975 = vpack.c.b16 %v7963, %v7962
  %v7976 = vpack.c.b16 %v7965, %v7964
  %v7977 = vpack.c.b16 %v7967, %v7966
  %v7978 = vpack.c.b16 %v7969, %v7968
  %v7979 = vpack.c.b16 %v7970, %v7970
  %v7981 = vshrl.u32 %v7971, 16
  %v7983 = vshll.u32 %v7971, 16
  %v7985 = vrot.slane %v7983, 1
  %v7986 = vor.u32 %v7981, %v7985
  %v7988 = vshll.u32 %v7972, 16
  %v7990 = vrot.slane %v7988, 1
  %v7991 = vsel %vm1853, %v7986, %v7990
  %v7992 = vshrl.u32 %v7972, 16
  %v7994 = vor.u32 %v7992, %v7990
  %v7996 = vshll.u32 %v7973, 16
  %v7998 = vrot.slane %v7996, 1
  %v7999 = vsel %vm1853, %v7994, %v7998
  %v8000 = vshrl.u32 %v7973, 16
  %v8002 = vor.u32 %v8000, %v7998
  %v8004 = vshll.u32 %v7974, 16
  %v8006 = vrot.slane %v8004, 1
  %v8007 = vsel %vm1853, %v8002, %v8006
  %v8008 = vshrl.u32 %v7974, 16
  %v8010 = vor.u32 %v8008, %v8006
  %v8012 = vshll.u32 %v7975, 16
  %v8014 = vrot.slane %v8012, 1
  %v8015 = vsel %vm1853, %v8010, %v8014
  %v8016 = vshrl.u32 %v7975, 16
  %v8018 = vor.u32 %v8016, %v8014
  %v8020 = vshll.u32 %v7976, 16
  %v8022 = vrot.slane %v8020, 1
  %v8023 = vsel %vm1853, %v8018, %v8022
  %v8024 = vshrl.u32 %v7976, 16
  %v8026 = vor.u32 %v8024, %v8022
  %v8028 = vshll.u32 %v7977, 16
  %v8030 = vrot.slane %v8028, 1
  %v8031 = vsel %vm1853, %v8026, %v8030
  %v8032 = vshrl.u32 %v7977, 16
  %v8034 = vor.u32 %v8032, %v8030
  %v8036 = vshll.u32 %v7978, 16
  %v8038 = vrot.slane %v8036, 1
  %v8039 = vsel %vm1853, %v8034, %v8038
  %v8040 = vshrl.u32 %v7978, 16
  %v8042 = vor.u32 %v8040, %v8038
  %v8044 = vshll.u32 %v7979, 16
  %v8046 = vrot.slane %v8044, 1
  %v8047 = vsel %vm1853, %v8042, %v8046
  %v8072 = vunpack.c.l.b16 %v7921
  %v8073 = vunpack.c.l.b16 %v7922
  %v8074 = vunpack.c.l.b16 %v7923
  %v8075 = vunpack.c.l.b16 %v7924
  %v8076 = vunpack.c.l.b16 %v7925
  %v8077 = vunpack.c.l.b16 %v7926
  %v8078 = vunpack.c.l.b16 %v7927
  %v8079 = vunpack.c.l.b16 %v7928
  %v8080 = vunpack.c.l.b16 %v7929
  %v8081 = vunpack.c.l.b16 %v7930
  %v8082 = vunpack.c.l.b16 %v7931
  %v8083 = vunpack.c.l.b16 %v7932
  %v8084 = vunpack.c.l.b16 %v7933
  %v8085 = vunpack.c.l.b16 %v7934
  %v8086 = vunpack.c.l.b16 %v7935
  %v8087 = vunpack.c.l.b16 %v7936
  %v8088 = vpack.c.b16 %v8073, %v8072
  %v8089 = vpack.c.b16 %v8075, %v8074
  %v8090 = vpack.c.b16 %v8077, %v8076
  %v8091 = vpack.c.b16 %v8079, %v8078
  %v8092 = vpack.c.b16 %v8081, %v8080
  %v8093 = vpack.c.b16 %v8083, %v8082
  %v8094 = vpack.c.b16 %v8085, %v8084
  %v8095 = vpack.c.b16 %v8087, %v8086
  %8104 = vmatpush.bf16.msra.mxu0 %v8095
  %8105 = vmatpush.bf16.msra.mxu0 %v8094
  %8106 = vmatpush.bf16.msra.mxu0 %v8093
  %8107 = vmatpush.bf16.msra.mxu0 %v8092
  %8108 = vmatpush.bf16.msra.mxu0 %v8091
  %8109 = vmatpush.bf16.msra.mxu0 %v8090
  %8110 = vmatpush.bf16.msra.mxu0 %v8089
  %8111 = vmatpush.bf16.msra.mxu0 %v8088
  %8112 = vmatmul.bf16.gmra.mxu0 %v7991
  %v8113 = vpop.f32.mrf.mxu0
  %v8114 = vadd.f32 0.0, %v8113
  %v8115 = vpop.f32.mrf.mxu0
  %v8116 = vadd.f32 0.0, %v8115
  %8117 = vmatmul.bf16.gmra.mxu0 %v7999
  %v8118 = vpop.f32.mrf.mxu0
  %v8119 = vadd.f32 0.0, %v8118
  %v8120 = vpop.f32.mrf.mxu0
  %v8121 = vadd.f32 0.0, %v8120
  %8122 = vmatmul.bf16.gmra.mxu0 %v8007
  %v8123 = vpop.f32.mrf.mxu0
  %v8124 = vadd.f32 0.0, %v8123
  %v8125 = vpop.f32.mrf.mxu0
  %v8126 = vadd.f32 0.0, %v8125
  %8127 = vmatmul.bf16.gmra.mxu0 %v8015
  %v8128 = vpop.f32.mrf.mxu0
  %v8129 = vadd.f32 0.0, %v8128
  %v8130 = vpop.f32.mrf.mxu0
  %v8131 = vadd.f32 0.0, %v8130
  %8132 = vmatmul.bf16.gmra.mxu0 %v8023
  %v8133 = vpop.f32.mrf.mxu0
  %v8134 = vadd.f32 0.0, %v8133
  %v8135 = vpop.f32.mrf.mxu0
  %v8136 = vadd.f32 0.0, %v8135
  %8137 = vmatmul.bf16.gmra.mxu0 %v8031
  %v8138 = vpop.f32.mrf.mxu0
  %v8139 = vadd.f32 0.0, %v8138
  %v8140 = vpop.f32.mrf.mxu0
  %v8141 = vadd.f32 0.0, %v8140
  %8142 = vmatmul.bf16.gmra.mxu0 %v8039
  %v8143 = vpop.f32.mrf.mxu0
  %v8144 = vadd.f32 0.0, %v8143
  %v8145 = vpop.f32.mrf.mxu0
  %v8146 = vadd.f32 0.0, %v8145
  %8147 = vmatmul.bf16.gmra.mxu0 %v8047
  %v8148 = vpop.f32.mrf.mxu0
  %v8149 = vadd.f32 0.0, %v8148
  %v8150 = vpop.f32.mrf.mxu0
  %v8151 = vadd.f32 0.0, %v8150
  %8152 = vdwg.mxu0
  %v8153 = vadd.f32 %v7865, %v8114
  %v8154 = vadd.f32 %v7867, %v8116
  %v8155 = vadd.f32 %v7870, %v8119
  %v8156 = vadd.f32 %v7872, %v8121
  %v8157 = vadd.f32 %v7875, %v8124
  %v8158 = vadd.f32 %v7877, %v8126
  %v8159 = vadd.f32 %v7880, %v8129
  %v8160 = vadd.f32 %v7882, %v8131
  %v8161 = vadd.f32 %v7885, %v8134
  %v8162 = vadd.f32 %v7887, %v8136
  %v8163 = vadd.f32 %v7890, %v8139
  %v8164 = vadd.f32 %v7892, %v8141
  %v8165 = vadd.f32 %v7895, %v8144
  %v8166 = vadd.f32 %v7897, %v8146
  %v8167 = vadd.f32 %v7900, %v8149
  %v8168 = vadd.f32 %v7902, %v8151
  %v8169 = vmul.f32 %v8153, %v2416
  %v8170 = vmul.f32 %v8154, %v2421
  %v8171 = vmul.f32 %v8155, %v2426
  %v8172 = vmul.f32 %v8156, %v2431
  %v8173 = vmul.f32 %v8157, %v2436
  %v8174 = vmul.f32 %v8158, %v2441
  %v8175 = vmul.f32 %v8159, %v2446
  %v8176 = vmul.f32 %v8160, %v2451
  %v8177 = vmul.f32 %v8161, %v2456
  %v8178 = vmul.f32 %v8162, %v2461
  %v8179 = vmul.f32 %v8163, %v2466
  %v8180 = vmul.f32 %v8164, %v2471
  %v8181 = vmul.f32 %v8165, %v2476
  %v8182 = vmul.f32 %v8166, %v2481
  %v8183 = vmul.f32 %v8167, %v2486
  %v8184 = vmul.f32 %v8168, %v2491
  %v8185 = vadd.f32 %v7500, %v8169
  %v8186 = vadd.f32 %v7501, %v8170
  %v8187 = vadd.f32 %v7502, %v8171
  %v8188 = vadd.f32 %v7503, %v8172
  %v8189 = vadd.f32 %v7504, %v8173
  %v8190 = vadd.f32 %v7505, %v8174
  %v8191 = vadd.f32 %v7506, %v8175
  %v8192 = vadd.f32 %v7507, %v8176
  %v8193 = vadd.f32 %v7508, %v8177
  %v8194 = vadd.f32 %v7509, %v8178
  %v8195 = vadd.f32 %v7510, %v8179
  %v8196 = vadd.f32 %v7511, %v8180
  %v8197 = vadd.f32 %v7512, %v8181
  %v8198 = vadd.f32 %v7513, %v8182
  %v8199 = vadd.f32 %v7514, %v8183
  %v8200 = vadd.f32 %v7515, %v8184
  %v8201 = vld [vmem:[%s2525] sm:$0xf]
  %v8202 = vld [vmem:[%s2525 + $0x4] sm:$0xf]
  %v8203 = vld [vmem:[%s2525 + $0x8] sm:$0xf]
  %v8204 = vld [vmem:[%s2525 + $0xc] sm:$0xf]
  %v8205 = vld [vmem:[%s2525 + $0x10] sm:$0xf]
  %v8206 = vld [vmem:[%s2525 + $0x14] sm:$0xf]
  %v8207 = vld [vmem:[%s2525 + $0x18] sm:$0xf]
  %v8208 = vld [vmem:[%s2525 + $0x1c] sm:$0xf]
  %v8209 = vld [vmem:[%s2525 + $0x20] sm:$0xf]
  %v8210 = vld [vmem:[%s2525 + $0x24] sm:$0xf]
  %v8211 = vld [vmem:[%s2525 + $0x28] sm:$0xf]
  %v8212 = vld [vmem:[%s2525 + $0x2c] sm:$0xf]
  %v8213 = vld [vmem:[%s2525 + $0x30] sm:$0xf]
  %v8214 = vld [vmem:[%s2525 + $0x34] sm:$0xf]
  %v8215 = vld [vmem:[%s2525 + $0x38] sm:$0xf]
  %v8216 = vld [vmem:[%s2525 + $0x3c] sm:$0xf]
  %v8217 = vpack.c.b16 %v7092, %v7091
  %v8218 = vpack.c.b16 %v6878, %v6877
  %v8219 = vpack.c.b16 %v6880, %v6879
  %v8220 = vpack.c.b16 %v6882, %v6881
  %v8221 = vpack.c.b16 %v6884, %v6883
  %v8222 = vpack.c.b16 %v6886, %v6885
  %v8223 = vpack.c.b16 %v6888, %v6887
  %v8224 = vpack.c.b16 %v6890, %v6889
  %v8249 = vunpack.c.l.b16 %v8201
  %v8250 = vunpack.c.l.b16 %v8202
  %v8251 = vunpack.c.l.b16 %v8203
  %v8252 = vunpack.c.l.b16 %v8204
  %v8253 = vunpack.c.l.b16 %v8205
  %v8254 = vunpack.c.l.b16 %v8206
  %v8255 = vunpack.c.l.b16 %v8207
  %v8256 = vunpack.c.l.b16 %v8208
  %v8257 = vunpack.c.l.b16 %v8209
  %v8258 = vunpack.c.l.b16 %v8210
  %v8259 = vunpack.c.l.b16 %v8211
  %v8260 = vunpack.c.l.b16 %v8212
  %v8261 = vunpack.c.l.b16 %v8213
  %v8262 = vunpack.c.l.b16 %v8214
  %v8263 = vunpack.c.l.b16 %v8215
  %v8264 = vunpack.c.l.b16 %v8216
  %v8265 = vpack.c.b16 %v8250, %v8249
  %v8266 = vpack.c.b16 %v8252, %v8251
  %v8267 = vpack.c.b16 %v8254, %v8253
  %v8268 = vpack.c.b16 %v8256, %v8255
  %v8269 = vpack.c.b16 %v8258, %v8257
  %v8270 = vpack.c.b16 %v8260, %v8259
  %v8271 = vpack.c.b16 %v8262, %v8261
  %v8272 = vpack.c.b16 %v8264, %v8263
  %8281 = vmatpush.bf16.msra.mxu0 %v8272
  %8282 = vmatpush.bf16.msra.mxu0 %v8271
  %8283 = vmatpush.bf16.msra.mxu0 %v8270
  %8284 = vmatpush.bf16.msra.mxu0 %v8269
  %8285 = vmatpush.bf16.msra.mxu0 %v8268
  %8286 = vmatpush.bf16.msra.mxu0 %v8267
  %8287 = vmatpush.bf16.msra.mxu0 %v8266
  %8288 = vmatpush.bf16.msra.mxu0 %v8265
  %8289 = vmatmul.bf16.gmra.mxu0 %v8217
  %v8290 = vpop.f32.mrf.mxu0
  %v8291 = vadd.f32 0.0, %v8290
  %v8292 = vpop.f32.mrf.mxu0
  %v8293 = vadd.f32 0.0, %v8292
  %8294 = vmatmul.bf16.gmra.mxu0 %v8218
  %v8295 = vpop.f32.mrf.mxu0
  %v8296 = vadd.f32 0.0, %v8295
  %v8297 = vpop.f32.mrf.mxu0
  %v8298 = vadd.f32 0.0, %v8297
  %8299 = vmatmul.bf16.gmra.mxu0 %v8219
  %v8300 = vpop.f32.mrf.mxu0
  %v8301 = vadd.f32 0.0, %v8300
  %v8302 = vpop.f32.mrf.mxu0
  %v8303 = vadd.f32 0.0, %v8302
  %8304 = vmatmul.bf16.gmra.mxu0 %v8220
  %v8305 = vpop.f32.mrf.mxu0
  %v8306 = vadd.f32 0.0, %v8305
  %v8307 = vpop.f32.mrf.mxu0
  %v8308 = vadd.f32 0.0, %v8307
  %8309 = vmatmul.bf16.gmra.mxu0 %v8221
  %v8310 = vpop.f32.mrf.mxu0
  %v8311 = vadd.f32 0.0, %v8310
  %v8312 = vpop.f32.mrf.mxu0
  %v8313 = vadd.f32 0.0, %v8312
  %8314 = vmatmul.bf16.gmra.mxu0 %v8222
  %v8315 = vpop.f32.mrf.mxu0
  %v8316 = vadd.f32 0.0, %v8315
  %v8317 = vpop.f32.mrf.mxu0
  %v8318 = vadd.f32 0.0, %v8317
  %8319 = vmatmul.bf16.gmra.mxu0 %v8223
  %v8320 = vpop.f32.mrf.mxu0
  %v8321 = vadd.f32 0.0, %v8320
  %v8322 = vpop.f32.mrf.mxu0
  %v8323 = vadd.f32 0.0, %v8322
  %8324 = vmatmul.bf16.gmra.mxu0 %v8224
  %v8325 = vpop.f32.mrf.mxu0
  %v8326 = vadd.f32 0.0, %v8325
  %v8327 = vpop.f32.mrf.mxu0
  %v8328 = vadd.f32 0.0, %v8327
  %8329 = vdwg.mxu0
  %v8330 = vadd.f32 %v8185, %v8291
  %v8331 = vadd.f32 %v8186, %v8293
  %v8332 = vadd.f32 %v8187, %v8296
  %v8333 = vadd.f32 %v8188, %v8298
  %v8334 = vadd.f32 %v8189, %v8301
  %v8335 = vadd.f32 %v8190, %v8303
  %v8336 = vadd.f32 %v8191, %v8306
  %v8337 = vadd.f32 %v8192, %v8308
  %v8338 = vadd.f32 %v8193, %v8311
  %v8339 = vadd.f32 %v8194, %v8313
  %v8340 = vadd.f32 %v8195, %v8316
  %v8341 = vadd.f32 %v8196, %v8318
  %v8342 = vadd.f32 %v8197, %v8321
  %v8343 = vadd.f32 %v8198, %v8323
  %v8344 = vadd.f32 %v8199, %v8326
  %v8345 = vadd.f32 %v8200, %v8328
  %v8346 = vld [vmem:[%s2671] sm:$0xf]
  %v8347 = vld [vmem:[%s2671 + $0x4] sm:$0xf]
  %v8348 = vld [vmem:[%s2671 + $0x8] sm:$0xf]
  %v8349 = vld [vmem:[%s2671 + $0xc] sm:$0xf]
  %v8350 = vld [vmem:[%s2671 + $0x10] sm:$0xf]
  %v8351 = vld [vmem:[%s2671 + $0x14] sm:$0xf]
  %v8352 = vld [vmem:[%s2671 + $0x18] sm:$0xf]
  %v8353 = vld [vmem:[%s2671 + $0x1c] sm:$0xf]
  %v8354 = vld [vmem:[%s2671 + $0x20] sm:$0xf]
  %v8355 = vld [vmem:[%s2671 + $0x24] sm:$0xf]
  %v8356 = vld [vmem:[%s2671 + $0x28] sm:$0xf]
  %v8357 = vld [vmem:[%s2671 + $0x2c] sm:$0xf]
  %v8358 = vld [vmem:[%s2671 + $0x30] sm:$0xf]
  %v8359 = vld [vmem:[%s2671 + $0x34] sm:$0xf]
  %v8360 = vld [vmem:[%s2671 + $0x38] sm:$0xf]
  %v8361 = vld [vmem:[%s2671 + $0x3c] sm:$0xf]
  %v8362 = vpack.c.b16 %v6892, %v6891
  %v8380 = vunpack.c.l.b16 %v8346
  %v8381 = vunpack.c.l.b16 %v8347
  %v8382 = vunpack.c.l.b16 %v8348
  %v8383 = vunpack.c.l.b16 %v8349
  %v8384 = vunpack.c.l.b16 %v8350
  %v8385 = vunpack.c.l.b16 %v8351
  %v8386 = vunpack.c.l.b16 %v8352
  %v8387 = vunpack.c.l.b16 %v8353
  %v8388 = vunpack.c.l.b16 %v8354
  %v8389 = vunpack.c.l.b16 %v8355
  %v8390 = vunpack.c.l.b16 %v8356
  %v8391 = vunpack.c.l.b16 %v8357
  %v8392 = vunpack.c.l.b16 %v8358
  %v8393 = vunpack.c.l.b16 %v8359
  %v8394 = vunpack.c.l.b16 %v8360
  %v8395 = vunpack.c.l.b16 %v8361
  %v8396 = vpack.c.b16 %v8381, %v8380
  %v8397 = vpack.c.b16 %v8383, %v8382
  %v8398 = vpack.c.b16 %v8385, %v8384
  %v8399 = vpack.c.b16 %v8387, %v8386
  %v8400 = vpack.c.b16 %v8389, %v8388
  %v8401 = vpack.c.b16 %v8391, %v8390
  %v8402 = vpack.c.b16 %v8393, %v8392
  %v8403 = vpack.c.b16 %v8395, %v8394
  %8412 = vmatpush.bf16.msra.mxu0 %v8403
  %8413 = vmatpush.bf16.msra.mxu0 %v8402
  %8414 = vmatpush.bf16.msra.mxu0 %v8401
  %8415 = vmatpush.bf16.msra.mxu0 %v8400
  %8416 = vmatpush.bf16.msra.mxu0 %v8399
  %8417 = vmatpush.bf16.msra.mxu0 %v8398
  %8418 = vmatpush.bf16.msra.mxu0 %v8397
  %8419 = vmatpush.bf16.msra.mxu0 %v8396
  %8420 = vmatmul.bf16.gmra.mxu0 %v8218
  %v8421 = vpop.f32.mrf.mxu0
  %v8422 = vadd.f32 0.0, %v8421
  %v8423 = vpop.f32.mrf.mxu0
  %v8424 = vadd.f32 0.0, %v8423
  %8425 = vmatmul.bf16.gmra.mxu0 %v8219
  %v8426 = vpop.f32.mrf.mxu0
  %v8427 = vadd.f32 0.0, %v8426
  %v8428 = vpop.f32.mrf.mxu0
  %v8429 = vadd.f32 0.0, %v8428
  %8430 = vmatmul.bf16.gmra.mxu0 %v8220
  %v8431 = vpop.f32.mrf.mxu0
  %v8432 = vadd.f32 0.0, %v8431
  %v8433 = vpop.f32.mrf.mxu0
  %v8434 = vadd.f32 0.0, %v8433
  %8435 = vmatmul.bf16.gmra.mxu0 %v8221
  %v8436 = vpop.f32.mrf.mxu0
  %v8437 = vadd.f32 0.0, %v8436
  %v8438 = vpop.f32.mrf.mxu0
  %v8439 = vadd.f32 0.0, %v8438
  %8440 = vmatmul.bf16.gmra.mxu0 %v8222
  %v8441 = vpop.f32.mrf.mxu0
  %v8442 = vadd.f32 0.0, %v8441
  %v8443 = vpop.f32.mrf.mxu0
  %v8444 = vadd.f32 0.0, %v8443
  %8445 = vmatmul.bf16.gmra.mxu0 %v8223
  %v8446 = vpop.f32.mrf.mxu0
  %v8447 = vadd.f32 0.0, %v8446
  %v8448 = vpop.f32.mrf.mxu0
  %v8449 = vadd.f32 0.0, %v8448
  %8450 = vmatmul.bf16.gmra.mxu0 %v8224
  %v8451 = vpop.f32.mrf.mxu0
  %v8452 = vadd.f32 0.0, %v8451
  %v8453 = vpop.f32.mrf.mxu0
  %v8454 = vadd.f32 0.0, %v8453
  %8455 = vmatmul.bf16.gmra.mxu0 %v8362
  %v8456 = vpop.f32.mrf.mxu0
  %v8457 = vadd.f32 0.0, %v8456
  %v8458 = vpop.f32.mrf.mxu0
  %v8459 = vadd.f32 0.0, %v8458
  %8460 = vdwg.mxu0
  %v8461 = vadd.f32 %v8330, %v8422
  %v8462 = vadd.f32 %v8331, %v8424
  %v8463 = vadd.f32 %v8332, %v8427
  %v8464 = vadd.f32 %v8333, %v8429
  %v8465 = vadd.f32 %v8334, %v8432
  %v8466 = vadd.f32 %v8335, %v8434
  %v8467 = vadd.f32 %v8336, %v8437
  %v8468 = vadd.f32 %v8337, %v8439
  %v8469 = vadd.f32 %v8338, %v8442
  %v8470 = vadd.f32 %v8339, %v8444
  %v8471 = vadd.f32 %v8340, %v8447
  %v8472 = vadd.f32 %v8341, %v8449
  %v8473 = vadd.f32 %v8342, %v8452
  %v8474 = vadd.f32 %v8343, %v8454
  %v8475 = vadd.f32 %v8344, %v8457
  %v8476 = vadd.f32 %v8345, %v8459
  %v8477 = vld [vmem:[%s2803] sm:$0xf]
  %v8478 = vld [vmem:[%s2803 + $0x4] sm:$0xf]
  %v8479 = vld [vmem:[%s2803 + $0x8] sm:$0xf]
  %v8480 = vld [vmem:[%s2803 + $0xc] sm:$0xf]
  %v8481 = vld [vmem:[%s2803 + $0x10] sm:$0xf]
  %v8482 = vld [vmem:[%s2803 + $0x14] sm:$0xf]
  %v8483 = vld [vmem:[%s2803 + $0x18] sm:$0xf]
  %v8484 = vld [vmem:[%s2803 + $0x1c] sm:$0xf]
  %v8485 = vld [vmem:[%s2803 + $0x20] sm:$0xf]
  %v8486 = vld [vmem:[%s2803 + $0x24] sm:$0xf]
  %v8487 = vld [vmem:[%s2803 + $0x28] sm:$0xf]
  %v8488 = vld [vmem:[%s2803 + $0x2c] sm:$0xf]
  %v8489 = vld [vmem:[%s2803 + $0x30] sm:$0xf]
  %v8490 = vld [vmem:[%s2803 + $0x34] sm:$0xf]
  %v8491 = vld [vmem:[%s2803 + $0x38] sm:$0xf]
  %v8492 = vld [vmem:[%s2803 + $0x3c] sm:$0xf]
  %v8493 = vpack.c.b16 %v7275, %v7274
  %v8494 = vpack.c.b16 %v7277, %v7276
  %v8495 = vpack.c.b16 %v7279, %v7278
  %v8496 = vpack.c.b16 %v7281, %v7280
  %v8497 = vpack.c.b16 %v7283, %v7282
  %v8498 = vpack.c.b16 %v7285, %v7284
  %v8499 = vpack.c.b16 %v7287, %v7286
  %v8500 = vpack.c.b16 %v7289, %v7288
  %v8525 = vunpack.c.l.b16 %v8477
  %v8526 = vunpack.c.l.b16 %v8478
  %v8527 = vunpack.c.l.b16 %v8479
  %v8528 = vunpack.c.l.b16 %v8480
  %v8529 = vunpack.c.l.b16 %v8481
  %v8530 = vunpack.c.l.b16 %v8482
  %v8531 = vunpack.c.l.b16 %v8483
  %v8532 = vunpack.c.l.b16 %v8484
  %v8533 = vunpack.c.l.b16 %v8485
  %v8534 = vunpack.c.l.b16 %v8486
  %v8535 = vunpack.c.l.b16 %v8487
  %v8536 = vunpack.c.l.b16 %v8488
  %v8537 = vunpack.c.l.b16 %v8489
  %v8538 = vunpack.c.l.b16 %v8490
  %v8539 = vunpack.c.l.b16 %v8491
  %v8540 = vunpack.c.l.b16 %v8492
  %v8541 = vpack.c.b16 %v8526, %v8525
  %v8542 = vpack.c.b16 %v8528, %v8527
  %v8543 = vpack.c.b16 %v8530, %v8529
  %v8544 = vpack.c.b16 %v8532, %v8531
  %v8545 = vpack.c.b16 %v8534, %v8533
  %v8546 = vpack.c.b16 %v8536, %v8535
  %v8547 = vpack.c.b16 %v8538, %v8537
  %v8548 = vpack.c.b16 %v8540, %v8539
  %8557 = vmatpush.bf16.msra.mxu0 %v8548
  %8558 = vmatpush.bf16.msra.mxu0 %v8547
  %8559 = vmatpush.bf16.msra.mxu0 %v8546
  %8560 = vmatpush.bf16.msra.mxu0 %v8545
  %8561 = vmatpush.bf16.msra.mxu0 %v8544
  %8562 = vmatpush.bf16.msra.mxu0 %v8543
  %8563 = vmatpush.bf16.msra.mxu0 %v8542
  %8564 = vmatpush.bf16.msra.mxu0 %v8541
  %8565 = vmatmul.bf16.gmra.mxu0 %v8493
  %v8566 = vpop.f32.mrf.mxu0
  %v8567 = vadd.f32 0.0, %v8566
  %v8568 = vpop.f32.mrf.mxu0
  %v8569 = vadd.f32 0.0, %v8568
  %8570 = vmatmul.bf16.gmra.mxu0 %v8494
  %v8571 = vpop.f32.mrf.mxu0
  %v8572 = vadd.f32 0.0, %v8571
  %v8573 = vpop.f32.mrf.mxu0
  %v8574 = vadd.f32 0.0, %v8573
  %8575 = vmatmul.bf16.gmra.mxu0 %v8495
  %v8576 = vpop.f32.mrf.mxu0
  %v8577 = vadd.f32 0.0, %v8576
  %v8578 = vpop.f32.mrf.mxu0
  %v8579 = vadd.f32 0.0, %v8578
  %8580 = vmatmul.bf16.gmra.mxu0 %v8496
  %v8581 = vpop.f32.mrf.mxu0
  %v8582 = vadd.f32 0.0, %v8581
  %v8583 = vpop.f32.mrf.mxu0
  %v8584 = vadd.f32 0.0, %v8583
  %8585 = vmatmul.bf16.gmra.mxu0 %v8497
  %v8586 = vpop.f32.mrf.mxu0
  %v8587 = vadd.f32 0.0, %v8586
  %v8588 = vpop.f32.mrf.mxu0
  %v8589 = vadd.f32 0.0, %v8588
  %8590 = vmatmul.bf16.gmra.mxu0 %v8498
  %v8591 = vpop.f32.mrf.mxu0
  %v8592 = vadd.f32 0.0, %v8591
  %v8593 = vpop.f32.mrf.mxu0
  %v8594 = vadd.f32 0.0, %v8593
  %8595 = vmatmul.bf16.gmra.mxu0 %v8499
  %v8596 = vpop.f32.mrf.mxu0
  %v8597 = vadd.f32 0.0, %v8596
  %v8598 = vpop.f32.mrf.mxu0
  %v8599 = vadd.f32 0.0, %v8598
  %8600 = vmatmul.bf16.gmra.mxu0 %v8500
  %v8601 = vpop.f32.mrf.mxu0
  %v8602 = vadd.f32 0.0, %v8601
  %v8603 = vpop.f32.mrf.mxu0
  %v8604 = vadd.f32 0.0, %v8603
  %8605 = vdwg.mxu0
  %v8606 = vadd.f32 %v8461, %v8567
  %v8607 = vadd.f32 %v8462, %v8569
  %v8608 = vadd.f32 %v8463, %v8572
  %v8609 = vadd.f32 %v8464, %v8574
  %v8610 = vadd.f32 %v8465, %v8577
  %v8611 = vadd.f32 %v8466, %v8579
  %v8612 = vadd.f32 %v8467, %v8582
  %v8613 = vadd.f32 %v8468, %v8584
  %v8614 = vadd.f32 %v8469, %v8587
  %v8615 = vadd.f32 %v8470, %v8589
  %v8616 = vadd.f32 %v8471, %v8592
  %v8617 = vadd.f32 %v8472, %v8594
  %v8618 = vadd.f32 %v8473, %v8597
  %v8619 = vadd.f32 %v8474, %v8599
  %v8620 = vadd.f32 %v8475, %v8602
  %v8621 = vadd.f32 %v8476, %v8604
  %v8622 = vadd.f32 %v8606, %v8607
  %v8623 = vadd.f32 %v8622, %v8608
  %v8624 = vadd.f32 %v8623, %v8609
  %v8625 = vadd.f32 %v8624, %v8610
  %v8626 = vadd.f32 %v8625, %v8611
  %v8627 = vadd.f32 %v8626, %v8612
  %v8628 = vadd.f32 %v8627, %v8613
  %v8629 = vadd.f32 %v8628, %v8614
  %v8630 = vadd.f32 %v8629, %v8615
  %v8631 = vadd.f32 %v8630, %v8616
  %v8632 = vadd.f32 %v8631, %v8617
  %v8633 = vadd.f32 %v8632, %v8618
  %v8634 = vadd.f32 %v8633, %v8619
  %v8635 = vadd.f32 %v8634, %v8620
  %v8636 = vadd.f32 %v8635, %v8621
  %v8637 = vrot.slane %v8636, 4
  %v8638 = vadd.f32 %v8636, %v8637
  %v8639 = vrot.slane %v8638, 2
  %v8640 = vadd.f32 %v8638, %v8639
  %v8641 = vrot.slane %v8640, 1
  %v8642 = vadd.f32 %v8640, %v8641
  %v8643 = vadd.f32 %v6752, %v8642
  %v8644 = vmul.f32 %v8606, %v8606
  %v8645 = vmul.f32 %v8607, %v8607
  %v8646 = vmul.f32 %v8608, %v8608
  %v8647 = vmul.f32 %v8609, %v8609
  %v8648 = vmul.f32 %v8610, %v8610
  %v8649 = vmul.f32 %v8611, %v8611
  %v8650 = vmul.f32 %v8612, %v8612
  %v8651 = vmul.f32 %v8613, %v8613
  %v8652 = vmul.f32 %v8614, %v8614
  %v8653 = vmul.f32 %v8615, %v8615
  %v8654 = vmul.f32 %v8616, %v8616
  %v8655 = vmul.f32 %v8617, %v8617
  %v8656 = vmul.f32 %v8618, %v8618
  %v8657 = vmul.f32 %v8619, %v8619
  %v8658 = vmul.f32 %v8620, %v8620
  %v8659 = vmul.f32 %v8621, %v8621
  %v8660 = vadd.f32 %v8644, %v8645
  %v8661 = vadd.f32 %v8660, %v8646
  %v8662 = vadd.f32 %v8661, %v8647
  %v8663 = vadd.f32 %v8662, %v8648
  %v8664 = vadd.f32 %v8663, %v8649
  %v8665 = vadd.f32 %v8664, %v8650
  %v8666 = vadd.f32 %v8665, %v8651
  %v8667 = vadd.f32 %v8666, %v8652
  %v8668 = vadd.f32 %v8667, %v8653
  %v8669 = vadd.f32 %v8668, %v8654
  %v8670 = vadd.f32 %v8669, %v8655
  %v8671 = vadd.f32 %v8670, %v8656
  %v8672 = vadd.f32 %v8671, %v8657
  %v8673 = vadd.f32 %v8672, %v8658
  %v8674 = vadd.f32 %v8673, %v8659
  %v8675 = vrot.slane %v8674, 4
  %v8676 = vadd.f32 %v8674, %v8675
  %v8677 = vrot.slane %v8676, 2
  %v8678 = vadd.f32 %v8676, %v8677
  %v8679 = vrot.slane %v8678, 1
  %v8680 = vadd.f32 %v8678, %v8679
  %v8681 = vadd.f32 %v6790, %v8680
  %8682 = vst [vmem:[#allocation3 + $0x180] sm:$0xff] %v8606
  %8683 = vst [vmem:[#allocation3 + $0x188] sm:$0xff] %v8607
  %8684 = vst [vmem:[#allocation3 + $0x190] sm:$0xff] %v8608
  %8685 = vst [vmem:[#allocation3 + $0x198] sm:$0xff] %v8609
  %8686 = vst [vmem:[#allocation3 + $0x1a0] sm:$0xff] %v8610
  %8687 = vst [vmem:[#allocation3 + $0x1a8] sm:$0xff] %v8611
  %8688 = vst [vmem:[#allocation3 + $0x1b0] sm:$0xff] %v8612
  %8689 = vst [vmem:[#allocation3 + $0x1b8] sm:$0xff] %v8613
  %8690 = vst [vmem:[#allocation3 + $0x1c0] sm:$0xff] %v8614
  %8691 = vst [vmem:[#allocation3 + $0x1c8] sm:$0xff] %v8615
  %8692 = vst [vmem:[#allocation3 + $0x1d0] sm:$0xff] %v8616
  %8693 = vst [vmem:[#allocation3 + $0x1d8] sm:$0xff] %v8617
  %8694 = vst [vmem:[#allocation3 + $0x1e0] sm:$0xff] %v8618
  %8695 = vst [vmem:[#allocation3 + $0x1e8] sm:$0xff] %v8619
  %8696 = vst [vmem:[#allocation3 + $0x1f0] sm:$0xff] %v8620
  %8697 = vst [vmem:[#allocation3 + $0x1f8] sm:$0xff] %v8621
  %v8698 = vmul.f32 %v8643, 0.001953125
  %v8699 = vmul.f32 %v8681, 0.001953125
  %v8700 = vmul.f32 %v8698, %v8698
  %v8701 = vsub.f32 %v8699, %v8700
  %v8702 = vmax.f32 %v8701, 0.0
  %v8703 = vld [vmem:[%s6] sm:$0x1]
  %v8704 = vadd.f32 %v8702, 1e-05
  %v8705 = vrsqrt.pop %v8704
  %v8706 = vmul.f32 %v8705, %v8704
  %v8707 = vmul.f32 %v8706, %v8705
  %v8708 = vmul.f32 0.5, %v8707
  %v8709 = vsub.f32 1.5, %v8708
  %v8710 = vmul.f32 %v8705, %v8709
  %vm8711 = vweird.f32 %v8704
  %vm8712 = vweird.f32 %v8705
  %vm8713 = vmor %vm8711, %vm8712
  %v8714 = vsel %vm8713, %v8705, %v8710
  %v8715 = vmul.f32 %v8703, %v8714
  %v8716 = vld [vmem:[%s7] sm:$0x1]
  %v8717 = vmul.f32 %v8698, %v8715
  %v8718 = vsub.f32 %v8716, %v8717
  %v8719 = vld [vmem:[#allocation3] sm:$0xff]
  %v8720 = vld [vmem:[#allocation3 + $0x8] sm:$0xff]
  %v8721 = vld [vmem:[#allocation3 + $0x10] sm:$0xff]
  %v8722 = vld [vmem:[#allocation3 + $0x18] sm:$0xff]
  %v8723 = vld [vmem:[#allocation3 + $0x20] sm:$0xff]
  %v8724 = vld [vmem:[#allocation3 + $0x28] sm:$0xff]
  %v8725 = vld [vmem:[#allocation3 + $0x30] sm:$0xff]
  %v8726 = vld [vmem:[#allocation3 + $0x38] sm:$0xff]
  %v8727 = vld [vmem:[#allocation3 + $0x40] sm:$0xff]
  %v8728 = vld [vmem:[#allocation3 + $0x48] sm:$0xff]
  %v8729 = vld [vmem:[#allocation3 + $0x50] sm:$0xff]
  %v8730 = vld [vmem:[#allocation3 + $0x58] sm:$0xff]
  %v8731 = vld [vmem:[#allocation3 + $0x60] sm:$0xff]
  %v8732 = vld [vmem:[#allocation3 + $0x68] sm:$0xff]
  %v8733 = vld [vmem:[#allocation3 + $0x70] sm:$0xff]
  %v8734 = vld [vmem:[#allocation3 + $0x78] sm:$0xff]
  %v8735 = vld [vmem:[#allocation3 + $0x80] sm:$0xff]
  %v8736 = vld [vmem:[#allocation3 + $0x88] sm:$0xff]
  %v8737 = vld [vmem:[#allocation3 + $0x90] sm:$0xff]
  %v8738 = vld [vmem:[#allocation3 + $0x98] sm:$0xff]
  %v8739 = vld [vmem:[#allocation3 + $0xa0] sm:$0xff]
  %v8740 = vld [vmem:[#allocation3 + $0xa8] sm:$0xff]
  %v8741 = vld [vmem:[#allocation3 + $0xb0] sm:$0xff]
  %v8742 = vld [vmem:[#allocation3 + $0xb8] sm:$0xff]
  %v8743 = vld [vmem:[#allocation3 + $0xc0] sm:$0xff]
  %v8744 = vld [vmem:[#allocation3 + $0xc8] sm:$0xff]
  %v8745 = vld [vmem:[#allocation3 + $0xd0] sm:$0xff]
  %v8746 = vld [vmem:[#allocation3 + $0xd8] sm:$0xff]
  %v8747 = vld [vmem:[#allocation3 + $0xe0] sm:$0xff]
  %v8748 = vld [vmem:[#allocation3 + $0xe8] sm:$0xff]
  %v8749 = vld [vmem:[#allocation3 + $0xf0] sm:$0xff]
  %v8750 = vld [vmem:[#allocation3 + $0xf8] sm:$0xff]
  %v8751 = vld [vmem:[#allocation3 + $0x100] sm:$0xff]
  %v8752 = vld [vmem:[#allocation3 + $0x108] sm:$0xff]
  %v8753 = vld [vmem:[#allocation3 + $0x110] sm:$0xff]
  %v8754 = vld [vmem:[#allocation3 + $0x118] sm:$0xff]
  %v8755 = vld [vmem:[#allocation3 + $0x120] sm:$0xff]
  %v8756 = vld [vmem:[#allocation3 + $0x128] sm:$0xff]
  %v8757 = vld [vmem:[#allocation3 + $0x130] sm:$0xff]
  %v8758 = vld [vmem:[#allocation3 + $0x138] sm:$0xff]
  %v8759 = vld [vmem:[#allocation3 + $0x140] sm:$0xff]
  %v8760 = vld [vmem:[#allocation3 + $0x148] sm:$0xff]
  %v8761 = vld [vmem:[#allocation3 + $0x150] sm:$0xff]
  %v8762 = vld [vmem:[#allocation3 + $0x158] sm:$0xff]
  %v8763 = vld [vmem:[#allocation3 + $0x160] sm:$0xff]
  %v8764 = vld [vmem:[#allocation3 + $0x168] sm:$0xff]
  %v8765 = vld [vmem:[#allocation3 + $0x170] sm:$0xff]
  %v8766 = vld [vmem:[#allocation3 + $0x178] sm:$0xff]
  %v8767 = vld [vmem:[#allocation3 + $0x180] sm:$0xff]
  %v8768 = vld [vmem:[#allocation3 + $0x188] sm:$0xff]
  %v8769 = vld [vmem:[#allocation3 + $0x190] sm:$0xff]
  %v8770 = vld [vmem:[#allocation3 + $0x198] sm:$0xff]
  %v8771 = vld [vmem:[#allocation3 + $0x1a0] sm:$0xff]
  %v8772 = vld [vmem:[#allocation3 + $0x1a8] sm:$0xff]
  %v8773 = vld [vmem:[#allocation3 + $0x1b0] sm:$0xff]
  %v8774 = vld [vmem:[#allocation3 + $0x1b8] sm:$0xff]
  %v8775 = vld [vmem:[#allocation3 + $0x1c0] sm:$0xff]
  %v8776 = vld [vmem:[#allocation3 + $0x1c8] sm:$0xff]
  %v8777 = vld [vmem:[#allocation3 + $0x1d0] sm:$0xff]
  %v8778 = vld [vmem:[#allocation3 + $0x1d8] sm:$0xff]
  %v8779 = vld [vmem:[#allocation3 + $0x1e0] sm:$0xff]
  %v8780 = vld [vmem:[#allocation3 + $0x1e8] sm:$0xff]
  %v8781 = vld [vmem:[#allocation3 + $0x1f0] sm:$0xff]
  %v8782 = vld [vmem:[#allocation3 + $0x1f8] sm:$0xff]
  %v8784 = vperm.slane %v8715, 0
  %v8786 = vmul.f32 %v8719, %v8784
  %v8787 = vmul.f32 %v8720, %v8784
  %v8788 = vmul.f32 %v8721, %v8784
  %v8789 = vmul.f32 %v8722, %v8784
  %v8790 = vmul.f32 %v8723, %v8784
  %v8791 = vmul.f32 %v8724, %v8784
  %v8792 = vmul.f32 %v8725, %v8784
  %v8793 = vmul.f32 %v8726, %v8784
  %v8794 = vmul.f32 %v8727, %v8784
  %v8795 = vmul.f32 %v8728, %v8784
  %v8796 = vmul.f32 %v8729, %v8784
  %v8797 = vmul.f32 %v8730, %v8784
  %v8798 = vmul.f32 %v8731, %v8784
  %v8799 = vmul.f32 %v8732, %v8784
  %v8800 = vmul.f32 %v8733, %v8784
  %v8801 = vmul.f32 %v8734, %v8784
  %v8802 = vmul.f32 %v8735, %v8784
  %v8803 = vmul.f32 %v8736, %v8784
  %v8804 = vmul.f32 %v8737, %v8784
  %v8805 = vmul.f32 %v8738, %v8784
  %v8806 = vmul.f32 %v8739, %v8784
  %v8807 = vmul.f32 %v8740, %v8784
  %v8808 = vmul.f32 %v8741, %v8784
  %v8809 = vmul.f32 %v8742, %v8784
  %v8810 = vmul.f32 %v8743, %v8784
  %v8811 = vmul.f32 %v8744, %v8784
  %v8812 = vmul.f32 %v8745, %v8784
  %v8813 = vmul.f32 %v8746, %v8784
  %v8814 = vmul.f32 %v8747, %v8784
  %v8815 = vmul.f32 %v8748, %v8784
  %v8816 = vmul.f32 %v8749, %v8784
  %v8817 = vmul.f32 %v8750, %v8784
  %v8818 = vmul.f32 %v8751, %v8784
  %v8819 = vmul.f32 %v8752, %v8784
  %v8820 = vmul.f32 %v8753, %v8784
  %v8821 = vmul.f32 %v8754, %v8784
  %v8822 = vmul.f32 %v8755, %v8784
  %v8823 = vmul.f32 %v8756, %v8784
  %v8824 = vmul.f32 %v8757, %v8784
  %v8825 = vmul.f32 %v8758, %v8784
  %v8826 = vmul.f32 %v8759, %v8784
  %v8827 = vmul.f32 %v8760, %v8784
  %v8828 = vmul.f32 %v8761, %v8784
  %v8829 = vmul.f32 %v8762, %v8784
  %v8830 = vmul.f32 %v8763, %v8784
  %v8831 = vmul.f32 %v8764, %v8784
  %v8832 = vmul.f32 %v8765, %v8784
  %v8833 = vmul.f32 %v8766, %v8784
  %v8834 = vmul.f32 %v8767, %v8784
  %v8835 = vmul.f32 %v8768, %v8784
  %v8836 = vmul.f32 %v8769, %v8784
  %v8837 = vmul.f32 %v8770, %v8784
  %v8838 = vmul.f32 %v8771, %v8784
  %v8839 = vmul.f32 %v8772, %v8784
  %v8840 = vmul.f32 %v8773, %v8784
  %v8841 = vmul.f32 %v8774, %v8784
  %v8842 = vmul.f32 %v8775, %v8784
  %v8843 = vmul.f32 %v8776, %v8784
  %v8844 = vmul.f32 %v8777, %v8784
  %v8845 = vmul.f32 %v8778, %v8784
  %v8846 = vmul.f32 %v8779, %v8784
  %v8847 = vmul.f32 %v8780, %v8784
  %v8848 = vmul.f32 %v8781, %v8784
  %v8849 = vmul.f32 %v8782, %v8784
  %v8851 = vperm.slane %v8718, 0
  %v8853 = vadd.f32 %v8786, %v8851
  %v8854 = vadd.f32 %v8787, %v8851
  %v8855 = vadd.f32 %v8788, %v8851
  %v8856 = vadd.f32 %v8789, %v8851
  %v8857 = vadd.f32 %v8790, %v8851
  %v8858 = vadd.f32 %v8791, %v8851
  %v8859 = vadd.f32 %v8792, %v8851
  %v8860 = vadd.f32 %v8793, %v8851
  %v8861 = vadd.f32 %v8794, %v8851
  %v8862 = vadd.f32 %v8795, %v8851
  %v8863 = vadd.f32 %v8796, %v8851
  %v8864 = vadd.f32 %v8797, %v8851
  %v8865 = vadd.f32 %v8798, %v8851
  %v8866 = vadd.f32 %v8799, %v8851
  %v8867 = vadd.f32 %v8800, %v8851
  %v8868 = vadd.f32 %v8801, %v8851
  %v8869 = vadd.f32 %v8802, %v8851
  %v8870 = vadd.f32 %v8803, %v8851
  %v8871 = vadd.f32 %v8804, %v8851
  %v8872 = vadd.f32 %v8805, %v8851
  %v8873 = vadd.f32 %v8806, %v8851
  %v8874 = vadd.f32 %v8807, %v8851
  %v8875 = vadd.f32 %v8808, %v8851
  %v8876 = vadd.f32 %v8809, %v8851
  %v8877 = vadd.f32 %v8810, %v8851
  %v8878 = vadd.f32 %v8811, %v8851
  %v8879 = vadd.f32 %v8812, %v8851
  %v8880 = vadd.f32 %v8813, %v8851
  %v8881 = vadd.f32 %v8814, %v8851
  %v8882 = vadd.f32 %v8815, %v8851
  %v8883 = vadd.f32 %v8816, %v8851
  %v8884 = vadd.f32 %v8817, %v8851
  %v8885 = vadd.f32 %v8818, %v8851
  %v8886 = vadd.f32 %v8819, %v8851
  %v8887 = vadd.f32 %v8820, %v8851
  %v8888 = vadd.f32 %v8821, %v8851
  %v8889 = vadd.f32 %v8822, %v8851
  %v8890 = vadd.f32 %v8823, %v8851
  %v8891 = vadd.f32 %v8824, %v8851
  %v8892 = vadd.f32 %v8825, %v8851
  %v8893 = vadd.f32 %v8826, %v8851
  %v8894 = vadd.f32 %v8827, %v8851
  %v8895 = vadd.f32 %v8828, %v8851
  %v8896 = vadd.f32 %v8829, %v8851
  %v8897 = vadd.f32 %v8830, %v8851
  %v8898 = vadd.f32 %v8831, %v8851
  %v8899 = vadd.f32 %v8832, %v8851
  %v8900 = vadd.f32 %v8833, %v8851
  %v8901 = vadd.f32 %v8834, %v8851
  %v8902 = vadd.f32 %v8835, %v8851
  %v8903 = vadd.f32 %v8836, %v8851
  %v8904 = vadd.f32 %v8837, %v8851
  %v8905 = vadd.f32 %v8838, %v8851
  %v8906 = vadd.f32 %v8839, %v8851
  %v8907 = vadd.f32 %v8840, %v8851
  %v8908 = vadd.f32 %v8841, %v8851
  %v8909 = vadd.f32 %v8842, %v8851
  %v8910 = vadd.f32 %v8843, %v8851
  %v8911 = vadd.f32 %v8844, %v8851
  %v8912 = vadd.f32 %v8845, %v8851
  %v8913 = vadd.f32 %v8846, %v8851
  %v8914 = vadd.f32 %v8847, %v8851
  %v8915 = vadd.f32 %v8848, %v8851
  %v8916 = vadd.f32 %v8849, %v8851
  %v8917 = vmax.f32 %v8853, 0.0
  %v8918 = vmax.f32 %v8854, 0.0
  %v8919 = vmax.f32 %v8855, 0.0
  %v8920 = vmax.f32 %v8856, 0.0
  %v8921 = vmax.f32 %v8857, 0.0
  %v8922 = vmax.f32 %v8858, 0.0
  %v8923 = vmax.f32 %v8859, 0.0
  %v8924 = vmax.f32 %v8860, 0.0
  %v8925 = vmax.f32 %v8861, 0.0
  %v8926 = vmax.f32 %v8862, 0.0
  %v8927 = vmax.f32 %v8863, 0.0
  %v8928 = vmax.f32 %v8864, 0.0
  %v8929 = vmax.f32 %v8865, 0.0
  %v8930 = vmax.f32 %v8866, 0.0
  %v8931 = vmax.f32 %v8867, 0.0
  %v8932 = vmax.f32 %v8868, 0.0
  %v8933 = vmax.f32 %v8869, 0.0
  %v8934 = vmax.f32 %v8870, 0.0
  %v8935 = vmax.f32 %v8871, 0.0
  %v8936 = vmax.f32 %v8872, 0.0
  %v8937 = vmax.f32 %v8873, 0.0
  %v8938 = vmax.f32 %v8874, 0.0
  %v8939 = vmax.f32 %v8875, 0.0
  %v8940 = vmax.f32 %v8876, 0.0
  %v8941 = vmax.f32 %v8877, 0.0
  %v8942 = vmax.f32 %v8878, 0.0
  %v8943 = vmax.f32 %v8879, 0.0
  %v8944 = vmax.f32 %v8880, 0.0
  %v8945 = vmax.f32 %v8881, 0.0
  %v8946 = vmax.f32 %v8882, 0.0
  %v8947 = vmax.f32 %v8883, 0.0
  %v8948 = vmax.f32 %v8884, 0.0
  %v8949 = vmax.f32 %v8885, 0.0
  %v8950 = vmax.f32 %v8886, 0.0
  %v8951 = vmax.f32 %v8887, 0.0
  %v8952 = vmax.f32 %v8888, 0.0
  %v8953 = vmax.f32 %v8889, 0.0
  %v8954 = vmax.f32 %v8890, 0.0
  %v8955 = vmax.f32 %v8891, 0.0
  %v8956 = vmax.f32 %v8892, 0.0
  %v8957 = vmax.f32 %v8893, 0.0
  %v8958 = vmax.f32 %v8894, 0.0
  %v8959 = vmax.f32 %v8895, 0.0
  %v8960 = vmax.f32 %v8896, 0.0
  %v8961 = vmax.f32 %v8897, 0.0
  %v8962 = vmax.f32 %v8898, 0.0
  %v8963 = vmax.f32 %v8899, 0.0
  %v8964 = vmax.f32 %v8900, 0.0
  %v8965 = vmax.f32 %v8901, 0.0
  %v8966 = vmax.f32 %v8902, 0.0
  %v8967 = vmax.f32 %v8903, 0.0
  %v8968 = vmax.f32 %v8904, 0.0
  %v8969 = vmax.f32 %v8905, 0.0
  %v8970 = vmax.f32 %v8906, 0.0
  %v8971 = vmax.f32 %v8907, 0.0
  %v8972 = vmax.f32 %v8908, 0.0
  %v8973 = vmax.f32 %v8909, 0.0
  %v8974 = vmax.f32 %v8910, 0.0
  %v8975 = vmax.f32 %v8911, 0.0
  %v8976 = vmax.f32 %v8912, 0.0
  %v8977 = vmax.f32 %v8913, 0.0
  %v8978 = vmax.f32 %v8914, 0.0
  %v8979 = vmax.f32 %v8915, 0.0
  %v8980 = vmax.f32 %v8916, 0.0
  %v8981 = vpack.c.bf16 %v8918, %v8917
  %v8982 = vpack.c.bf16 %v8920, %v8919
  %v8983 = vpack.c.bf16 %v8922, %v8921
  %v8984 = vpack.c.bf16 %v8924, %v8923
  %v8985 = vpack.c.bf16 %v8926, %v8925
  %v8986 = vpack.c.bf16 %v8928, %v8927
  %v8987 = vpack.c.bf16 %v8930, %v8929
  %v8988 = vpack.c.bf16 %v8932, %v8931
  %v8989 = vpack.c.bf16 %v8934, %v8933
  %v8990 = vpack.c.bf16 %v8936, %v8935
  %v8991 = vpack.c.bf16 %v8938, %v8937
  %v8992 = vpack.c.bf16 %v8940, %v8939
  %v8993 = vpack.c.bf16 %v8942, %v8941
  %v8994 = vpack.c.bf16 %v8944, %v8943
  %v8995 = vpack.c.bf16 %v8946, %v8945
  %v8996 = vpack.c.bf16 %v8948, %v8947
  %v8997 = vpack.c.bf16 %v8950, %v8949
  %v8998 = vpack.c.bf16 %v8952, %v8951
  %v8999 = vpack.c.bf16 %v8954, %v8953
  %v9000 = vpack.c.bf16 %v8956, %v8955
  %v9001 = vpack.c.bf16 %v8958, %v8957
  %v9002 = vpack.c.bf16 %v8960, %v8959
  %v9003 = vpack.c.bf16 %v8962, %v8961
  %v9004 = vpack.c.bf16 %v8964, %v8963
  %v9005 = vpack.c.bf16 %v8966, %v8965
  %v9006 = vpack.c.bf16 %v8968, %v8967
  %v9007 = vpack.c.bf16 %v8970, %v8969
  %v9008 = vpack.c.bf16 %v8972, %v8971
  %v9009 = vpack.c.bf16 %v8974, %v8973
  %v9010 = vpack.c.bf16 %v8976, %v8975
  %v9011 = vpack.c.bf16 %v8978, %v8977
  %v9012 = vpack.c.bf16 %v8980, %v8979
  %v9013 = vld [vmem:[%s3] sm:$0xf]
  %v9014 = vld [vmem:[%s3 + $0x4] sm:$0xf]
  %v9015 = vld [vmem:[%s3 + $0x8] sm:$0xf]
  %v9016 = vld [vmem:[%s3 + $0xc] sm:$0xf]
  %v9017 = vld [vmem:[%s3 + $0x10] sm:$0xf]
  %v9018 = vld [vmem:[%s3 + $0x14] sm:$0xf]
  %v9019 = vld [vmem:[%s3 + $0x18] sm:$0xf]
  %v9020 = vld [vmem:[%s3 + $0x1c] sm:$0xf]
  %v9021 = vld [vmem:[%s3 + $0x20] sm:$0xf]
  %v9022 = vld [vmem:[%s3 + $0x24] sm:$0xf]
  %v9023 = vld [vmem:[%s3 + $0x28] sm:$0xf]
  %v9024 = vld [vmem:[%s3 + $0x2c] sm:$0xf]
  %v9025 = vld [vmem:[%s3 + $0x30] sm:$0xf]
  %v9026 = vld [vmem:[%s3 + $0x34] sm:$0xf]
  %v9027 = vld [vmem:[%s3 + $0x38] sm:$0xf]
  %v9028 = vld [vmem:[%s3 + $0x3c] sm:$0xf]
  %v9045 = vunpack.c.l.b16 %v9013
  %v9046 = vunpack.c.l.b16 %v9014
  %v9047 = vunpack.c.l.b16 %v9015
  %v9048 = vunpack.c.l.b16 %v9016
  %v9049 = vunpack.c.l.b16 %v9017
  %v9050 = vunpack.c.l.b16 %v9018
  %v9051 = vunpack.c.l.b16 %v9019
  %v9052 = vunpack.c.l.b16 %v9020
  %v9053 = vunpack.c.l.b16 %v9021
  %v9054 = vunpack.c.l.b16 %v9022
  %v9055 = vunpack.c.l.b16 %v9023
  %v9056 = vunpack.c.l.b16 %v9024
  %v9057 = vunpack.c.l.b16 %v9025
  %v9058 = vunpack.c.l.b16 %v9026
  %v9059 = vunpack.c.l.b16 %v9027
  %v9060 = vunpack.c.l.b16 %v9028
  %v9061 = vpack.c.b16 %v9046, %v9045
  %v9062 = vpack.c.b16 %v9048, %v9047
  %v9063 = vpack.c.b16 %v9050, %v9049
  %v9064 = vpack.c.b16 %v9052, %v9051
  %v9065 = vpack.c.b16 %v9054, %v9053
  %v9066 = vpack.c.b16 %v9056, %v9055
  %v9067 = vpack.c.b16 %v9058, %v9057
  %v9068 = vpack.c.b16 %v9060, %v9059
  %9077 = vmatpush.bf16.msra.mxu0 %v9068
  %9078 = vmatpush.bf16.msra.mxu0 %v9067
  %9079 = vmatpush.bf16.msra.mxu0 %v9066
  %9080 = vmatpush.bf16.msra.mxu0 %v9065
  %9081 = vmatpush.bf16.msra.mxu0 %v9064
  %9082 = vmatpush.bf16.msra.mxu0 %v9063
  %9083 = vmatpush.bf16.msra.mxu0 %v9062
  %9084 = vmatpush.bf16.msra.mxu0 %v9061
  %9085 = vmatmul.bf16.gmra.mxu0 %v8981
  %v9086 = vpop.f32.mrf.mxu0
  %v9087 = vadd.f32 0.0, %v9086
  %v9088 = vpop.f32.mrf.mxu0
  %v9089 = vadd.f32 0.0, %v9088
  %9090 = vmatmul.bf16.gmra.mxu0 %v8982
  %v9091 = vpop.f32.mrf.mxu0
  %v9092 = vadd.f32 0.0, %v9091
  %v9093 = vpop.f32.mrf.mxu0
  %v9094 = vadd.f32 0.0, %v9093
  %9095 = vmatmul.bf16.gmra.mxu0 %v8983
  %v9096 = vpop.f32.mrf.mxu0
  %v9097 = vadd.f32 0.0, %v9096
  %v9098 = vpop.f32.mrf.mxu0
  %v9099 = vadd.f32 0.0, %v9098
  %9100 = vmatmul.bf16.gmra.mxu0 %v8984
  %v9101 = vpop.f32.mrf.mxu0
  %v9102 = vadd.f32 0.0, %v9101
  %v9103 = vpop.f32.mrf.mxu0
  %v9104 = vadd.f32 0.0, %v9103
  %9105 = vmatmul.bf16.gmra.mxu0 %v8985
  %v9106 = vpop.f32.mrf.mxu0
  %v9107 = vadd.f32 0.0, %v9106
  %v9108 = vpop.f32.mrf.mxu0
  %v9109 = vadd.f32 0.0, %v9108
  %9110 = vmatmul.bf16.gmra.mxu0 %v8986
  %v9111 = vpop.f32.mrf.mxu0
  %v9112 = vadd.f32 0.0, %v9111
  %v9113 = vpop.f32.mrf.mxu0
  %v9114 = vadd.f32 0.0, %v9113
  %9115 = vmatmul.bf16.gmra.mxu0 %v8987
  %v9116 = vpop.f32.mrf.mxu0
  %v9117 = vadd.f32 0.0, %v9116
  %v9118 = vpop.f32.mrf.mxu0
  %v9119 = vadd.f32 0.0, %v9118
  %9120 = vmatmul.bf16.gmra.mxu0 %v8988
  %v9121 = vpop.f32.mrf.mxu0
  %v9122 = vadd.f32 0.0, %v9121
  %v9123 = vpop.f32.mrf.mxu0
  %v9124 = vadd.f32 0.0, %v9123
  %9125 = vmatmul.bf16.gmra.mxu0 %v8989
  %v9126 = vpop.f32.mrf.mxu0
  %v9127 = vadd.f32 0.0, %v9126
  %v9128 = vpop.f32.mrf.mxu0
  %v9129 = vadd.f32 0.0, %v9128
  %9130 = vmatmul.bf16.gmra.mxu0 %v8990
  %v9131 = vpop.f32.mrf.mxu0
  %v9132 = vadd.f32 0.0, %v9131
  %v9133 = vpop.f32.mrf.mxu0
  %v9134 = vadd.f32 0.0, %v9133
  %9135 = vmatmul.bf16.gmra.mxu0 %v8991
  %v9136 = vpop.f32.mrf.mxu0
  %v9137 = vadd.f32 0.0, %v9136
  %v9138 = vpop.f32.mrf.mxu0
  %v9139 = vadd.f32 0.0, %v9138
  %9140 = vmatmul.bf16.gmra.mxu0 %v8992
  %v9141 = vpop.f32.mrf.mxu0
  %v9142 = vadd.f32 0.0, %v9141
  %v9143 = vpop.f32.mrf.mxu0
  %v9144 = vadd.f32 0.0, %v9143
  %9145 = vmatmul.bf16.gmra.mxu0 %v8993
  %v9146 = vpop.f32.mrf.mxu0
  %v9147 = vadd.f32 0.0, %v9146
  %v9148 = vpop.f32.mrf.mxu0
  %v9149 = vadd.f32 0.0, %v9148
  %9150 = vmatmul.bf16.gmra.mxu0 %v8994
  %v9151 = vpop.f32.mrf.mxu0
  %v9152 = vadd.f32 0.0, %v9151
  %v9153 = vpop.f32.mrf.mxu0
  %v9154 = vadd.f32 0.0, %v9153
  %9155 = vmatmul.bf16.gmra.mxu0 %v8995
  %v9156 = vpop.f32.mrf.mxu0
  %v9157 = vadd.f32 0.0, %v9156
  %v9158 = vpop.f32.mrf.mxu0
  %v9159 = vadd.f32 0.0, %v9158
  %9160 = vmatmul.bf16.gmra.mxu0 %v8996
  %v9161 = vpop.f32.mrf.mxu0
  %v9162 = vadd.f32 0.0, %v9161
  %v9163 = vpop.f32.mrf.mxu0
  %v9164 = vadd.f32 0.0, %v9163
  %9165 = vmatmul.bf16.gmra.mxu0 %v8997
  %v9166 = vpop.f32.mrf.mxu0
  %v9167 = vadd.f32 0.0, %v9166
  %v9168 = vpop.f32.mrf.mxu0
  %v9169 = vadd.f32 0.0, %v9168
  %9170 = vmatmul.bf16.gmra.mxu0 %v8998
  %v9171 = vpop.f32.mrf.mxu0
  %v9172 = vadd.f32 0.0, %v9171
  %v9173 = vpop.f32.mrf.mxu0
  %v9174 = vadd.f32 0.0, %v9173
  %9175 = vmatmul.bf16.gmra.mxu0 %v8999
  %v9176 = vpop.f32.mrf.mxu0
  %v9177 = vadd.f32 0.0, %v9176
  %v9178 = vpop.f32.mrf.mxu0
  %v9179 = vadd.f32 0.0, %v9178
  %9180 = vmatmul.bf16.gmra.mxu0 %v9000
  %v9181 = vpop.f32.mrf.mxu0
  %v9182 = vadd.f32 0.0, %v9181
  %v9183 = vpop.f32.mrf.mxu0
  %v9184 = vadd.f32 0.0, %v9183
  %9185 = vmatmul.bf16.gmra.mxu0 %v9001
  %v9186 = vpop.f32.mrf.mxu0
  %v9187 = vadd.f32 0.0, %v9186
  %v9188 = vpop.f32.mrf.mxu0
  %v9189 = vadd.f32 0.0, %v9188
  %9190 = vmatmul.bf16.gmra.mxu0 %v9002
  %v9191 = vpop.f32.mrf.mxu0
  %v9192 = vadd.f32 0.0, %v9191
  %v9193 = vpop.f32.mrf.mxu0
  %v9194 = vadd.f32 0.0, %v9193
  %9195 = vmatmul.bf16.gmra.mxu0 %v9003
  %v9196 = vpop.f32.mrf.mxu0
  %v9197 = vadd.f32 0.0, %v9196
  %v9198 = vpop.f32.mrf.mxu0
  %v9199 = vadd.f32 0.0, %v9198
  %9200 = vmatmul.bf16.gmra.mxu0 %v9004
  %v9201 = vpop.f32.mrf.mxu0
  %v9202 = vadd.f32 0.0, %v9201
  %v9203 = vpop.f32.mrf.mxu0
  %v9204 = vadd.f32 0.0, %v9203
  %9205 = vmatmul.bf16.gmra.mxu0 %v9005
  %v9206 = vpop.f32.mrf.mxu0
  %v9207 = vadd.f32 0.0, %v9206
  %v9208 = vpop.f32.mrf.mxu0
  %v9209 = vadd.f32 0.0, %v9208
  %9210 = vmatmul.bf16.gmra.mxu0 %v9006
  %v9211 = vpop.f32.mrf.mxu0
  %v9212 = vadd.f32 0.0, %v9211
  %v9213 = vpop.f32.mrf.mxu0
  %v9214 = vadd.f32 0.0, %v9213
  %9215 = vmatmul.bf16.gmra.mxu0 %v9007
  %v9216 = vpop.f32.mrf.mxu0
  %v9217 = vadd.f32 0.0, %v9216
  %v9218 = vpop.f32.mrf.mxu0
  %v9219 = vadd.f32 0.0, %v9218
  %9220 = vmatmul.bf16.gmra.mxu0 %v9008
  %v9221 = vpop.f32.mrf.mxu0
  %v9222 = vadd.f32 0.0, %v9221
  %v9223 = vpop.f32.mrf.mxu0
  %v9224 = vadd.f32 0.0, %v9223
  %9225 = vmatmul.bf16.gmra.mxu0 %v9009
  %v9226 = vpop.f32.mrf.mxu0
  %v9227 = vadd.f32 0.0, %v9226
  %v9228 = vpop.f32.mrf.mxu0
  %v9229 = vadd.f32 0.0, %v9228
  %9230 = vmatmul.bf16.gmra.mxu0 %v9010
  %v9231 = vpop.f32.mrf.mxu0
  %v9232 = vadd.f32 0.0, %v9231
  %v9233 = vpop.f32.mrf.mxu0
  %v9234 = vadd.f32 0.0, %v9233
  %9235 = vmatmul.bf16.gmra.mxu0 %v9011
  %v9236 = vpop.f32.mrf.mxu0
  %v9237 = vadd.f32 0.0, %v9236
  %v9238 = vpop.f32.mrf.mxu0
  %v9239 = vadd.f32 0.0, %v9238
  %9240 = vmatmul.bf16.gmra.mxu0 %v9012
  %v9241 = vpop.f32.mrf.mxu0
  %v9242 = vadd.f32 0.0, %v9241
  %v9243 = vpop.f32.mrf.mxu0
  %v9244 = vadd.f32 0.0, %v9243
  %9245 = vdwg.mxu0
  %v9246 = vadd.f32 %v9087, %v9089
  %v9247 = vadd.f32 %v9246, %v9092
  %v9248 = vadd.f32 %v9247, %v9094
  %v9249 = vadd.f32 %v9248, %v9097
  %v9250 = vadd.f32 %v9249, %v9099
  %v9251 = vadd.f32 %v9250, %v9102
  %v9252 = vadd.f32 %v9251, %v9104
  %v9253 = vadd.f32 %v9252, %v9107
  %v9254 = vadd.f32 %v9253, %v9109
  %v9255 = vadd.f32 %v9254, %v9112
  %v9256 = vadd.f32 %v9255, %v9114
  %v9257 = vadd.f32 %v9256, %v9117
  %v9258 = vadd.f32 %v9257, %v9119
  %v9259 = vadd.f32 %v9258, %v9122
  %v9260 = vadd.f32 %v9259, %v9124
  %v9261 = vadd.f32 %v9260, %v9127
  %v9262 = vadd.f32 %v9261, %v9129
  %v9263 = vadd.f32 %v9262, %v9132
  %v9264 = vadd.f32 %v9263, %v9134
  %v9265 = vadd.f32 %v9264, %v9137
  %v9266 = vadd.f32 %v9265, %v9139
  %v9267 = vadd.f32 %v9266, %v9142
  %v9268 = vadd.f32 %v9267, %v9144
  %v9269 = vadd.f32 %v9268, %v9147
  %v9270 = vadd.f32 %v9269, %v9149
  %v9271 = vadd.f32 %v9270, %v9152
  %v9272 = vadd.f32 %v9271, %v9154
  %v9273 = vadd.f32 %v9272, %v9157
  %v9274 = vadd.f32 %v9273, %v9159
  %v9275 = vadd.f32 %v9274, %v9162
  %v9276 = vadd.f32 %v9275, %v9164
  %v9277 = vadd.f32 %v9276, %v9167
  %v9278 = vadd.f32 %v9277, %v9169
  %v9279 = vadd.f32 %v9278, %v9172
  %v9280 = vadd.f32 %v9279, %v9174
  %v9281 = vadd.f32 %v9280, %v9177
  %v9282 = vadd.f32 %v9281, %v9179
  %v9283 = vadd.f32 %v9282, %v9182
  %v9284 = vadd.f32 %v9283, %v9184
  %v9285 = vadd.f32 %v9284, %v9187
  %v9286 = vadd.f32 %v9285, %v9189
  %v9287 = vadd.f32 %v9286, %v9192
  %v9288 = vadd.f32 %v9287, %v9194
  %v9289 = vadd.f32 %v9288, %v9197
  %v9290 = vadd.f32 %v9289, %v9199
  %v9291 = vadd.f32 %v9290, %v9202
  %v9292 = vadd.f32 %v9291, %v9204
  %v9293 = vadd.f32 %v9292, %v9207
  %v9294 = vadd.f32 %v9293, %v9209
  %v9295 = vadd.f32 %v9294, %v9212
  %v9296 = vadd.f32 %v9295, %v9214
  %v9297 = vadd.f32 %v9296, %v9217
  %v9298 = vadd.f32 %v9297, %v9219
  %v9299 = vadd.f32 %v9298, %v9222
  %v9300 = vadd.f32 %v9299, %v9224
  %v9301 = vadd.f32 %v9300, %v9227
  %v9302 = vadd.f32 %v9301, %v9229
  %v9303 = vadd.f32 %v9302, %v9232
  %v9304 = vadd.f32 %v9303, %v9234
  %v9305 = vadd.f32 %v9304, %v9237
  %v9306 = vadd.f32 %v9305, %v9239
  %v9307 = vadd.f32 %v9306, %v9242
  %v9308 = vadd.f32 %v9307, %v9244
  %v9309 = vrot.slane %v9308, 4
  %v9310 = vadd.f32 %v9308, %v9309
  %v9311 = vrot.slane %v9310, 2
  %v9312 = vadd.f32 %v9310, %v9311
  %v9313 = vrot.slane %v9312, 1
  %v9314 = vadd.f32 %v9312, %v9313
  %v9315 = vmul.f32 %v9087, %v9087
  %v9316 = vmul.f32 %v9089, %v9089
  %v9317 = vmul.f32 %v9092, %v9092
  %v9318 = vmul.f32 %v9094, %v9094
  %v9319 = vmul.f32 %v9097, %v9097
  %v9320 = vmul.f32 %v9099, %v9099
  %v9321 = vmul.f32 %v9102, %v9102
  %v9322 = vmul.f32 %v9104, %v9104
  %v9323 = vmul.f32 %v9107, %v9107
  %v9324 = vmul.f32 %v9109, %v9109
  %v9325 = vmul.f32 %v9112, %v9112
  %v9326 = vmul.f32 %v9114, %v9114
  %v9327 = vmul.f32 %v9117, %v9117
  %v9328 = vmul.f32 %v9119, %v9119
  %v9329 = vmul.f32 %v9122, %v9122
  %v9330 = vmul.f32 %v9124, %v9124
  %v9331 = vmul.f32 %v9127, %v9127
  %v9332 = vmul.f32 %v9129, %v9129
  %v9333 = vmul.f32 %v9132, %v9132
  %v9334 = vmul.f32 %v9134, %v9134
  %v9335 = vmul.f32 %v9137, %v9137
  %v9336 = vmul.f32 %v9139, %v9139
  %v9337 = vmul.f32 %v9142, %v9142
  %v9338 = vmul.f32 %v9144, %v9144
  %v9339 = vmul.f32 %v9147, %v9147
  %v9340 = vmul.f32 %v9149, %v9149
  %v9341 = vmul.f32 %v9152, %v9152
  %v9342 = vmul.f32 %v9154, %v9154
  %v9343 = vmul.f32 %v9157, %v9157
  %v9344 = vmul.f32 %v9159, %v9159
  %v9345 = vmul.f32 %v9162, %v9162
  %v9346 = vmul.f32 %v9164, %v9164
  %v9347 = vmul.f32 %v9167, %v9167
  %v9348 = vmul.f32 %v9169, %v9169
  %v9349 = vmul.f32 %v9172, %v9172
  %v9350 = vmul.f32 %v9174, %v9174
  %v9351 = vmul.f32 %v9177, %v9177
  %v9352 = vmul.f32 %v9179, %v9179
  %v9353 = vmul.f32 %v9182, %v9182
  %v9354 = vmul.f32 %v9184, %v9184
  %v9355 = vmul.f32 %v9187, %v9187
  %v9356 = vmul.f32 %v9189, %v9189
  %v9357 = vmul.f32 %v9192, %v9192
  %v9358 = vmul.f32 %v9194, %v9194
  %v9359 = vmul.f32 %v9197, %v9197
  %v9360 = vmul.f32 %v9199, %v9199
  %v9361 = vmul.f32 %v9202, %v9202
  %v9362 = vmul.f32 %v9204, %v9204
  %v9363 = vmul.f32 %v9207, %v9207
  %v9364 = vmul.f32 %v9209, %v9209
  %v9365 = vmul.f32 %v9212, %v9212
  %v9366 = vmul.f32 %v9214, %v9214
  %v9367 = vmul.f32 %v9217, %v9217
  %v9368 = vmul.f32 %v9219, %v9219
  %v9369 = vmul.f32 %v9222, %v9222
  %v9370 = vmul.f32 %v9224, %v9224
  %v9371 = vmul.f32 %v9227, %v9227
  %v9372 = vmul.f32 %v9229, %v9229
  %v9373 = vmul.f32 %v9232, %v9232
  %v9374 = vmul.f32 %v9234, %v9234
  %v9375 = vmul.f32 %v9237, %v9237
  %v9376 = vmul.f32 %v9239, %v9239
  %v9377 = vmul.f32 %v9242, %v9242
  %v9378 = vmul.f32 %v9244, %v9244
  %v9379 = vadd.f32 %v9315, %v9316
  %v9380 = vadd.f32 %v9379, %v9317
  %v9381 = vadd.f32 %v9380, %v9318
  %v9382 = vadd.f32 %v9381, %v9319
  %v9383 = vadd.f32 %v9382, %v9320
  %v9384 = vadd.f32 %v9383, %v9321
  %v9385 = vadd.f32 %v9384, %v9322
  %v9386 = vadd.f32 %v9385, %v9323
  %v9387 = vadd.f32 %v9386, %v9324
  %v9388 = vadd.f32 %v9387, %v9325
  %v9389 = vadd.f32 %v9388, %v9326
  %v9390 = vadd.f32 %v9389, %v9327
  %v9391 = vadd.f32 %v9390, %v9328
  %v9392 = vadd.f32 %v9391, %v9329
  %v9393 = vadd.f32 %v9392, %v9330
  %v9394 = vadd.f32 %v9393, %v9331
  %v9395 = vadd.f32 %v9394, %v9332
  %v9396 = vadd.f32 %v9395, %v9333
  %v9397 = vadd.f32 %v9396, %v9334
  %v9398 = vadd.f32 %v9397, %v9335
  %v9399 = vadd.f32 %v9398, %v9336
  %v9400 = vadd.f32 %v9399, %v9337
  %v9401 = vadd.f32 %v9400, %v9338
  %v9402 = vadd.f32 %v9401, %v9339
  %v9403 = vadd.f32 %v9402, %v9340
  %v9404 = vadd.f32 %v9403, %v9341
  %v9405 = vadd.f32 %v9404, %v9342
  %v9406 = vadd.f32 %v9405, %v9343
  %v9407 = vadd.f32 %v9406, %v9344
  %v9408 = vadd.f32 %v9407, %v9345
  %v9409 = vadd.f32 %v9408, %v9346
  %v9410 = vadd.f32 %v9409, %v9347
  %v9411 = vadd.f32 %v9410, %v9348
  %v9412 = vadd.f32 %v9411, %v9349
  %v9413 = vadd.f32 %v9412, %v9350
  %v9414 = vadd.f32 %v9413, %v9351
  %v9415 = vadd.f32 %v9414, %v9352
  %v9416 = vadd.f32 %v9415, %v9353
  %v9417 = vadd.f32 %v9416, %v9354
  %v9418 = vadd.f32 %v9417, %v9355
  %v9419 = vadd.f32 %v9418, %v9356
  %v9420 = vadd.f32 %v9419, %v9357
  %v9421 = vadd.f32 %v9420, %v9358
  %v9422 = vadd.f32 %v9421, %v9359
  %v9423 = vadd.f32 %v9422, %v9360
  %v9424 = vadd.f32 %v9423, %v9361
  %v9425 = vadd.f32 %v9424, %v9362
  %v9426 = vadd.f32 %v9425, %v9363
  %v9427 = vadd.f32 %v9426, %v9364
  %v9428 = vadd.f32 %v9427, %v9365
  %v9429 = vadd.f32 %v9428, %v9366
  %v9430 = vadd.f32 %v9429, %v9367
  %v9431 = vadd.f32 %v9430, %v9368
  %v9432 = vadd.f32 %v9431, %v9369
  %v9433 = vadd.f32 %v9432, %v9370
  %v9434 = vadd.f32 %v9433, %v9371
  %v9435 = vadd.f32 %v9434, %v9372
  %v9436 = vadd.f32 %v9435, %v9373
  %v9437 = vadd.f32 %v9436, %v9374
  %v9438 = vadd.f32 %v9437, %v9375
  %v9439 = vadd.f32 %v9438, %v9376
  %v9440 = vadd.f32 %v9439, %v9377
  %v9441 = vadd.f32 %v9440, %v9378
  %v9442 = vrot.slane %v9441, 4
  %v9443 = vadd.f32 %v9441, %v9442
  %v9444 = vrot.slane %v9443, 2
  %v9445 = vadd.f32 %v9443, %v9444
  %v9446 = vrot.slane %v9445, 1
  %v9447 = vadd.f32 %v9445, %v9446
  %v9448 = vmul.f32 %v9314, 0.001953125
  %v9449 = vmul.f32 %v9447, 0.001953125
  %v9450 = vmul.f32 %v9448, %v9448
  %v9451 = vsub.f32 %v9449, %v9450
  %v9452 = vmax.f32 %v9451, 0.0
  %v9453 = vld [vmem:[%s8] sm:$0x1]
  %v9454 = vadd.f32 %v9452, 1e-05
  %v9455 = vrsqrt.pop %v9454
  %v9456 = vmul.f32 %v9455, %v9454
  %v9457 = vmul.f32 %v9456, %v9455
  %v9458 = vmul.f32 0.5, %v9457
  %v9459 = vsub.f32 1.5, %v9458
  %v9460 = vmul.f32 %v9455, %v9459
  %vm9461 = vweird.f32 %v9454
  %vm9462 = vweird.f32 %v9455
  %vm9463 = vmor %vm9461, %vm9462
  %v9464 = vsel %vm9463, %v9455, %v9460
  %v9465 = vmul.f32 %v9453, %v9464
  %v9466 = vld [vmem:[%s9] sm:$0x1]
  %v9467 = vmul.f32 %v9448, %v9465
  %v9468 = vsub.f32 %v9466, %v9467
  %v9470 = vperm.slane %v9465, 0
  %v9472 = vmul.f32 %v9087, %v9470
  %v9473 = vmul.f32 %v9089, %v9470
  %v9474 = vmul.f32 %v9092, %v9470
  %v9475 = vmul.f32 %v9094, %v9470
  %v9476 = vmul.f32 %v9097, %v9470
  %v9477 = vmul.f32 %v9099, %v9470
  %v9478 = vmul.f32 %v9102, %v9470
  %v9479 = vmul.f32 %v9104, %v9470
  %v9480 = vmul.f32 %v9107, %v9470
  %v9481 = vmul.f32 %v9109, %v9470
  %v9482 = vmul.f32 %v9112, %v9470
  %v9483 = vmul.f32 %v9114, %v9470
  %v9484 = vmul.f32 %v9117, %v9470
  %v9485 = vmul.f32 %v9119, %v9470
  %v9486 = vmul.f32 %v9122, %v9470
  %v9487 = vmul.f32 %v9124, %v9470
  %v9488 = vmul.f32 %v9127, %v9470
  %v9489 = vmul.f32 %v9129, %v9470
  %v9490 = vmul.f32 %v9132, %v9470
  %v9491 = vmul.f32 %v9134, %v9470
  %v9492 = vmul.f32 %v9137, %v9470
  %v9493 = vmul.f32 %v9139, %v9470
  %v9494 = vmul.f32 %v9142, %v9470
  %v9495 = vmul.f32 %v9144, %v9470
  %v9496 = vmul.f32 %v9147, %v9470
  %v9497 = vmul.f32 %v9149, %v9470
  %v9498 = vmul.f32 %v9152, %v9470
  %v9499 = vmul.f32 %v9154, %v9470
  %v9500 = vmul.f32 %v9157, %v9470
  %v9501 = vmul.f32 %v9159, %v9470
  %v9502 = vmul.f32 %v9162, %v9470
  %v9503 = vmul.f32 %v9164, %v9470
  %v9504 = vmul.f32 %v9167, %v9470
  %v9505 = vmul.f32 %v9169, %v9470
  %v9506 = vmul.f32 %v9172, %v9470
  %v9507 = vmul.f32 %v9174, %v9470
  %v9508 = vmul.f32 %v9177, %v9470
  %v9509 = vmul.f32 %v9179, %v9470
  %v9510 = vmul.f32 %v9182, %v9470
  %v9511 = vmul.f32 %v9184, %v9470
  %v9512 = vmul.f32 %v9187, %v9470
  %v9513 = vmul.f32 %v9189, %v9470
  %v9514 = vmul.f32 %v9192, %v9470
  %v9515 = vmul.f32 %v9194, %v9470
  %v9516 = vmul.f32 %v9197, %v9470
  %v9517 = vmul.f32 %v9199, %v9470
  %v9518 = vmul.f32 %v9202, %v9470
  %v9519 = vmul.f32 %v9204, %v9470
  %v9520 = vmul.f32 %v9207, %v9470
  %v9521 = vmul.f32 %v9209, %v9470
  %v9522 = vmul.f32 %v9212, %v9470
  %v9523 = vmul.f32 %v9214, %v9470
  %v9524 = vmul.f32 %v9217, %v9470
  %v9525 = vmul.f32 %v9219, %v9470
  %v9526 = vmul.f32 %v9222, %v9470
  %v9527 = vmul.f32 %v9224, %v9470
  %v9528 = vmul.f32 %v9227, %v9470
  %v9529 = vmul.f32 %v9229, %v9470
  %v9530 = vmul.f32 %v9232, %v9470
  %v9531 = vmul.f32 %v9234, %v9470
  %v9532 = vmul.f32 %v9237, %v9470
  %v9533 = vmul.f32 %v9239, %v9470
  %v9534 = vmul.f32 %v9242, %v9470
  %v9535 = vmul.f32 %v9244, %v9470
  %v9537 = vperm.slane %v9468, 0
  %v9539 = vadd.f32 %v9472, %v9537
  %v9540 = vadd.f32 %v9473, %v9537
  %v9541 = vadd.f32 %v9474, %v9537
  %v9542 = vadd.f32 %v9475, %v9537
  %v9543 = vadd.f32 %v9476, %v9537
  %v9544 = vadd.f32 %v9477, %v9537
  %v9545 = vadd.f32 %v9478, %v9537
  %v9546 = vadd.f32 %v9479, %v9537
  %v9547 = vadd.f32 %v9480, %v9537
  %v9548 = vadd.f32 %v9481, %v9537
  %v9549 = vadd.f32 %v9482, %v9537
  %v9550 = vadd.f32 %v9483, %v9537
  %v9551 = vadd.f32 %v9484, %v9537
  %v9552 = vadd.f32 %v9485, %v9537
  %v9553 = vadd.f32 %v9486, %v9537
  %v9554 = vadd.f32 %v9487, %v9537
  %v9555 = vadd.f32 %v9488, %v9537
  %v9556 = vadd.f32 %v9489, %v9537
  %v9557 = vadd.f32 %v9490, %v9537
  %v9558 = vadd.f32 %v9491, %v9537
  %v9559 = vadd.f32 %v9492, %v9537
  %v9560 = vadd.f32 %v9493, %v9537
  %v9561 = vadd.f32 %v9494, %v9537
  %v9562 = vadd.f32 %v9495, %v9537
  %v9563 = vadd.f32 %v9496, %v9537
  %v9564 = vadd.f32 %v9497, %v9537
  %v9565 = vadd.f32 %v9498, %v9537
  %v9566 = vadd.f32 %v9499, %v9537
  %v9567 = vadd.f32 %v9500, %v9537
  %v9568 = vadd.f32 %v9501, %v9537
  %v9569 = vadd.f32 %v9502, %v9537
  %v9570 = vadd.f32 %v9503, %v9537
  %v9571 = vadd.f32 %v9504, %v9537
  %v9572 = vadd.f32 %v9505, %v9537
  %v9573 = vadd.f32 %v9506, %v9537
  %v9574 = vadd.f32 %v9507, %v9537
  %v9575 = vadd.f32 %v9508, %v9537
  %v9576 = vadd.f32 %v9509, %v9537
  %v9577 = vadd.f32 %v9510, %v9537
  %v9578 = vadd.f32 %v9511, %v9537
  %v9579 = vadd.f32 %v9512, %v9537
  %v9580 = vadd.f32 %v9513, %v9537
  %v9581 = vadd.f32 %v9514, %v9537
  %v9582 = vadd.f32 %v9515, %v9537
  %v9583 = vadd.f32 %v9516, %v9537
  %v9584 = vadd.f32 %v9517, %v9537
  %v9585 = vadd.f32 %v9518, %v9537
  %v9586 = vadd.f32 %v9519, %v9537
  %v9587 = vadd.f32 %v9520, %v9537
  %v9588 = vadd.f32 %v9521, %v9537
  %v9589 = vadd.f32 %v9522, %v9537
  %v9590 = vadd.f32 %v9523, %v9537
  %v9591 = vadd.f32 %v9524, %v9537
  %v9592 = vadd.f32 %v9525, %v9537
  %v9593 = vadd.f32 %v9526, %v9537
  %v9594 = vadd.f32 %v9527, %v9537
  %v9595 = vadd.f32 %v9528, %v9537
  %v9596 = vadd.f32 %v9529, %v9537
  %v9597 = vadd.f32 %v9530, %v9537
  %v9598 = vadd.f32 %v9531, %v9537
  %v9599 = vadd.f32 %v9532, %v9537
  %v9600 = vadd.f32 %v9533, %v9537
  %v9601 = vadd.f32 %v9534, %v9537
  %v9602 = vadd.f32 %v9535, %v9537
  %v9603 = vld [vmem:[%s0] sm:$0xff]
  %v9604 = vld [vmem:[%s0 + $0x8] sm:$0xff]
  %v9605 = vld [vmem:[%s0 + $0x10] sm:$0xff]
  %v9606 = vld [vmem:[%s0 + $0x18] sm:$0xff]
  %v9607 = vld [vmem:[%s0 + $0x20] sm:$0xff]
  %v9608 = vld [vmem:[%s0 + $0x28] sm:$0xff]
  %v9609 = vld [vmem:[%s0 + $0x30] sm:$0xff]
  %v9610 = vld [vmem:[%s0 + $0x38] sm:$0xff]
  %v9611 = vld [vmem:[%s0 + $0x40] sm:$0xff]
  %v9612 = vld [vmem:[%s0 + $0x48] sm:$0xff]
  %v9613 = vld [vmem:[%s0 + $0x50] sm:$0xff]
  %v9614 = vld [vmem:[%s0 + $0x58] sm:$0xff]
  %v9615 = vld [vmem:[%s0 + $0x60] sm:$0xff]
  %v9616 = vld [vmem:[%s0 + $0x68] sm:$0xff]
  %v9617 = vld [vmem:[%s0 + $0x70] sm:$0xff]
  %v9618 = vld [vmem:[%s0 + $0x78] sm:$0xff]
  %v9619 = vld [vmem:[%s0 + $0x80] sm:$0xff]
  %v9620 = vld [vmem:[%s0 + $0x88] sm:$0xff]
  %v9621 = vld [vmem:[%s0 + $0x90] sm:$0xff]
  %v9622 = vld [vmem:[%s0 + $0x98] sm:$0xff]
  %v9623 = vld [vmem:[%s0 + $0xa0] sm:$0xff]
  %v9624 = vld [vmem:[%s0 + $0xa8] sm:$0xff]
  %v9625 = vld [vmem:[%s0 + $0xb0] sm:$0xff]
  %v9626 = vld [vmem:[%s0 + $0xb8] sm:$0xff]
  %v9627 = vld [vmem:[%s0 + $0xc0] sm:$0xff]
  %v9628 = vld [vmem:[%s0 + $0xc8] sm:$0xff]
  %v9629 = vld [vmem:[%s0 + $0xd0] sm:$0xff]
  %v9630 = vld [vmem:[%s0 + $0xd8] sm:$0xff]
  %v9631 = vld [vmem:[%s0 + $0xe0] sm:$0xff]
  %v9632 = vld [vmem:[%s0 + $0xe8] sm:$0xff]
  %v9633 = vld [vmem:[%s0 + $0xf0] sm:$0xff]
  %v9634 = vld [vmem:[%s0 + $0xf8] sm:$0xff]
  %v9635 = vld [vmem:[%s0 + $0x100] sm:$0xff]
  %v9636 = vld [vmem:[%s0 + $0x108] sm:$0xff]
  %v9637 = vld [vmem:[%s0 + $0x110] sm:$0xff]
  %v9638 = vld [vmem:[%s0 + $0x118] sm:$0xff]
  %v9639 = vld [vmem:[%s0 + $0x120] sm:$0xff]
  %v9640 = vld [vmem:[%s0 + $0x128] sm:$0xff]
  %v9641 = vld [vmem:[%s0 + $0x130] sm:$0xff]
  %v9642 = vld [vmem:[%s0 + $0x138] sm:$0xff]
  %v9643 = vld [vmem:[%s0 + $0x140] sm:$0xff]
  %v9644 = vld [vmem:[%s0 + $0x148] sm:$0xff]
  %v9645 = vld [vmem:[%s0 + $0x150] sm:$0xff]
  %v9646 = vld [vmem:[%s0 + $0x158] sm:$0xff]
  %v9647 = vld [vmem:[%s0 + $0x160] sm:$0xff]
  %v9648 = vld [vmem:[%s0 + $0x168] sm:$0xff]
  %v9649 = vld [vmem:[%s0 + $0x170] sm:$0xff]
  %v9650 = vld [vmem:[%s0 + $0x178] sm:$0xff]
  %v9651 = vld [vmem:[%s0 + $0x180] sm:$0xff]
  %v9652 = vld [vmem:[%s0 + $0x188] sm:$0xff]
  %v9653 = vld [vmem:[%s0 + $0x190] sm:$0xff]
  %v9654 = vld [vmem:[%s0 + $0x198] sm:$0xff]
  %v9655 = vld [vmem:[%s0 + $0x1a0] sm:$0xff]
  %v9656 = vld [vmem:[%s0 + $0x1a8] sm:$0xff]
  %v9657 = vld [vmem:[%s0 + $0x1b0] sm:$0xff]
  %v9658 = vld [vmem:[%s0 + $0x1b8] sm:$0xff]
  %v9659 = vld [vmem:[%s0 + $0x1c0] sm:$0xff]
  %v9660 = vld [vmem:[%s0 + $0x1c8] sm:$0xff]
  %v9661 = vld [vmem:[%s0 + $0x1d0] sm:$0xff]
  %v9662 = vld [vmem:[%s0 + $0x1d8] sm:$0xff]
  %v9663 = vld [vmem:[%s0 + $0x1e0] sm:$0xff]
  %v9664 = vld [vmem:[%s0 + $0x1e8] sm:$0xff]
  %v9665 = vld [vmem:[%s0 + $0x1f0] sm:$0xff]
  %v9666 = vld [vmem:[%s0 + $0x1f8] sm:$0xff]
  %v9667 = vadd.f32 %v9539, %v9603
  %v9668 = vadd.f32 %v9540, %v9604
  %v9669 = vadd.f32 %v9541, %v9605
  %v9670 = vadd.f32 %v9542, %v9606
  %v9671 = vadd.f32 %v9543, %v9607
  %v9672 = vadd.f32 %v9544, %v9608
  %v9673 = vadd.f32 %v9545, %v9609
  %v9674 = vadd.f32 %v9546, %v9610
  %v9675 = vadd.f32 %v9547, %v9611
  %v9676 = vadd.f32 %v9548, %v9612
  %v9677 = vadd.f32 %v9549, %v9613
  %v9678 = vadd.f32 %v9550, %v9614
  %v9679 = vadd.f32 %v9551, %v9615
  %v9680 = vadd.f32 %v9552, %v9616
  %v9681 = vadd.f32 %v9553, %v9617
  %v9682 = vadd.f32 %v9554, %v9618
  %v9683 = vadd.f32 %v9555, %v9619
  %v9684 = vadd.f32 %v9556, %v9620
  %v9685 = vadd.f32 %v9557, %v9621
  %v9686 = vadd.f32 %v9558, %v9622
  %v9687 = vadd.f32 %v9559, %v9623
  %v9688 = vadd.f32 %v9560, %v9624
  %v9689 = vadd.f32 %v9561, %v9625
  %v9690 = vadd.f32 %v9562, %v9626
  %v9691 = vadd.f32 %v9563, %v9627
  %v9692 = vadd.f32 %v9564, %v9628
  %v9693 = vadd.f32 %v9565, %v9629
  %v9694 = vadd.f32 %v9566, %v9630
  %v9695 = vadd.f32 %v9567, %v9631
  %v9696 = vadd.f32 %v9568, %v9632
  %v9697 = vadd.f32 %v9569, %v9633
  %v9698 = vadd.f32 %v9570, %v9634
  %v9699 = vadd.f32 %v9571, %v9635
  %v9700 = vadd.f32 %v9572, %v9636
  %v9701 = vadd.f32 %v9573, %v9637
  %v9702 = vadd.f32 %v9574, %v9638
  %v9703 = vadd.f32 %v9575, %v9639
  %v9704 = vadd.f32 %v9576, %v9640
  %v9705 = vadd.f32 %v9577, %v9641
  %v9706 = vadd.f32 %v9578, %v9642
  %v9707 = vadd.f32 %v9579, %v9643
  %v9708 = vadd.f32 %v9580, %v9644
  %v9709 = vadd.f32 %v9581, %v9645
  %v9710 = vadd.f32 %v9582, %v9646
  %v9711 = vadd.f32 %v9583, %v9647
  %v9712 = vadd.f32 %v9584, %v9648
  %v9713 = vadd.f32 %v9585, %v9649
  %v9714 = vadd.f32 %v9586, %v9650
  %v9715 = vadd.f32 %v9587, %v9651
  %v9716 = vadd.f32 %v9588, %v9652
  %v9717 = vadd.f32 %v9589, %v9653
  %v9718 = vadd.f32 %v9590, %v9654
  %v9719 = vadd.f32 %v9591, %v9655
  %v9720 = vadd.f32 %v9592, %v9656
  %v9721 = vadd.f32 %v9593, %v9657
  %v9722 = vadd.f32 %v9594, %v9658
  %v9723 = vadd.f32 %v9595, %v9659
  %v9724 = vadd.f32 %v9596, %v9660
  %v9725 = vadd.f32 %v9597, %v9661
  %v9726 = vadd.f32 %v9598, %v9662
  %v9727 = vadd.f32 %v9599, %v9663
  %v9728 = vadd.f32 %v9600, %v9664
  %v9729 = vadd.f32 %v9601, %v9665
  %v9730 = vadd.f32 %v9602, %v9666
  %v9731 = vmax.f32 %v9667, 0.0
  %v9732 = vmax.f32 %v9668, 0.0
  %v9733 = vmax.f32 %v9669, 0.0
  %v9734 = vmax.f32 %v9670, 0.0
  %v9735 = vmax.f32 %v9671, 0.0
  %v9736 = vmax.f32 %v9672, 0.0
  %v9737 = vmax.f32 %v9673, 0.0
  %v9738 = vmax.f32 %v9674, 0.0
  %v9739 = vmax.f32 %v9675, 0.0
  %v9740 = vmax.f32 %v9676, 0.0
  %v9741 = vmax.f32 %v9677, 0.0
  %v9742 = vmax.f32 %v9678, 0.0
  %v9743 = vmax.f32 %v9679, 0.0
  %v9744 = vmax.f32 %v9680, 0.0
  %v9745 = vmax.f32 %v9681, 0.0
  %v9746 = vmax.f32 %v9682, 0.0
  %v9747 = vmax.f32 %v9683, 0.0
  %v9748 = vmax.f32 %v9684, 0.0
  %v9749 = vmax.f32 %v9685, 0.0
  %v9750 = vmax.f32 %v9686, 0.0
  %v9751 = vmax.f32 %v9687, 0.0
  %v9752 = vmax.f32 %v9688, 0.0
  %v9753 = vmax.f32 %v9689, 0.0
  %v9754 = vmax.f32 %v9690, 0.0
  %v9755 = vmax.f32 %v9691, 0.0
  %v9756 = vmax.f32 %v9692, 0.0
  %v9757 = vmax.f32 %v9693, 0.0
  %v9758 = vmax.f32 %v9694, 0.0
  %v9759 = vmax.f32 %v9695, 0.0
  %v9760 = vmax.f32 %v9696, 0.0
  %v9761 = vmax.f32 %v9697, 0.0
  %v9762 = vmax.f32 %v9698, 0.0
  %v9763 = vmax.f32 %v9699, 0.0
  %v9764 = vmax.f32 %v9700, 0.0
  %v9765 = vmax.f32 %v9701, 0.0
  %v9766 = vmax.f32 %v9702, 0.0
  %v9767 = vmax.f32 %v9703, 0.0
  %v9768 = vmax.f32 %v9704, 0.0
  %v9769 = vmax.f32 %v9705, 0.0
  %v9770 = vmax.f32 %v9706, 0.0
  %v9771 = vmax.f32 %v9707, 0.0
  %v9772 = vmax.f32 %v9708, 0.0
  %v9773 = vmax.f32 %v9709, 0.0
  %v9774 = vmax.f32 %v9710, 0.0
  %v9775 = vmax.f32 %v9711, 0.0
  %v9776 = vmax.f32 %v9712, 0.0
  %v9777 = vmax.f32 %v9713, 0.0
  %v9778 = vmax.f32 %v9714, 0.0
  %v9779 = vmax.f32 %v9715, 0.0
  %v9780 = vmax.f32 %v9716, 0.0
  %v9781 = vmax.f32 %v9717, 0.0
  %v9782 = vmax.f32 %v9718, 0.0
  %v9783 = vmax.f32 %v9719, 0.0
  %v9784 = vmax.f32 %v9720, 0.0
  %v9785 = vmax.f32 %v9721, 0.0
  %v9786 = vmax.f32 %v9722, 0.0
  %v9787 = vmax.f32 %v9723, 0.0
  %v9788 = vmax.f32 %v9724, 0.0
  %v9789 = vmax.f32 %v9725, 0.0
  %v9790 = vmax.f32 %v9726, 0.0
  %v9791 = vmax.f32 %v9727, 0.0
  %v9792 = vmax.f32 %v9728, 0.0
  %v9793 = vmax.f32 %v9729, 0.0
  %v9794 = vmax.f32 %v9730, 0.0
  %9795 = vst [vmem:[%s12] sm:$0xff] %v9731
  %9796 = vst [vmem:[%s12 + $0x8] sm:$0xff] %v9732
  %9797 = vst [vmem:[%s12 + $0x10] sm:$0xff] %v9733
  %9798 = vst [vmem:[%s12 + $0x18] sm:$0xff] %v9734
  %9799 = vst [vmem:[%s12 + $0x20] sm:$0xff] %v9735
  %9800 = vst [vmem:[%s12 + $0x28] sm:$0xff] %v9736
  %9801 = vst [vmem:[%s12 + $0x30] sm:$0xff] %v9737
  %9802 = vst [vmem:[%s12 + $0x38] sm:$0xff] %v9738
  %9803 = vst [vmem:[%s12 + $0x40] sm:$0xff] %v9739
  %9804 = vst [vmem:[%s12 + $0x48] sm:$0xff] %v9740
  %9805 = vst [vmem:[%s12 + $0x50] sm:$0xff] %v9741
  %9806 = vst [vmem:[%s12 + $0x58] sm:$0xff] %v9742
  %9807 = vst [vmem:[%s12 + $0x60] sm:$0xff] %v9743
  %9808 = vst [vmem:[%s12 + $0x68] sm:$0xff] %v9744
  %9809 = vst [vmem:[%s12 + $0x70] sm:$0xff] %v9745
  %9810 = vst [vmem:[%s12 + $0x78] sm:$0xff] %v9746
  %9811 = vst [vmem:[%s12 + $0x80] sm:$0xff] %v9747
  %9812 = vst [vmem:[%s12 + $0x88] sm:$0xff] %v9748
  %9813 = vst [vmem:[%s12 + $0x90] sm:$0xff] %v9749
  %9814 = vst [vmem:[%s12 + $0x98] sm:$0xff] %v9750
  %9815 = vst [vmem:[%s12 + $0xa0] sm:$0xff] %v9751
  %9816 = vst [vmem:[%s12 + $0xa8] sm:$0xff] %v9752
  %9817 = vst [vmem:[%s12 + $0xb0] sm:$0xff] %v9753
  %9818 = vst [vmem:[%s12 + $0xb8] sm:$0xff] %v9754
  %9819 = vst [vmem:[%s12 + $0xc0] sm:$0xff] %v9755
  %9820 = vst [vmem:[%s12 + $0xc8] sm:$0xff] %v9756
  %9821 = vst [vmem:[%s12 + $0xd0] sm:$0xff] %v9757
  %9822 = vst [vmem:[%s12 + $0xd8] sm:$0xff] %v9758
  %9823 = vst [vmem:[%s12 + $0xe0] sm:$0xff] %v9759
  %9824 = vst [vmem:[%s12 + $0xe8] sm:$0xff] %v9760
  %9825 = vst [vmem:[%s12 + $0xf0] sm:$0xff] %v9761
  %9826 = vst [vmem:[%s12 + $0xf8] sm:$0xff] %v9762
  %9827 = vst [vmem:[%s12 + $0x100] sm:$0xff] %v9763
  %9828 = vst [vmem:[%s12 + $0x108] sm:$0xff] %v9764
  %9829 = vst [vmem:[%s12 + $0x110] sm:$0xff] %v9765
  %9830 = vst [vmem:[%s12 + $0x118] sm:$0xff] %v9766
  %9831 = vst [vmem:[%s12 + $0x120] sm:$0xff] %v9767
  %9832 = vst [vmem:[%s12 + $0x128] sm:$0xff] %v9768
  %9833 = vst [vmem:[%s12 + $0x130] sm:$0xff] %v9769
  %9834 = vst [vmem:[%s12 + $0x138] sm:$0xff] %v9770
  %9835 = vst [vmem:[%s12 + $0x140] sm:$0xff] %v9771
  %9836 = vst [vmem:[%s12 + $0x148] sm:$0xff] %v9772
  %9837 = vst [vmem:[%s12 + $0x150] sm:$0xff] %v9773
  %9838 = vst [vmem:[%s12 + $0x158] sm:$0xff] %v9774
  %9839 = vst [vmem:[%s12 + $0x160] sm:$0xff] %v9775
  %9840 = vst [vmem:[%s12 + $0x168] sm:$0xff] %v9776
  %9841 = vst [vmem:[%s12 + $0x170] sm:$0xff] %v9777
  %9842 = vst [vmem:[%s12 + $0x178] sm:$0xff] %v9778
  %9843 = vst [vmem:[%s12 + $0x180] sm:$0xff] %v9779
  %9844 = vst [vmem:[%s12 + $0x188] sm:$0xff] %v9780
  %9845 = vst [vmem:[%s12 + $0x190] sm:$0xff] %v9781
  %9846 = vst [vmem:[%s12 + $0x198] sm:$0xff] %v9782
  %9847 = vst [vmem:[%s12 + $0x1a0] sm:$0xff] %v9783
  %9848 = vst [vmem:[%s12 + $0x1a8] sm:$0xff] %v9784
  %9849 = vst [vmem:[%s12 + $0x1b0] sm:$0xff] %v9785
  %9850 = vst [vmem:[%s12 + $0x1b8] sm:$0xff] %v9786
  %9851 = vst [vmem:[%s12 + $0x1c0] sm:$0xff] %v9787
  %9852 = vst [vmem:[%s12 + $0x1c8] sm:$0xff] %v9788
  %9853 = vst [vmem:[%s12 + $0x1d0] sm:$0xff] %v9789
  %9854 = vst [vmem:[%s12 + $0x1d8] sm:$0xff] %v9790
  %9855 = vst [vmem:[%s12 + $0x1e0] sm:$0xff] %v9791
  %9856 = vst [vmem:[%s12 + $0x1e8] sm:$0xff] %v9792
  %9857 = vst [vmem:[%s12 + $0x1f0] sm:$0xff] %v9793
  %9858 = vst [vmem:[%s12 + $0x1f8] sm:$0xff] %v9794
  // Predicated region
  $region50: #{bottleneck_block_forward.1} parent=0 // pred_check
    _
  $region51: #{bottleneck_block_forward.1} parent=0 // pred_check_branch
    %9860 = sbr.rel (0) target = $region53
  $region52: #{bottleneck_block_forward.1} parent=0 // pred_region
    _
  $region53: #{bottleneck_block_forward.1} parent=0 // pred_fallthru
    _
  // Predicated region
  $region54: #{bottleneck_block_forward.1} parent=0 // pred_check
    _
  $region55: #{bottleneck_block_forward.1} parent=0 // pred_check_branch
    %9862 = sbr.rel (0) target = $region57
  $region56: #{bottleneck_block_forward.1} parent=0 // pred_region
    _
  $region57: #{bottleneck_block_forward.1} parent=0 // pred_fallthru
    _

</llo_original>
